<compile_context>
chip_gen: v7x
topology: tpu7x:2x2x1
jax: 0.10.0
libtpu: 0.0.40
codegen_flags: <defaults>
</compile_context>

<pallas_src>
import math

import jax
import jax.numpy as jnp
from jax import lax
from jax.experimental import pallas as pl
from jax.experimental.pallas import tpu as pltpu


def _round_up(x, m):
    return ((x + m - 1) // m) * m


# ----------------------------------------------------------------------------
# Pallas kernel: one bidirectional GRU layer, grid=(num_time_chunks,).
# Both directions fused/interleaved; hidden state carried in VMEM scratch.
# ----------------------------------------------------------------------------
def _bigru_layer_kernel(gi_f_ref, gi_b_ref, len_ref,
                        whh_f_ref, whh_b_ref, bhn_f_ref, bhn_b_ref, h0_ref,
                        y_f_ref, y_b_ref, hT_ref,
                        hf_sc, hb_sc):
    # gi_*_ref : (Tc, B, 3H) precomputed x @ W_ih (+ folded biases), per dir
    # len_ref  : (B, 1) int32 sequence lengths
    # whh_*_ref: (H, 3H)  fused recurrent weights (gate order r|z|n)
    # bhn_*_ref: (1, H)   b_hh_n (must stay inside the r * (.) term)
    # h0_ref   : (2, B, H) initial hidden (fwd, bwd)
    # y_*_ref  : (Tc, B, H) per-step outputs; hT_ref: (2, B, H) final hidden
    # hf_sc/hb_sc: (B, H) VMEM-carried hidden state across time chunks
    c = pl.program_id(0)
    nC = pl.num_programs(0)
    Tc = y_f_ref.shape[0]
    B, H = hf_sc.shape

    @pl.when(c == 0)
    def _():
        hf_sc[...] = h0_ref[0]
        hb_sc[...] = h0_ref[1]

    lengths = len_ref[...]                       # (B, 1) int32, read once
    # Hoisted broadcasts (JAX does not CSE broadcast_in_dim inside the loop).
    bhn_f = jnp.broadcast_to(bhn_f_ref[...], (B, H))
    bhn_b = jnp.broadcast_to(bhn_b_ref[...], (B, H))

    t0_f = c * Tc                                # global t of fwd chunk start
    t0_b = (nC - 1 - c) * Tc                     # global t of bwd chunk start

    def gru_step(gi, h, w_ref, b_hn, t):
        # Single fused (B,H)@(H,3H) MXU dot; H-aligned r|z|n gate slices.
        gh = jnp.dot(h, w_ref[...], preferred_element_type=jnp.float32)
        r = jax.nn.sigmoid(gi[:, :H] + gh[:, :H])
        z = jax.nn.sigmoid(gi[:, H:2 * H] + gh[:, H:2 * H])
        n = jnp.tanh(gi[:, 2 * H:] + r * (gh[:, 2 * H:] + b_hn))
        h_new = (1.0 - z) * n + z * h
        valid = t < lengths                      # (B,1) packed-sequence mask
        return jnp.where(valid, h_new, 0.0), jnp.where(valid, h_new, h)

    def step(s, carry):
        h_f, h_b = carry
        # Interleave fwd + bwd: two independent dots / gate blocks per step
        # fill the latency of the serial h->h dependency (1-TC v5e/v6e win).
        y_f, h_f = gru_step(gi_f_ref[s], h_f, whh_f_ref, bhn_f, t0_f + s)
        y_f_ref[s] = y_f
        sb = Tc - 1 - s                          # bwd walks its chunk in reverse
        y_b, h_b = gru_step(gi_b_ref[sb], h_b, whh_b_ref, bhn_b, t0_b + sb)
        y_b_ref[sb] = y_b
        return h_f, h_b

    unroll = True if Tc <= 16 else 8
    h_f, h_b = lax.fori_loop(0, Tc, step, (hf_sc[...], hb_sc[...]),
                             unroll=unroll)
    hf_sc[...] = h_f
    hb_sc[...] = h_b

    @pl.when(c == nC - 1)
    def _():
        hT_ref[0] = h_f
        hT_ref[1] = h_b


def bigru_layer(gi_f, gi_b, lengths_col, w_hh, b_hh_n, h0, *, time_chunk):
    """One bidirectional GRU layer (padded shapes).

    gi_f/gi_b: (T_pad, B_pad, 3H_pad)  precomputed input projections
    lengths_col: (B_pad, 1) int32
    w_hh: (2, H_pad, 3H_pad); b_hh_n: (2, 1, H_pad); h0: (2, B_pad, H_pad)
    returns y_f, y_b: (T_pad, B_pad, H_pad), hT: (2, B_pad, H_pad)
    """
    Tp, Bp, threeH = gi_f.shape
    Hp = threeH // 3
    assert Tp % time_chunk == 0
    nC = Tp // time_chunk
    Tc = time_chunk

    # Explicit VMEM budget: double-buffered gi-in and y-out chunks dominate.
    f32 = 4
    need = (2 * 2 * Tc * Bp * threeH * f32      # gi_f + gi_b, double-buffered
            + 2 * 2 * Tc * Bp * Hp * f32        # y_f + y_b, double-buffered
            + 2 * 2 * Hp * threeH * f32         # w_hh fwd/bwd
            + 10 * Bp * Hp * f32                # h0, hT, scratch
            + 4 * Bp * f32 + 4 * Hp * f32)      # lengths, b_hh_n
    vmem_limit = int(min(max(2 * need + (8 << 20), 32 << 20), 64 << 20))

    y_f, y_b, hT = pl.pallas_call(
        _bigru_layer_kernel,
        out_shape=(jax.ShapeDtypeStruct((Tp, Bp, Hp), jnp.float32),
                   jax.ShapeDtypeStruct((Tp, Bp, Hp), jnp.float32),
                   jax.ShapeDtypeStruct((2, Bp, Hp), jnp.float32)),
        grid=(nC,),
        in_specs=[
            pl.BlockSpec((Tc, Bp, threeH), lambda c: (c, 0, 0)),           # gi fwd
            pl.BlockSpec((Tc, Bp, threeH), lambda c: (nC - 1 - c, 0, 0)),  # gi bwd (reversed)
            pl.BlockSpec((Bp, 1), lambda c: (0, 0)),                       # lengths
            pl.BlockSpec((Hp, threeH), lambda c: (0, 0)),                  # W_hh fwd
            pl.BlockSpec((Hp, threeH), lambda c: (0, 0)),                  # W_hh bwd
            pl.BlockSpec((1, Hp), lambda c: (0, 0)),                       # b_hh_n fwd
            pl.BlockSpec((1, Hp), lambda c: (0, 0)),                       # b_hh_n bwd
            pl.BlockSpec((2, Bp, Hp), lambda c: (0, 0, 0)),                # h0
        ],
        out_specs=(
            pl.BlockSpec((Tc, Bp, Hp), lambda c: (c, 0, 0)),               # y fwd
            pl.BlockSpec((Tc, Bp, Hp), lambda c: (nC - 1 - c, 0, 0)),      # y bwd
            pl.BlockSpec((2, Bp, Hp), lambda c: (0, 0, 0)),                # hT
        ),
        scratch_shapes=[pltpu.VMEM((Bp, Hp), jnp.float32),
                        pltpu.VMEM((Bp, Hp), jnp.float32)],
        # Time axis carries the recurrence -> "arbitrary".
        # TODO(synk): on v7x (2 TCs) a leading CORE_PARALLEL direction axis
        # with un-fused directions could map one direction per core.
        compiler_params=pltpu.CompilerParams(
            dimension_semantics=("arbitrary",),
            vmem_limit_bytes=vmem_limit),
    )(gi_f, gi_b, lengths_col, w_hh[0], w_hh[1], b_hh_n[0], b_hh_n[1], h0)
    return y_f, y_b, hT


# ----------------------------------------------------------------------------
# EncoderRNN forward (embedding + hoisted input projections in JAX,
# recurrence in Pallas)
# ----------------------------------------------------------------------------
def encoder_rnn_forward(params, input_seqs, input_lengths, hidden=None, *,
                        time_chunk=16):
    T, B = input_seqs.shape
    H = params["hidden_size"]
    Hp = params["hidden_size_padded"]
    n_layers = params["n_layers"]

    Bp = _round_up(max(B, 8), 8)          # f32 sublane alignment
    Tp = _round_up(T, time_chunk)

    # embedding lookup (gather); padding_idx=0 row is zero by construction
    emb = jnp.take(params["embedding"], input_seqs, axis=0)           # (T, B, E)
    # TODO(synk): nn.Dropout(p=0.5) is stochastic in training mode; eval-mode
    # (identity) semantics are implemented here (embedding + inter-layer).
    emb = jnp.pad(emb, ((0, Tp - T), (0, Bp - B), (0, 0)))

    lengths = jnp.pad(input_lengths.astype(jnp.int32), (0, Bp - B))
    lengths_col = lengths.reshape(Bp, 1)

    if hidden is None:
        hidden = jnp.zeros((n_layers * 2, B, H), jnp.float32)
    hidden_p = jnp.pad(hidden, ((0, 0), (0, Bp - B), (0, Hp - H)))

    finals = []
    y_f = y_b = None
    x_parts = (emb,)              # layer 0: one input tensor; later: (y_f, y_b)
    for layer in range(n_layers):
        lp = params["gru_fused"][layer]
        # Hoisted, fused input projection: one big (T*B, In) x (In, 3H) matmul
        # per direction; biases pre-folded.  Keeping y_f / y_b separate avoids
        # materializing the (T, B, 2H) concat in HBM between layers.
        # TODO(synk): gi could be stored bf16 to halve HBM traffic (loosen test
        # tolerance and upcast in-kernel); kept f32 here.
        gi = []
        for d in range(2):
            gi_d = lp["gi_bias"][d][None, None, :]                    # (1,1,3Hp)
            for xp, w in zip(x_parts, lp["w_ih"]):                    # w: (2,In_p,3Hp)
                gi_d = gi_d + jnp.einsum("tbi,ig->tbg", xp, w[d])
            gi.append(gi_d)
        h0 = hidden_p[2 * layer:2 * layer + 2]                        # (2, Bp, Hp)
        y_f, y_b, hT = bigru_layer(gi[0], gi[1], lengths_col,
                                   lp["w_hh"], lp["b_hh_n"], h0,
                                   time_chunk=time_chunk)
        finals.append(hT)
        x_parts = (y_f, y_b)                                          # next layer input

    outputs = (y_f + y_b)[:T, :B, :H]     # == outputs[..., :H] + outputs[..., H:]
    hidden_out = jnp.concatenate(finals, axis=0)[:, :B, :H]           # (n_layers*2,B,H)
    return outputs, hidden_out


# ----------------------------------------------------------------------------
# Parameter fusion: per-gate (3, In, H) weights -> fused, 128-lane-padded layout
# ----------------------------------------------------------------------------
def fuse_gru_params(params, H_pad):
    H = params["hidden_size"]
    pad_h = H_pad - H

    def pad_cols(w):  # pad last dim H -> H_pad with zeros
        return jnp.pad(w, [(0, 0)] * (w.ndim - 1) + [(0, pad_h)])

    fused = []
    for layer in range(params["n_layers"]):
        w_ih_d, w_hh_d, bias_d, bhn_d = [], [], [], []
        for d in ("fwd", "bwd"):
            w_ih, w_hh, b_ih, b_hh = params["gru"][layer][d]
            # per-gate (In,H)->(In,H_pad), concat r|z|n -> (In, 3H_pad)
            w_ih_d.append(jnp.concatenate([pad_cols(w_ih[g]) for g in range(3)], -1))
            # per-gate (H,H)->(H_pad,H_pad) (zero rows+cols), concat -> (H_pad,3H_pad)
            w_hh_p = [jnp.pad(w_hh[g], ((0, pad_h), (0, pad_h))) for g in range(3)]
            w_hh_d.append(jnp.concatenate(w_hh_p, -1))
            # fold b_ih (all gates) + b_hh (r,z) into the input projection bias
            b = [b_ih[0] + b_hh[0], b_ih[1] + b_hh[1], b_ih[2]]
            bias_d.append(jnp.concatenate([pad_cols(x) for x in b], -1)[0])  # (3H_pad,)
            bhn_d.append(pad_cols(b_hh[2]))                                  # (1,H_pad)
        w_ih_all = jnp.stack(w_ih_d, 0)                                      # (2,In,3H_pad)
        if layer == 0:
            w_ih_parts = (w_ih_all,)
        else:
            # next-layer input is [y_f | y_b] (each H_pad wide, padded lanes zero):
            # split W_ih rows per half, zero-pad rows H..H_pad
            pad_rows = lambda w: jnp.pad(w, ((0, 0), (0, pad_h), (0, 0)))
            w_ih_parts = (pad_rows(w_ih_all[:, :H, :]),
                          pad_rows(w_ih_all[:, H:, :]))
        fused.append({
            "w_ih": w_ih_parts,
            "w_hh": jnp.stack(w_hh_d, 0),       # (2, H_pad, 3H_pad)
            "gi_bias": jnp.stack(bias_d, 0),    # (2, 3H_pad)
            "b_hh_n": jnp.stack(bhn_d, 0),      # (2, 1, H_pad)
        })
    return fused


# ----------------------------------------------------------------------------
# Pure-JAX reference (per-gate math, identical equations) for correctness
# ----------------------------------------------------------------------------
def _gru_dir_ref(x, lengths, w_ih, w_hh, b_ih, b_hh, h0, reverse):
    T, B, _ = x.shape
    h = h0
    ys = [None] * T
    times = range(T - 1, -1, -1) if reverse else range(T)
    for t in times:
        x_t = x[t]
        gi = [x_t @ w_ih[g] + b_ih[g] for g in range(3)]
        gh = [h @ w_hh[g] + b_hh[g] for g in range(3)]
        r = jax.nn.sigmoid(gi[0] + gh[0])
        z = jax.nn.sigmoid(gi[1] + gh[1])
        n = jnp.tanh(gi[2] + r * gh[2])
        h_new = (1.0 - z) * n + z * h
        mask = (t < lengths).astype(jnp.float32)
        h = mask * h_new + (1.0 - mask) * h
        ys[t] = mask * h_new
    return jnp.stack(ys, 0), h


def encoder_rnn_forward_ref(params, input_seqs, input_lengths, hidden=None):
    T, B = input_seqs.shape
    H = params["hidden_size"]
    n_layers = params["n_layers"]
    emb = jnp.take(params["embedding"], input_seqs, axis=0)
    lengths = input_lengths.astype(jnp.int32).reshape(B, 1)
    if hidden is None:
        hidden = jnp.zeros((n_layers * 2, B, H), jnp.float32)
    x = emb
    finals = []
    y_f = y_b = None
    for layer in range(n_layers):
        y_f, h_f = _gru_dir_ref(x, lengths, *params["gru"][layer]["fwd"],
                                hidden[2 * layer], reverse=False)
        y_b, h_b = _gru_dir_ref(x, lengths, *params["gru"][layer]["bwd"],
                                hidden[2 * layer + 1], reverse=True)
        finals += [h_f, h_b]
        x = jnp.concatenate([y_f, y_b], -1)
    return y_f + y_b, jnp.stack(finals, 0)


# ----------------------------------------------------------------------------
# Deterministic parameter init (mirrors nn.Embedding + nn.GRU shapes)
# ----------------------------------------------------------------------------
def init_params(key, vocab, E, H, n_layers):
    k_emb, key = jax.random.split(key)
    emb = jax.random.normal(k_emb, (vocab, E), jnp.float32)
    emb = emb.at[0].set(0.0)                    # padding_idx=0
    bound = 1.0 / math.sqrt(H)
    gru = []
    in_sz = E
    for _layer in range(n_layers):
        layer_p = {}
        for d in ("fwd", "bwd"):
            key, k1, k2, k3, k4 = jax.random.split(key, 5)
            w_ih = jax.random.uniform(k1, (3, in_sz, H), jnp.float32, -bound, bound)
            w_hh = jax.random.uniform(k2, (3, H, H), jnp.float32, -bound, bound)
            b_ih = jax.random.uniform(k3, (3, 1, H), jnp.float32, -bound, bound)
            b_hh = jax.random.uniform(k4, (3, 1, H), jnp.float32, -bound, bound)
            layer_p[d] = (w_ih, w_hh, b_ih, b_hh)
        gru.append(layer_p)
        in_sz = 2 * H                            # bidirectional concat feeds next layer
    return {"embedding": emb, "gru": gru, "hidden_size": H, "n_layers": n_layers}


if __name__ == "__main__":
    import numpy as np

    vocab, E, H, n_layers = 20, 16, 32, 2
    T, B = 8, 4
    time_chunk = 4                               # -> 2 time chunks (exercises carry)

    params = init_params(jax.random.PRNGKey(0), vocab, E, H, n_layers)
    H_pad = _round_up(max(H, 128), 128)          # lane-aligned hidden size
    params["hidden_size_padded"] = H_pad
    params["gru_fused"] = fuse_gru_params(params, H_pad)

    k_seq, k_hid = jax.random.split(jax.random.PRNGKey(0))
    input_lengths = jnp.array([8, 6, 5, 3], jnp.int32)   # sorted (pack requirement)
    input_seqs = jax.random.randint(k_seq, (T, B), 1, vocab, jnp.int32)
    t_ids = jnp.arange(T)[:, None]
    input_seqs = jnp.where(t_ids < input_lengths[None, :], input_seqs, 0)  # pad = 0

    run = jax.jit(lambda seqs, lens, hid: encoder_rnn_forward(
        params, seqs, lens, hid, time_chunk=time_chunk))

    # case 1: default zero initial hidden (hidden=None path of the module)
    hidden0 = jnp.zeros((n_layers * 2, B, H), jnp.float32)
    outputs, hidden_out = run(input_seqs, input_lengths, hidden0)
    jax.block_until_ready((outputs, hidden_out))
    ref_out, ref_hid = encoder_rnn_forward_ref(params, input_seqs, input_lengths)
    assert outputs.shape == (T, B, H) and hidden_out.shape == (n_layers * 2, B, H)
    assert np.allclose(np.asarray(outputs), np.asarray(ref_out), atol=1e-4, rtol=1e-4)
    assert np.allclose(np.asarray(hidden_out), np.asarray(ref_hid), atol=1e-4, rtol=1e-4)

    # case 2: non-zero initial hidden
    hidden_rand = 0.1 * jax.random.normal(k_hid, (n_layers * 2, B, H), jnp.float32)
    outputs2, hidden_out2 = run(input_seqs, input_lengths, hidden_rand)
    jax.block_until_ready((outputs2, hidden_out2))
    ref_out2, ref_hid2 = encoder_rnn_forward_ref(params, input_seqs, input_lengths,
                                                 hidden_rand)
    assert np.allclose(np.asarray(outputs2), np.asarray(ref_out2), atol=1e-4, rtol=1e-4)
    assert np.allclose(np.asarray(hidden_out2), np.asarray(ref_hid2), atol=1e-4, rtol=1e-4)

    print("KERNEL_OK")
</pallas_src>

<mosaic_0001>
module attributes {stable_mosaic.version = 11 : i64} {
  func.func @_bigru_layer_kernel(%arg0: i32, %arg1: memref<4x8x384xf32, #tpu.memory_space<vmem>>, %arg2: memref<4x8x384xf32, #tpu.memory_space<vmem>>, %arg3: memref<8x1xi32, #tpu.memory_space<vmem>>, %arg4: memref<128x384xf32, #tpu.memory_space<vmem>>, %arg5: memref<128x384xf32, #tpu.memory_space<vmem>>, %arg6: memref<1x128xf32, #tpu.memory_space<vmem>>, %arg7: memref<1x128xf32, #tpu.memory_space<vmem>>, %arg8: memref<2x8x128xf32, #tpu.memory_space<vmem>>, %arg9: memref<4x8x128xf32, #tpu.memory_space<vmem>>, %arg10: memref<4x8x128xf32, #tpu.memory_space<vmem>>, %arg11: memref<2x8x128xf32, #tpu.memory_space<vmem>>, %arg12: memref<8x128xf32, #tpu.memory_space<vmem>>, %arg13: memref<8x128xf32, #tpu.memory_space<vmem>>) attributes {dimension_semantics = [#tpu.dimension_semantics<arbitrary>], iteration_bounds = array<i64: 2>, scalar_prefetch = 0 : i64, scratch_operands = 2 : i64, tpu.core_type = #tpu.core_type<tc>, window_params = [{transform_indices = @transform_0, window_bounds = array<i64: 4, 8, 384>}, {transform_indices = @transform_1, window_bounds = array<i64: 4, 8, 384>}, {pipeline_mode = #tpu.pipeline_mode<synchronous>, transform_indices = @transform_2, window_bounds = array<i64: 8, 1>}, {pipeline_mode = #tpu.pipeline_mode<synchronous>, transform_indices = @transform_3, window_bounds = array<i64: 128, 384>}, {pipeline_mode = #tpu.pipeline_mode<synchronous>, transform_indices = @transform_4, window_bounds = array<i64: 128, 384>}, {pipeline_mode = #tpu.pipeline_mode<synchronous>, transform_indices = @transform_5, window_bounds = array<i64: 1, 128>}, {pipeline_mode = #tpu.pipeline_mode<synchronous>, transform_indices = @transform_6, window_bounds = array<i64: 1, 128>}, {pipeline_mode = #tpu.pipeline_mode<synchronous>, transform_indices = @transform_7, window_bounds = array<i64: 2, 8, 128>}, {transform_indices = @transform_8, window_bounds = array<i64: 4, 8, 128>}, {transform_indices = @transform_9, window_bounds = array<i64: 4, 8, 128>}, {pipeline_mode = #tpu.pipeline_mode<synchronous>, transform_indices = @transform_10, window_bounds = array<i64: 2, 8, 128>}]} {
    %c0_i32 = arith.constant 0 : i32
    %0 = arith.cmpi eq, %arg0, %c0_i32 : i32
    %1 = arith.extui %0 : i1 to i32
    %c0_i32_0 = arith.constant 0 : i32
    %2 = arith.cmpi ne, %1, %c0_i32_0 : i32
    scf.if %2 {
      %c0_111 = arith.constant 0 : index
      %c0_112 = arith.constant 0 : index
      %c0_113 = arith.constant 0 : index
      %392 = vector.load %arg8[%c0_111, %c0_112, %c0_113] : memref<2x8x128xf32, #tpu.memory_space<vmem>>, vector<1x8x128xf32>
      %393 = vector.shape_cast %392 : vector<1x8x128xf32> to vector<8x128xf32>
      %c0_114 = arith.constant 0 : index
      %c0_115 = arith.constant 0 : index
      %394 = vector.load %arg12[%c0_114, %c0_115] : memref<8x128xf32, #tpu.memory_space<vmem>>, vector<8x128xf32>
      tpu.vector_store %arg12[%c0_114, %c0_115], %393 {strides = array<i32>} : memref<8x128xf32, #tpu.memory_space<vmem>>, vector<8x128xf32>,
      %c1 = arith.constant 1 : index
      %c0_116 = arith.constant 0 : index
      %c0_117 = arith.constant 0 : index
      %395 = vector.load %arg8[%c1, %c0_116, %c0_117] : memref<2x8x128xf32, #tpu.memory_space<vmem>>, vector<1x8x128xf32>
      %396 = vector.shape_cast %395 : vector<1x8x128xf32> to vector<8x128xf32>
      %c0_118 = arith.constant 0 : index
      %c0_119 = arith.constant 0 : index
      %397 = vector.load %arg13[%c0_118, %c0_119] : memref<8x128xf32, #tpu.memory_space<vmem>>, vector<8x128xf32>
      tpu.vector_store %arg13[%c0_118, %c0_119], %396 {strides = array<i32>} : memref<8x128xf32, #tpu.memory_space<vmem>>, vector<8x128xf32>,
    } else {
    }
    %c0 = arith.constant 0 : index
    %c0_1 = arith.constant 0 : index
    %3 = vector.load %arg3[%c0, %c0_1] : memref<8x1xi32, #tpu.memory_space<vmem>>, vector<8x1xi32>
    %c0_2 = arith.constant 0 : index
    %c0_3 = arith.constant 0 : index
    %4 = vector.load %arg6[%c0_2, %c0_3] : memref<1x128xf32, #tpu.memory_space<vmem>>, vector<1x128xf32>
    %5 = vector.shape_cast %4 : vector<1x128xf32> to vector<1x128xf32>
    %6 = vector.broadcast %5 : vector<1x128xf32> to vector<8x128xf32>
    %c0_4 = arith.constant 0 : index
    %c0_5 = arith.constant 0 : index
    %7 = vector.load %arg7[%c0_4, %c0_5] : memref<1x128xf32, #tpu.memory_space<vmem>>, vector<1x128xf32>
    %8 = vector.shape_cast %7 : vector<1x128xf32> to vector<1x128xf32>
    %9 = vector.broadcast %8 : vector<1x128xf32> to vector<8x128xf32>
    %c4_i32 = arith.constant 4 : i32
    %10 = arith.muli %arg0, %c4_i32 : i32
    %c1_i32 = arith.constant 1 : i32
    %11 = arith.subi %c1_i32, %arg0 : i32
    %c4_i32_6 = arith.constant 4 : i32
    %12 = arith.muli %11, %c4_i32_6 : i32
    %c0_7 = arith.constant 0 : index
    %c0_8 = arith.constant 0 : index
    %13 = vector.load %arg12[%c0_7, %c0_8] : memref<8x128xf32, #tpu.memory_space<vmem>>, vector<8x128xf32>
    %c0_9 = arith.constant 0 : index
    %c0_10 = arith.constant 0 : index
    %14 = vector.load %arg13[%c0_9, %c0_10] : memref<8x128xf32, #tpu.memory_space<vmem>>, vector<8x128xf32>
    %c0_i32_11 = arith.constant 0 : i32
    %15 = arith.index_cast %c0_i32_11 : i32 to index
    %c0_12 = arith.constant 0 : index
    %c0_13 = arith.constant 0 : index
    %16 = vector.load %arg1[%15, %c0_12, %c0_13] : memref<4x8x384xf32, #tpu.memory_space<vmem>>, vector<1x8x384xf32>
    %17 = vector.shape_cast %16 : vector<1x8x384xf32> to vector<8x384xf32>
    %18 = arith.addi %10, %c0_i32_11 : i32
    %c0_14 = arith.constant 0 : index
    %c0_15 = arith.constant 0 : index
    %19 = vector.load %arg4[%c0_14, %c0_15] : memref<128x384xf32, #tpu.memory_space<vmem>>, vector<128x384xf32>
    %cst = arith.constant dense<0.000000e+00> : vector<8x384xf32>
    %20 = tpu.matmul %13, %19, %cst {dimension_numbers = #tpu.dot_dimension_numbers<[1], [0], [0], [1], [0, 0, 1, 1], [], []>} : vector<8x128xf32>, vector<128x384xf32>, vector<8x384xf32> -> vector<8x384xf32>
    %21 = vector.extract_strided_slice %17 {offsets = [0, 0], sizes = [8, 128], strides = [1, 1]} : vector<8x384xf32> to vector<8x128xf32>
    %22 = vector.extract_strided_slice %20 {offsets = [0, 0], sizes = [8, 128], strides = [1, 1]} : vector<8x384xf32> to vector<8x128xf32>
    %23 = arith.addf %21, %22 : vector<8x128xf32>
    %24 = arith.negf %23 : vector<8x128xf32>
    %25 = math.exp %24 : vector<8x128xf32>
    %cst_16 = arith.constant 1.000000e+00 : f32
    %26 = vector.broadcast %cst_16 : f32 to vector<8x128xf32>
    %27 = arith.addf %26, %25 : vector<8x128xf32>
    %28 = arith.divf %26, %27 : vector<8x128xf32>
    %29 = vector.extract_strided_slice %17 {offsets = [0, 128], sizes = [8, 128], strides = [1, 1]} : vector<8x384xf32> to vector<8x128xf32>
    %30 = vector.extract_strided_slice %20 {offsets = [0, 128], sizes = [8, 128], strides = [1, 1]} : vector<8x384xf32> to vector<8x128xf32>
    %31 = arith.addf %29, %30 : vector<8x128xf32>
    %32 = arith.negf %31 : vector<8x128xf32>
    %33 = math.exp %32 : vector<8x128xf32>
    %cst_17 = arith.constant 1.000000e+00 : f32
    %34 = vector.broadcast %cst_17 : f32 to vector<8x128xf32>
    %35 = arith.addf %34, %33 : vector<8x128xf32>
    %36 = arith.divf %34, %35 : vector<8x128xf32>
    %37 = vector.extract_strided_slice %17 {offsets = [0, 256], sizes = [8, 128], strides = [1, 1]} : vector<8x384xf32> to vector<8x128xf32>
    %38 = vector.extract_strided_slice %20 {offsets = [0, 256], sizes = [8, 128], strides = [1, 1]} : vector<8x384xf32> to vector<8x128xf32>
    %39 = arith.addf %38, %6 : vector<8x128xf32>
    %40 = arith.mulf %28, %39 : vector<8x128xf32>
    %41 = arith.addf %37, %40 : vector<8x128xf32>
    %42 = math.tanh %41 : vector<8x128xf32>
    %cst_18 = arith.constant 1.000000e+00 : f32
    %43 = vector.broadcast %cst_18 : f32 to vector<8x128xf32>
    %44 = arith.subf %43, %36 : vector<8x128xf32>
    %45 = arith.mulf %44, %42 : vector<8x128xf32>
    %46 = arith.mulf %36, %13 : vector<8x128xf32>
    %47 = arith.addf %45, %46 : vector<8x128xf32>
    %48 = vector.broadcast %18 : i32 to vector<8x1xi32>
    %49 = arith.cmpi slt, %48, %3 : vector<8x1xi32>
    %cst_19 = arith.constant 0.000000e+00 : f32
    %50 = vector.shape_cast %49 : vector<8x1xi1> to vector<8x1xi1>
    %51 = vector.broadcast %50 : vector<8x1xi1> to vector<8x128xi1>
    %52 = vector.broadcast %cst_19 : f32 to vector<8x128xf32>
    %53 = arith.select %51, %47, %52 : vector<8x128xi1>, vector<8x128xf32>
    %54 = vector.shape_cast %49 : vector<8x1xi1> to vector<8x1xi1>
    %55 = vector.broadcast %54 : vector<8x1xi1> to vector<8x128xi1>
    %56 = arith.select %55, %47, %13 : vector<8x128xi1>, vector<8x128xf32>
    %57 = arith.index_cast %c0_i32_11 : i32 to index
    %c0_20 = arith.constant 0 : index
    %c0_21 = arith.constant 0 : index
    %58 = vector.load %arg9[%57, %c0_20, %c0_21] : memref<4x8x128xf32, #tpu.memory_space<vmem>>, vector<1x8x128xf32>
    %59 = vector.shape_cast %58 : vector<1x8x128xf32> to vector<8x128xf32>
    %60 = vector.shape_cast %53 : vector<8x128xf32> to vector<1x8x128xf32>
    tpu.vector_store %arg9[%57, %c0_20, %c0_21], %60 {strides = array<i32>} : memref<4x8x128xf32, #tpu.memory_space<vmem>>, vector<1x8x128xf32>,
    %c3_i32 = arith.constant 3 : i32
    %61 = arith.subi %c3_i32, %c0_i32_11 : i32
    %62 = arith.index_cast %61 : i32 to index
    %c0_22 = arith.constant 0 : index
    %c0_23 = arith.constant 0 : index
    %63 = vector.load %arg2[%62, %c0_22, %c0_23] : memref<4x8x384xf32, #tpu.memory_space<vmem>>, vector<1x8x384xf32>
    %64 = vector.shape_cast %63 : vector<1x8x384xf32> to vector<8x384xf32>
    %65 = arith.addi %12, %61 : i32
    %c0_24 = arith.constant 0 : index
    %c0_25 = arith.constant 0 : index
    %66 = vector.load %arg5[%c0_24, %c0_25] : memref<128x384xf32, #tpu.memory_space<vmem>>, vector<128x384xf32>
    %cst_26 = arith.constant dense<0.000000e+00> : vector<8x384xf32>
    %67 = tpu.matmul %14, %66, %cst_26 {dimension_numbers = #tpu.dot_dimension_numbers<[1], [0], [0], [1], [0, 0, 1, 1], [], []>} : vector<8x128xf32>, vector<128x384xf32>, vector<8x384xf32> -> vector<8x384xf32>
    %68 = vector.extract_strided_slice %64 {offsets = [0, 0], sizes = [8, 128], strides = [1, 1]} : vector<8x384xf32> to vector<8x128xf32>
    %69 = vector.extract_strided_slice %67 {offsets = [0, 0], sizes = [8, 128], strides = [1, 1]} : vector<8x384xf32> to vector<8x128xf32>
    %70 = arith.addf %68, %69 : vector<8x128xf32>
    %71 = arith.negf %70 : vector<8x128xf32>
    %72 = math.exp %71 : vector<8x128xf32>
    %cst_27 = arith.constant 1.000000e+00 : f32
    %73 = vector.broadcast %cst_27 : f32 to vector<8x128xf32>
    %74 = arith.addf %73, %72 : vector<8x128xf32>
    %75 = arith.divf %73, %74 : vector<8x128xf32>
    %76 = vector.extract_strided_slice %64 {offsets = [0, 128], sizes = [8, 128], strides = [1, 1]} : vector<8x384xf32> to vector<8x128xf32>
    %77 = vector.extract_strided_slice %67 {offsets = [0, 128], sizes = [8, 128], strides = [1, 1]} : vector<8x384xf32> to vector<8x128xf32>
    %78 = arith.addf %76, %77 : vector<8x128xf32>
    %79 = arith.negf %78 : vector<8x128xf32>
    %80 = math.exp %79 : vector<8x128xf32>
    %cst_28 = arith.constant 1.000000e+00 : f32
    %81 = vector.broadcast %cst_28 : f32 to vector<8x128xf32>
    %82 = arith.addf %81, %80 : vector<8x128xf32>
    %83 = arith.divf %81, %82 : vector<8x128xf32>
    %84 = vector.extract_strided_slice %64 {offsets = [0, 256], sizes = [8, 128], strides = [1, 1]} : vector<8x384xf32> to vector<8x128xf32>
    %85 = vector.extract_strided_slice %67 {offsets = [0, 256], sizes = [8, 128], strides = [1, 1]} : vector<8x384xf32> to vector<8x128xf32>
    %86 = arith.addf %85, %9 : vector<8x128xf32>
    %87 = arith.mulf %75, %86 : vector<8x128xf32>
    %88 = arith.addf %84, %87 : vector<8x128xf32>
    %89 = math.tanh %88 : vector<8x128xf32>
    %cst_29 = arith.constant 1.000000e+00 : f32
    %90 = vector.broadcast %cst_29 : f32 to vector<8x128xf32>
    %91 = arith.subf %90, %83 : vector<8x128xf32>
    %92 = arith.mulf %91, %89 : vector<8x128xf32>
    %93 = arith.mulf %83, %14 : vector<8x128xf32>
    %94 = arith.addf %92, %93 : vector<8x128xf32>
    %95 = vector.broadcast %65 : i32 to vector<8x1xi32>
    %96 = arith.cmpi slt, %95, %3 : vector<8x1xi32>
    %cst_30 = arith.constant 0.000000e+00 : f32
    %97 = vector.shape_cast %96 : vector<8x1xi1> to vector<8x1xi1>
    %98 = vector.broadcast %97 : vector<8x1xi1> to vector<8x128xi1>
    %99 = vector.broadcast %cst_30 : f32 to vector<8x128xf32>
    %100 = arith.select %98, %94, %99 : vector<8x128xi1>, vector<8x128xf32>
    %101 = vector.shape_cast %96 : vector<8x1xi1> to vector<8x1xi1>
    %102 = vector.broadcast %101 : vector<8x1xi1> to vector<8x128xi1>
    %103 = arith.select %102, %94, %14 : vector<8x128xi1>, vector<8x128xf32>
    %104 = arith.index_cast %61 : i32 to index
    %c0_31 = arith.constant 0 : index
    %c0_32 = arith.constant 0 : index
    %105 = vector.load %arg10[%104, %c0_31, %c0_32] : memref<4x8x128xf32, #tpu.memory_space<vmem>>, vector<1x8x128xf32>
    %106 = vector.shape_cast %105 : vector<1x8x128xf32> to vector<8x128xf32>
    %107 = vector.shape_cast %100 : vector<8x128xf32> to vector<1x8x128xf32>
    tpu.vector_store %arg10[%104, %c0_31, %c0_32], %107 {strides = array<i32>} : memref<4x8x128xf32, #tpu.memory_space<vmem>>, vector<1x8x128xf32>,
    %c1_i32_33 = arith.constant 1 : i32
    %108 = arith.index_cast %c1_i32_33 : i32 to index
    %c0_34 = arith.constant 0 : index
    %c0_35 = arith.constant 0 : index
    %109 = vector.load %arg1[%108, %c0_34, %c0_35] : memref<4x8x384xf32, #tpu.memory_space<vmem>>, vector<1x8x384xf32>
    %110 = vector.shape_cast %109 : vector<1x8x384xf32> to vector<8x384xf32>
    %111 = arith.addi %10, %c1_i32_33 : i32
    %c0_36 = arith.constant 0 : index
    %c0_37 = arith.constant 0 : index
    %112 = vector.load %arg4[%c0_36, %c0_37] : memref<128x384xf32, #tpu.memory_space<vmem>>, vector<128x384xf32>
    %cst_38 = arith.constant dense<0.000000e+00> : vector<8x384xf32>
    %113 = tpu.matmul %56, %112, %cst_38 {dimension_numbers = #tpu.dot_dimension_numbers<[1], [0], [0], [1], [0, 0, 1, 1], [], []>} : vector<8x128xf32>, vector<128x384xf32>, vector<8x384xf32> -> vector<8x384xf32>
    %114 = vector.extract_strided_slice %110 {offsets = [0, 0], sizes = [8, 128], strides = [1, 1]} : vector<8x384xf32> to vector<8x128xf32>
    %115 = vector.extract_strided_slice %113 {offsets = [0, 0], sizes = [8, 128], strides = [1, 1]} : vector<8x384xf32> to vector<8x128xf32>
    %116 = arith.addf %114, %115 : vector<8x128xf32>
    %117 = arith.negf %116 : vector<8x128xf32>
    %118 = math.exp %117 : vector<8x128xf32>
    %cst_39 = arith.constant 1.000000e+00 : f32
    %119 = vector.broadcast %cst_39 : f32 to vector<8x128xf32>
    %120 = arith.addf %119, %118 : vector<8x128xf32>
    %121 = arith.divf %119, %120 : vector<8x128xf32>
    %122 = vector.extract_strided_slice %110 {offsets = [0, 128], sizes = [8, 128], strides = [1, 1]} : vector<8x384xf32> to vector<8x128xf32>
    %123 = vector.extract_strided_slice %113 {offsets = [0, 128], sizes = [8, 128], strides = [1, 1]} : vector<8x384xf32> to vector<8x128xf32>
    %124 = arith.addf %122, %123 : vector<8x128xf32>
    %125 = arith.negf %124 : vector<8x128xf32>
    %126 = math.exp %125 : vector<8x128xf32>
    %cst_40 = arith.constant 1.000000e+00 : f32
    %127 = vector.broadcast %cst_40 : f32 to vector<8x128xf32>
    %128 = arith.addf %127, %126 : vector<8x128xf32>
    %129 = arith.divf %127, %128 : vector<8x128xf32>
    %130 = vector.extract_strided_slice %110 {offsets = [0, 256], sizes = [8, 128], strides = [1, 1]} : vector<8x384xf32> to vector<8x128xf32>
    %131 = vector.extract_strided_slice %113 {offsets = [0, 256], sizes = [8, 128], strides = [1, 1]} : vector<8x384xf32> to vector<8x128xf32>
    %132 = arith.addf %131, %6 : vector<8x128xf32>
    %133 = arith.mulf %121, %132 : vector<8x128xf32>
    %134 = arith.addf %130, %133 : vector<8x128xf32>
    %135 = math.tanh %134 : vector<8x128xf32>
    %cst_41 = arith.constant 1.000000e+00 : f32
    %136 = vector.broadcast %cst_41 : f32 to vector<8x128xf32>
    %137 = arith.subf %136, %129 : vector<8x128xf32>
    %138 = arith.mulf %137, %135 : vector<8x128xf32>
    %139 = arith.mulf %129, %56 : vector<8x128xf32>
    %140 = arith.addf %138, %139 : vector<8x128xf32>
    %141 = vector.broadcast %111 : i32 to vector<8x1xi32>
    %142 = arith.cmpi slt, %141, %3 : vector<8x1xi32>
    %cst_42 = arith.constant 0.000000e+00 : f32
    %143 = vector.shape_cast %142 : vector<8x1xi1> to vector<8x1xi1>
    %144 = vector.broadcast %143 : vector<8x1xi1> to vector<8x128xi1>
    %145 = vector.broadcast %cst_42 : f32 to vector<8x128xf32>
    %146 = arith.select %144, %140, %145 : vector<8x128xi1>, vector<8x128xf32>
    %147 = vector.shape_cast %142 : vector<8x1xi1> to vector<8x1xi1>
    %148 = vector.broadcast %147 : vector<8x1xi1> to vector<8x128xi1>
    %149 = arith.select %148, %140, %56 : vector<8x128xi1>, vector<8x128xf32>
    %150 = arith.index_cast %c1_i32_33 : i32 to index
    %c0_43 = arith.constant 0 : index
    %c0_44 = arith.constant 0 : index
    %151 = vector.load %arg9[%150, %c0_43, %c0_44] : memref<4x8x128xf32, #tpu.memory_space<vmem>>, vector<1x8x128xf32>
    %152 = vector.shape_cast %151 : vector<1x8x128xf32> to vector<8x128xf32>
    %153 = vector.shape_cast %146 : vector<8x128xf32> to vector<1x8x128xf32>
    tpu.vector_store %arg9[%150, %c0_43, %c0_44], %153 {strides = array<i32>} : memref<4x8x128xf32, #tpu.memory_space<vmem>>, vector<1x8x128xf32>,
    %c3_i32_45 = arith.constant 3 : i32
    %154 = arith.subi %c3_i32_45, %c1_i32_33 : i32
    %155 = arith.index_cast %154 : i32 to index
    %c0_46 = arith.constant 0 : index
    %c0_47 = arith.constant 0 : index
    %156 = vector.load %arg2[%155, %c0_46, %c0_47] : memref<4x8x384xf32, #tpu.memory_space<vmem>>, vector<1x8x384xf32>
    %157 = vector.shape_cast %156 : vector<1x8x384xf32> to vector<8x384xf32>
    %158 = arith.addi %12, %154 : i32
    %c0_48 = arith.constant 0 : index
    %c0_49 = arith.constant 0 : index
    %159 = vector.load %arg5[%c0_48, %c0_49] : memref<128x384xf32, #tpu.memory_space<vmem>>, vector<128x384xf32>
    %cst_50 = arith.constant dense<0.000000e+00> : vector<8x384xf32>
    %160 = tpu.matmul %103, %159, %cst_50 {dimension_numbers = #tpu.dot_dimension_numbers<[1], [0], [0], [1], [0, 0, 1, 1], [], []>} : vector<8x128xf32>, vector<128x384xf32>, vector<8x384xf32> -> vector<8x384xf32>
    %161 = vector.extract_strided_slice %157 {offsets = [0, 0], sizes = [8, 128], strides = [1, 1]} : vector<8x384xf32> to vector<8x128xf32>
    %162 = vector.extract_strided_slice %160 {offsets = [0, 0], sizes = [8, 128], strides = [1, 1]} : vector<8x384xf32> to vector<8x128xf32>
    %163 = arith.addf %161, %162 : vector<8x128xf32>
    %164 = arith.negf %163 : vector<8x128xf32>
    %165 = math.exp %164 : vector<8x128xf32>
    %cst_51 = arith.constant 1.000000e+00 : f32
    %166 = vector.broadcast %cst_51 : f32 to vector<8x128xf32>
    %167 = arith.addf %166, %165 : vector<8x128xf32>
    %168 = arith.divf %166, %167 : vector<8x128xf32>
    %169 = vector.extract_strided_slice %157 {offsets = [0, 128], sizes = [8, 128], strides = [1, 1]} : vector<8x384xf32> to vector<8x128xf32>
    %170 = vector.extract_strided_slice %160 {offsets = [0, 128], sizes = [8, 128], strides = [1, 1]} : vector<8x384xf32> to vector<8x128xf32>
    %171 = arith.addf %169, %170 : vector<8x128xf32>
    %172 = arith.negf %171 : vector<8x128xf32>
    %173 = math.exp %172 : vector<8x128xf32>
    %cst_52 = arith.constant 1.000000e+00 : f32
    %174 = vector.broadcast %cst_52 : f32 to vector<8x128xf32>
    %175 = arith.addf %174, %173 : vector<8x128xf32>
    %176 = arith.divf %174, %175 : vector<8x128xf32>
    %177 = vector.extract_strided_slice %157 {offsets = [0, 256], sizes = [8, 128], strides = [1, 1]} : vector<8x384xf32> to vector<8x128xf32>
    %178 = vector.extract_strided_slice %160 {offsets = [0, 256], sizes = [8, 128], strides = [1, 1]} : vector<8x384xf32> to vector<8x128xf32>
    %179 = arith.addf %178, %9 : vector<8x128xf32>
    %180 = arith.mulf %168, %179 : vector<8x128xf32>
    %181 = arith.addf %177, %180 : vector<8x128xf32>
    %182 = math.tanh %181 : vector<8x128xf32>
    %cst_53 = arith.constant 1.000000e+00 : f32
    %183 = vector.broadcast %cst_53 : f32 to vector<8x128xf32>
    %184 = arith.subf %183, %176 : vector<8x128xf32>
    %185 = arith.mulf %184, %182 : vector<8x128xf32>
    %186 = arith.mulf %176, %103 : vector<8x128xf32>
    %187 = arith.addf %185, %186 : vector<8x128xf32>
    %188 = vector.broadcast %158 : i32 to vector<8x1xi32>
    %189 = arith.cmpi slt, %188, %3 : vector<8x1xi32>
    %cst_54 = arith.constant 0.000000e+00 : f32
    %190 = vector.shape_cast %189 : vector<8x1xi1> to vector<8x1xi1>
    %191 = vector.broadcast %190 : vector<8x1xi1> to vector<8x128xi1>
    %192 = vector.broadcast %cst_54 : f32 to vector<8x128xf32>
    %193 = arith.select %191, %187, %192 : vector<8x128xi1>, vector<8x128xf32>
    %194 = vector.shape_cast %189 : vector<8x1xi1> to vector<8x1xi1>
    %195 = vector.broadcast %194 : vector<8x1xi1> to vector<8x128xi1>
    %196 = arith.select %195, %187, %103 : vector<8x128xi1>, vector<8x128xf32>
    %197 = arith.index_cast %154 : i32 to index
    %c0_55 = arith.constant 0 : index
    %c0_56 = arith.constant 0 : index
    %198 = vector.load %arg10[%197, %c0_55, %c0_56] : memref<4x8x128xf32, #tpu.memory_space<vmem>>, vector<1x8x128xf32>
    %199 = vector.shape_cast %198 : vector<1x8x128xf32> to vector<8x128xf32>
    %200 = vector.shape_cast %193 : vector<8x128xf32> to vector<1x8x128xf32>
    tpu.vector_store %arg10[%197, %c0_55, %c0_56], %200 {strides = array<i32>} : memref<4x8x128xf32, #tpu.memory_space<vmem>>, vector<1x8x128xf32>,
    %c2_i32 = arith.constant 2 : i32
    %201 = arith.index_cast %c2_i32 : i32 to index
    %c0_57 = arith.constant 0 : index
    %c0_58 = arith.constant 0 : index
    %202 = vector.load %arg1[%201, %c0_57, %c0_58] : memref<4x8x384xf32, #tpu.memory_space<vmem>>, vector<1x8x384xf32>
    %203 = vector.shape_cast %202 : vector<1x8x384xf32> to vector<8x384xf32>
    %204 = arith.addi %10, %c2_i32 : i32
    %c0_59 = arith.constant 0 : index
    %c0_60 = arith.constant 0 : index
    %205 = vector.load %arg4[%c0_59, %c0_60] : memref<128x384xf32, #tpu.memory_space<vmem>>, vector<128x384xf32>
    %cst_61 = arith.constant dense<0.000000e+00> : vector<8x384xf32>
    %206 = tpu.matmul %149, %205, %cst_61 {dimension_numbers = #tpu.dot_dimension_numbers<[1], [0], [0], [1], [0, 0, 1, 1], [], []>} : vector<8x128xf32>, vector<128x384xf32>, vector<8x384xf32> -> vector<8x384xf32>
    %207 = vector.extract_strided_slice %203 {offsets = [0, 0], sizes = [8, 128], strides = [1, 1]} : vector<8x384xf32> to vector<8x128xf32>
    %208 = vector.extract_strided_slice %206 {offsets = [0, 0], sizes = [8, 128], strides = [1, 1]} : vector<8x384xf32> to vector<8x128xf32>
    %209 = arith.addf %207, %208 : vector<8x128xf32>
    %210 = arith.negf %209 : vector<8x128xf32>
    %211 = math.exp %210 : vector<8x128xf32>
    %cst_62 = arith.constant 1.000000e+00 : f32
    %212 = vector.broadcast %cst_62 : f32 to vector<8x128xf32>
    %213 = arith.addf %212, %211 : vector<8x128xf32>
    %214 = arith.divf %212, %213 : vector<8x128xf32>
    %215 = vector.extract_strided_slice %203 {offsets = [0, 128], sizes = [8, 128], strides = [1, 1]} : vector<8x384xf32> to vector<8x128xf32>
    %216 = vector.extract_strided_slice %206 {offsets = [0, 128], sizes = [8, 128], strides = [1, 1]} : vector<8x384xf32> to vector<8x128xf32>
    %217 = arith.addf %215, %216 : vector<8x128xf32>
    %218 = arith.negf %217 : vector<8x128xf32>
    %219 = math.exp %218 : vector<8x128xf32>
    %cst_63 = arith.constant 1.000000e+00 : f32
    %220 = vector.broadcast %cst_63 : f32 to vector<8x128xf32>
    %221 = arith.addf %220, %219 : vector<8x128xf32>
    %222 = arith.divf %220, %221 : vector<8x128xf32>
    %223 = vector.extract_strided_slice %203 {offsets = [0, 256], sizes = [8, 128], strides = [1, 1]} : vector<8x384xf32> to vector<8x128xf32>
    %224 = vector.extract_strided_slice %206 {offsets = [0, 256], sizes = [8, 128], strides = [1, 1]} : vector<8x384xf32> to vector<8x128xf32>
    %225 = arith.addf %224, %6 : vector<8x128xf32>
    %226 = arith.mulf %214, %225 : vector<8x128xf32>
    %227 = arith.addf %223, %226 : vector<8x128xf32>
    %228 = math.tanh %227 : vector<8x128xf32>
    %cst_64 = arith.constant 1.000000e+00 : f32
    %229 = vector.broadcast %cst_64 : f32 to vector<8x128xf32>
    %230 = arith.subf %229, %222 : vector<8x128xf32>
    %231 = arith.mulf %230, %228 : vector<8x128xf32>
    %232 = arith.mulf %222, %149 : vector<8x128xf32>
    %233 = arith.addf %231, %232 : vector<8x128xf32>
    %234 = vector.broadcast %204 : i32 to vector<8x1xi32>
    %235 = arith.cmpi slt, %234, %3 : vector<8x1xi32>
    %cst_65 = arith.constant 0.000000e+00 : f32
    %236 = vector.shape_cast %235 : vector<8x1xi1> to vector<8x1xi1>
    %237 = vector.broadcast %236 : vector<8x1xi1> to vector<8x128xi1>
    %238 = vector.broadcast %cst_65 : f32 to vector<8x128xf32>
    %239 = arith.select %237, %233, %238 : vector<8x128xi1>, vector<8x128xf32>
    %240 = vector.shape_cast %235 : vector<8x1xi1> to vector<8x1xi1>
    %241 = vector.broadcast %240 : vector<8x1xi1> to vector<8x128xi1>
    %242 = arith.select %241, %233, %149 : vector<8x128xi1>, vector<8x128xf32>
    %243 = arith.index_cast %c2_i32 : i32 to index
    %c0_66 = arith.constant 0 : index
    %c0_67 = arith.constant 0 : index
    %244 = vector.load %arg9[%243, %c0_66, %c0_67] : memref<4x8x128xf32, #tpu.memory_space<vmem>>, vector<1x8x128xf32>
    %245 = vector.shape_cast %244 : vector<1x8x128xf32> to vector<8x128xf32>
    %246 = vector.shape_cast %239 : vector<8x128xf32> to vector<1x8x128xf32>
    tpu.vector_store %arg9[%243, %c0_66, %c0_67], %246 {strides = array<i32>} : memref<4x8x128xf32, #tpu.memory_space<vmem>>, vector<1x8x128xf32>,
    %c3_i32_68 = arith.constant 3 : i32
    %247 = arith.subi %c3_i32_68, %c2_i32 : i32
    %248 = arith.index_cast %247 : i32 to index
    %c0_69 = arith.constant 0 : index
    %c0_70 = arith.constant 0 : index
    %249 = vector.load %arg2[%248, %c0_69, %c0_70] : memref<4x8x384xf32, #tpu.memory_space<vmem>>, vector<1x8x384xf32>
    %250 = vector.shape_cast %249 : vector<1x8x384xf32> to vector<8x384xf32>
    %251 = arith.addi %12, %247 : i32
    %c0_71 = arith.constant 0 : index
    %c0_72 = arith.constant 0 : index
    %252 = vector.load %arg5[%c0_71, %c0_72] : memref<128x384xf32, #tpu.memory_space<vmem>>, vector<128x384xf32>
    %cst_73 = arith.constant dense<0.000000e+00> : vector<8x384xf32>
    %253 = tpu.matmul %196, %252, %cst_73 {dimension_numbers = #tpu.dot_dimension_numbers<[1], [0], [0], [1], [0, 0, 1, 1], [], []>} : vector<8x128xf32>, vector<128x384xf32>, vector<8x384xf32> -> vector<8x384xf32>
    %254 = vector.extract_strided_slice %250 {offsets = [0, 0], sizes = [8, 128], strides = [1, 1]} : vector<8x384xf32> to vector<8x128xf32>
    %255 = vector.extract_strided_slice %253 {offsets = [0, 0], sizes = [8, 128], strides = [1, 1]} : vector<8x384xf32> to vector<8x128xf32>
    %256 = arith.addf %254, %255 : vector<8x128xf32>
    %257 = arith.negf %256 : vector<8x128xf32>
    %258 = math.exp %257 : vector<8x128xf32>
    %cst_74 = arith.constant 1.000000e+00 : f32
    %259 = vector.broadcast %cst_74 : f32 to vector<8x128xf32>
    %260 = arith.addf %259, %258 : vector<8x128xf32>
    %261 = arith.divf %259, %260 : vector<8x128xf32>
    %262 = vector.extract_strided_slice %250 {offsets = [0, 128], sizes = [8, 128], strides = [1, 1]} : vector<8x384xf32> to vector<8x128xf32>
    %263 = vector.extract_strided_slice %253 {offsets = [0, 128], sizes = [8, 128], strides = [1, 1]} : vector<8x384xf32> to vector<8x128xf32>
    %264 = arith.addf %262, %263 : vector<8x128xf32>
    %265 = arith.negf %264 : vector<8x128xf32>
    %266 = math.exp %265 : vector<8x128xf32>
    %cst_75 = arith.constant 1.000000e+00 : f32
    %267 = vector.broadcast %cst_75 : f32 to vector<8x128xf32>
    %268 = arith.addf %267, %266 : vector<8x128xf32>
    %269 = arith.divf %267, %268 : vector<8x128xf32>
    %270 = vector.extract_strided_slice %250 {offsets = [0, 256], sizes = [8, 128], strides = [1, 1]} : vector<8x384xf32> to vector<8x128xf32>
    %271 = vector.extract_strided_slice %253 {offsets = [0, 256], sizes = [8, 128], strides = [1, 1]} : vector<8x384xf32> to vector<8x128xf32>
    %272 = arith.addf %271, %9 : vector<8x128xf32>
    %273 = arith.mulf %261, %272 : vector<8x128xf32>
    %274 = arith.addf %270, %273 : vector<8x128xf32>
    %275 = math.tanh %274 : vector<8x128xf32>
    %cst_76 = arith.constant 1.000000e+00 : f32
    %276 = vector.broadcast %cst_76 : f32 to vector<8x128xf32>
    %277 = arith.subf %276, %269 : vector<8x128xf32>
    %278 = arith.mulf %277, %275 : vector<8x128xf32>
    %279 = arith.mulf %269, %196 : vector<8x128xf32>
    %280 = arith.addf %278, %279 : vector<8x128xf32>
    %281 = vector.broadcast %251 : i32 to vector<8x1xi32>
    %282 = arith.cmpi slt, %281, %3 : vector<8x1xi32>
    %cst_77 = arith.constant 0.000000e+00 : f32
    %283 = vector.shape_cast %282 : vector<8x1xi1> to vector<8x1xi1>
    %284 = vector.broadcast %283 : vector<8x1xi1> to vector<8x128xi1>
    %285 = vector.broadcast %cst_77 : f32 to vector<8x128xf32>
    %286 = arith.select %284, %280, %285 : vector<8x128xi1>, vector<8x128xf32>
    %287 = vector.shape_cast %282 : vector<8x1xi1> to vector<8x1xi1>
    %288 = vector.broadcast %287 : vector<8x1xi1> to vector<8x128xi1>
    %289 = arith.select %288, %280, %196 : vector<8x128xi1>, vector<8x128xf32>
    %290 = arith.index_cast %247 : i32 to index
    %c0_78 = arith.constant 0 : index
    %c0_79 = arith.constant 0 : index
    %291 = vector.load %arg10[%290, %c0_78, %c0_79] : memref<4x8x128xf32, #tpu.memory_space<vmem>>, vector<1x8x128xf32>
    %292 = vector.shape_cast %291 : vector<1x8x128xf32> to vector<8x128xf32>
    %293 = vector.shape_cast %286 : vector<8x128xf32> to vector<1x8x128xf32>
    tpu.vector_store %arg10[%290, %c0_78, %c0_79], %293 {strides = array<i32>} : memref<4x8x128xf32, #tpu.memory_space<vmem>>, vector<1x8x128xf32>,
    %c3_i32_80 = arith.constant 3 : i32
    %294 = arith.index_cast %c3_i32_80 : i32 to index
    %c0_81 = arith.constant 0 : index
    %c0_82 = arith.constant 0 : index
    %295 = vector.load %arg1[%294, %c0_81, %c0_82] : memref<4x8x384xf32, #tpu.memory_space<vmem>>, vector<1x8x384xf32>
    %296 = vector.shape_cast %295 : vector<1x8x384xf32> to vector<8x384xf32>
    %297 = arith.addi %10, %c3_i32_80 : i32
    %c0_83 = arith.constant 0 : index
    %c0_84 = arith.constant 0 : index
    %298 = vector.load %arg4[%c0_83, %c0_84] : memref<128x384xf32, #tpu.memory_space<vmem>>, vector<128x384xf32>
    %cst_85 = arith.constant dense<0.000000e+00> : vector<8x384xf32>
    %299 = tpu.matmul %242, %298, %cst_85 {dimension_numbers = #tpu.dot_dimension_numbers<[1], [0], [0], [1], [0, 0, 1, 1], [], []>} : vector<8x128xf32>, vector<128x384xf32>, vector<8x384xf32> -> vector<8x384xf32>
    %300 = vector.extract_strided_slice %296 {offsets = [0, 0], sizes = [8, 128], strides = [1, 1]} : vector<8x384xf32> to vector<8x128xf32>
    %301 = vector.extract_strided_slice %299 {offsets = [0, 0], sizes = [8, 128], strides = [1, 1]} : vector<8x384xf32> to vector<8x128xf32>
    %302 = arith.addf %300, %301 : vector<8x128xf32>
    %303 = arith.negf %302 : vector<8x128xf32>
    %304 = math.exp %303 : vector<8x128xf32>
    %cst_86 = arith.constant 1.000000e+00 : f32
    %305 = vector.broadcast %cst_86 : f32 to vector<8x128xf32>
    %306 = arith.addf %305, %304 : vector<8x128xf32>
    %307 = arith.divf %305, %306 : vector<8x128xf32>
    %308 = vector.extract_strided_slice %296 {offsets = [0, 128], sizes = [8, 128], strides = [1, 1]} : vector<8x384xf32> to vector<8x128xf32>
    %309 = vector.extract_strided_slice %299 {offsets = [0, 128], sizes = [8, 128], strides = [1, 1]} : vector<8x384xf32> to vector<8x128xf32>
    %310 = arith.addf %308, %309 : vector<8x128xf32>
    %311 = arith.negf %310 : vector<8x128xf32>
    %312 = math.exp %311 : vector<8x128xf32>
    %cst_87 = arith.constant 1.000000e+00 : f32
    %313 = vector.broadcast %cst_87 : f32 to vector<8x128xf32>
    %314 = arith.addf %313, %312 : vector<8x128xf32>
    %315 = arith.divf %313, %314 : vector<8x128xf32>
    %316 = vector.extract_strided_slice %296 {offsets = [0, 256], sizes = [8, 128], strides = [1, 1]} : vector<8x384xf32> to vector<8x128xf32>
    %317 = vector.extract_strided_slice %299 {offsets = [0, 256], sizes = [8, 128], strides = [1, 1]} : vector<8x384xf32> to vector<8x128xf32>
    %318 = arith.addf %317, %6 : vector<8x128xf32>
    %319 = arith.mulf %307, %318 : vector<8x128xf32>
    %320 = arith.addf %316, %319 : vector<8x128xf32>
    %321 = math.tanh %320 : vector<8x128xf32>
    %cst_88 = arith.constant 1.000000e+00 : f32
    %322 = vector.broadcast %cst_88 : f32 to vector<8x128xf32>
    %323 = arith.subf %322, %315 : vector<8x128xf32>
    %324 = arith.mulf %323, %321 : vector<8x128xf32>
    %325 = arith.mulf %315, %242 : vector<8x128xf32>
    %326 = arith.addf %324, %325 : vector<8x128xf32>
    %327 = vector.broadcast %297 : i32 to vector<8x1xi32>
    %328 = arith.cmpi slt, %327, %3 : vector<8x1xi32>
    %cst_89 = arith.constant 0.000000e+00 : f32
    %329 = vector.shape_cast %328 : vector<8x1xi1> to vector<8x1xi1>
    %330 = vector.broadcast %329 : vector<8x1xi1> to vector<8x128xi1>
    %331 = vector.broadcast %cst_89 : f32 to vector<8x128xf32>
    %332 = arith.select %330, %326, %331 : vector<8x128xi1>, vector<8x128xf32>
    %333 = vector.shape_cast %328 : vector<8x1xi1> to vector<8x1xi1>
    %334 = vector.broadcast %333 : vector<8x1xi1> to vector<8x128xi1>
    %335 = arith.select %334, %326, %242 : vector<8x128xi1>, vector<8x128xf32>
    %336 = arith.index_cast %c3_i32_80 : i32 to index
    %c0_90 = arith.constant 0 : index
    %c0_91 = arith.constant 0 : index
    %337 = vector.load %arg9[%336, %c0_90, %c0_91] : memref<4x8x128xf32, #tpu.memory_space<vmem>>, vector<1x8x128xf32>
    %338 = vector.shape_cast %337 : vector<1x8x128xf32> to vector<8x128xf32>
    %339 = vector.shape_cast %332 : vector<8x128xf32> to vector<1x8x128xf32>
    tpu.vector_store %arg9[%336, %c0_90, %c0_91], %339 {strides = array<i32>} : memref<4x8x128xf32, #tpu.memory_space<vmem>>, vector<1x8x128xf32>,
    %c3_i32_92 = arith.constant 3 : i32
    %340 = arith.subi %c3_i32_92, %c3_i32_80 : i32
    %341 = arith.index_cast %340 : i32 to index
    %c0_93 = arith.constant 0 : index
    %c0_94 = arith.constant 0 : index
    %342 = vector.load %arg2[%341, %c0_93, %c0_94] : memref<4x8x384xf32, #tpu.memory_space<vmem>>, vector<1x8x384xf32>
    %343 = vector.shape_cast %342 : vector<1x8x384xf32> to vector<8x384xf32>
    %344 = arith.addi %12, %340 : i32
    %c0_95 = arith.constant 0 : index
    %c0_96 = arith.constant 0 : index
    %345 = vector.load %arg5[%c0_95, %c0_96] : memref<128x384xf32, #tpu.memory_space<vmem>>, vector<128x384xf32>
    %cst_97 = arith.constant dense<0.000000e+00> : vector<8x384xf32>
    %346 = tpu.matmul %289, %345, %cst_97 {dimension_numbers = #tpu.dot_dimension_numbers<[1], [0], [0], [1], [0, 0, 1, 1], [], []>} : vector<8x128xf32>, vector<128x384xf32>, vector<8x384xf32> -> vector<8x384xf32>
    %347 = vector.extract_strided_slice %343 {offsets = [0, 0], sizes = [8, 128], strides = [1, 1]} : vector<8x384xf32> to vector<8x128xf32>
    %348 = vector.extract_strided_slice %346 {offsets = [0, 0], sizes = [8, 128], strides = [1, 1]} : vector<8x384xf32> to vector<8x128xf32>
    %349 = arith.addf %347, %348 : vector<8x128xf32>
    %350 = arith.negf %349 : vector<8x128xf32>
    %351 = math.exp %350 : vector<8x128xf32>
    %cst_98 = arith.constant 1.000000e+00 : f32
    %352 = vector.broadcast %cst_98 : f32 to vector<8x128xf32>
    %353 = arith.addf %352, %351 : vector<8x128xf32>
    %354 = arith.divf %352, %353 : vector<8x128xf32>
    %355 = vector.extract_strided_slice %343 {offsets = [0, 128], sizes = [8, 128], strides = [1, 1]} : vector<8x384xf32> to vector<8x128xf32>
    %356 = vector.extract_strided_slice %346 {offsets = [0, 128], sizes = [8, 128], strides = [1, 1]} : vector<8x384xf32> to vector<8x128xf32>
    %357 = arith.addf %355, %356 : vector<8x128xf32>
    %358 = arith.negf %357 : vector<8x128xf32>
    %359 = math.exp %358 : vector<8x128xf32>
    %cst_99 = arith.constant 1.000000e+00 : f32
    %360 = vector.broadcast %cst_99 : f32 to vector<8x128xf32>
    %361 = arith.addf %360, %359 : vector<8x128xf32>
    %362 = arith.divf %360, %361 : vector<8x128xf32>
    %363 = vector.extract_strided_slice %343 {offsets = [0, 256], sizes = [8, 128], strides = [1, 1]} : vector<8x384xf32> to vector<8x128xf32>
    %364 = vector.extract_strided_slice %346 {offsets = [0, 256], sizes = [8, 128], strides = [1, 1]} : vector<8x384xf32> to vector<8x128xf32>
    %365 = arith.addf %364, %9 : vector<8x128xf32>
    %366 = arith.mulf %354, %365 : vector<8x128xf32>
    %367 = arith.addf %363, %366 : vector<8x128xf32>
    %368 = math.tanh %367 : vector<8x128xf32>
    %cst_100 = arith.constant 1.000000e+00 : f32
    %369 = vector.broadcast %cst_100 : f32 to vector<8x128xf32>
    %370 = arith.subf %369, %362 : vector<8x128xf32>
    %371 = arith.mulf %370, %368 : vector<8x128xf32>
    %372 = arith.mulf %362, %289 : vector<8x128xf32>
    %373 = arith.addf %371, %372 : vector<8x128xf32>
    %374 = vector.broadcast %344 : i32 to vector<8x1xi32>
    %375 = arith.cmpi slt, %374, %3 : vector<8x1xi32>
    %cst_101 = arith.constant 0.000000e+00 : f32
    %376 = vector.shape_cast %375 : vector<8x1xi1> to vector<8x1xi1>
    %377 = vector.broadcast %376 : vector<8x1xi1> to vector<8x128xi1>
    %378 = vector.broadcast %cst_101 : f32 to vector<8x128xf32>
    %379 = arith.select %377, %373, %378 : vector<8x128xi1>, vector<8x128xf32>
    %380 = vector.shape_cast %375 : vector<8x1xi1> to vector<8x1xi1>
    %381 = vector.broadcast %380 : vector<8x1xi1> to vector<8x128xi1>
    %382 = arith.select %381, %373, %289 : vector<8x128xi1>, vector<8x128xf32>
    %383 = arith.index_cast %340 : i32 to index
    %c0_102 = arith.constant 0 : index
    %c0_103 = arith.constant 0 : index
    %384 = vector.load %arg10[%383, %c0_102, %c0_103] : memref<4x8x128xf32, #tpu.memory_space<vmem>>, vector<1x8x128xf32>
    %385 = vector.shape_cast %384 : vector<1x8x128xf32> to vector<8x128xf32>
    %386 = vector.shape_cast %379 : vector<8x128xf32> to vector<1x8x128xf32>
    tpu.vector_store %arg10[%383, %c0_102, %c0_103], %386 {strides = array<i32>} : memref<4x8x128xf32, #tpu.memory_space<vmem>>, vector<1x8x128xf32>,
    %c4_i32_104 = arith.constant 4 : i32
    %c0_105 = arith.constant 0 : index
    %c0_106 = arith.constant 0 : index
    %387 = vector.load %arg12[%c0_105, %c0_106] : memref<8x128xf32, #tpu.memory_space<vmem>>, vector<8x128xf32>
    tpu.vector_store %arg12[%c0_105, %c0_106], %335 {strides = array<i32>} : memref<8x128xf32, #tpu.memory_space<vmem>>, vector<8x128xf32>,
    %c0_107 = arith.constant 0 : index
    %c0_108 = arith.constant 0 : index
    %388 = vector.load %arg13[%c0_107, %c0_108] : memref<8x128xf32, #tpu.memory_space<vmem>>, vector<8x128xf32>
    tpu.vector_store %arg13[%c0_107, %c0_108], %382 {strides = array<i32>} : memref<8x128xf32, #tpu.memory_space<vmem>>, vector<8x128xf32>,
    %c1_i32_109 = arith.constant 1 : i32
    %389 = arith.cmpi eq, %arg0, %c1_i32_109 : i32
    %390 = arith.extui %389 : i1 to i32
    %c0_i32_110 = arith.constant 0 : i32
    %391 = arith.cmpi ne, %390, %c0_i32_110 : i32
    scf.if %391 {
      %c0_111 = arith.constant 0 : index
      %c0_112 = arith.constant 0 : index
      %c0_113 = arith.constant 0 : index
      %392 = vector.load %arg11[%c0_111, %c0_112, %c0_113] : memref<2x8x128xf32, #tpu.memory_space<vmem>>, vector<1x8x128xf32>
      %393 = vector.shape_cast %392 : vector<1x8x128xf32> to vector<8x128xf32>
      %394 = vector.shape_cast %335 : vector<8x128xf32> to vector<1x8x128xf32>
      tpu.vector_store %arg11[%c0_111, %c0_112, %c0_113], %394 {strides = array<i32>} : memref<2x8x128xf32, #tpu.memory_space<vmem>>, vector<1x8x128xf32>,
      %c1 = arith.constant 1 : index
      %c0_114 = arith.constant 0 : index
      %c0_115 = arith.constant 0 : index
      %395 = vector.load %arg11[%c1, %c0_114, %c0_115] : memref<2x8x128xf32, #tpu.memory_space<vmem>>, vector<1x8x128xf32>
      %396 = vector.shape_cast %395 : vector<1x8x128xf32> to vector<8x128xf32>
      %397 = vector.shape_cast %382 : vector<8x128xf32> to vector<1x8x128xf32>
      tpu.vector_store %arg11[%c1, %c0_114, %c0_115], %397 {strides = array<i32>} : memref<2x8x128xf32, #tpu.memory_space<vmem>>, vector<1x8x128xf32>,
    } else {
    }
    return
  }
  func.func @transform_0(%arg0: i32) -> (i32, i32, i32) {
    %c0_i32 = arith.constant 0 : i32
    %c0_i32_0 = arith.constant 0 : i32
    %c0_i32_1 = arith.constant 0 : i32
    return %arg0, %c0_i32, %c0_i32_0 : i32, i32, i32
  }
  func.func @transform_1(%arg0: i32) -> (i32, i32, i32) {
    %c1_i32 = arith.constant 1 : i32
    %0 = arith.subi %c1_i32, %arg0 : i32
    %c0_i32 = arith.constant 0 : i32
    %c0_i32_0 = arith.constant 0 : i32
    %c0_i32_1 = arith.constant 0 : i32
    return %0, %c0_i32, %c0_i32_0 : i32, i32, i32
  }
  func.func @transform_2(%arg0: i32) -> (i32, i32) {
    %c0_i32 = arith.constant 0 : i32
    %c0_i32_0 = arith.constant 0 : i32
    %c0_i32_1 = arith.constant 0 : i32
    return %c0_i32, %c0_i32_0 : i32, i32
  }
  func.func @transform_3(%arg0: i32) -> (i32, i32) {
    %c0_i32 = arith.constant 0 : i32
    %c0_i32_0 = arith.constant 0 : i32
    %c0_i32_1 = arith.constant 0 : i32
    return %c0_i32, %c0_i32_0 : i32, i32
  }
  func.func @transform_4(%arg0: i32) -> (i32, i32) {
    %c0_i32 = arith.constant 0 : i32
    %c0_i32_0 = arith.constant 0 : i32
    %c0_i32_1 = arith.constant 0 : i32
    return %c0_i32, %c0_i32_0 : i32, i32
  }
  func.func @transform_5(%arg0: i32) -> (i32, i32) {
    %c0_i32 = arith.constant 0 : i32
    %c0_i32_0 = arith.constant 0 : i32
    %c0_i32_1 = arith.constant 0 : i32
    return %c0_i32, %c0_i32_0 : i32, i32
  }
  func.func @transform_6(%arg0: i32) -> (i32, i32) {
    %c0_i32 = arith.constant 0 : i32
    %c0_i32_0 = arith.constant 0 : i32
    %c0_i32_1 = arith.constant 0 : i32
    return %c0_i32, %c0_i32_0 : i32, i32
  }
  func.func @transform_7(%arg0: i32) -> (i32, i32, i32) {
    %c0_i32 = arith.constant 0 : i32
    %c0_i32_0 = arith.constant 0 : i32
    %c0_i32_1 = arith.constant 0 : i32
    %c0_i32_2 = arith.constant 0 : i32
    return %c0_i32, %c0_i32_0, %c0_i32_1 : i32, i32, i32
  }
  func.func @transform_8(%arg0: i32) -> (i32, i32, i32) {
    %c0_i32 = arith.constant 0 : i32
    %c0_i32_0 = arith.constant 0 : i32
    %c0_i32_1 = arith.constant 0 : i32
    return %arg0, %c0_i32, %c0_i32_0 : i32, i32, i32
  }
  func.func @transform_9(%arg0: i32) -> (i32, i32, i32) {
    %c1_i32 = arith.constant 1 : i32
    %0 = arith.subi %c1_i32, %arg0 : i32
    %c0_i32 = arith.constant 0 : i32
    %c0_i32_0 = arith.constant 0 : i32
    %c0_i32_1 = arith.constant 0 : i32
    return %0, %c0_i32, %c0_i32_0 : i32, i32, i32
  }
  func.func @transform_10(%arg0: i32) -> (i32, i32, i32) {
    %c0_i32 = arith.constant 0 : i32
    %c0_i32_0 = arith.constant 0 : i32
    %c0_i32_1 = arith.constant 0 : i32
    %c0_i32_2 = arith.constant 0 : i32
    return %c0_i32, %c0_i32_0, %c0_i32_1 : i32, i32, i32
  }
}

module attributes {stable_mosaic.version = 11 : i64} {
  func.func @_bigru_layer_kernel(%arg0: i32, %arg1: memref<4x8x384xf32, #tpu.memory_space<vmem>>, %arg2: memref<4x8x384xf32, #tpu.memory_space<vmem>>, %arg3: memref<8x1xi32, #tpu.memory_space<vmem>>, %arg4: memref<128x384xf32, #tpu.memory_space<vmem>>, %arg5: memref<128x384xf32, #tpu.memory_space<vmem>>, %arg6: memref<1x128xf32, #tpu.memory_space<vmem>>, %arg7: memref<1x128xf32, #tpu.memory_space<vmem>>, %arg8: memref<2x8x128xf32, #tpu.memory_space<vmem>>, %arg9: memref<4x8x128xf32, #tpu.memory_space<vmem>>, %arg10: memref<4x8x128xf32, #tpu.memory_space<vmem>>, %arg11: memref<2x8x128xf32, #tpu.memory_space<vmem>>, %arg12: memref<8x128xf32, #tpu.memory_space<vmem>>, %arg13: memref<8x128xf32, #tpu.memory_space<vmem>>) attributes {dimension_semantics = [#tpu.dimension_semantics<arbitrary>], iteration_bounds = array<i64: 2>, scalar_prefetch = 0 : i64, scratch_operands = 2 : i64, tpu.core_type = #tpu.core_type<tc>, window_params = [{transform_indices = @transform_0, window_bounds = array<i64: 4, 8, 384>}, {transform_indices = @transform_1, window_bounds = array<i64: 4, 8, 384>}, {pipeline_mode = #tpu.pipeline_mode<synchronous>, transform_indices = @transform_2, window_bounds = array<i64: 8, 1>}, {pipeline_mode = #tpu.pipeline_mode<synchronous>, transform_indices = @transform_3, window_bounds = array<i64: 128, 384>}, {pipeline_mode = #tpu.pipeline_mode<synchronous>, transform_indices = @transform_4, window_bounds = array<i64: 128, 384>}, {pipeline_mode = #tpu.pipeline_mode<synchronous>, transform_indices = @transform_5, window_bounds = array<i64: 1, 128>}, {pipeline_mode = #tpu.pipeline_mode<synchronous>, transform_indices = @transform_6, window_bounds = array<i64: 1, 128>}, {pipeline_mode = #tpu.pipeline_mode<synchronous>, transform_indices = @transform_7, window_bounds = array<i64: 2, 8, 128>}, {transform_indices = @transform_8, window_bounds = array<i64: 4, 8, 128>}, {transform_indices = @transform_9, window_bounds = array<i64: 4, 8, 128>}, {pipeline_mode = #tpu.pipeline_mode<synchronous>, transform_indices = @transform_10, window_bounds = array<i64: 2, 8, 128>}]} {
    %c0_i32 = arith.constant 0 : i32
    %0 = arith.cmpi eq, %arg0, %c0_i32 : i32
    %1 = arith.extui %0 : i1 to i32
    %c0_i32_0 = arith.constant 0 : i32
    %2 = arith.cmpi ne, %1, %c0_i32_0 : i32
    scf.if %2 {
      %c0_111 = arith.constant 0 : index
      %c0_112 = arith.constant 0 : index
      %c0_113 = arith.constant 0 : index
      %392 = vector.load %arg8[%c0_111, %c0_112, %c0_113] : memref<2x8x128xf32, #tpu.memory_space<vmem>>, vector<1x8x128xf32>
      %393 = vector.shape_cast %392 : vector<1x8x128xf32> to vector<8x128xf32>
      %c0_114 = arith.constant 0 : index
      %c0_115 = arith.constant 0 : index
      %394 = vector.load %arg12[%c0_114, %c0_115] : memref<8x128xf32, #tpu.memory_space<vmem>>, vector<8x128xf32>
      tpu.vector_store %arg12[%c0_114, %c0_115], %393 {strides = array<i32>} : memref<8x128xf32, #tpu.memory_space<vmem>>, vector<8x128xf32>,
      %c1 = arith.constant 1 : index
      %c0_116 = arith.constant 0 : index
      %c0_117 = arith.constant 0 : index
      %395 = vector.load %arg8[%c1, %c0_116, %c0_117] : memref<2x8x128xf32, #tpu.memory_space<vmem>>, vector<1x8x128xf32>
      %396 = vector.shape_cast %395 : vector<1x8x128xf32> to vector<8x128xf32>
      %c0_118 = arith.constant 0 : index
      %c0_119 = arith.constant 0 : index
      %397 = vector.load %arg13[%c0_118, %c0_119] : memref<8x128xf32, #tpu.memory_space<vmem>>, vector<8x128xf32>
      tpu.vector_store %arg13[%c0_118, %c0_119], %396 {strides = array<i32>} : memref<8x128xf32, #tpu.memory_space<vmem>>, vector<8x128xf32>,
    } else {
    }
    %c0 = arith.constant 0 : index
    %c0_1 = arith.constant 0 : index
    %3 = vector.load %arg3[%c0, %c0_1] : memref<8x1xi32, #tpu.memory_space<vmem>>, vector<8x1xi32>
    %c0_2 = arith.constant 0 : index
    %c0_3 = arith.constant 0 : index
    %4 = vector.load %arg6[%c0_2, %c0_3] : memref<1x128xf32, #tpu.memory_space<vmem>>, vector<1x128xf32>
    %5 = vector.shape_cast %4 : vector<1x128xf32> to vector<1x128xf32>
    %6 = vector.broadcast %5 : vector<1x128xf32> to vector<8x128xf32>
    %c0_4 = arith.constant 0 : index
    %c0_5 = arith.constant 0 : index
    %7 = vector.load %arg7[%c0_4, %c0_5] : memref<1x128xf32, #tpu.memory_space<vmem>>, vector<1x128xf32>
    %8 = vector.shape_cast %7 : vector<1x128xf32> to vector<1x128xf32>
    %9 = vector.broadcast %8 : vector<1x128xf32> to vector<8x128xf32>
    %c4_i32 = arith.constant 4 : i32
    %10 = arith.muli %arg0, %c4_i32 : i32
    %c1_i32 = arith.constant 1 : i32
    %11 = arith.subi %c1_i32, %arg0 : i32
    %c4_i32_6 = arith.constant 4 : i32
    %12 = arith.muli %11, %c4_i32_6 : i32
    %c0_7 = arith.constant 0 : index
    %c0_8 = arith.constant 0 : index
    %13 = vector.load %arg12[%c0_7, %c0_8] : memref<8x128xf32, #tpu.memory_space<vmem>>, vector<8x128xf32>
    %c0_9 = arith.constant 0 : index
    %c0_10 = arith.constant 0 : index
    %14 = vector.load %arg13[%c0_9, %c0_10] : memref<8x128xf32, #tpu.memory_space<vmem>>, vector<8x128xf32>
    %c0_i32_11 = arith.constant 0 : i32
    %15 = arith.index_cast %c0_i32_11 : i32 to index
    %c0_12 = arith.constant 0 : index
    %c0_13 = arith.constant 0 : index
    %16 = vector.load %arg1[%15, %c0_12, %c0_13] : memref<4x8x384xf32, #tpu.memory_space<vmem>>, vector<1x8x384xf32>
    %17 = vector.shape_cast %16 : vector<1x8x384xf32> to vector<8x384xf32>
    %18 = arith.addi %10, %c0_i32_11 : i32
    %c0_14 = arith.constant 0 : index
    %c0_15 = arith.constant 0 : index
    %19 = vector.load %arg4[%c0_14, %c0_15] : memref<128x384xf32, #tpu.memory_space<vmem>>, vector<128x384xf32>
    %cst = arith.constant dense<0.000000e+00> : vector<8x384xf32>
    %20 = tpu.matmul %13, %19, %cst {dimension_numbers = #tpu.dot_dimension_numbers<[1], [0], [0], [1], [0, 0, 1, 1], [], []>} : vector<8x128xf32>, vector<128x384xf32>, vector<8x384xf32> -> vector<8x384xf32>
    %21 = vector.extract_strided_slice %17 {offsets = [0, 0], sizes = [8, 128], strides = [1, 1]} : vector<8x384xf32> to vector<8x128xf32>
    %22 = vector.extract_strided_slice %20 {offsets = [0, 0], sizes = [8, 128], strides = [1, 1]} : vector<8x384xf32> to vector<8x128xf32>
    %23 = arith.addf %21, %22 : vector<8x128xf32>
    %24 = arith.negf %23 : vector<8x128xf32>
    %25 = math.exp %24 : vector<8x128xf32>
    %cst_16 = arith.constant 1.000000e+00 : f32
    %26 = vector.broadcast %cst_16 : f32 to vector<8x128xf32>
    %27 = arith.addf %26, %25 : vector<8x128xf32>
    %28 = arith.divf %26, %27 : vector<8x128xf32>
    %29 = vector.extract_strided_slice %17 {offsets = [0, 128], sizes = [8, 128], strides = [1, 1]} : vector<8x384xf32> to vector<8x128xf32>
    %30 = vector.extract_strided_slice %20 {offsets = [0, 128], sizes = [8, 128], strides = [1, 1]} : vector<8x384xf32> to vector<8x128xf32>
    %31 = arith.addf %29, %30 : vector<8x128xf32>
    %32 = arith.negf %31 : vector<8x128xf32>
    %33 = math.exp %32 : vector<8x128xf32>
    %cst_17 = arith.constant 1.000000e+00 : f32
    %34 = vector.broadcast %cst_17 : f32 to vector<8x128xf32>
    %35 = arith.addf %34, %33 : vector<8x128xf32>
    %36 = arith.divf %34, %35 : vector<8x128xf32>
    %37 = vector.extract_strided_slice %17 {offsets = [0, 256], sizes = [8, 128], strides = [1, 1]} : vector<8x384xf32> to vector<8x128xf32>
    %38 = vector.extract_strided_slice %20 {offsets = [0, 256], sizes = [8, 128], strides = [1, 1]} : vector<8x384xf32> to vector<8x128xf32>
    %39 = arith.addf %38, %6 : vector<8x128xf32>
    %40 = arith.mulf %28, %39 : vector<8x128xf32>
    %41 = arith.addf %37, %40 : vector<8x128xf32>
    %42 = math.tanh %41 : vector<8x128xf32>
    %cst_18 = arith.constant 1.000000e+00 : f32
    %43 = vector.broadcast %cst_18 : f32 to vector<8x128xf32>
    %44 = arith.subf %43, %36 : vector<8x128xf32>
    %45 = arith.mulf %44, %42 : vector<8x128xf32>
    %46 = arith.mulf %36, %13 : vector<8x128xf32>
    %47 = arith.addf %45, %46 : vector<8x128xf32>
    %48 = vector.broadcast %18 : i32 to vector<8x1xi32>
    %49 = arith.cmpi slt, %48, %3 : vector<8x1xi32>
    %cst_19 = arith.constant 0.000000e+00 : f32
    %50 = vector.shape_cast %49 : vector<8x1xi1> to vector<8x1xi1>
    %51 = vector.broadcast %50 : vector<8x1xi1> to vector<8x128xi1>
    %52 = vector.broadcast %cst_19 : f32 to vector<8x128xf32>
    %53 = arith.select %51, %47, %52 : vector<8x128xi1>, vector<8x128xf32>
    %54 = vector.shape_cast %49 : vector<8x1xi1> to vector<8x1xi1>
    %55 = vector.broadcast %54 : vector<8x1xi1> to vector<8x128xi1>
    %56 = arith.select %55, %47, %13 : vector<8x128xi1>, vector<8x128xf32>
    %57 = arith.index_cast %c0_i32_11 : i32 to index
    %c0_20 = arith.constant 0 : index
    %c0_21 = arith.constant 0 : index
    %58 = vector.load %arg9[%57, %c0_20, %c0_21] : memref<4x8x128xf32, #tpu.memory_space<vmem>>, vector<1x8x128xf32>
    %59 = vector.shape_cast %58 : vector<1x8x128xf32> to vector<8x128xf32>
    %60 = vector.shape_cast %53 : vector<8x128xf32> to vector<1x8x128xf32>
    tpu.vector_store %arg9[%57, %c0_20, %c0_21], %60 {strides = array<i32>} : memref<4x8x128xf32, #tpu.memory_space<vmem>>, vector<1x8x128xf32>,
    %c3_i32 = arith.constant 3 : i32
    %61 = arith.subi %c3_i32, %c0_i32_11 : i32
    %62 = arith.index_cast %61 : i32 to index
    %c0_22 = arith.constant 0 : index
    %c0_23 = arith.constant 0 : index
    %63 = vector.load %arg2[%62, %c0_22, %c0_23] : memref<4x8x384xf32, #tpu.memory_space<vmem>>, vector<1x8x384xf32>
    %64 = vector.shape_cast %63 : vector<1x8x384xf32> to vector<8x384xf32>
    %65 = arith.addi %12, %61 : i32
    %c0_24 = arith.constant 0 : index
    %c0_25 = arith.constant 0 : index
    %66 = vector.load %arg5[%c0_24, %c0_25] : memref<128x384xf32, #tpu.memory_space<vmem>>, vector<128x384xf32>
    %cst_26 = arith.constant dense<0.000000e+00> : vector<8x384xf32>
    %67 = tpu.matmul %14, %66, %cst_26 {dimension_numbers = #tpu.dot_dimension_numbers<[1], [0], [0], [1], [0, 0, 1, 1], [], []>} : vector<8x128xf32>, vector<128x384xf32>, vector<8x384xf32> -> vector<8x384xf32>
    %68 = vector.extract_strided_slice %64 {offsets = [0, 0], sizes = [8, 128], strides = [1, 1]} : vector<8x384xf32> to vector<8x128xf32>
    %69 = vector.extract_strided_slice %67 {offsets = [0, 0], sizes = [8, 128], strides = [1, 1]} : vector<8x384xf32> to vector<8x128xf32>
    %70 = arith.addf %68, %69 : vector<8x128xf32>
    %71 = arith.negf %70 : vector<8x128xf32>
    %72 = math.exp %71 : vector<8x128xf32>
    %cst_27 = arith.constant 1.000000e+00 : f32
    %73 = vector.broadcast %cst_27 : f32 to vector<8x128xf32>
    %74 = arith.addf %73, %72 : vector<8x128xf32>
    %75 = arith.divf %73, %74 : vector<8x128xf32>
    %76 = vector.extract_strided_slice %64 {offsets = [0, 128], sizes = [8, 128], strides = [1, 1]} : vector<8x384xf32> to vector<8x128xf32>
    %77 = vector.extract_strided_slice %67 {offsets = [0, 128], sizes = [8, 128], strides = [1, 1]} : vector<8x384xf32> to vector<8x128xf32>
    %78 = arith.addf %76, %77 : vector<8x128xf32>
    %79 = arith.negf %78 : vector<8x128xf32>
    %80 = math.exp %79 : vector<8x128xf32>
    %cst_28 = arith.constant 1.000000e+00 : f32
    %81 = vector.broadcast %cst_28 : f32 to vector<8x128xf32>
    %82 = arith.addf %81, %80 : vector<8x128xf32>
    %83 = arith.divf %81, %82 : vector<8x128xf32>
    %84 = vector.extract_strided_slice %64 {offsets = [0, 256], sizes = [8, 128], strides = [1, 1]} : vector<8x384xf32> to vector<8x128xf32>
    %85 = vector.extract_strided_slice %67 {offsets = [0, 256], sizes = [8, 128], strides = [1, 1]} : vector<8x384xf32> to vector<8x128xf32>
    %86 = arith.addf %85, %9 : vector<8x128xf32>
    %87 = arith.mulf %75, %86 : vector<8x128xf32>
    %88 = arith.addf %84, %87 : vector<8x128xf32>
    %89 = math.tanh %88 : vector<8x128xf32>
    %cst_29 = arith.constant 1.000000e+00 : f32
    %90 = vector.broadcast %cst_29 : f32 to vector<8x128xf32>
    %91 = arith.subf %90, %83 : vector<8x128xf32>
    %92 = arith.mulf %91, %89 : vector<8x128xf32>
    %93 = arith.mulf %83, %14 : vector<8x128xf32>
    %94 = arith.addf %92, %93 : vector<8x128xf32>
    %95 = vector.broadcast %65 : i32 to vector<8x1xi32>
    %96 = arith.cmpi slt, %95, %3 : vector<8x1xi32>
    %cst_30 = arith.constant 0.000000e+00 : f32
    %97 = vector.shape_cast %96 : vector<8x1xi1> to vector<8x1xi1>
    %98 = vector.broadcast %97 : vector<8x1xi1> to vector<8x128xi1>
    %99 = vector.broadcast %cst_30 : f32 to vector<8x128xf32>
    %100 = arith.select %98, %94, %99 : vector<8x128xi1>, vector<8x128xf32>
    %101 = vector.shape_cast %96 : vector<8x1xi1> to vector<8x1xi1>
    %102 = vector.broadcast %101 : vector<8x1xi1> to vector<8x128xi1>
    %103 = arith.select %102, %94, %14 : vector<8x128xi1>, vector<8x128xf32>
    %104 = arith.index_cast %61 : i32 to index
    %c0_31 = arith.constant 0 : index
    %c0_32 = arith.constant 0 : index
    %105 = vector.load %arg10[%104, %c0_31, %c0_32] : memref<4x8x128xf32, #tpu.memory_space<vmem>>, vector<1x8x128xf32>
    %106 = vector.shape_cast %105 : vector<1x8x128xf32> to vector<8x128xf32>
    %107 = vector.shape_cast %100 : vector<8x128xf32> to vector<1x8x128xf32>
    tpu.vector_store %arg10[%104, %c0_31, %c0_32], %107 {strides = array<i32>} : memref<4x8x128xf32, #tpu.memory_space<vmem>>, vector<1x8x128xf32>,
    %c1_i32_33 = arith.constant 1 : i32
    %108 = arith.index_cast %c1_i32_33 : i32 to index
    %c0_34 = arith.constant 0 : index
    %c0_35 = arith.constant 0 : index
    %109 = vector.load %arg1[%108, %c0_34, %c0_35] : memref<4x8x384xf32, #tpu.memory_space<vmem>>, vector<1x8x384xf32>
    %110 = vector.shape_cast %109 : vector<1x8x384xf32> to vector<8x384xf32>
    %111 = arith.addi %10, %c1_i32_33 : i32
    %c0_36 = arith.constant 0 : index
    %c0_37 = arith.constant 0 : index
    %112 = vector.load %arg4[%c0_36, %c0_37] : memref<128x384xf32, #tpu.memory_space<vmem>>, vector<128x384xf32>
    %cst_38 = arith.constant dense<0.000000e+00> : vector<8x384xf32>
    %113 = tpu.matmul %56, %112, %cst_38 {dimension_numbers = #tpu.dot_dimension_numbers<[1], [0], [0], [1], [0, 0, 1, 1], [], []>} : vector<8x128xf32>, vector<128x384xf32>, vector<8x384xf32> -> vector<8x384xf32>
    %114 = vector.extract_strided_slice %110 {offsets = [0, 0], sizes = [8, 128], strides = [1, 1]} : vector<8x384xf32> to vector<8x128xf32>
    %115 = vector.extract_strided_slice %113 {offsets = [0, 0], sizes = [8, 128], strides = [1, 1]} : vector<8x384xf32> to vector<8x128xf32>
    %116 = arith.addf %114, %115 : vector<8x128xf32>
    %117 = arith.negf %116 : vector<8x128xf32>
    %118 = math.exp %117 : vector<8x128xf32>
    %cst_39 = arith.constant 1.000000e+00 : f32
    %119 = vector.broadcast %cst_39 : f32 to vector<8x128xf32>
    %120 = arith.addf %119, %118 : vector<8x128xf32>
    %121 = arith.divf %119, %120 : vector<8x128xf32>
    %122 = vector.extract_strided_slice %110 {offsets = [0, 128], sizes = [8, 128], strides = [1, 1]} : vector<8x384xf32> to vector<8x128xf32>
    %123 = vector.extract_strided_slice %113 {offsets = [0, 128], sizes = [8, 128], strides = [1, 1]} : vector<8x384xf32> to vector<8x128xf32>
    %124 = arith.addf %122, %123 : vector<8x128xf32>
    %125 = arith.negf %124 : vector<8x128xf32>
    %126 = math.exp %125 : vector<8x128xf32>
    %cst_40 = arith.constant 1.000000e+00 : f32
    %127 = vector.broadcast %cst_40 : f32 to vector<8x128xf32>
    %128 = arith.addf %127, %126 : vector<8x128xf32>
    %129 = arith.divf %127, %128 : vector<8x128xf32>
    %130 = vector.extract_strided_slice %110 {offsets = [0, 256], sizes = [8, 128], strides = [1, 1]} : vector<8x384xf32> to vector<8x128xf32>
    %131 = vector.extract_strided_slice %113 {offsets = [0, 256], sizes = [8, 128], strides = [1, 1]} : vector<8x384xf32> to vector<8x128xf32>
    %132 = arith.addf %131, %6 : vector<8x128xf32>
    %133 = arith.mulf %121, %132 : vector<8x128xf32>
    %134 = arith.addf %130, %133 : vector<8x128xf32>
    %135 = math.tanh %134 : vector<8x128xf32>
    %cst_41 = arith.constant 1.000000e+00 : f32
    %136 = vector.broadcast %cst_41 : f32 to vector<8x128xf32>
    %137 = arith.subf %136, %129 : vector<8x128xf32>
    %138 = arith.mulf %137, %135 : vector<8x128xf32>
    %139 = arith.mulf %129, %56 : vector<8x128xf32>
    %140 = arith.addf %138, %139 : vector<8x128xf32>
    %141 = vector.broadcast %111 : i32 to vector<8x1xi32>
    %142 = arith.cmpi slt, %141, %3 : vector<8x1xi32>
    %cst_42 = arith.constant 0.000000e+00 : f32
    %143 = vector.shape_cast %142 : vector<8x1xi1> to vector<8x1xi1>
    %144 = vector.broadcast %143 : vector<8x1xi1> to vector<8x128xi1>
    %145 = vector.broadcast %cst_42 : f32 to vector<8x128xf32>
    %146 = arith.select %144, %140, %145 : vector<8x128xi1>, vector<8x128xf32>
    %147 = vector.shape_cast %142 : vector<8x1xi1> to vector<8x1xi1>
    %148 = vector.broadcast %147 : vector<8x1xi1> to vector<8x128xi1>
    %149 = arith.select %148, %140, %56 : vector<8x128xi1>, vector<8x128xf32>
    %150 = arith.index_cast %c1_i32_33 : i32 to index
    %c0_43 = arith.constant 0 : index
    %c0_44 = arith.constant 0 : index
    %151 = vector.load %arg9[%150, %c0_43, %c0_44] : memref<4x8x128xf32, #tpu.memory_space<vmem>>, vector<1x8x128xf32>
    %152 = vector.shape_cast %151 : vector<1x8x128xf32> to vector<8x128xf32>
    %153 = vector.shape_cast %146 : vector<8x128xf32> to vector<1x8x128xf32>
    tpu.vector_store %arg9[%150, %c0_43, %c0_44], %153 {strides = array<i32>} : memref<4x8x128xf32, #tpu.memory_space<vmem>>, vector<1x8x128xf32>,
    %c3_i32_45 = arith.constant 3 : i32
    %154 = arith.subi %c3_i32_45, %c1_i32_33 : i32
    %155 = arith.index_cast %154 : i32 to index
    %c0_46 = arith.constant 0 : index
    %c0_47 = arith.constant 0 : index
    %156 = vector.load %arg2[%155, %c0_46, %c0_47] : memref<4x8x384xf32, #tpu.memory_space<vmem>>, vector<1x8x384xf32>
    %157 = vector.shape_cast %156 : vector<1x8x384xf32> to vector<8x384xf32>
    %158 = arith.addi %12, %154 : i32
    %c0_48 = arith.constant 0 : index
    %c0_49 = arith.constant 0 : index
    %159 = vector.load %arg5[%c0_48, %c0_49] : memref<128x384xf32, #tpu.memory_space<vmem>>, vector<128x384xf32>
    %cst_50 = arith.constant dense<0.000000e+00> : vector<8x384xf32>
    %160 = tpu.matmul %103, %159, %cst_50 {dimension_numbers = #tpu.dot_dimension_numbers<[1], [0], [0], [1], [0, 0, 1, 1], [], []>} : vector<8x128xf32>, vector<128x384xf32>, vector<8x384xf32> -> vector<8x384xf32>
    %161 = vector.extract_strided_slice %157 {offsets = [0, 0], sizes = [8, 128], strides = [1, 1]} : vector<8x384xf32> to vector<8x128xf32>
    %162 = vector.extract_strided_slice %160 {offsets = [0, 0], sizes = [8, 128], strides = [1, 1]} : vector<8x384xf32> to vector<8x128xf32>
    %163 = arith.addf %161, %162 : vector<8x128xf32>
    %164 = arith.negf %163 : vector<8x128xf32>
    %165 = math.exp %164 : vector<8x128xf32>
    %cst_51 = arith.constant 1.000000e+00 : f32
    %166 = vector.broadcast %cst_51 : f32 to vector<8x128xf32>
    %167 = arith.addf %166, %165 : vector<8x128xf32>
    %168 = arith.divf %166, %167 : vector<8x128xf32>
    %169 = vector.extract_strided_slice %157 {offsets = [0, 128], sizes = [8, 128], strides = [1, 1]} : vector<8x384xf32> to vector<8x128xf32>
    %170 = vector.extract_strided_slice %160 {offsets = [0, 128], sizes = [8, 128], strides = [1, 1]} : vector<8x384xf32> to vector<8x128xf32>
    %171 = arith.addf %169, %170 : vector<8x128xf32>
    %172 = arith.negf %171 : vector<8x128xf32>
    %173 = math.exp %172 : vector<8x128xf32>
    %cst_52 = arith.constant 1.000000e+00 : f32
    %174 = vector.broadcast %cst_52 : f32 to vector<8x128xf32>
    %175 = arith.addf %174, %173 : vector<8x128xf32>
    %176 = arith.divf %174, %175 : vector<8x128xf32>
    %177 = vector.extract_strided_slice %157 {offsets = [0, 256], sizes = [8, 128], strides = [1, 1]} : vector<8x384xf32> to vector<8x128xf32>
    %178 = vector.extract_strided_slice %160 {offsets = [0, 256], sizes = [8, 128], strides = [1, 1]} : vector<8x384xf32> to vector<8x128xf32>
    %179 = arith.addf %178, %9 : vector<8x128xf32>
    %180 = arith.mulf %168, %179 : vector<8x128xf32>
    %181 = arith.addf %177, %180 : vector<8x128xf32>
    %182 = math.tanh %181 : vector<8x128xf32>
    %cst_53 = arith.constant 1.000000e+00 : f32
    %183 = vector.broadcast %cst_53 : f32 to vector<8x128xf32>
    %184 = arith.subf %183, %176 : vector<8x128xf32>
    %185 = arith.mulf %184, %182 : vector<8x128xf32>
    %186 = arith.mulf %176, %103 : vector<8x128xf32>
    %187 = arith.addf %185, %186 : vector<8x128xf32>
    %188 = vector.broadcast %158 : i32 to vector<8x1xi32>
    %189 = arith.cmpi slt, %188, %3 : vector<8x1xi32>
    %cst_54 = arith.constant 0.000000e+00 : f32
    %190 = vector.shape_cast %189 : vector<8x1xi1> to vector<8x1xi1>
    %191 = vector.broadcast %190 : vector<8x1xi1> to vector<8x128xi1>
    %192 = vector.broadcast %cst_54 : f32 to vector<8x128xf32>
    %193 = arith.select %191, %187, %192 : vector<8x128xi1>, vector<8x128xf32>
    %194 = vector.shape_cast %189 : vector<8x1xi1> to vector<8x1xi1>
    %195 = vector.broadcast %194 : vector<8x1xi1> to vector<8x128xi1>
    %196 = arith.select %195, %187, %103 : vector<8x128xi1>, vector<8x128xf32>
    %197 = arith.index_cast %154 : i32 to index
    %c0_55 = arith.constant 0 : index
    %c0_56 = arith.constant 0 : index
    %198 = vector.load %arg10[%197, %c0_55, %c0_56] : memref<4x8x128xf32, #tpu.memory_space<vmem>>, vector<1x8x128xf32>
    %199 = vector.shape_cast %198 : vector<1x8x128xf32> to vector<8x128xf32>
    %200 = vector.shape_cast %193 : vector<8x128xf32> to vector<1x8x128xf32>
    tpu.vector_store %arg10[%197, %c0_55, %c0_56], %200 {strides = array<i32>} : memref<4x8x128xf32, #tpu.memory_space<vmem>>, vector<1x8x128xf32>,
    %c2_i32 = arith.constant 2 : i32
    %201 = arith.index_cast %c2_i32 : i32 to index
    %c0_57 = arith.constant 0 : index
    %c0_58 = arith.constant 0 : index
    %202 = vector.load %arg1[%201, %c0_57, %c0_58] : memref<4x8x384xf32, #tpu.memory_space<vmem>>, vector<1x8x384xf32>
    %203 = vector.shape_cast %202 : vector<1x8x384xf32> to vector<8x384xf32>
    %204 = arith.addi %10, %c2_i32 : i32
    %c0_59 = arith.constant 0 : index
    %c0_60 = arith.constant 0 : index
    %205 = vector.load %arg4[%c0_59, %c0_60] : memref<128x384xf32, #tpu.memory_space<vmem>>, vector<128x384xf32>
    %cst_61 = arith.constant dense<0.000000e+00> : vector<8x384xf32>
    %206 = tpu.matmul %149, %205, %cst_61 {dimension_numbers = #tpu.dot_dimension_numbers<[1], [0], [0], [1], [0, 0, 1, 1], [], []>} : vector<8x128xf32>, vector<128x384xf32>, vector<8x384xf32> -> vector<8x384xf32>
    %207 = vector.extract_strided_slice %203 {offsets = [0, 0], sizes = [8, 128], strides = [1, 1]} : vector<8x384xf32> to vector<8x128xf32>
    %208 = vector.extract_strided_slice %206 {offsets = [0, 0], sizes = [8, 128], strides = [1, 1]} : vector<8x384xf32> to vector<8x128xf32>
    %209 = arith.addf %207, %208 : vector<8x128xf32>
    %210 = arith.negf %209 : vector<8x128xf32>
    %211 = math.exp %210 : vector<8x128xf32>
    %cst_62 = arith.constant 1.000000e+00 : f32
    %212 = vector.broadcast %cst_62 : f32 to vector<8x128xf32>
    %213 = arith.addf %212, %211 : vector<8x128xf32>
    %214 = arith.divf %212, %213 : vector<8x128xf32>
    %215 = vector.extract_strided_slice %203 {offsets = [0, 128], sizes = [8, 128], strides = [1, 1]} : vector<8x384xf32> to vector<8x128xf32>
    %216 = vector.extract_strided_slice %206 {offsets = [0, 128], sizes = [8, 128], strides = [1, 1]} : vector<8x384xf32> to vector<8x128xf32>
    %217 = arith.addf %215, %216 : vector<8x128xf32>
    %218 = arith.negf %217 : vector<8x128xf32>
    %219 = math.exp %218 : vector<8x128xf32>
    %cst_63 = arith.constant 1.000000e+00 : f32
    %220 = vector.broadcast %cst_63 : f32 to vector<8x128xf32>
    %221 = arith.addf %220, %219 : vector<8x128xf32>
    %222 = arith.divf %220, %221 : vector<8x128xf32>
    %223 = vector.extract_strided_slice %203 {offsets = [0, 256], sizes = [8, 128], strides = [1, 1]} : vector<8x384xf32> to vector<8x128xf32>
    %224 = vector.extract_strided_slice %206 {offsets = [0, 256], sizes = [8, 128], strides = [1, 1]} : vector<8x384xf32> to vector<8x128xf32>
    %225 = arith.addf %224, %6 : vector<8x128xf32>
    %226 = arith.mulf %214, %225 : vector<8x128xf32>
    %227 = arith.addf %223, %226 : vector<8x128xf32>
    %228 = math.tanh %227 : vector<8x128xf32>
    %cst_64 = arith.constant 1.000000e+00 : f32
    %229 = vector.broadcast %cst_64 : f32 to vector<8x128xf32>
    %230 = arith.subf %229, %222 : vector<8x128xf32>
    %231 = arith.mulf %230, %228 : vector<8x128xf32>
    %232 = arith.mulf %222, %149 : vector<8x128xf32>
    %233 = arith.addf %231, %232 : vector<8x128xf32>
    %234 = vector.broadcast %204 : i32 to vector<8x1xi32>
    %235 = arith.cmpi slt, %234, %3 : vector<8x1xi32>
    %cst_65 = arith.constant 0.000000e+00 : f32
    %236 = vector.shape_cast %235 : vector<8x1xi1> to vector<8x1xi1>
    %237 = vector.broadcast %236 : vector<8x1xi1> to vector<8x128xi1>
    %238 = vector.broadcast %cst_65 : f32 to vector<8x128xf32>
    %239 = arith.select %237, %233, %238 : vector<8x128xi1>, vector<8x128xf32>
    %240 = vector.shape_cast %235 : vector<8x1xi1> to vector<8x1xi1>
    %241 = vector.broadcast %240 : vector<8x1xi1> to vector<8x128xi1>
    %242 = arith.select %241, %233, %149 : vector<8x128xi1>, vector<8x128xf32>
    %243 = arith.index_cast %c2_i32 : i32 to index
    %c0_66 = arith.constant 0 : index
    %c0_67 = arith.constant 0 : index
    %244 = vector.load %arg9[%243, %c0_66, %c0_67] : memref<4x8x128xf32, #tpu.memory_space<vmem>>, vector<1x8x128xf32>
    %245 = vector.shape_cast %244 : vector<1x8x128xf32> to vector<8x128xf32>
    %246 = vector.shape_cast %239 : vector<8x128xf32> to vector<1x8x128xf32>
    tpu.vector_store %arg9[%243, %c0_66, %c0_67], %246 {strides = array<i32>} : memref<4x8x128xf32, #tpu.memory_space<vmem>>, vector<1x8x128xf32>,
    %c3_i32_68 = arith.constant 3 : i32
    %247 = arith.subi %c3_i32_68, %c2_i32 : i32
    %248 = arith.index_cast %247 : i32 to index
    %c0_69 = arith.constant 0 : index
    %c0_70 = arith.constant 0 : index
    %249 = vector.load %arg2[%248, %c0_69, %c0_70] : memref<4x8x384xf32, #tpu.memory_space<vmem>>, vector<1x8x384xf32>
    %250 = vector.shape_cast %249 : vector<1x8x384xf32> to vector<8x384xf32>
    %251 = arith.addi %12, %247 : i32
    %c0_71 = arith.constant 0 : index
    %c0_72 = arith.constant 0 : index
    %252 = vector.load %arg5[%c0_71, %c0_72] : memref<128x384xf32, #tpu.memory_space<vmem>>, vector<128x384xf32>
    %cst_73 = arith.constant dense<0.000000e+00> : vector<8x384xf32>
    %253 = tpu.matmul %196, %252, %cst_73 {dimension_numbers = #tpu.dot_dimension_numbers<[1], [0], [0], [1], [0, 0, 1, 1], [], []>} : vector<8x128xf32>, vector<128x384xf32>, vector<8x384xf32> -> vector<8x384xf32>
    %254 = vector.extract_strided_slice %250 {offsets = [0, 0], sizes = [8, 128], strides = [1, 1]} : vector<8x384xf32> to vector<8x128xf32>
    %255 = vector.extract_strided_slice %253 {offsets = [0, 0], sizes = [8, 128], strides = [1, 1]} : vector<8x384xf32> to vector<8x128xf32>
    %256 = arith.addf %254, %255 : vector<8x128xf32>
    %257 = arith.negf %256 : vector<8x128xf32>
    %258 = math.exp %257 : vector<8x128xf32>
    %cst_74 = arith.constant 1.000000e+00 : f32
    %259 = vector.broadcast %cst_74 : f32 to vector<8x128xf32>
    %260 = arith.addf %259, %258 : vector<8x128xf32>
    %261 = arith.divf %259, %260 : vector<8x128xf32>
    %262 = vector.extract_strided_slice %250 {offsets = [0, 128], sizes = [8, 128], strides = [1, 1]} : vector<8x384xf32> to vector<8x128xf32>
    %263 = vector.extract_strided_slice %253 {offsets = [0, 128], sizes = [8, 128], strides = [1, 1]} : vector<8x384xf32> to vector<8x128xf32>
    %264 = arith.addf %262, %263 : vector<8x128xf32>
    %265 = arith.negf %264 : vector<8x128xf32>
    %266 = math.exp %265 : vector<8x128xf32>
    %cst_75 = arith.constant 1.000000e+00 : f32
    %267 = vector.broadcast %cst_75 : f32 to vector<8x128xf32>
    %268 = arith.addf %267, %266 : vector<8x128xf32>
    %269 = arith.divf %267, %268 : vector<8x128xf32>
    %270 = vector.extract_strided_slice %250 {offsets = [0, 256], sizes = [8, 128], strides = [1, 1]} : vector<8x384xf32> to vector<8x128xf32>
    %271 = vector.extract_strided_slice %253 {offsets = [0, 256], sizes = [8, 128], strides = [1, 1]} : vector<8x384xf32> to vector<8x128xf32>
    %272 = arith.addf %271, %9 : vector<8x128xf32>
    %273 = arith.mulf %261, %272 : vector<8x128xf32>
    %274 = arith.addf %270, %273 : vector<8x128xf32>
    %275 = math.tanh %274 : vector<8x128xf32>
    %cst_76 = arith.constant 1.000000e+00 : f32
    %276 = vector.broadcast %cst_76 : f32 to vector<8x128xf32>
    %277 = arith.subf %276, %269 : vector<8x128xf32>
    %278 = arith.mulf %277, %275 : vector<8x128xf32>
    %279 = arith.mulf %269, %196 : vector<8x128xf32>
    %280 = arith.addf %278, %279 : vector<8x128xf32>
    %281 = vector.broadcast %251 : i32 to vector<8x1xi32>
    %282 = arith.cmpi slt, %281, %3 : vector<8x1xi32>
    %cst_77 = arith.constant 0.000000e+00 : f32
    %283 = vector.shape_cast %282 : vector<8x1xi1> to vector<8x1xi1>
    %284 = vector.broadcast %283 : vector<8x1xi1> to vector<8x128xi1>
    %285 = vector.broadcast %cst_77 : f32 to vector<8x128xf32>
    %286 = arith.select %284, %280, %285 : vector<8x128xi1>, vector<8x128xf32>
    %287 = vector.shape_cast %282 : vector<8x1xi1> to vector<8x1xi1>
    %288 = vector.broadcast %287 : vector<8x1xi1> to vector<8x128xi1>
    %289 = arith.select %288, %280, %196 : vector<8x128xi1>, vector<8x128xf32>
    %290 = arith.index_cast %247 : i32 to index
    %c0_78 = arith.constant 0 : index
    %c0_79 = arith.constant 0 : index
    %291 = vector.load %arg10[%290, %c0_78, %c0_79] : memref<4x8x128xf32, #tpu.memory_space<vmem>>, vector<1x8x128xf32>
    %292 = vector.shape_cast %291 : vector<1x8x128xf32> to vector<8x128xf32>
    %293 = vector.shape_cast %286 : vector<8x128xf32> to vector<1x8x128xf32>
    tpu.vector_store %arg10[%290, %c0_78, %c0_79], %293 {strides = array<i32>} : memref<4x8x128xf32, #tpu.memory_space<vmem>>, vector<1x8x128xf32>,
    %c3_i32_80 = arith.constant 3 : i32
    %294 = arith.index_cast %c3_i32_80 : i32 to index
    %c0_81 = arith.constant 0 : index
    %c0_82 = arith.constant 0 : index
    %295 = vector.load %arg1[%294, %c0_81, %c0_82] : memref<4x8x384xf32, #tpu.memory_space<vmem>>, vector<1x8x384xf32>
    %296 = vector.shape_cast %295 : vector<1x8x384xf32> to vector<8x384xf32>
    %297 = arith.addi %10, %c3_i32_80 : i32
    %c0_83 = arith.constant 0 : index
    %c0_84 = arith.constant 0 : index
    %298 = vector.load %arg4[%c0_83, %c0_84] : memref<128x384xf32, #tpu.memory_space<vmem>>, vector<128x384xf32>
    %cst_85 = arith.constant dense<0.000000e+00> : vector<8x384xf32>
    %299 = tpu.matmul %242, %298, %cst_85 {dimension_numbers = #tpu.dot_dimension_numbers<[1], [0], [0], [1], [0, 0, 1, 1], [], []>} : vector<8x128xf32>, vector<128x384xf32>, vector<8x384xf32> -> vector<8x384xf32>
    %300 = vector.extract_strided_slice %296 {offsets = [0, 0], sizes = [8, 128], strides = [1, 1]} : vector<8x384xf32> to vector<8x128xf32>
    %301 = vector.extract_strided_slice %299 {offsets = [0, 0], sizes = [8, 128], strides = [1, 1]} : vector<8x384xf32> to vector<8x128xf32>
    %302 = arith.addf %300, %301 : vector<8x128xf32>
    %303 = arith.negf %302 : vector<8x128xf32>
    %304 = math.exp %303 : vector<8x128xf32>
    %cst_86 = arith.constant 1.000000e+00 : f32
    %305 = vector.broadcast %cst_86 : f32 to vector<8x128xf32>
    %306 = arith.addf %305, %304 : vector<8x128xf32>
    %307 = arith.divf %305, %306 : vector<8x128xf32>
    %308 = vector.extract_strided_slice %296 {offsets = [0, 128], sizes = [8, 128], strides = [1, 1]} : vector<8x384xf32> to vector<8x128xf32>
    %309 = vector.extract_strided_slice %299 {offsets = [0, 128], sizes = [8, 128], strides = [1, 1]} : vector<8x384xf32> to vector<8x128xf32>
    %310 = arith.addf %308, %309 : vector<8x128xf32>
    %311 = arith.negf %310 : vector<8x128xf32>
    %312 = math.exp %311 : vector<8x128xf32>
    %cst_87 = arith.constant 1.000000e+00 : f32
    %313 = vector.broadcast %cst_87 : f32 to vector<8x128xf32>
    %314 = arith.addf %313, %312 : vector<8x128xf32>
    %315 = arith.divf %313, %314 : vector<8x128xf32>
    %316 = vector.extract_strided_slice %296 {offsets = [0, 256], sizes = [8, 128], strides = [1, 1]} : vector<8x384xf32> to vector<8x128xf32>
    %317 = vector.extract_strided_slice %299 {offsets = [0, 256], sizes = [8, 128], strides = [1, 1]} : vector<8x384xf32> to vector<8x128xf32>
    %318 = arith.addf %317, %6 : vector<8x128xf32>
    %319 = arith.mulf %307, %318 : vector<8x128xf32>
    %320 = arith.addf %316, %319 : vector<8x128xf32>
    %321 = math.tanh %320 : vector<8x128xf32>
    %cst_88 = arith.constant 1.000000e+00 : f32
    %322 = vector.broadcast %cst_88 : f32 to vector<8x128xf32>
    %323 = arith.subf %322, %315 : vector<8x128xf32>
    %324 = arith.mulf %323, %321 : vector<8x128xf32>
    %325 = arith.mulf %315, %242 : vector<8x128xf32>
    %326 = arith.addf %324, %325 : vector<8x128xf32>
    %327 = vector.broadcast %297 : i32 to vector<8x1xi32>
    %328 = arith.cmpi slt, %327, %3 : vector<8x1xi32>
    %cst_89 = arith.constant 0.000000e+00 : f32
    %329 = vector.shape_cast %328 : vector<8x1xi1> to vector<8x1xi1>
    %330 = vector.broadcast %329 : vector<8x1xi1> to vector<8x128xi1>
    %331 = vector.broadcast %cst_89 : f32 to vector<8x128xf32>
    %332 = arith.select %330, %326, %331 : vector<8x128xi1>, vector<8x128xf32>
    %333 = vector.shape_cast %328 : vector<8x1xi1> to vector<8x1xi1>
    %334 = vector.broadcast %333 : vector<8x1xi1> to vector<8x128xi1>
    %335 = arith.select %334, %326, %242 : vector<8x128xi1>, vector<8x128xf32>
    %336 = arith.index_cast %c3_i32_80 : i32 to index
    %c0_90 = arith.constant 0 : index
    %c0_91 = arith.constant 0 : index
    %337 = vector.load %arg9[%336, %c0_90, %c0_91] : memref<4x8x128xf32, #tpu.memory_space<vmem>>, vector<1x8x128xf32>
    %338 = vector.shape_cast %337 : vector<1x8x128xf32> to vector<8x128xf32>
    %339 = vector.shape_cast %332 : vector<8x128xf32> to vector<1x8x128xf32>
    tpu.vector_store %arg9[%336, %c0_90, %c0_91], %339 {strides = array<i32>} : memref<4x8x128xf32, #tpu.memory_space<vmem>>, vector<1x8x128xf32>,
    %c3_i32_92 = arith.constant 3 : i32
    %340 = arith.subi %c3_i32_92, %c3_i32_80 : i32
    %341 = arith.index_cast %340 : i32 to index
    %c0_93 = arith.constant 0 : index
    %c0_94 = arith.constant 0 : index
    %342 = vector.load %arg2[%341, %c0_93, %c0_94] : memref<4x8x384xf32, #tpu.memory_space<vmem>>, vector<1x8x384xf32>
    %343 = vector.shape_cast %342 : vector<1x8x384xf32> to vector<8x384xf32>
    %344 = arith.addi %12, %340 : i32
    %c0_95 = arith.constant 0 : index
    %c0_96 = arith.constant 0 : index
    %345 = vector.load %arg5[%c0_95, %c0_96] : memref<128x384xf32, #tpu.memory_space<vmem>>, vector<128x384xf32>
    %cst_97 = arith.constant dense<0.000000e+00> : vector<8x384xf32>
    %346 = tpu.matmul %289, %345, %cst_97 {dimension_numbers = #tpu.dot_dimension_numbers<[1], [0], [0], [1], [0, 0, 1, 1], [], []>} : vector<8x128xf32>, vector<128x384xf32>, vector<8x384xf32> -> vector<8x384xf32>
    %347 = vector.extract_strided_slice %343 {offsets = [0, 0], sizes = [8, 128], strides = [1, 1]} : vector<8x384xf32> to vector<8x128xf32>
    %348 = vector.extract_strided_slice %346 {offsets = [0, 0], sizes = [8, 128], strides = [1, 1]} : vector<8x384xf32> to vector<8x128xf32>
    %349 = arith.addf %347, %348 : vector<8x128xf32>
    %350 = arith.negf %349 : vector<8x128xf32>
    %351 = math.exp %350 : vector<8x128xf32>
    %cst_98 = arith.constant 1.000000e+00 : f32
    %352 = vector.broadcast %cst_98 : f32 to vector<8x128xf32>
    %353 = arith.addf %352, %351 : vector<8x128xf32>
    %354 = arith.divf %352, %353 : vector<8x128xf32>
    %355 = vector.extract_strided_slice %343 {offsets = [0, 128], sizes = [8, 128], strides = [1, 1]} : vector<8x384xf32> to vector<8x128xf32>
    %356 = vector.extract_strided_slice %346 {offsets = [0, 128], sizes = [8, 128], strides = [1, 1]} : vector<8x384xf32> to vector<8x128xf32>
    %357 = arith.addf %355, %356 : vector<8x128xf32>
    %358 = arith.negf %357 : vector<8x128xf32>
    %359 = math.exp %358 : vector<8x128xf32>
    %cst_99 = arith.constant 1.000000e+00 : f32
    %360 = vector.broadcast %cst_99 : f32 to vector<8x128xf32>
    %361 = arith.addf %360, %359 : vector<8x128xf32>
    %362 = arith.divf %360, %361 : vector<8x128xf32>
    %363 = vector.extract_strided_slice %343 {offsets = [0, 256], sizes = [8, 128], strides = [1, 1]} : vector<8x384xf32> to vector<8x128xf32>
    %364 = vector.extract_strided_slice %346 {offsets = [0, 256], sizes = [8, 128], strides = [1, 1]} : vector<8x384xf32> to vector<8x128xf32>
    %365 = arith.addf %364, %9 : vector<8x128xf32>
    %366 = arith.mulf %354, %365 : vector<8x128xf32>
    %367 = arith.addf %363, %366 : vector<8x128xf32>
    %368 = math.tanh %367 : vector<8x128xf32>
    %cst_100 = arith.constant 1.000000e+00 : f32
    %369 = vector.broadcast %cst_100 : f32 to vector<8x128xf32>
    %370 = arith.subf %369, %362 : vector<8x128xf32>
    %371 = arith.mulf %370, %368 : vector<8x128xf32>
    %372 = arith.mulf %362, %289 : vector<8x128xf32>
    %373 = arith.addf %371, %372 : vector<8x128xf32>
    %374 = vector.broadcast %344 : i32 to vector<8x1xi32>
    %375 = arith.cmpi slt, %374, %3 : vector<8x1xi32>
    %cst_101 = arith.constant 0.000000e+00 : f32
    %376 = vector.shape_cast %375 : vector<8x1xi1> to vector<8x1xi1>
    %377 = vector.broadcast %376 : vector<8x1xi1> to vector<8x128xi1>
    %378 = vector.broadcast %cst_101 : f32 to vector<8x128xf32>
    %379 = arith.select %377, %373, %378 : vector<8x128xi1>, vector<8x128xf32>
    %380 = vector.shape_cast %375 : vector<8x1xi1> to vector<8x1xi1>
    %381 = vector.broadcast %380 : vector<8x1xi1> to vector<8x128xi1>
    %382 = arith.select %381, %373, %289 : vector<8x128xi1>, vector<8x128xf32>
    %383 = arith.index_cast %340 : i32 to index
    %c0_102 = arith.constant 0 : index
    %c0_103 = arith.constant 0 : index
    %384 = vector.load %arg10[%383, %c0_102, %c0_103] : memref<4x8x128xf32, #tpu.memory_space<vmem>>, vector<1x8x128xf32>
    %385 = vector.shape_cast %384 : vector<1x8x128xf32> to vector<8x128xf32>
    %386 = vector.shape_cast %379 : vector<8x128xf32> to vector<1x8x128xf32>
    tpu.vector_store %arg10[%383, %c0_102, %c0_103], %386 {strides = array<i32>} : memref<4x8x128xf32, #tpu.memory_space<vmem>>, vector<1x8x128xf32>,
    %c4_i32_104 = arith.constant 4 : i32
    %c0_105 = arith.constant 0 : index
    %c0_106 = arith.constant 0 : index
    %387 = vector.load %arg12[%c0_105, %c0_106] : memref<8x128xf32, #tpu.memory_space<vmem>>, vector<8x128xf32>
    tpu.vector_store %arg12[%c0_105, %c0_106], %335 {strides = array<i32>} : memref<8x128xf32, #tpu.memory_space<vmem>>, vector<8x128xf32>,
    %c0_107 = arith.constant 0 : index
    %c0_108 = arith.constant 0 : index
    %388 = vector.load %arg13[%c0_107, %c0_108] : memref<8x128xf32, #tpu.memory_space<vmem>>, vector<8x128xf32>
    tpu.vector_store %arg13[%c0_107, %c0_108], %382 {strides = array<i32>} : memref<8x128xf32, #tpu.memory_space<vmem>>, vector<8x128xf32>,
    %c1_i32_109 = arith.constant 1 : i32
    %389 = arith.cmpi eq, %arg0, %c1_i32_109 : i32
    %390 = arith.extui %389 : i1 to i32
    %c0_i32_110 = arith.constant 0 : i32
    %391 = arith.cmpi ne, %390, %c0_i32_110 : i32
    scf.if %391 {
      %c0_111 = arith.constant 0 : index
      %c0_112 = arith.constant 0 : index
      %c0_113 = arith.constant 0 : index
      %392 = vector.load %arg11[%c0_111, %c0_112, %c0_113] : memref<2x8x128xf32, #tpu.memory_space<vmem>>, vector<1x8x128xf32>
      %393 = vector.shape_cast %392 : vector<1x8x128xf32> to vector<8x128xf32>
      %394 = vector.shape_cast %335 : vector<8x128xf32> to vector<1x8x128xf32>
      tpu.vector_store %arg11[%c0_111, %c0_112, %c0_113], %394 {strides = array<i32>} : memref<2x8x128xf32, #tpu.memory_space<vmem>>, vector<1x8x128xf32>,
      %c1 = arith.constant 1 : index
      %c0_114 = arith.constant 0 : index
      %c0_115 = arith.constant 0 : index
      %395 = vector.load %arg11[%c1, %c0_114, %c0_115] : memref<2x8x128xf32, #tpu.memory_space<vmem>>, vector<1x8x128xf32>
      %396 = vector.shape_cast %395 : vector<1x8x128xf32> to vector<8x128xf32>
      %397 = vector.shape_cast %382 : vector<8x128xf32> to vector<1x8x128xf32>
      tpu.vector_store %arg11[%c1, %c0_114, %c0_115], %397 {strides = array<i32>} : memref<2x8x128xf32, #tpu.memory_space<vmem>>, vector<1x8x128xf32>,
    } else {
    }
    return
  }
  func.func @transform_0(%arg0: i32) -> (i32, i32, i32) {
    %c0_i32 = arith.constant 0 : i32
    %c0_i32_0 = arith.constant 0 : i32
    %c0_i32_1 = arith.constant 0 : i32
    return %arg0, %c0_i32, %c0_i32_0 : i32, i32, i32
  }
  func.func @transform_1(%arg0: i32) -> (i32, i32, i32) {
    %c1_i32 = arith.constant 1 : i32
    %0 = arith.subi %c1_i32, %arg0 : i32
    %c0_i32 = arith.constant 0 : i32
    %c0_i32_0 = arith.constant 0 : i32
    %c0_i32_1 = arith.constant 0 : i32
    return %0, %c0_i32, %c0_i32_0 : i32, i32, i32
  }
  func.func @transform_2(%arg0: i32) -> (i32, i32) {
    %c0_i32 = arith.constant 0 : i32
    %c0_i32_0 = arith.constant 0 : i32
    %c0_i32_1 = arith.constant 0 : i32
    return %c0_i32, %c0_i32_0 : i32, i32
  }
  func.func @transform_3(%arg0: i32) -> (i32, i32) {
    %c0_i32 = arith.constant 0 : i32
    %c0_i32_0 = arith.constant 0 : i32
    %c0_i32_1 = arith.constant 0 : i32
    return %c0_i32, %c0_i32_0 : i32, i32
  }
  func.func @transform_4(%arg0: i32) -> (i32, i32) {
    %c0_i32 = arith.constant 0 : i32
    %c0_i32_0 = arith.constant 0 : i32
    %c0_i32_1 = arith.constant 0 : i32
    return %c0_i32, %c0_i32_0 : i32, i32
  }
  func.func @transform_5(%arg0: i32) -> (i32, i32) {
    %c0_i32 = arith.constant 0 : i32
    %c0_i32_0 = arith.constant 0 : i32
    %c0_i32_1 = arith.constant 0 : i32
    return %c0_i32, %c0_i32_0 : i32, i32
  }
  func.func @transform_6(%arg0: i32) -> (i32, i32) {
    %c0_i32 = arith.constant 0 : i32
    %c0_i32_0 = arith.constant 0 : i32
    %c0_i32_1 = arith.constant 0 : i32
    return %c0_i32, %c0_i32_0 : i32, i32
  }
  func.func @transform_7(%arg0: i32) -> (i32, i32, i32) {
    %c0_i32 = arith.constant 0 : i32
    %c0_i32_0 = arith.constant 0 : i32
    %c0_i32_1 = arith.constant 0 : i32
    %c0_i32_2 = arith.constant 0 : i32
    return %c0_i32, %c0_i32_0, %c0_i32_1 : i32, i32, i32
  }
  func.func @transform_8(%arg0: i32) -> (i32, i32, i32) {
    %c0_i32 = arith.constant 0 : i32
    %c0_i32_0 = arith.constant 0 : i32
    %c0_i32_1 = arith.constant 0 : i32
    return %arg0, %c0_i32, %c0_i32_0 : i32, i32, i32
  }
  func.func @transform_9(%arg0: i32) -> (i32, i32, i32) {
    %c1_i32 = arith.constant 1 : i32
    %0 = arith.subi %c1_i32, %arg0 : i32
    %c0_i32 = arith.constant 0 : i32
    %c0_i32_0 = arith.constant 0 : i32
    %c0_i32_1 = arith.constant 0 : i32
    return %0, %c0_i32, %c0_i32_0 : i32, i32, i32
  }
  func.func @transform_10(%arg0: i32) -> (i32, i32, i32) {
    %c0_i32 = arith.constant 0 : i32
    %c0_i32_0 = arith.constant 0 : i32
    %c0_i32_1 = arith.constant 0 : i32
    %c0_i32_2 = arith.constant 0 : i32
    return %c0_i32, %c0_i32_0, %c0_i32_1 : i32, i32, i32
  }
}

</mosaic_0001>

<llo_original>
// kernel: _lambda_.2
$region0: #{_lambda_.2}
  #allocation0 [shape = 'u32[]', space=smem, size = 0x4, offset = 0x4, fixed_abs, tag = 'smem constant byte address 0x4 - core index']
  #allocation1 [shape = 'u32[144,128]{1,0:T(1,128)}', space=vmem, size = 0x12000, scoped, tag = 'internal scratch']
  #allocation2 [shape = 'f32[8,128]{1,0:T(8,128)}', space=vmem, size = 0x1000, scoped, tag = 'scratch operand']
  #allocation3 [shape = 'f32[8,128]{1,0:T(8,128)}', space=vmem, size = 0x1000, scoped, tag = 'scratch operand']
  %s0 = inlined_call_operand.vmem [shape: f32[8,8,384], index: 0, kind: input, shape index: {}]
  %s1 = inlined_call_operand.vmem [shape: f32[8,8,384], index: 1, kind: input, shape index: {}]
  %s2 = inlined_call_operand.vmem [shape: s32[8,1], index: 2, kind: input, shape index: {}]
  %s3 = inlined_call_operand.vmem [shape: f32[128,384], index: 3, kind: input, shape index: {}]
  %s4 = inlined_call_operand.hbm [shape: f32[128,384], index: 4, kind: input, shape index: {}]
  %s5 = inlined_call_operand.vmem [shape: f32[1,128], index: 5, kind: input, shape index: {}]
  %s6 = inlined_call_operand.vmem [shape: f32[1,128], index: 6, kind: input, shape index: {}]
  %s7 = inlined_call_operand.vmem [shape: f32[2,8,128], index: 7, kind: input, shape index: {}]
  %s8 = inlined_call_operand.vmem [shape: f32[8,8,128], index: 8, kind: output, shape index: {0}]
  %s9 = inlined_call_operand.vmem [shape: f32[8,8,128], index: 9, kind: output, shape index: {1}]
  %s10 = inlined_call_operand.vmem [shape: f32[2,8,128], index: 10, kind: output, shape index: {2}]
  %11 = xla_tuple %s8, %s9, %s10
  %s12 = sld [smem:[#allocation0]]
  $region93: #{_lambda_.2} parent=0
    _
  %s14 = ssub.s32 1, %s12
  %s15 = scalar_select 0, %s14, %s12
  $region1: #{_lambda_.2} parent=0
    #allocation4 [shape = 'u8[196608]{0}', space=vmem, size = 0x30000, scoped, tag = 'input window, operand 4, single buffered']
    #allocation5 [shape = 's32[2]{0}', space=sflag, size = 0x8, scoped, tag = 'scoped memory for _lambda_.2']
    %16 = vsyncpa [#allocation5], 0
    loop: start=0, step=1, limit=4
    $region2: #{_lambda_.2} parent=1 // loop_pre_header
      _
    $region3: #{_lambda_.2} parent=1 // loop_header
      %s18 = sphi 0, %s22
      %p19 = scmp.ge.s32.totalorder %s18, 4
      %s28 = sphi 0, %s30
      %s31 = sphi 0, %s28
      %s32 = sphi 0, %s31
      %s48 = sphi 0, %s32
      %s56 = sphi 0, %s58
      %s59 = sphi 0, %s56
      %s60 = sphi 0, %s59
      %s76 = sphi 0, %s60
      %s80 = sphi 0, %s80
      %s82 = sphi 0, %s80
      %s83 = sphi 0, %s82
      %s97 = sphi 0, %s83
      %s101 = sphi 0, %s101
      %s103 = sphi 0, %s101
      %s104 = sphi 0, %s103
      %s118 = sphi 0, %s104
      %s122 = sphi 0, %s122
      %s124 = sphi 0, %s122
      %s125 = sphi 0, %s124
      %s139 = sphi 0, %s125
      %s143 = sphi 0, %s143
      %s145 = sphi 0, %s143
      %s146 = sphi 0, %s145
      %s160 = sphi 0, %s146
      %s164 = sphi 0, %s164
      %s166 = sphi 0, %s164
      %s167 = sphi 0, %s166
      %s181 = sphi 0, %s167
      %s185 = sphi 0, %s185
      %s187 = sphi 0, %s185
      %s188 = sphi 0, %s187
      %s202 = sphi 0, %s188
      %s208 = sphi 0, %s210
      %s211 = sphi 0, %s208
      %s212 = sphi 0, %s211
      %s228 = sphi 0, %s212
      %s236 = sphi 0, %s238
      %s239 = sphi 0, %s236
      %s240 = sphi 0, %s239
      %s256 = sphi 0, %s240
      %s260 = sphi 0, %s260
      %s262 = sphi 0, %s260
      %s263 = sphi 0, %s262
      %s277 = sphi 0, %s263
    $region4: #{_lambda_.2} parent=1 // loop_header_branch
      %21 = sbr.rel (%p19) target = $region8
    $region5: #{_lambda_.2} parent=1 // loop_body
      %s23 = ssub.s32 %s18, 1
      %s24 = ssub.s32 %s18, 2
      %s25 = sadd.s32 %s18, 1
      %s26 = ssub.s32 %s18, %s25
      %p27 = scmp.eq.s32.totalorder %s26, 0
      %s29 = sadd.s32 %s28, 1
      %s30 = scalar_select %p27, %s28, %s29
      %p33 = pneg %p27
      %p34 = scmp.eq.s32.totalorder %s18, 1
      %p35 = por %p33, %p34
      %p36 = scmp.ne.s32.totalorder %s28, %s31
      %p37 = scmp.eq.s32.totalorder %s18, 0
      %p38 = por %p36, %p37
      %p39 = scmp.ne.s32.totalorder %s28, %s31
      %p40 = scmp.eq.s32.totalorder %s23, 1
      %p41 = por %p39, %p40
      %p42 = scmp.ne.s32.totalorder %s31, %s32
      %p43 = scmp.eq.s32.totalorder %s23, 0
      %p44 = por %p42, %p43
      %p45 = scmp.ne.s32.totalorder %s31, %s32
      %p46 = scmp.eq.s32.totalorder %s24, 1
      %p47 = por %p45, %p46
      %p49 = scmp.ne.s32.totalorder %s32, %s48
      %p50 = scmp.eq.s32.totalorder %s24, 0
      %p51 = por %p49, %p50
      %s52 = ssub.s32 1, %s18
      %s53 = ssub.s32 1, %s25
      %s54 = ssub.s32 %s52, %s53
      %p55 = scmp.eq.s32.totalorder %s54, 0
      %s57 = sadd.s32 %s56, 1
      %s58 = scalar_select %p55, %s56, %s57
      %p61 = pneg %p55
      %p62 = scmp.eq.s32.totalorder %s18, 1
      %p63 = por %p61, %p62
      %p64 = scmp.ne.s32.totalorder %s56, %s59
      %p65 = scmp.eq.s32.totalorder %s18, 0
      %p66 = por %p64, %p65
      %p67 = scmp.ne.s32.totalorder %s56, %s59
      %p68 = scmp.eq.s32.totalorder %s23, 1
      %p69 = por %p67, %p68
      %p70 = scmp.ne.s32.totalorder %s59, %s60
      %p71 = scmp.eq.s32.totalorder %s23, 0
      %p72 = por %p70, %p71
      %p73 = scmp.ne.s32.totalorder %s59, %s60
      %p74 = scmp.eq.s32.totalorder %s24, 1
      %p75 = por %p73, %p74
      %p77 = scmp.ne.s32.totalorder %s60, %s76
      %p78 = scmp.eq.s32.totalorder %s24, 0
      %p79 = por %p77, %p78
      %s81 = sadd.s32 %s80, 1
      %p84 = scmp.eq.s32.totalorder %s18, 1
      %p85 = scmp.ne.s32.totalorder %s80, %s82
      %p86 = scmp.eq.s32.totalorder %s18, 0
      %p87 = por %p85, %p86
      %p88 = scmp.ne.s32.totalorder %s80, %s82
      %p89 = scmp.eq.s32.totalorder %s23, 1
      %p90 = por %p88, %p89
      %p91 = scmp.ne.s32.totalorder %s82, %s83
      %p92 = scmp.eq.s32.totalorder %s23, 0
      %p93 = por %p91, %p92
      %p94 = scmp.ne.s32.totalorder %s82, %s83
      %p95 = scmp.eq.s32.totalorder %s24, 1
      %p96 = por %p94, %p95
      %p98 = scmp.ne.s32.totalorder %s83, %s97
      %p99 = scmp.eq.s32.totalorder %s24, 0
      %p100 = por %p98, %p99
      %s102 = sadd.s32 %s101, 1
      %p105 = scmp.eq.s32.totalorder %s18, 1
      %p106 = scmp.ne.s32.totalorder %s101, %s103
      %p107 = scmp.eq.s32.totalorder %s18, 0
      %p108 = por %p106, %p107
      %p109 = scmp.ne.s32.totalorder %s101, %s103
      %p110 = scmp.eq.s32.totalorder %s23, 1
      %p111 = por %p109, %p110
      %p112 = scmp.ne.s32.totalorder %s103, %s104
      %p113 = scmp.eq.s32.totalorder %s23, 0
      %p114 = por %p112, %p113
      %p115 = scmp.ne.s32.totalorder %s103, %s104
      %p116 = scmp.eq.s32.totalorder %s24, 1
      %p117 = por %p115, %p116
      %p119 = scmp.ne.s32.totalorder %s104, %s118
      %p120 = scmp.eq.s32.totalorder %s24, 0
      %p121 = por %p119, %p120
      %s123 = sadd.s32 %s122, 1
      %p126 = scmp.eq.s32.totalorder %s18, 1
      %p127 = scmp.ne.s32.totalorder %s122, %s124
      %p128 = scmp.eq.s32.totalorder %s18, 0
      %p129 = por %p127, %p128
      %p130 = scmp.ne.s32.totalorder %s122, %s124
      %p131 = scmp.eq.s32.totalorder %s23, 1
      %p132 = por %p130, %p131
      %p133 = scmp.ne.s32.totalorder %s124, %s125
      %p134 = scmp.eq.s32.totalorder %s23, 0
      %p135 = por %p133, %p134
      %p136 = scmp.ne.s32.totalorder %s124, %s125
      %p137 = scmp.eq.s32.totalorder %s24, 1
      %p138 = por %p136, %p137
      %p140 = scmp.ne.s32.totalorder %s125, %s139
      %p141 = scmp.eq.s32.totalorder %s24, 0
      %p142 = por %p140, %p141
      %s144 = sadd.s32 %s143, 1
      %p147 = scmp.eq.s32.totalorder %s18, 1
      %p148 = scmp.ne.s32.totalorder %s143, %s145
      %p149 = scmp.eq.s32.totalorder %s18, 0
      %p150 = por %p148, %p149
      %p151 = scmp.ne.s32.totalorder %s143, %s145
      %p152 = scmp.eq.s32.totalorder %s23, 1
      %p153 = por %p151, %p152
      %p154 = scmp.ne.s32.totalorder %s145, %s146
      %p155 = scmp.eq.s32.totalorder %s23, 0
      %p156 = por %p154, %p155
      %p157 = scmp.ne.s32.totalorder %s145, %s146
      %p158 = scmp.eq.s32.totalorder %s24, 1
      %p159 = por %p157, %p158
      %p161 = scmp.ne.s32.totalorder %s146, %s160
      %p162 = scmp.eq.s32.totalorder %s24, 0
      %p163 = por %p161, %p162
      %s165 = sadd.s32 %s164, 1
      %p168 = scmp.eq.s32.totalorder %s18, 1
      %p169 = scmp.ne.s32.totalorder %s164, %s166
      %p170 = scmp.eq.s32.totalorder %s18, 0
      %p171 = por %p169, %p170
      %p172 = scmp.ne.s32.totalorder %s164, %s166
      %p173 = scmp.eq.s32.totalorder %s23, 1
      %p174 = por %p172, %p173
      %p175 = scmp.ne.s32.totalorder %s166, %s167
      %p176 = scmp.eq.s32.totalorder %s23, 0
      %p177 = por %p175, %p176
      %p178 = scmp.ne.s32.totalorder %s166, %s167
      %p179 = scmp.eq.s32.totalorder %s24, 1
      %p180 = por %p178, %p179
      %p182 = scmp.ne.s32.totalorder %s167, %s181
      %p183 = scmp.eq.s32.totalorder %s24, 0
      %p184 = por %p182, %p183
      %s186 = sadd.s32 %s185, 1
      %p189 = scmp.eq.s32.totalorder %s18, 1
      %p190 = scmp.ne.s32.totalorder %s185, %s187
      %p191 = scmp.eq.s32.totalorder %s18, 0
      %p192 = por %p190, %p191
      %p193 = scmp.ne.s32.totalorder %s185, %s187
      %p194 = scmp.eq.s32.totalorder %s23, 1
      %p195 = por %p193, %p194
      %p196 = scmp.ne.s32.totalorder %s187, %s188
      %p197 = scmp.eq.s32.totalorder %s23, 0
      %p198 = por %p196, %p197
      %p199 = scmp.ne.s32.totalorder %s187, %s188
      %p200 = scmp.eq.s32.totalorder %s24, 1
      %p201 = por %p199, %p200
      %p203 = scmp.ne.s32.totalorder %s188, %s202
      %p204 = scmp.eq.s32.totalorder %s24, 0
      %p205 = por %p203, %p204
      %s206 = ssub.s32 %s18, %s25
      %p207 = scmp.eq.s32.totalorder %s206, 0
      %s209 = sadd.s32 %s208, 1
      %s210 = scalar_select %p207, %s208, %s209
      %p213 = pneg %p207
      %p214 = scmp.eq.s32.totalorder %s18, 1
      %p215 = por %p213, %p214
      %p216 = scmp.ne.s32.totalorder %s208, %s211
      %p217 = scmp.eq.s32.totalorder %s18, 0
      %p218 = por %p216, %p217
      %p219 = scmp.ne.s32.totalorder %s208, %s211
      %p220 = scmp.eq.s32.totalorder %s23, 1
      %p221 = por %p219, %p220
      %p222 = scmp.ne.s32.totalorder %s211, %s212
      %p223 = scmp.eq.s32.totalorder %s23, 0
      %p224 = por %p222, %p223
      %p225 = scmp.ne.s32.totalorder %s211, %s212
      %p226 = scmp.eq.s32.totalorder %s24, 1
      %p227 = por %p225, %p226
      %p229 = scmp.ne.s32.totalorder %s212, %s228
      %p230 = scmp.eq.s32.totalorder %s24, 0
      %p231 = por %p229, %p230
      %s232 = ssub.s32 1, %s18
      %s233 = ssub.s32 1, %s25
      %s234 = ssub.s32 %s232, %s233
      %p235 = scmp.eq.s32.totalorder %s234, 0
      %s237 = sadd.s32 %s236, 1
      %s238 = scalar_select %p235, %s236, %s237
      %p241 = pneg %p235
      %p242 = scmp.eq.s32.totalorder %s18, 1
      %p243 = por %p241, %p242
      %p244 = scmp.ne.s32.totalorder %s236, %s239
      %p245 = scmp.eq.s32.totalorder %s18, 0
      %p246 = por %p244, %p245
      %p247 = scmp.ne.s32.totalorder %s236, %s239
      %p248 = scmp.eq.s32.totalorder %s23, 1
      %p249 = por %p247, %p248
      %p250 = scmp.ne.s32.totalorder %s239, %s240
      %p251 = scmp.eq.s32.totalorder %s23, 0
      %p252 = por %p250, %p251
      %p253 = scmp.ne.s32.totalorder %s239, %s240
      %p254 = scmp.eq.s32.totalorder %s24, 1
      %p255 = por %p253, %p254
      %p257 = scmp.ne.s32.totalorder %s240, %s256
      %p258 = scmp.eq.s32.totalorder %s24, 0
      %p259 = por %p257, %p258
      %s261 = sadd.s32 %s260, 1
      %p264 = scmp.eq.s32.totalorder %s18, 1
      %p265 = scmp.ne.s32.totalorder %s260, %s262
      %p266 = scmp.eq.s32.totalorder %s18, 0
      %p267 = por %p265, %p266
      %p268 = scmp.ne.s32.totalorder %s260, %s262
      %p269 = scmp.eq.s32.totalorder %s23, 1
      %p270 = por %p268, %p269
      %p271 = scmp.ne.s32.totalorder %s262, %s263
      %p272 = scmp.eq.s32.totalorder %s23, 0
      %p273 = por %p271, %p272
      %p274 = scmp.ne.s32.totalorder %s262, %s263
      %p275 = scmp.eq.s32.totalorder %s24, 1
      %p276 = por %p274, %p275
      %p278 = scmp.ne.s32.totalorder %s263, %s277
      %p279 = scmp.eq.s32.totalorder %s24, 0
      %p280 = por %p278, %p279
      %p281 = scmp.le.s32.totalorder 1, %s18
      %p282 = scmp.lt.s32.totalorder %s18, 3
      %p283 = pnand %p281, %p282
      %p284 = pneg %p283
      // Predicated region
      $region9: #{_lambda_.2} parent=5 // pred_check
        _
      $region10: #{_lambda_.2} parent=5 // pred_check_branch
        %286 = sbr.rel (%p283) target = $region12
      $region11: #{_lambda_.2} parent=5 // pred_region
        %s287 = ssub.s32 %s18, 1
        // Predicated region
        $region13: #{_lambda_.2} parent=11 // pred_check
          %p288 = pneg %p93
        $region14: #{_lambda_.2} parent=11 // pred_check_branch
          %290 = sbr.rel (%p288) target = $region16
        $region15: #{_lambda_.2} parent=11 // pred_region
          _
        $region16: #{_lambda_.2} parent=11 // pred_fallthru
          _
        // Predicated region
        $region17: #{_lambda_.2} parent=11 // pred_check
          %p291 = pneg %p114
        $region18: #{_lambda_.2} parent=11 // pred_check_branch
          %293 = sbr.rel (%p291) target = $region20
        $region19: #{_lambda_.2} parent=11 // pred_region
          _
        $region20: #{_lambda_.2} parent=11 // pred_fallthru
          _
        // Predicated region
        $region21: #{_lambda_.2} parent=11 // pred_check
          %p294 = pneg %p135
        $region22: #{_lambda_.2} parent=11 // pred_check_branch
          %296 = sbr.rel (%p294) target = $region24
        $region23: #{_lambda_.2} parent=11 // pred_region
          %s298 = ssub.s32 6144, 6144
          %299 = vsyncadd [#allocation5], %s298
          %s300 = sshll.u32 [#allocation4], 4
          %s301 = int_to_ptr.vmem [resolvable:$true] %s300
          %306 = dma.hbm_to_vmem [thread:$0]  %s4, 6144, %s301, [#allocation5], 384, 384, 24
        $region24: #{_lambda_.2} parent=11 // pred_fallthru
          _
        // Predicated region
        $region25: #{_lambda_.2} parent=11 // pred_check
          %p307 = pneg %p156
        $region26: #{_lambda_.2} parent=11 // pred_check_branch
          %309 = sbr.rel (%p307) target = $region28
        $region27: #{_lambda_.2} parent=11 // pred_region
          _
        $region28: #{_lambda_.2} parent=11 // pred_fallthru
          _
        // Predicated region
        $region29: #{_lambda_.2} parent=11 // pred_check
          %p310 = pneg %p177
        $region30: #{_lambda_.2} parent=11 // pred_check_branch
          %312 = sbr.rel (%p310) target = $region32
        $region31: #{_lambda_.2} parent=11 // pred_region
          _
        $region32: #{_lambda_.2} parent=11 // pred_fallthru
          _
        // Predicated region
        $region33: #{_lambda_.2} parent=11 // pred_check
          %p313 = pneg %p198
        $region34: #{_lambda_.2} parent=11 // pred_check_branch
          %315 = sbr.rel (%p313) target = $region36
        $region35: #{_lambda_.2} parent=11 // pred_region
          _
        $region36: #{_lambda_.2} parent=11 // pred_fallthru
          _
      $region12: #{_lambda_.2} parent=5 // pred_fallthru
        _
      %p316 = scmp.lt.s32.totalorder %s18, 2
      // Predicated region
      $region37: #{_lambda_.2} parent=5 // pred_check
        %p317 = pneg %p316
      $region38: #{_lambda_.2} parent=5 // pred_check_branch
        %319 = sbr.rel (%p317) target = $region40
      $region39: #{_lambda_.2} parent=5 // pred_region
        // Predicated region
        $region41: #{_lambda_.2} parent=39 // pred_check
          %p320 = pneg %p38
        $region42: #{_lambda_.2} parent=39 // pred_check_branch
          %322 = sbr.rel (%p320) target = $region44
        $region43: #{_lambda_.2} parent=39 // pred_region
          %s323 = smul.u32 4, %s18
          %p324 = scmp.lt.s32.totalorder %s323, 7
          %s325 = scalar_select %p324, %s323, 7
          %s326 = smul.addr %s325, 3
          %s327 = smul.addr %s326, 8
          %s328 = scalar_lea.vmem %s0, %s327
          %s329 = smul.u32 4, %s18
        $region44: #{_lambda_.2} parent=39 // pred_fallthru
          _
        // Predicated region
        $region45: #{_lambda_.2} parent=39 // pred_check
          %p330 = pneg %p66
        $region46: #{_lambda_.2} parent=39 // pred_check_branch
          %332 = sbr.rel (%p330) target = $region48
        $region47: #{_lambda_.2} parent=39 // pred_region
          %s333 = ssub.s32 1, %s18
          %s334 = smul.u32 4, %s333
          %p335 = scmp.lt.s32.totalorder %s334, 7
          %s336 = scalar_select %p335, %s334, 7
          %s337 = smul.addr %s336, 3
          %s338 = smul.addr %s337, 8
          %s339 = scalar_lea.vmem %s1, %s338
          %s340 = ssub.s32 1, %s18
          %s341 = smul.u32 4, %s340
        $region48: #{_lambda_.2} parent=39 // pred_fallthru
          _
      $region40: #{_lambda_.2} parent=5 // pred_fallthru
        _
      %p342 = scmp.le.s32.totalorder 1, %s18
      %p343 = scmp.lt.s32.totalorder %s18, 3
      %p344 = pnand %p342, %p343
      %p345 = pneg %p344
      // Predicated region
      $region49: #{_lambda_.2} parent=5 // pred_check
        _
      $region50: #{_lambda_.2} parent=5 // pred_check_branch
        %347 = sbr.rel (%p344) target = $region52
      $region51: #{_lambda_.2} parent=5 // pred_region
        %s348 = ssub.s32 %s18, 1
        // Predicated region
        $region53: #{_lambda_.2} parent=51 // pred_check
          %p349 = pneg %p135
        $region54: #{_lambda_.2} parent=51 // pred_check_branch
          %351 = sbr.rel (%p349) target = $region56
        $region55: #{_lambda_.2} parent=51 // pred_region
          %352 = dma.done [#allocation5], 6144
        $region56: #{_lambda_.2} parent=51 // pred_fallthru
          _
        %s353 = smul.u32 4, %s23
        %p354 = scmp.lt.s32.totalorder %s353, 7
        %s355 = scalar_select %p354, %s353, 7
        %s356 = smul.addr %s355, 3
        %s357 = smul.addr %s356, 8
        %s358 = scalar_lea.vmem %s0, %s357
        %p359 = pneg %p44
        %p360 = pneg %p41
        %s361 = ssub.s32 1, %s23
        %s362 = smul.u32 4, %s361
        %p363 = scmp.lt.s32.totalorder %s362, 7
        %s364 = scalar_select %p363, %s362, 7
        %s365 = smul.addr %s364, 3
        %s366 = smul.addr %s365, 8
        %s367 = scalar_lea.vmem %s1, %s366
        %p368 = pneg %p72
        %p369 = pneg %p69
        %p370 = pneg %p93
        %p371 = pneg %p90
        %p372 = pneg %p114
        %p373 = pneg %p111
        %p374 = pneg %p135
        %p375 = pneg %p132
        %p376 = pneg %p156
        %p377 = pneg %p153
        %p378 = pneg %p177
        %p379 = pneg %p174
        %p380 = pneg %p198
        %p381 = pneg %p195
        %p382 = pneg %p224
        %p383 = pneg %p221
        %s384 = smul.u32 4, %s23
        %p385 = scmp.lt.s32.totalorder %s384, 7
        %s386 = scalar_select %p385, %s384, 7
        %s387 = smul.addr %s386, 8
        %s388 = scalar_lea.vmem %s8, %s387
        %p389 = pneg %p252
        %p390 = pneg %p249
        %s391 = ssub.s32 1, %s23
        %s392 = smul.u32 4, %s391
        %p393 = scmp.lt.s32.totalorder %s392, 7
        %s394 = scalar_select %p393, %s392, 7
        %s395 = smul.addr %s394, 8
        %s396 = scalar_lea.vmem %s9, %s395
        %p397 = pneg %p273
        %p398 = pneg %p270
        %s399 = smul.u32 4, %s23
        %p400 = scmp.lt.s32.totalorder %s399, 7
        %s401 = scalar_select %p400, %s399, 7
        %s402 = smul.addr %s401, 3
        %s403 = smul.addr %s402, 8
        %s404 = scalar_lea.vmem %s0, %s403
        %s405 = smul.u32 4, %s23
        %s406 = ssub.s32 1, %s23
        %s407 = smul.u32 4, %s406
        %p408 = scmp.lt.s32.totalorder %s407, 7
        %s409 = scalar_select %p408, %s407, 7
        %s410 = smul.addr %s409, 3
        %s411 = smul.addr %s410, 8
        %s412 = scalar_lea.vmem %s1, %s411
        %s413 = ssub.s32 1, %s23
        %s414 = smul.u32 4, %s413
        %s415 = smul.u32 4, %s23
        %p416 = scmp.lt.s32.totalorder %s415, 7
        %s417 = scalar_select %p416, %s415, 7
        %s418 = smul.addr %s417, 8
        %s419 = scalar_lea.vmem %s8, %s418
        %s420 = smul.u32 4, %s23
        %s421 = ssub.s32 1, %s23
        %s422 = smul.u32 4, %s421
        %p423 = scmp.lt.s32.totalorder %s422, 7
        %s424 = scalar_select %p423, %s422, 7
        %s425 = smul.addr %s424, 8
        %s426 = scalar_lea.vmem %s9, %s425
        %s427 = ssub.s32 1, %s23
        %s428 = smul.u32 4, %s427
        %p429 = scmp.eq.s32.totalorder %s23, 0
        // Predicated region
        $region57: #{_lambda_.2} parent=51 // pred_check
          %p430 = pneg %p429
        $region58: #{_lambda_.2} parent=51 // pred_check_branch
          %432 = sbr.rel (%p430) target = $region60
        $region59: #{_lambda_.2} parent=51 // pred_region
          %v433 = vld [vmem:[%s7] sm:$0xff]
          %434 = vst [vmem:[#allocation2] sm:$0xff] %v433
          %s435 = scalar_lea.vmem %s7, 8
          %v436 = vld [vmem:[%s435] sm:$0xff]
          %437 = vst [vmem:[#allocation3] sm:$0xff] %v436
        $region60: #{_lambda_.2} parent=51 // pred_fallthru
          _
        %v438 = vld [vmem:[%s2] sm:$0xff]
        %v439 = vld [vmem:[%s5] sm:$0x1]
        %v441 = vlaneseq
        %v442 = vshrl.u32 %v441, 7
        %v443 = vsub.s32 0, %v442
        %v444 = vrot.slane %v439, %v443
        %v446 = vld [vmem:[%s6] sm:$0x1]
        %v448 = vlaneseq
        %v449 = vshrl.u32 %v448, 7
        %v450 = vsub.s32 0, %v449
        %v451 = vrot.slane %v446, %v450
        %s453 = smul.u32 %s23, 4
        %s454 = ssub.s32 1, %s23
        %s455 = smul.u32 %s454, 4
        %v456 = vld [vmem:[#allocation2] sm:$0xff]
        %v457 = vld [vmem:[#allocation3] sm:$0xff]
        %v458 = vld [vmem:[%s404] sm:$0xff]
        %v459 = vld [vmem:[%s404 + $0x8] sm:$0xff]
        %v460 = vld [vmem:[%s404 + $0x10] sm:$0xff]
        %v461 = vld [vmem:[%s3] sm:$0xff]
        %v462 = vld [vmem:[%s3 + $0x8] sm:$0xff]
        %v463 = vld [vmem:[%s3 + $0x10] sm:$0xff]
        %v464 = vld [vmem:[%s3 + $0x18] sm:$0xff]
        %v465 = vld [vmem:[%s3 + $0x20] sm:$0xff]
        %v466 = vld [vmem:[%s3 + $0x28] sm:$0xff]
        %v467 = vld [vmem:[%s3 + $0x30] sm:$0xff]
        %v468 = vld [vmem:[%s3 + $0x38] sm:$0xff]
        %v469 = vld [vmem:[%s3 + $0x40] sm:$0xff]
        %v470 = vld [vmem:[%s3 + $0x48] sm:$0xff]
        %v471 = vld [vmem:[%s3 + $0x50] sm:$0xff]
        %v472 = vld [vmem:[%s3 + $0x58] sm:$0xff]
        %v473 = vld [vmem:[%s3 + $0x60] sm:$0xff]
        %v474 = vld [vmem:[%s3 + $0x68] sm:$0xff]
        %v475 = vld [vmem:[%s3 + $0x70] sm:$0xff]
        %v476 = vld [vmem:[%s3 + $0x78] sm:$0xff]
        %v477 = vld [vmem:[%s3 + $0x80] sm:$0xff]
        %v478 = vld [vmem:[%s3 + $0x88] sm:$0xff]
        %v479 = vld [vmem:[%s3 + $0x90] sm:$0xff]
        %v480 = vld [vmem:[%s3 + $0x98] sm:$0xff]
        %v481 = vld [vmem:[%s3 + $0xa0] sm:$0xff]
        %v482 = vld [vmem:[%s3 + $0xa8] sm:$0xff]
        %v483 = vld [vmem:[%s3 + $0xb0] sm:$0xff]
        %v484 = vld [vmem:[%s3 + $0xb8] sm:$0xff]
        %v485 = vld [vmem:[%s3 + $0xc0] sm:$0xff]
        %v486 = vld [vmem:[%s3 + $0xc8] sm:$0xff]
        %v487 = vld [vmem:[%s3 + $0xd0] sm:$0xff]
        %v488 = vld [vmem:[%s3 + $0xd8] sm:$0xff]
        %v489 = vld [vmem:[%s3 + $0xe0] sm:$0xff]
        %v490 = vld [vmem:[%s3 + $0xe8] sm:$0xff]
        %v491 = vld [vmem:[%s3 + $0xf0] sm:$0xff]
        %v492 = vld [vmem:[%s3 + $0xf8] sm:$0xff]
        %v493 = vld [vmem:[%s3 + $0x100] sm:$0xff]
        %v494 = vld [vmem:[%s3 + $0x108] sm:$0xff]
        %v495 = vld [vmem:[%s3 + $0x110] sm:$0xff]
        %v496 = vld [vmem:[%s3 + $0x118] sm:$0xff]
        %v497 = vld [vmem:[%s3 + $0x120] sm:$0xff]
        %v498 = vld [vmem:[%s3 + $0x128] sm:$0xff]
        %v499 = vld [vmem:[%s3 + $0x130] sm:$0xff]
        %v500 = vld [vmem:[%s3 + $0x138] sm:$0xff]
        %v501 = vld [vmem:[%s3 + $0x140] sm:$0xff]
        %v502 = vld [vmem:[%s3 + $0x148] sm:$0xff]
        %v503 = vld [vmem:[%s3 + $0x150] sm:$0xff]
        %v504 = vld [vmem:[%s3 + $0x158] sm:$0xff]
        %v505 = vld [vmem:[%s3 + $0x160] sm:$0xff]
        %v506 = vld [vmem:[%s3 + $0x168] sm:$0xff]
        %v507 = vld [vmem:[%s3 + $0x170] sm:$0xff]
        %v508 = vld [vmem:[%s3 + $0x178] sm:$0xff]
        %509 = vmatprep.subr.mxu0 %v462
        %510 = vmatpush1.msra.mxu0 %v461
        %511 = vmatprep.subr.mxu0 %v465
        %512 = vmatpush1.msra.mxu0 %v464
        %513 = vmatprep.subr.mxu0 %v468
        %514 = vmatpush1.msra.mxu0 %v467
        %515 = vmatprep.subr.mxu0 %v471
        %516 = vmatpush1.msra.mxu0 %v470
        %517 = vmatprep.subr.mxu0 %v474
        %518 = vmatpush1.msra.mxu0 %v473
        %519 = vmatprep.subr.mxu0 %v477
        %520 = vmatpush1.msra.mxu0 %v476
        %521 = vmatprep.subr.mxu0 %v480
        %522 = vmatpush1.msra.mxu0 %v479
        %523 = vmatprep.subr.mxu0 %v483
        %524 = vmatpush1.msra.mxu0 %v482
        %525 = vmatprep.subr.mxu0 %v486
        %526 = vmatpush1.msra.mxu0 %v485
        %527 = vmatprep.subr.mxu0 %v489
        %528 = vmatpush1.msra.mxu0 %v488
        %529 = vmatprep.subr.mxu0 %v492
        %530 = vmatpush1.msra.mxu0 %v491
        %531 = vmatprep.subr.mxu0 %v495
        %532 = vmatpush1.msra.mxu0 %v494
        %533 = vmatprep.subr.mxu0 %v498
        %534 = vmatpush1.msra.mxu0 %v497
        %535 = vmatprep.subr.mxu0 %v501
        %536 = vmatpush1.msra.mxu0 %v500
        %537 = vmatprep.subr.mxu0 %v504
        %538 = vmatpush1.msra.mxu0 %v503
        %539 = vmatprep.subr.mxu0 %v507
        %540 = vmatpush1.msra.mxu0 %v506
        %541 = vmatprep.subr.mxu0 0.0
        %542 = vmatpush1.msra.mxu0 0.0
        %543 = vmatprep.subr.mxu0 0.0
        %544 = vmatpush1.msra.mxu0 0.0
        %545 = vmatprep.subr.mxu0 0.0
        %546 = vmatpush1.msra.mxu0 0.0
        %547 = vmatprep.subr.mxu0 0.0
        %548 = vmatpush1.msra.mxu0 0.0
        %549 = vmatprep.subr.mxu0 0.0
        %550 = vmatpush1.msra.mxu0 0.0
        %551 = vmatprep.subr.mxu0 0.0
        %552 = vmatpush1.msra.mxu0 0.0
        %553 = vmatprep.subr.mxu0 0.0
        %554 = vmatpush1.msra.mxu0 0.0
        %555 = vmatprep.subr.mxu0 0.0
        %556 = vmatpush1.msra.mxu0 0.0
        %557 = vmatprep.subr.mxu0 0.0
        %558 = vmatpush1.msra.mxu0 0.0
        %559 = vmatprep.subr.mxu0 0.0
        %560 = vmatpush1.msra.mxu0 0.0
        %561 = vmatprep.subr.mxu0 0.0
        %562 = vmatpush1.msra.mxu0 0.0
        %563 = vmatprep.subr.mxu0 0.0
        %564 = vmatpush1.msra.mxu0 0.0
        %565 = vmatprep.subr.mxu0 0.0
        %566 = vmatpush1.msra.mxu0 0.0
        %567 = vmatprep.subr.mxu0 0.0
        %568 = vmatpush1.msra.mxu0 0.0
        %569 = vmatprep.subr.mxu0 0.0
        %570 = vmatpush1.msra.mxu0 0.0
        %571 = vmatprep.subr.mxu0 0.0
        %572 = vmatpush1.msra.mxu0 0.0
        %573 = vmatprep.mubr.f32.mxu0 0.0
        %574 = vmatmul.mubr.f32.gmra.mrb[0].mxu0 %v456
        %v575 = vpop.f32.mrb[0].mxu0
        %v576 = vadd.f32 0.0, %v575
        %v577 = vpop.f32.mrb[0].mxu0
        %v578 = vadd.f32 0.0, %v577
        %579 = vdwg.mxu0
        %580 = vmatprep.subr.mxu0 0.0
        %581 = vmatpush1.msra.mxu0 %v463
        %582 = vmatprep.subr.mxu0 0.0
        %583 = vmatpush1.msra.mxu0 %v466
        %584 = vmatprep.subr.mxu0 0.0
        %585 = vmatpush1.msra.mxu0 %v469
        %586 = vmatprep.subr.mxu0 0.0
        %587 = vmatpush1.msra.mxu0 %v472
        %588 = vmatprep.subr.mxu0 0.0
        %589 = vmatpush1.msra.mxu0 %v475
        %590 = vmatprep.subr.mxu0 0.0
        %591 = vmatpush1.msra.mxu0 %v478
        %592 = vmatprep.subr.mxu0 0.0
        %593 = vmatpush1.msra.mxu0 %v481
        %594 = vmatprep.subr.mxu0 0.0
        %595 = vmatpush1.msra.mxu0 %v484
        %596 = vmatprep.subr.mxu0 0.0
        %597 = vmatpush1.msra.mxu0 %v487
        %598 = vmatprep.subr.mxu0 0.0
        %599 = vmatpush1.msra.mxu0 %v490
        %600 = vmatprep.subr.mxu0 0.0
        %601 = vmatpush1.msra.mxu0 %v493
        %602 = vmatprep.subr.mxu0 0.0
        %603 = vmatpush1.msra.mxu0 %v496
        %604 = vmatprep.subr.mxu0 0.0
        %605 = vmatpush1.msra.mxu0 %v499
        %606 = vmatprep.subr.mxu0 0.0
        %607 = vmatpush1.msra.mxu0 %v502
        %608 = vmatprep.subr.mxu0 0.0
        %609 = vmatpush1.msra.mxu0 %v505
        %610 = vmatprep.subr.mxu0 0.0
        %611 = vmatpush1.msra.mxu0 %v508
        %612 = vmatprep.subr.mxu0 0.0
        %613 = vmatpush1.msra.mxu0 0.0
        %614 = vmatprep.subr.mxu0 0.0
        %615 = vmatpush1.msra.mxu0 0.0
        %616 = vmatprep.subr.mxu0 0.0
        %617 = vmatpush1.msra.mxu0 0.0
        %618 = vmatprep.subr.mxu0 0.0
        %619 = vmatpush1.msra.mxu0 0.0
        %620 = vmatprep.subr.mxu0 0.0
        %621 = vmatpush1.msra.mxu0 0.0
        %622 = vmatprep.subr.mxu0 0.0
        %623 = vmatpush1.msra.mxu0 0.0
        %624 = vmatprep.subr.mxu0 0.0
        %625 = vmatpush1.msra.mxu0 0.0
        %626 = vmatprep.subr.mxu0 0.0
        %627 = vmatpush1.msra.mxu0 0.0
        %628 = vmatprep.subr.mxu0 0.0
        %629 = vmatpush1.msra.mxu0 0.0
        %630 = vmatprep.subr.mxu0 0.0
        %631 = vmatpush1.msra.mxu0 0.0
        %632 = vmatprep.subr.mxu0 0.0
        %633 = vmatpush1.msra.mxu0 0.0
        %634 = vmatprep.subr.mxu0 0.0
        %635 = vmatpush1.msra.mxu0 0.0
        %636 = vmatprep.subr.mxu0 0.0
        %637 = vmatpush1.msra.mxu0 0.0
        %638 = vmatprep.subr.mxu0 0.0
        %639 = vmatpush1.msra.mxu0 0.0
        %640 = vmatprep.subr.mxu0 0.0
        %641 = vmatpush1.msra.mxu0 0.0
        %642 = vmatprep.subr.mxu0 0.0
        %643 = vmatpush1.msra.mxu0 0.0
        %644 = vmatprep.mubr.f32.mxu0 0.0
        %645 = vmatmul.mubr.f32.gmra.mrb[0].mxu0 %v456
        %v646 = vpop.f32.mrb[0].mxu0
        %v647 = vadd.f32 0.0, %v646
        %v648 = vpop.f32.mrb[0].mxu0
        %649 = vdwg.mxu0
        %v650 = vadd.f32 %v458, %v576
        %v651 = vxor.u32 %v650, 2147483648
        %v652 = vmul.f32 %v651, 1.442695
        %v653 = vpow.pop %v652
        %v654 = vadd.f32 %v653, 1.0
        %v655 = vrcp.pop %v654
        %v656 = vmul.f32 1.0, %v655
        %v657 = vadd.f32 %v459, %v578
        %v658 = vxor.u32 %v657, 2147483648
        %v659 = vmul.f32 %v658, 1.442695
        %v660 = vpow.pop %v659
        %v661 = vadd.f32 %v660, 1.0
        %v662 = vrcp.pop %v661
        %v663 = vmul.f32 1.0, %v662
        %v664 = vadd.f32 %v647, %v444
        %v665 = vmul.f32 %v656, %v664
        %v666 = vadd.f32 %v460, %v665
        %v667 = vtanh.pop %v666
        %v668 = vsub.f32 1.0, %v663
        %v669 = vmul.f32 %v668, %v667
        %v670 = vmul.f32 %v663, %v456
        %v671 = vadd.f32 %v669, %v670
        %v672 = vstv %s453
        %vm673 = vcmp.lt.s32.totalorder %v672, %v438
        %v674 = vsel %vm673, 1, 0
        %675 = vset.pattern.permute.xlu0 0
        %676 = vperm.xlu0 %675, %v674
        %v677 = vpop.permute.xlu0 %676
        %vm678 = vcmp.eq.s32.totalorder %v677, 1
        %v679 = vsel %vm678, %v671, 0.0
        %v680 = vsel %vm678, %v671, %v456
        %681 = vst [vmem:[%s419] sm:$0xff] %v679
        %s682 = scalar_lea.vmem %s412, 72
        %v683 = vld [vmem:[%s682] sm:$0xff]
        %v684 = vld [vmem:[%s682 + $0x8] sm:$0xff]
        %v685 = vld [vmem:[%s682 + $0x10] sm:$0xff]
        %s686 = sadd.s32 %s455, 3
        %v687 = vld [vmem:[#allocation4] sm:$0xff]
        %v688 = vld [vmem:[#allocation4 + $0x8] sm:$0xff]
        %v689 = vld [vmem:[#allocation4 + $0x10] sm:$0xff]
        %v690 = vld [vmem:[#allocation4 + $0x18] sm:$0xff]
        %v691 = vld [vmem:[#allocation4 + $0x20] sm:$0xff]
        %v692 = vld [vmem:[#allocation4 + $0x28] sm:$0xff]
        %v693 = vld [vmem:[#allocation4 + $0x30] sm:$0xff]
        %v694 = vld [vmem:[#allocation4 + $0x38] sm:$0xff]
        %v695 = vld [vmem:[#allocation4 + $0x40] sm:$0xff]
        %v696 = vld [vmem:[#allocation4 + $0x48] sm:$0xff]
        %v697 = vld [vmem:[#allocation4 + $0x50] sm:$0xff]
        %v698 = vld [vmem:[#allocation4 + $0x58] sm:$0xff]
        %v699 = vld [vmem:[#allocation4 + $0x60] sm:$0xff]
        %v700 = vld [vmem:[#allocation4 + $0x68] sm:$0xff]
        %v701 = vld [vmem:[#allocation4 + $0x70] sm:$0xff]
        %v702 = vld [vmem:[#allocation4 + $0x78] sm:$0xff]
        %v703 = vld [vmem:[#allocation4 + $0x80] sm:$0xff]
        %v704 = vld [vmem:[#allocation4 + $0x88] sm:$0xff]
        %v705 = vld [vmem:[#allocation4 + $0x90] sm:$0xff]
        %v706 = vld [vmem:[#allocation4 + $0x98] sm:$0xff]
        %v707 = vld [vmem:[#allocation4 + $0xa0] sm:$0xff]
        %v708 = vld [vmem:[#allocation4 + $0xa8] sm:$0xff]
        %v709 = vld [vmem:[#allocation4 + $0xb0] sm:$0xff]
        %v710 = vld [vmem:[#allocation4 + $0xb8] sm:$0xff]
        %v711 = vld [vmem:[#allocation4 + $0xc0] sm:$0xff]
        %v712 = vld [vmem:[#allocation4 + $0xc8] sm:$0xff]
        %v713 = vld [vmem:[#allocation4 + $0xd0] sm:$0xff]
        %v714 = vld [vmem:[#allocation4 + $0xd8] sm:$0xff]
        %v715 = vld [vmem:[#allocation4 + $0xe0] sm:$0xff]
        %v716 = vld [vmem:[#allocation4 + $0xe8] sm:$0xff]
        %v717 = vld [vmem:[#allocation4 + $0xf0] sm:$0xff]
        %v718 = vld [vmem:[#allocation4 + $0xf8] sm:$0xff]
        %v719 = vld [vmem:[#allocation4 + $0x100] sm:$0xff]
        %v720 = vld [vmem:[#allocation4 + $0x108] sm:$0xff]
        %v721 = vld [vmem:[#allocation4 + $0x110] sm:$0xff]
        %v722 = vld [vmem:[#allocation4 + $0x118] sm:$0xff]
        %v723 = vld [vmem:[#allocation4 + $0x120] sm:$0xff]
        %v724 = vld [vmem:[#allocation4 + $0x128] sm:$0xff]
        %v725 = vld [vmem:[#allocation4 + $0x130] sm:$0xff]
        %v726 = vld [vmem:[#allocation4 + $0x138] sm:$0xff]
        %v727 = vld [vmem:[#allocation4 + $0x140] sm:$0xff]
        %v728 = vld [vmem:[#allocation4 + $0x148] sm:$0xff]
        %v729 = vld [vmem:[#allocation4 + $0x150] sm:$0xff]
        %v730 = vld [vmem:[#allocation4 + $0x158] sm:$0xff]
        %v731 = vld [vmem:[#allocation4 + $0x160] sm:$0xff]
        %v732 = vld [vmem:[#allocation4 + $0x168] sm:$0xff]
        %v733 = vld [vmem:[#allocation4 + $0x170] sm:$0xff]
        %v734 = vld [vmem:[#allocation4 + $0x178] sm:$0xff]
        %735 = vmatprep.subr.mxu0 %v688
        %736 = vmatpush1.msra.mxu0 %v687
        %737 = vmatprep.subr.mxu0 %v691
        %738 = vmatpush1.msra.mxu0 %v690
        %739 = vmatprep.subr.mxu0 %v694
        %740 = vmatpush1.msra.mxu0 %v693
        %741 = vmatprep.subr.mxu0 %v697
        %742 = vmatpush1.msra.mxu0 %v696
        %743 = vmatprep.subr.mxu0 %v700
        %744 = vmatpush1.msra.mxu0 %v699
        %745 = vmatprep.subr.mxu0 %v703
        %746 = vmatpush1.msra.mxu0 %v702
        %747 = vmatprep.subr.mxu0 %v706
        %748 = vmatpush1.msra.mxu0 %v705
        %749 = vmatprep.subr.mxu0 %v709
        %750 = vmatpush1.msra.mxu0 %v708
        %751 = vmatprep.subr.mxu0 %v712
        %752 = vmatpush1.msra.mxu0 %v711
        %753 = vmatprep.subr.mxu0 %v715
        %754 = vmatpush1.msra.mxu0 %v714
        %755 = vmatprep.subr.mxu0 %v718
        %756 = vmatpush1.msra.mxu0 %v717
        %757 = vmatprep.subr.mxu0 %v721
        %758 = vmatpush1.msra.mxu0 %v720
        %759 = vmatprep.subr.mxu0 %v724
        %760 = vmatpush1.msra.mxu0 %v723
        %761 = vmatprep.subr.mxu0 %v727
        %762 = vmatpush1.msra.mxu0 %v726
        %763 = vmatprep.subr.mxu0 %v730
        %764 = vmatpush1.msra.mxu0 %v729
        %765 = vmatprep.subr.mxu0 %v733
        %766 = vmatpush1.msra.mxu0 %v732
        %767 = vmatprep.subr.mxu0 0.0
        %768 = vmatpush1.msra.mxu0 0.0
        %769 = vmatprep.subr.mxu0 0.0
        %770 = vmatpush1.msra.mxu0 0.0
        %771 = vmatprep.subr.mxu0 0.0
        %772 = vmatpush1.msra.mxu0 0.0
        %773 = vmatprep.subr.mxu0 0.0
        %774 = vmatpush1.msra.mxu0 0.0
        %775 = vmatprep.subr.mxu0 0.0
        %776 = vmatpush1.msra.mxu0 0.0
        %777 = vmatprep.subr.mxu0 0.0
        %778 = vmatpush1.msra.mxu0 0.0
        %779 = vmatprep.subr.mxu0 0.0
        %780 = vmatpush1.msra.mxu0 0.0
        %781 = vmatprep.subr.mxu0 0.0
        %782 = vmatpush1.msra.mxu0 0.0
        %783 = vmatprep.subr.mxu0 0.0
        %784 = vmatpush1.msra.mxu0 0.0
        %785 = vmatprep.subr.mxu0 0.0
        %786 = vmatpush1.msra.mxu0 0.0
        %787 = vmatprep.subr.mxu0 0.0
        %788 = vmatpush1.msra.mxu0 0.0
        %789 = vmatprep.subr.mxu0 0.0
        %790 = vmatpush1.msra.mxu0 0.0
        %791 = vmatprep.subr.mxu0 0.0
        %792 = vmatpush1.msra.mxu0 0.0
        %793 = vmatprep.subr.mxu0 0.0
        %794 = vmatpush1.msra.mxu0 0.0
        %795 = vmatprep.subr.mxu0 0.0
        %796 = vmatpush1.msra.mxu0 0.0
        %797 = vmatprep.subr.mxu0 0.0
        %798 = vmatpush1.msra.mxu0 0.0
        %799 = vmatprep.mubr.f32.mxu0 0.0
        %800 = vmatmul.mubr.f32.gmra.mrb[0].mxu0 %v457
        %v801 = vpop.f32.mrb[0].mxu0
        %v802 = vadd.f32 0.0, %v801
        %v803 = vpop.f32.mrb[0].mxu0
        %v804 = vadd.f32 0.0, %v803
        %805 = vdwg.mxu0
        %806 = vmatprep.subr.mxu0 0.0
        %807 = vmatpush1.msra.mxu0 %v689
        %808 = vmatprep.subr.mxu0 0.0
        %809 = vmatpush1.msra.mxu0 %v692
        %810 = vmatprep.subr.mxu0 0.0
        %811 = vmatpush1.msra.mxu0 %v695
        %812 = vmatprep.subr.mxu0 0.0
        %813 = vmatpush1.msra.mxu0 %v698
        %814 = vmatprep.subr.mxu0 0.0
        %815 = vmatpush1.msra.mxu0 %v701
        %816 = vmatprep.subr.mxu0 0.0
        %817 = vmatpush1.msra.mxu0 %v704
        %818 = vmatprep.subr.mxu0 0.0
        %819 = vmatpush1.msra.mxu0 %v707
        %820 = vmatprep.subr.mxu0 0.0
        %821 = vmatpush1.msra.mxu0 %v710
        %822 = vmatprep.subr.mxu0 0.0
        %823 = vmatpush1.msra.mxu0 %v713
        %824 = vmatprep.subr.mxu0 0.0
        %825 = vmatpush1.msra.mxu0 %v716
        %826 = vmatprep.subr.mxu0 0.0
        %827 = vmatpush1.msra.mxu0 %v719
        %828 = vmatprep.subr.mxu0 0.0
        %829 = vmatpush1.msra.mxu0 %v722
        %830 = vmatprep.subr.mxu0 0.0
        %831 = vmatpush1.msra.mxu0 %v725
        %832 = vmatprep.subr.mxu0 0.0
        %833 = vmatpush1.msra.mxu0 %v728
        %834 = vmatprep.subr.mxu0 0.0
        %835 = vmatpush1.msra.mxu0 %v731
        %836 = vmatprep.subr.mxu0 0.0
        %837 = vmatpush1.msra.mxu0 %v734
        %838 = vmatprep.subr.mxu0 0.0
        %839 = vmatpush1.msra.mxu0 0.0
        %840 = vmatprep.subr.mxu0 0.0
        %841 = vmatpush1.msra.mxu0 0.0
        %842 = vmatprep.subr.mxu0 0.0
        %843 = vmatpush1.msra.mxu0 0.0
        %844 = vmatprep.subr.mxu0 0.0
        %845 = vmatpush1.msra.mxu0 0.0
        %846 = vmatprep.subr.mxu0 0.0
        %847 = vmatpush1.msra.mxu0 0.0
        %848 = vmatprep.subr.mxu0 0.0
        %849 = vmatpush1.msra.mxu0 0.0
        %850 = vmatprep.subr.mxu0 0.0
        %851 = vmatpush1.msra.mxu0 0.0
        %852 = vmatprep.subr.mxu0 0.0
        %853 = vmatpush1.msra.mxu0 0.0
        %854 = vmatprep.subr.mxu0 0.0
        %855 = vmatpush1.msra.mxu0 0.0
        %856 = vmatprep.subr.mxu0 0.0
        %857 = vmatpush1.msra.mxu0 0.0
        %858 = vmatprep.subr.mxu0 0.0
        %859 = vmatpush1.msra.mxu0 0.0
        %860 = vmatprep.subr.mxu0 0.0
        %861 = vmatpush1.msra.mxu0 0.0
        %862 = vmatprep.subr.mxu0 0.0
        %863 = vmatpush1.msra.mxu0 0.0
        %864 = vmatprep.subr.mxu0 0.0
        %865 = vmatpush1.msra.mxu0 0.0
        %866 = vmatprep.subr.mxu0 0.0
        %867 = vmatpush1.msra.mxu0 0.0
        %868 = vmatprep.subr.mxu0 0.0
        %869 = vmatpush1.msra.mxu0 0.0
        %870 = vmatprep.mubr.f32.mxu0 0.0
        %871 = vmatmul.mubr.f32.gmra.mrb[0].mxu0 %v457
        %v872 = vpop.f32.mrb[0].mxu0
        %v873 = vadd.f32 0.0, %v872
        %v874 = vpop.f32.mrb[0].mxu0
        %875 = vdwg.mxu0
        %v876 = vadd.f32 %v683, %v802
        %v877 = vxor.u32 %v876, 2147483648
        %v878 = vmul.f32 %v877, 1.442695
        %v879 = vpow.pop %v878
        %v880 = vadd.f32 %v879, 1.0
        %v881 = vrcp.pop %v880
        %v882 = vmul.f32 1.0, %v881
        %v883 = vadd.f32 %v684, %v804
        %v884 = vxor.u32 %v883, 2147483648
        %v885 = vmul.f32 %v884, 1.442695
        %v886 = vpow.pop %v885
        %v887 = vadd.f32 %v886, 1.0
        %v888 = vrcp.pop %v887
        %v889 = vmul.f32 1.0, %v888
        %v890 = vadd.f32 %v873, %v451
        %v891 = vmul.f32 %v882, %v890
        %v892 = vadd.f32 %v685, %v891
        %v893 = vtanh.pop %v892
        %v894 = vsub.f32 1.0, %v889
        %v895 = vmul.f32 %v894, %v893
        %v896 = vmul.f32 %v889, %v457
        %v897 = vadd.f32 %v895, %v896
        %v898 = vstv %s686
        %vm899 = vcmp.lt.s32.totalorder %v898, %v438
        %v900 = vsel %vm899, 1, 0
        %901 = vset.pattern.permute.xlu0 0
        %902 = vperm.xlu0 %901, %v900
        %v903 = vpop.permute.xlu0 %902
        %vm904 = vcmp.eq.s32.totalorder %v903, 1
        %v905 = vsel %vm904, %v897, 0.0
        %v906 = vsel %vm904, %v897, %v457
        %s907 = scalar_lea.vmem %s426, 24
        %908 = vst [vmem:[%s907] sm:$0xff] %v905
        %s909 = scalar_lea.vmem %s404, 24
        %v910 = vld [vmem:[%s909] sm:$0xff]
        %v911 = vld [vmem:[%s909 + $0x8] sm:$0xff]
        %v912 = vld [vmem:[%s909 + $0x10] sm:$0xff]
        %s913 = sadd.s32 %s453, 1
        %v914 = vld [vmem:[%s3] sm:$0xff]
        %v915 = vld [vmem:[%s3 + $0x8] sm:$0xff]
        %v916 = vld [vmem:[%s3 + $0x10] sm:$0xff]
        %v917 = vld [vmem:[%s3 + $0x18] sm:$0xff]
        %v918 = vld [vmem:[%s3 + $0x20] sm:$0xff]
        %v919 = vld [vmem:[%s3 + $0x28] sm:$0xff]
        %v920 = vld [vmem:[%s3 + $0x30] sm:$0xff]
        %v921 = vld [vmem:[%s3 + $0x38] sm:$0xff]
        %v922 = vld [vmem:[%s3 + $0x40] sm:$0xff]
        %v923 = vld [vmem:[%s3 + $0x48] sm:$0xff]
        %v924 = vld [vmem:[%s3 + $0x50] sm:$0xff]
        %v925 = vld [vmem:[%s3 + $0x58] sm:$0xff]
        %v926 = vld [vmem:[%s3 + $0x60] sm:$0xff]
        %v927 = vld [vmem:[%s3 + $0x68] sm:$0xff]
        %v928 = vld [vmem:[%s3 + $0x70] sm:$0xff]
        %v929 = vld [vmem:[%s3 + $0x78] sm:$0xff]
        %v930 = vld [vmem:[%s3 + $0x80] sm:$0xff]
        %v931 = vld [vmem:[%s3 + $0x88] sm:$0xff]
        %v932 = vld [vmem:[%s3 + $0x90] sm:$0xff]
        %v933 = vld [vmem:[%s3 + $0x98] sm:$0xff]
        %v934 = vld [vmem:[%s3 + $0xa0] sm:$0xff]
        %v935 = vld [vmem:[%s3 + $0xa8] sm:$0xff]
        %v936 = vld [vmem:[%s3 + $0xb0] sm:$0xff]
        %v937 = vld [vmem:[%s3 + $0xb8] sm:$0xff]
        %v938 = vld [vmem:[%s3 + $0xc0] sm:$0xff]
        %v939 = vld [vmem:[%s3 + $0xc8] sm:$0xff]
        %v940 = vld [vmem:[%s3 + $0xd0] sm:$0xff]
        %v941 = vld [vmem:[%s3 + $0xd8] sm:$0xff]
        %v942 = vld [vmem:[%s3 + $0xe0] sm:$0xff]
        %v943 = vld [vmem:[%s3 + $0xe8] sm:$0xff]
        %v944 = vld [vmem:[%s3 + $0xf0] sm:$0xff]
        %v945 = vld [vmem:[%s3 + $0xf8] sm:$0xff]
        %v946 = vld [vmem:[%s3 + $0x100] sm:$0xff]
        %v947 = vld [vmem:[%s3 + $0x108] sm:$0xff]
        %v948 = vld [vmem:[%s3 + $0x110] sm:$0xff]
        %v949 = vld [vmem:[%s3 + $0x118] sm:$0xff]
        %v950 = vld [vmem:[%s3 + $0x120] sm:$0xff]
        %v951 = vld [vmem:[%s3 + $0x128] sm:$0xff]
        %v952 = vld [vmem:[%s3 + $0x130] sm:$0xff]
        %v953 = vld [vmem:[%s3 + $0x138] sm:$0xff]
        %v954 = vld [vmem:[%s3 + $0x140] sm:$0xff]
        %v955 = vld [vmem:[%s3 + $0x148] sm:$0xff]
        %v956 = vld [vmem:[%s3 + $0x150] sm:$0xff]
        %v957 = vld [vmem:[%s3 + $0x158] sm:$0xff]
        %v958 = vld [vmem:[%s3 + $0x160] sm:$0xff]
        %v959 = vld [vmem:[%s3 + $0x168] sm:$0xff]
        %v960 = vld [vmem:[%s3 + $0x170] sm:$0xff]
        %v961 = vld [vmem:[%s3 + $0x178] sm:$0xff]
        %962 = vmatprep.subr.mxu0 %v915
        %963 = vmatpush1.msra.mxu0 %v914
        %964 = vmatprep.subr.mxu0 %v918
        %965 = vmatpush1.msra.mxu0 %v917
        %966 = vmatprep.subr.mxu0 %v921
        %967 = vmatpush1.msra.mxu0 %v920
        %968 = vmatprep.subr.mxu0 %v924
        %969 = vmatpush1.msra.mxu0 %v923
        %970 = vmatprep.subr.mxu0 %v927
        %971 = vmatpush1.msra.mxu0 %v926
        %972 = vmatprep.subr.mxu0 %v930
        %973 = vmatpush1.msra.mxu0 %v929
        %974 = vmatprep.subr.mxu0 %v933
        %975 = vmatpush1.msra.mxu0 %v932
        %976 = vmatprep.subr.mxu0 %v936
        %977 = vmatpush1.msra.mxu0 %v935
        %978 = vmatprep.subr.mxu0 %v939
        %979 = vmatpush1.msra.mxu0 %v938
        %980 = vmatprep.subr.mxu0 %v942
        %981 = vmatpush1.msra.mxu0 %v941
        %982 = vmatprep.subr.mxu0 %v945
        %983 = vmatpush1.msra.mxu0 %v944
        %984 = vmatprep.subr.mxu0 %v948
        %985 = vmatpush1.msra.mxu0 %v947
        %986 = vmatprep.subr.mxu0 %v951
        %987 = vmatpush1.msra.mxu0 %v950
        %988 = vmatprep.subr.mxu0 %v954
        %989 = vmatpush1.msra.mxu0 %v953
        %990 = vmatprep.subr.mxu0 %v957
        %991 = vmatpush1.msra.mxu0 %v956
        %992 = vmatprep.subr.mxu0 %v960
        %993 = vmatpush1.msra.mxu0 %v959
        %994 = vmatprep.subr.mxu0 0.0
        %995 = vmatpush1.msra.mxu0 0.0
        %996 = vmatprep.subr.mxu0 0.0
        %997 = vmatpush1.msra.mxu0 0.0
        %998 = vmatprep.subr.mxu0 0.0
        %999 = vmatpush1.msra.mxu0 0.0
        %1000 = vmatprep.subr.mxu0 0.0
        %1001 = vmatpush1.msra.mxu0 0.0
        %1002 = vmatprep.subr.mxu0 0.0
        %1003 = vmatpush1.msra.mxu0 0.0
        %1004 = vmatprep.subr.mxu0 0.0
        %1005 = vmatpush1.msra.mxu0 0.0
        %1006 = vmatprep.subr.mxu0 0.0
        %1007 = vmatpush1.msra.mxu0 0.0
        %1008 = vmatprep.subr.mxu0 0.0
        %1009 = vmatpush1.msra.mxu0 0.0
        %1010 = vmatprep.subr.mxu0 0.0
        %1011 = vmatpush1.msra.mxu0 0.0
        %1012 = vmatprep.subr.mxu0 0.0
        %1013 = vmatpush1.msra.mxu0 0.0
        %1014 = vmatprep.subr.mxu0 0.0
        %1015 = vmatpush1.msra.mxu0 0.0
        %1016 = vmatprep.subr.mxu0 0.0
        %1017 = vmatpush1.msra.mxu0 0.0
        %1018 = vmatprep.subr.mxu0 0.0
        %1019 = vmatpush1.msra.mxu0 0.0
        %1020 = vmatprep.subr.mxu0 0.0
        %1021 = vmatpush1.msra.mxu0 0.0
        %1022 = vmatprep.subr.mxu0 0.0
        %1023 = vmatpush1.msra.mxu0 0.0
        %1024 = vmatprep.subr.mxu0 0.0
        %1025 = vmatpush1.msra.mxu0 0.0
        %1026 = vmatprep.mubr.f32.mxu0 0.0
        %1027 = vmatmul.mubr.f32.gmra.mrb[0].mxu0 %v680
        %v1028 = vpop.f32.mrb[0].mxu0
        %v1029 = vadd.f32 0.0, %v1028
        %v1030 = vpop.f32.mrb[0].mxu0
        %v1031 = vadd.f32 0.0, %v1030
        %1032 = vdwg.mxu0
        %1033 = vmatprep.subr.mxu0 0.0
        %1034 = vmatpush1.msra.mxu0 %v916
        %1035 = vmatprep.subr.mxu0 0.0
        %1036 = vmatpush1.msra.mxu0 %v919
        %1037 = vmatprep.subr.mxu0 0.0
        %1038 = vmatpush1.msra.mxu0 %v922
        %1039 = vmatprep.subr.mxu0 0.0
        %1040 = vmatpush1.msra.mxu0 %v925
        %1041 = vmatprep.subr.mxu0 0.0
        %1042 = vmatpush1.msra.mxu0 %v928
        %1043 = vmatprep.subr.mxu0 0.0
        %1044 = vmatpush1.msra.mxu0 %v931
        %1045 = vmatprep.subr.mxu0 0.0
        %1046 = vmatpush1.msra.mxu0 %v934
        %1047 = vmatprep.subr.mxu0 0.0
        %1048 = vmatpush1.msra.mxu0 %v937
        %1049 = vmatprep.subr.mxu0 0.0
        %1050 = vmatpush1.msra.mxu0 %v940
        %1051 = vmatprep.subr.mxu0 0.0
        %1052 = vmatpush1.msra.mxu0 %v943
        %1053 = vmatprep.subr.mxu0 0.0
        %1054 = vmatpush1.msra.mxu0 %v946
        %1055 = vmatprep.subr.mxu0 0.0
        %1056 = vmatpush1.msra.mxu0 %v949
        %1057 = vmatprep.subr.mxu0 0.0
        %1058 = vmatpush1.msra.mxu0 %v952
        %1059 = vmatprep.subr.mxu0 0.0
        %1060 = vmatpush1.msra.mxu0 %v955
        %1061 = vmatprep.subr.mxu0 0.0
        %1062 = vmatpush1.msra.mxu0 %v958
        %1063 = vmatprep.subr.mxu0 0.0
        %1064 = vmatpush1.msra.mxu0 %v961
        %1065 = vmatprep.subr.mxu0 0.0
        %1066 = vmatpush1.msra.mxu0 0.0
        %1067 = vmatprep.subr.mxu0 0.0
        %1068 = vmatpush1.msra.mxu0 0.0
        %1069 = vmatprep.subr.mxu0 0.0
        %1070 = vmatpush1.msra.mxu0 0.0
        %1071 = vmatprep.subr.mxu0 0.0
        %1072 = vmatpush1.msra.mxu0 0.0
        %1073 = vmatprep.subr.mxu0 0.0
        %1074 = vmatpush1.msra.mxu0 0.0
        %1075 = vmatprep.subr.mxu0 0.0
        %1076 = vmatpush1.msra.mxu0 0.0
        %1077 = vmatprep.subr.mxu0 0.0
        %1078 = vmatpush1.msra.mxu0 0.0
        %1079 = vmatprep.subr.mxu0 0.0
        %1080 = vmatpush1.msra.mxu0 0.0
        %1081 = vmatprep.subr.mxu0 0.0
        %1082 = vmatpush1.msra.mxu0 0.0
        %1083 = vmatprep.subr.mxu0 0.0
        %1084 = vmatpush1.msra.mxu0 0.0
        %1085 = vmatprep.subr.mxu0 0.0
        %1086 = vmatpush1.msra.mxu0 0.0
        %1087 = vmatprep.subr.mxu0 0.0
        %1088 = vmatpush1.msra.mxu0 0.0
        %1089 = vmatprep.subr.mxu0 0.0
        %1090 = vmatpush1.msra.mxu0 0.0
        %1091 = vmatprep.subr.mxu0 0.0
        %1092 = vmatpush1.msra.mxu0 0.0
        %1093 = vmatprep.subr.mxu0 0.0
        %1094 = vmatpush1.msra.mxu0 0.0
        %1095 = vmatprep.subr.mxu0 0.0
        %1096 = vmatpush1.msra.mxu0 0.0
        %1097 = vmatprep.mubr.f32.mxu0 0.0
        %1098 = vmatmul.mubr.f32.gmra.mrb[0].mxu0 %v680
        %v1099 = vpop.f32.mrb[0].mxu0
        %v1100 = vadd.f32 0.0, %v1099
        %v1101 = vpop.f32.mrb[0].mxu0
        %1102 = vdwg.mxu0
        %v1103 = vadd.f32 %v910, %v1029
        %v1104 = vxor.u32 %v1103, 2147483648
        %v1105 = vmul.f32 %v1104, 1.442695
        %v1106 = vpow.pop %v1105
        %v1107 = vadd.f32 %v1106, 1.0
        %v1108 = vrcp.pop %v1107
        %v1109 = vmul.f32 1.0, %v1108
        %v1110 = vadd.f32 %v911, %v1031
        %v1111 = vxor.u32 %v1110, 2147483648
        %v1112 = vmul.f32 %v1111, 1.442695
        %v1113 = vpow.pop %v1112
        %v1114 = vadd.f32 %v1113, 1.0
        %v1115 = vrcp.pop %v1114
        %v1116 = vmul.f32 1.0, %v1115
        %v1117 = vadd.f32 %v1100, %v444
        %v1118 = vmul.f32 %v1109, %v1117
        %v1119 = vadd.f32 %v912, %v1118
        %v1120 = vtanh.pop %v1119
        %v1121 = vsub.f32 1.0, %v1116
        %v1122 = vmul.f32 %v1121, %v1120
        %v1123 = vmul.f32 %v1116, %v680
        %v1124 = vadd.f32 %v1122, %v1123
        %v1125 = vstv %s913
        %vm1126 = vcmp.lt.s32.totalorder %v1125, %v438
        %v1127 = vsel %vm1126, 1, 0
        %1128 = vset.pattern.permute.xlu0 0
        %1129 = vperm.xlu0 %1128, %v1127
        %v1130 = vpop.permute.xlu0 %1129
        %vm1131 = vcmp.eq.s32.totalorder %v1130, 1
        %v1132 = vsel %vm1131, %v1124, 0.0
        %v1133 = vsel %vm1131, %v1124, %v680
        %s1134 = scalar_lea.vmem %s419, 8
        %1135 = vst [vmem:[%s1134] sm:$0xff] %v1132
        %s1136 = scalar_lea.vmem %s412, 48
        %v1137 = vld [vmem:[%s1136] sm:$0xff]
        %v1138 = vld [vmem:[%s1136 + $0x8] sm:$0xff]
        %v1139 = vld [vmem:[%s1136 + $0x10] sm:$0xff]
        %s1140 = sadd.s32 %s455, 2
        %v1141 = vld [vmem:[#allocation4] sm:$0xff]
        %v1142 = vld [vmem:[#allocation4 + $0x8] sm:$0xff]
        %v1143 = vld [vmem:[#allocation4 + $0x10] sm:$0xff]
        %v1144 = vld [vmem:[#allocation4 + $0x18] sm:$0xff]
        %v1145 = vld [vmem:[#allocation4 + $0x20] sm:$0xff]
        %v1146 = vld [vmem:[#allocation4 + $0x28] sm:$0xff]
        %v1147 = vld [vmem:[#allocation4 + $0x30] sm:$0xff]
        %v1148 = vld [vmem:[#allocation4 + $0x38] sm:$0xff]
        %v1149 = vld [vmem:[#allocation4 + $0x40] sm:$0xff]
        %v1150 = vld [vmem:[#allocation4 + $0x48] sm:$0xff]
        %v1151 = vld [vmem:[#allocation4 + $0x50] sm:$0xff]
        %v1152 = vld [vmem:[#allocation4 + $0x58] sm:$0xff]
        %v1153 = vld [vmem:[#allocation4 + $0x60] sm:$0xff]
        %v1154 = vld [vmem:[#allocation4 + $0x68] sm:$0xff]
        %v1155 = vld [vmem:[#allocation4 + $0x70] sm:$0xff]
        %v1156 = vld [vmem:[#allocation4 + $0x78] sm:$0xff]
        %v1157 = vld [vmem:[#allocation4 + $0x80] sm:$0xff]
        %v1158 = vld [vmem:[#allocation4 + $0x88] sm:$0xff]
        %v1159 = vld [vmem:[#allocation4 + $0x90] sm:$0xff]
        %v1160 = vld [vmem:[#allocation4 + $0x98] sm:$0xff]
        %v1161 = vld [vmem:[#allocation4 + $0xa0] sm:$0xff]
        %v1162 = vld [vmem:[#allocation4 + $0xa8] sm:$0xff]
        %v1163 = vld [vmem:[#allocation4 + $0xb0] sm:$0xff]
        %v1164 = vld [vmem:[#allocation4 + $0xb8] sm:$0xff]
        %v1165 = vld [vmem:[#allocation4 + $0xc0] sm:$0xff]
        %v1166 = vld [vmem:[#allocation4 + $0xc8] sm:$0xff]
        %v1167 = vld [vmem:[#allocation4 + $0xd0] sm:$0xff]
        %v1168 = vld [vmem:[#allocation4 + $0xd8] sm:$0xff]
        %v1169 = vld [vmem:[#allocation4 + $0xe0] sm:$0xff]
        %v1170 = vld [vmem:[#allocation4 + $0xe8] sm:$0xff]
        %v1171 = vld [vmem:[#allocation4 + $0xf0] sm:$0xff]
        %v1172 = vld [vmem:[#allocation4 + $0xf8] sm:$0xff]
        %v1173 = vld [vmem:[#allocation4 + $0x100] sm:$0xff]
        %v1174 = vld [vmem:[#allocation4 + $0x108] sm:$0xff]
        %v1175 = vld [vmem:[#allocation4 + $0x110] sm:$0xff]
        %v1176 = vld [vmem:[#allocation4 + $0x118] sm:$0xff]
        %v1177 = vld [vmem:[#allocation4 + $0x120] sm:$0xff]
        %v1178 = vld [vmem:[#allocation4 + $0x128] sm:$0xff]
        %v1179 = vld [vmem:[#allocation4 + $0x130] sm:$0xff]
        %v1180 = vld [vmem:[#allocation4 + $0x138] sm:$0xff]
        %v1181 = vld [vmem:[#allocation4 + $0x140] sm:$0xff]
        %v1182 = vld [vmem:[#allocation4 + $0x148] sm:$0xff]
        %v1183 = vld [vmem:[#allocation4 + $0x150] sm:$0xff]
        %v1184 = vld [vmem:[#allocation4 + $0x158] sm:$0xff]
        %v1185 = vld [vmem:[#allocation4 + $0x160] sm:$0xff]
        %v1186 = vld [vmem:[#allocation4 + $0x168] sm:$0xff]
        %v1187 = vld [vmem:[#allocation4 + $0x170] sm:$0xff]
        %v1188 = vld [vmem:[#allocation4 + $0x178] sm:$0xff]
        %1189 = vmatprep.subr.mxu0 %v1142
        %1190 = vmatpush1.msra.mxu0 %v1141
        %1191 = vmatprep.subr.mxu0 %v1145
        %1192 = vmatpush1.msra.mxu0 %v1144
        %1193 = vmatprep.subr.mxu0 %v1148
        %1194 = vmatpush1.msra.mxu0 %v1147
        %1195 = vmatprep.subr.mxu0 %v1151
        %1196 = vmatpush1.msra.mxu0 %v1150
        %1197 = vmatprep.subr.mxu0 %v1154
        %1198 = vmatpush1.msra.mxu0 %v1153
        %1199 = vmatprep.subr.mxu0 %v1157
        %1200 = vmatpush1.msra.mxu0 %v1156
        %1201 = vmatprep.subr.mxu0 %v1160
        %1202 = vmatpush1.msra.mxu0 %v1159
        %1203 = vmatprep.subr.mxu0 %v1163
        %1204 = vmatpush1.msra.mxu0 %v1162
        %1205 = vmatprep.subr.mxu0 %v1166
        %1206 = vmatpush1.msra.mxu0 %v1165
        %1207 = vmatprep.subr.mxu0 %v1169
        %1208 = vmatpush1.msra.mxu0 %v1168
        %1209 = vmatprep.subr.mxu0 %v1172
        %1210 = vmatpush1.msra.mxu0 %v1171
        %1211 = vmatprep.subr.mxu0 %v1175
        %1212 = vmatpush1.msra.mxu0 %v1174
        %1213 = vmatprep.subr.mxu0 %v1178
        %1214 = vmatpush1.msra.mxu0 %v1177
        %1215 = vmatprep.subr.mxu0 %v1181
        %1216 = vmatpush1.msra.mxu0 %v1180
        %1217 = vmatprep.subr.mxu0 %v1184
        %1218 = vmatpush1.msra.mxu0 %v1183
        %1219 = vmatprep.subr.mxu0 %v1187
        %1220 = vmatpush1.msra.mxu0 %v1186
        %1221 = vmatprep.subr.mxu0 0.0
        %1222 = vmatpush1.msra.mxu0 0.0
        %1223 = vmatprep.subr.mxu0 0.0
        %1224 = vmatpush1.msra.mxu0 0.0
        %1225 = vmatprep.subr.mxu0 0.0
        %1226 = vmatpush1.msra.mxu0 0.0
        %1227 = vmatprep.subr.mxu0 0.0
        %1228 = vmatpush1.msra.mxu0 0.0
        %1229 = vmatprep.subr.mxu0 0.0
        %1230 = vmatpush1.msra.mxu0 0.0
        %1231 = vmatprep.subr.mxu0 0.0
        %1232 = vmatpush1.msra.mxu0 0.0
        %1233 = vmatprep.subr.mxu0 0.0
        %1234 = vmatpush1.msra.mxu0 0.0
        %1235 = vmatprep.subr.mxu0 0.0
        %1236 = vmatpush1.msra.mxu0 0.0
        %1237 = vmatprep.subr.mxu0 0.0
        %1238 = vmatpush1.msra.mxu0 0.0
        %1239 = vmatprep.subr.mxu0 0.0
        %1240 = vmatpush1.msra.mxu0 0.0
        %1241 = vmatprep.subr.mxu0 0.0
        %1242 = vmatpush1.msra.mxu0 0.0
        %1243 = vmatprep.subr.mxu0 0.0
        %1244 = vmatpush1.msra.mxu0 0.0
        %1245 = vmatprep.subr.mxu0 0.0
        %1246 = vmatpush1.msra.mxu0 0.0
        %1247 = vmatprep.subr.mxu0 0.0
        %1248 = vmatpush1.msra.mxu0 0.0
        %1249 = vmatprep.subr.mxu0 0.0
        %1250 = vmatpush1.msra.mxu0 0.0
        %1251 = vmatprep.subr.mxu0 0.0
        %1252 = vmatpush1.msra.mxu0 0.0
        %1253 = vmatprep.mubr.f32.mxu0 0.0
        %1254 = vmatmul.mubr.f32.gmra.mrb[0].mxu0 %v906
        %v1255 = vpop.f32.mrb[0].mxu0
        %v1256 = vadd.f32 0.0, %v1255
        %v1257 = vpop.f32.mrb[0].mxu0
        %v1258 = vadd.f32 0.0, %v1257
        %1259 = vdwg.mxu0
        %1260 = vmatprep.subr.mxu0 0.0
        %1261 = vmatpush1.msra.mxu0 %v1143
        %1262 = vmatprep.subr.mxu0 0.0
        %1263 = vmatpush1.msra.mxu0 %v1146
        %1264 = vmatprep.subr.mxu0 0.0
        %1265 = vmatpush1.msra.mxu0 %v1149
        %1266 = vmatprep.subr.mxu0 0.0
        %1267 = vmatpush1.msra.mxu0 %v1152
        %1268 = vmatprep.subr.mxu0 0.0
        %1269 = vmatpush1.msra.mxu0 %v1155
        %1270 = vmatprep.subr.mxu0 0.0
        %1271 = vmatpush1.msra.mxu0 %v1158
        %1272 = vmatprep.subr.mxu0 0.0
        %1273 = vmatpush1.msra.mxu0 %v1161
        %1274 = vmatprep.subr.mxu0 0.0
        %1275 = vmatpush1.msra.mxu0 %v1164
        %1276 = vmatprep.subr.mxu0 0.0
        %1277 = vmatpush1.msra.mxu0 %v1167
        %1278 = vmatprep.subr.mxu0 0.0
        %1279 = vmatpush1.msra.mxu0 %v1170
        %1280 = vmatprep.subr.mxu0 0.0
        %1281 = vmatpush1.msra.mxu0 %v1173
        %1282 = vmatprep.subr.mxu0 0.0
        %1283 = vmatpush1.msra.mxu0 %v1176
        %1284 = vmatprep.subr.mxu0 0.0
        %1285 = vmatpush1.msra.mxu0 %v1179
        %1286 = vmatprep.subr.mxu0 0.0
        %1287 = vmatpush1.msra.mxu0 %v1182
        %1288 = vmatprep.subr.mxu0 0.0
        %1289 = vmatpush1.msra.mxu0 %v1185
        %1290 = vmatprep.subr.mxu0 0.0
        %1291 = vmatpush1.msra.mxu0 %v1188
        %1292 = vmatprep.subr.mxu0 0.0
        %1293 = vmatpush1.msra.mxu0 0.0
        %1294 = vmatprep.subr.mxu0 0.0
        %1295 = vmatpush1.msra.mxu0 0.0
        %1296 = vmatprep.subr.mxu0 0.0
        %1297 = vmatpush1.msra.mxu0 0.0
        %1298 = vmatprep.subr.mxu0 0.0
        %1299 = vmatpush1.msra.mxu0 0.0
        %1300 = vmatprep.subr.mxu0 0.0
        %1301 = vmatpush1.msra.mxu0 0.0
        %1302 = vmatprep.subr.mxu0 0.0
        %1303 = vmatpush1.msra.mxu0 0.0
        %1304 = vmatprep.subr.mxu0 0.0
        %1305 = vmatpush1.msra.mxu0 0.0
        %1306 = vmatprep.subr.mxu0 0.0
        %1307 = vmatpush1.msra.mxu0 0.0
        %1308 = vmatprep.subr.mxu0 0.0
        %1309 = vmatpush1.msra.mxu0 0.0
        %1310 = vmatprep.subr.mxu0 0.0
        %1311 = vmatpush1.msra.mxu0 0.0
        %1312 = vmatprep.subr.mxu0 0.0
        %1313 = vmatpush1.msra.mxu0 0.0
        %1314 = vmatprep.subr.mxu0 0.0
        %1315 = vmatpush1.msra.mxu0 0.0
        %1316 = vmatprep.subr.mxu0 0.0
        %1317 = vmatpush1.msra.mxu0 0.0
        %1318 = vmatprep.subr.mxu0 0.0
        %1319 = vmatpush1.msra.mxu0 0.0
        %1320 = vmatprep.subr.mxu0 0.0
        %1321 = vmatpush1.msra.mxu0 0.0
        %1322 = vmatprep.subr.mxu0 0.0
        %1323 = vmatpush1.msra.mxu0 0.0
        %1324 = vmatprep.mubr.f32.mxu0 0.0
        %1325 = vmatmul.mubr.f32.gmra.mrb[0].mxu0 %v906
        %v1326 = vpop.f32.mrb[0].mxu0
        %v1327 = vadd.f32 0.0, %v1326
        %v1328 = vpop.f32.mrb[0].mxu0
        %1329 = vdwg.mxu0
        %v1330 = vadd.f32 %v1137, %v1256
        %v1331 = vxor.u32 %v1330, 2147483648
        %v1332 = vmul.f32 %v1331, 1.442695
        %v1333 = vpow.pop %v1332
        %v1334 = vadd.f32 %v1333, 1.0
        %v1335 = vrcp.pop %v1334
        %v1336 = vmul.f32 1.0, %v1335
        %v1337 = vadd.f32 %v1138, %v1258
        %v1338 = vxor.u32 %v1337, 2147483648
        %v1339 = vmul.f32 %v1338, 1.442695
        %v1340 = vpow.pop %v1339
        %v1341 = vadd.f32 %v1340, 1.0
        %v1342 = vrcp.pop %v1341
        %v1343 = vmul.f32 1.0, %v1342
        %v1344 = vadd.f32 %v1327, %v451
        %v1345 = vmul.f32 %v1336, %v1344
        %v1346 = vadd.f32 %v1139, %v1345
        %v1347 = vtanh.pop %v1346
        %v1348 = vsub.f32 1.0, %v1343
        %v1349 = vmul.f32 %v1348, %v1347
        %v1350 = vmul.f32 %v1343, %v906
        %v1351 = vadd.f32 %v1349, %v1350
        %v1352 = vstv %s1140
        %vm1353 = vcmp.lt.s32.totalorder %v1352, %v438
        %v1354 = vsel %vm1353, 1, 0
        %1355 = vset.pattern.permute.xlu0 0
        %1356 = vperm.xlu0 %1355, %v1354
        %v1357 = vpop.permute.xlu0 %1356
        %vm1358 = vcmp.eq.s32.totalorder %v1357, 1
        %v1359 = vsel %vm1358, %v1351, 0.0
        %v1360 = vsel %vm1358, %v1351, %v906
        %s1361 = scalar_lea.vmem %s426, 16
        %1362 = vst [vmem:[%s1361] sm:$0xff] %v1359
        %s1363 = scalar_lea.vmem %s404, 48
        %v1364 = vld [vmem:[%s1363] sm:$0xff]
        %v1365 = vld [vmem:[%s1363 + $0x8] sm:$0xff]
        %v1366 = vld [vmem:[%s1363 + $0x10] sm:$0xff]
        %s1367 = sadd.s32 %s453, 2
        %v1368 = vld [vmem:[%s3] sm:$0xff]
        %v1369 = vld [vmem:[%s3 + $0x8] sm:$0xff]
        %v1370 = vld [vmem:[%s3 + $0x10] sm:$0xff]
        %v1371 = vld [vmem:[%s3 + $0x18] sm:$0xff]
        %v1372 = vld [vmem:[%s3 + $0x20] sm:$0xff]
        %v1373 = vld [vmem:[%s3 + $0x28] sm:$0xff]
        %v1374 = vld [vmem:[%s3 + $0x30] sm:$0xff]
        %v1375 = vld [vmem:[%s3 + $0x38] sm:$0xff]
        %v1376 = vld [vmem:[%s3 + $0x40] sm:$0xff]
        %v1377 = vld [vmem:[%s3 + $0x48] sm:$0xff]
        %v1378 = vld [vmem:[%s3 + $0x50] sm:$0xff]
        %v1379 = vld [vmem:[%s3 + $0x58] sm:$0xff]
        %v1380 = vld [vmem:[%s3 + $0x60] sm:$0xff]
        %v1381 = vld [vmem:[%s3 + $0x68] sm:$0xff]
        %v1382 = vld [vmem:[%s3 + $0x70] sm:$0xff]
        %v1383 = vld [vmem:[%s3 + $0x78] sm:$0xff]
        %v1384 = vld [vmem:[%s3 + $0x80] sm:$0xff]
        %v1385 = vld [vmem:[%s3 + $0x88] sm:$0xff]
        %v1386 = vld [vmem:[%s3 + $0x90] sm:$0xff]
        %v1387 = vld [vmem:[%s3 + $0x98] sm:$0xff]
        %v1388 = vld [vmem:[%s3 + $0xa0] sm:$0xff]
        %v1389 = vld [vmem:[%s3 + $0xa8] sm:$0xff]
        %v1390 = vld [vmem:[%s3 + $0xb0] sm:$0xff]
        %v1391 = vld [vmem:[%s3 + $0xb8] sm:$0xff]
        %v1392 = vld [vmem:[%s3 + $0xc0] sm:$0xff]
        %v1393 = vld [vmem:[%s3 + $0xc8] sm:$0xff]
        %v1394 = vld [vmem:[%s3 + $0xd0] sm:$0xff]
        %v1395 = vld [vmem:[%s3 + $0xd8] sm:$0xff]
        %v1396 = vld [vmem:[%s3 + $0xe0] sm:$0xff]
        %v1397 = vld [vmem:[%s3 + $0xe8] sm:$0xff]
        %v1398 = vld [vmem:[%s3 + $0xf0] sm:$0xff]
        %v1399 = vld [vmem:[%s3 + $0xf8] sm:$0xff]
        %v1400 = vld [vmem:[%s3 + $0x100] sm:$0xff]
        %v1401 = vld [vmem:[%s3 + $0x108] sm:$0xff]
        %v1402 = vld [vmem:[%s3 + $0x110] sm:$0xff]
        %v1403 = vld [vmem:[%s3 + $0x118] sm:$0xff]
        %v1404 = vld [vmem:[%s3 + $0x120] sm:$0xff]
        %v1405 = vld [vmem:[%s3 + $0x128] sm:$0xff]
        %v1406 = vld [vmem:[%s3 + $0x130] sm:$0xff]
        %v1407 = vld [vmem:[%s3 + $0x138] sm:$0xff]
        %v1408 = vld [vmem:[%s3 + $0x140] sm:$0xff]
        %v1409 = vld [vmem:[%s3 + $0x148] sm:$0xff]
        %v1410 = vld [vmem:[%s3 + $0x150] sm:$0xff]
        %v1411 = vld [vmem:[%s3 + $0x158] sm:$0xff]
        %v1412 = vld [vmem:[%s3 + $0x160] sm:$0xff]
        %v1413 = vld [vmem:[%s3 + $0x168] sm:$0xff]
        %v1414 = vld [vmem:[%s3 + $0x170] sm:$0xff]
        %v1415 = vld [vmem:[%s3 + $0x178] sm:$0xff]
        %1416 = vmatprep.subr.mxu0 %v1369
        %1417 = vmatpush1.msra.mxu0 %v1368
        %1418 = vmatprep.subr.mxu0 %v1372
        %1419 = vmatpush1.msra.mxu0 %v1371
        %1420 = vmatprep.subr.mxu0 %v1375
        %1421 = vmatpush1.msra.mxu0 %v1374
        %1422 = vmatprep.subr.mxu0 %v1378
        %1423 = vmatpush1.msra.mxu0 %v1377
        %1424 = vmatprep.subr.mxu0 %v1381
        %1425 = vmatpush1.msra.mxu0 %v1380
        %1426 = vmatprep.subr.mxu0 %v1384
        %1427 = vmatpush1.msra.mxu0 %v1383
        %1428 = vmatprep.subr.mxu0 %v1387
        %1429 = vmatpush1.msra.mxu0 %v1386
        %1430 = vmatprep.subr.mxu0 %v1390
        %1431 = vmatpush1.msra.mxu0 %v1389
        %1432 = vmatprep.subr.mxu0 %v1393
        %1433 = vmatpush1.msra.mxu0 %v1392
        %1434 = vmatprep.subr.mxu0 %v1396
        %1435 = vmatpush1.msra.mxu0 %v1395
        %1436 = vmatprep.subr.mxu0 %v1399
        %1437 = vmatpush1.msra.mxu0 %v1398
        %1438 = vmatprep.subr.mxu0 %v1402
        %1439 = vmatpush1.msra.mxu0 %v1401
        %1440 = vmatprep.subr.mxu0 %v1405
        %1441 = vmatpush1.msra.mxu0 %v1404
        %1442 = vmatprep.subr.mxu0 %v1408
        %1443 = vmatpush1.msra.mxu0 %v1407
        %1444 = vmatprep.subr.mxu0 %v1411
        %1445 = vmatpush1.msra.mxu0 %v1410
        %1446 = vmatprep.subr.mxu0 %v1414
        %1447 = vmatpush1.msra.mxu0 %v1413
        %1448 = vmatprep.subr.mxu0 0.0
        %1449 = vmatpush1.msra.mxu0 0.0
        %1450 = vmatprep.subr.mxu0 0.0
        %1451 = vmatpush1.msra.mxu0 0.0
        %1452 = vmatprep.subr.mxu0 0.0
        %1453 = vmatpush1.msra.mxu0 0.0
        %1454 = vmatprep.subr.mxu0 0.0
        %1455 = vmatpush1.msra.mxu0 0.0
        %1456 = vmatprep.subr.mxu0 0.0
        %1457 = vmatpush1.msra.mxu0 0.0
        %1458 = vmatprep.subr.mxu0 0.0
        %1459 = vmatpush1.msra.mxu0 0.0
        %1460 = vmatprep.subr.mxu0 0.0
        %1461 = vmatpush1.msra.mxu0 0.0
        %1462 = vmatprep.subr.mxu0 0.0
        %1463 = vmatpush1.msra.mxu0 0.0
        %1464 = vmatprep.subr.mxu0 0.0
        %1465 = vmatpush1.msra.mxu0 0.0
        %1466 = vmatprep.subr.mxu0 0.0
        %1467 = vmatpush1.msra.mxu0 0.0
        %1468 = vmatprep.subr.mxu0 0.0
        %1469 = vmatpush1.msra.mxu0 0.0
        %1470 = vmatprep.subr.mxu0 0.0
        %1471 = vmatpush1.msra.mxu0 0.0
        %1472 = vmatprep.subr.mxu0 0.0
        %1473 = vmatpush1.msra.mxu0 0.0
        %1474 = vmatprep.subr.mxu0 0.0
        %1475 = vmatpush1.msra.mxu0 0.0
        %1476 = vmatprep.subr.mxu0 0.0
        %1477 = vmatpush1.msra.mxu0 0.0
        %1478 = vmatprep.subr.mxu0 0.0
        %1479 = vmatpush1.msra.mxu0 0.0
        %1480 = vmatprep.mubr.f32.mxu0 0.0
        %1481 = vmatmul.mubr.f32.gmra.mrb[0].mxu0 %v1133
        %v1482 = vpop.f32.mrb[0].mxu0
        %v1483 = vadd.f32 0.0, %v1482
        %v1484 = vpop.f32.mrb[0].mxu0
        %v1485 = vadd.f32 0.0, %v1484
        %1486 = vdwg.mxu0
        %1487 = vmatprep.subr.mxu0 0.0
        %1488 = vmatpush1.msra.mxu0 %v1370
        %1489 = vmatprep.subr.mxu0 0.0
        %1490 = vmatpush1.msra.mxu0 %v1373
        %1491 = vmatprep.subr.mxu0 0.0
        %1492 = vmatpush1.msra.mxu0 %v1376
        %1493 = vmatprep.subr.mxu0 0.0
        %1494 = vmatpush1.msra.mxu0 %v1379
        %1495 = vmatprep.subr.mxu0 0.0
        %1496 = vmatpush1.msra.mxu0 %v1382
        %1497 = vmatprep.subr.mxu0 0.0
        %1498 = vmatpush1.msra.mxu0 %v1385
        %1499 = vmatprep.subr.mxu0 0.0
        %1500 = vmatpush1.msra.mxu0 %v1388
        %1501 = vmatprep.subr.mxu0 0.0
        %1502 = vmatpush1.msra.mxu0 %v1391
        %1503 = vmatprep.subr.mxu0 0.0
        %1504 = vmatpush1.msra.mxu0 %v1394
        %1505 = vmatprep.subr.mxu0 0.0
        %1506 = vmatpush1.msra.mxu0 %v1397
        %1507 = vmatprep.subr.mxu0 0.0
        %1508 = vmatpush1.msra.mxu0 %v1400
        %1509 = vmatprep.subr.mxu0 0.0
        %1510 = vmatpush1.msra.mxu0 %v1403
        %1511 = vmatprep.subr.mxu0 0.0
        %1512 = vmatpush1.msra.mxu0 %v1406
        %1513 = vmatprep.subr.mxu0 0.0
        %1514 = vmatpush1.msra.mxu0 %v1409
        %1515 = vmatprep.subr.mxu0 0.0
        %1516 = vmatpush1.msra.mxu0 %v1412
        %1517 = vmatprep.subr.mxu0 0.0
        %1518 = vmatpush1.msra.mxu0 %v1415
        %1519 = vmatprep.subr.mxu0 0.0
        %1520 = vmatpush1.msra.mxu0 0.0
        %1521 = vmatprep.subr.mxu0 0.0
        %1522 = vmatpush1.msra.mxu0 0.0
        %1523 = vmatprep.subr.mxu0 0.0
        %1524 = vmatpush1.msra.mxu0 0.0
        %1525 = vmatprep.subr.mxu0 0.0
        %1526 = vmatpush1.msra.mxu0 0.0
        %1527 = vmatprep.subr.mxu0 0.0
        %1528 = vmatpush1.msra.mxu0 0.0
        %1529 = vmatprep.subr.mxu0 0.0
        %1530 = vmatpush1.msra.mxu0 0.0
        %1531 = vmatprep.subr.mxu0 0.0
        %1532 = vmatpush1.msra.mxu0 0.0
        %1533 = vmatprep.subr.mxu0 0.0
        %1534 = vmatpush1.msra.mxu0 0.0
        %1535 = vmatprep.subr.mxu0 0.0
        %1536 = vmatpush1.msra.mxu0 0.0
        %1537 = vmatprep.subr.mxu0 0.0
        %1538 = vmatpush1.msra.mxu0 0.0
        %1539 = vmatprep.subr.mxu0 0.0
        %1540 = vmatpush1.msra.mxu0 0.0
        %1541 = vmatprep.subr.mxu0 0.0
        %1542 = vmatpush1.msra.mxu0 0.0
        %1543 = vmatprep.subr.mxu0 0.0
        %1544 = vmatpush1.msra.mxu0 0.0
        %1545 = vmatprep.subr.mxu0 0.0
        %1546 = vmatpush1.msra.mxu0 0.0
        %1547 = vmatprep.subr.mxu0 0.0
        %1548 = vmatpush1.msra.mxu0 0.0
        %1549 = vmatprep.subr.mxu0 0.0
        %1550 = vmatpush1.msra.mxu0 0.0
        %1551 = vmatprep.mubr.f32.mxu0 0.0
        %1552 = vmatmul.mubr.f32.gmra.mrb[0].mxu0 %v1133
        %v1553 = vpop.f32.mrb[0].mxu0
        %v1554 = vadd.f32 0.0, %v1553
        %v1555 = vpop.f32.mrb[0].mxu0
        %1556 = vdwg.mxu0
        %v1557 = vadd.f32 %v1364, %v1483
        %v1558 = vxor.u32 %v1557, 2147483648
        %v1559 = vmul.f32 %v1558, 1.442695
        %v1560 = vpow.pop %v1559
        %v1561 = vadd.f32 %v1560, 1.0
        %v1562 = vrcp.pop %v1561
        %v1563 = vmul.f32 1.0, %v1562
        %v1564 = vadd.f32 %v1365, %v1485
        %v1565 = vxor.u32 %v1564, 2147483648
        %v1566 = vmul.f32 %v1565, 1.442695
        %v1567 = vpow.pop %v1566
        %v1568 = vadd.f32 %v1567, 1.0
        %v1569 = vrcp.pop %v1568
        %v1570 = vmul.f32 1.0, %v1569
        %v1571 = vadd.f32 %v1554, %v444
        %v1572 = vmul.f32 %v1563, %v1571
        %v1573 = vadd.f32 %v1366, %v1572
        %v1574 = vtanh.pop %v1573
        %v1575 = vsub.f32 1.0, %v1570
        %v1576 = vmul.f32 %v1575, %v1574
        %v1577 = vmul.f32 %v1570, %v1133
        %v1578 = vadd.f32 %v1576, %v1577
        %v1579 = vstv %s1367
        %vm1580 = vcmp.lt.s32.totalorder %v1579, %v438
        %v1581 = vsel %vm1580, 1, 0
        %1582 = vset.pattern.permute.xlu0 0
        %1583 = vperm.xlu0 %1582, %v1581
        %v1584 = vpop.permute.xlu0 %1583
        %vm1585 = vcmp.eq.s32.totalorder %v1584, 1
        %v1586 = vsel %vm1585, %v1578, 0.0
        %v1587 = vsel %vm1585, %v1578, %v1133
        %s1588 = scalar_lea.vmem %s419, 16
        %1589 = vst [vmem:[%s1588] sm:$0xff] %v1586
        %s1590 = scalar_lea.vmem %s412, 24
        %v1591 = vld [vmem:[%s1590] sm:$0xff]
        %v1592 = vld [vmem:[%s1590 + $0x8] sm:$0xff]
        %v1593 = vld [vmem:[%s1590 + $0x10] sm:$0xff]
        %s1594 = sadd.s32 %s455, 1
        %v1595 = vld [vmem:[#allocation4] sm:$0xff]
        %v1596 = vld [vmem:[#allocation4 + $0x8] sm:$0xff]
        %v1597 = vld [vmem:[#allocation4 + $0x10] sm:$0xff]
        %v1598 = vld [vmem:[#allocation4 + $0x18] sm:$0xff]
        %v1599 = vld [vmem:[#allocation4 + $0x20] sm:$0xff]
        %v1600 = vld [vmem:[#allocation4 + $0x28] sm:$0xff]
        %v1601 = vld [vmem:[#allocation4 + $0x30] sm:$0xff]
        %v1602 = vld [vmem:[#allocation4 + $0x38] sm:$0xff]
        %v1603 = vld [vmem:[#allocation4 + $0x40] sm:$0xff]
        %v1604 = vld [vmem:[#allocation4 + $0x48] sm:$0xff]
        %v1605 = vld [vmem:[#allocation4 + $0x50] sm:$0xff]
        %v1606 = vld [vmem:[#allocation4 + $0x58] sm:$0xff]
        %v1607 = vld [vmem:[#allocation4 + $0x60] sm:$0xff]
        %v1608 = vld [vmem:[#allocation4 + $0x68] sm:$0xff]
        %v1609 = vld [vmem:[#allocation4 + $0x70] sm:$0xff]
        %v1610 = vld [vmem:[#allocation4 + $0x78] sm:$0xff]
        %v1611 = vld [vmem:[#allocation4 + $0x80] sm:$0xff]
        %v1612 = vld [vmem:[#allocation4 + $0x88] sm:$0xff]
        %v1613 = vld [vmem:[#allocation4 + $0x90] sm:$0xff]
        %v1614 = vld [vmem:[#allocation4 + $0x98] sm:$0xff]
        %v1615 = vld [vmem:[#allocation4 + $0xa0] sm:$0xff]
        %v1616 = vld [vmem:[#allocation4 + $0xa8] sm:$0xff]
        %v1617 = vld [vmem:[#allocation4 + $0xb0] sm:$0xff]
        %v1618 = vld [vmem:[#allocation4 + $0xb8] sm:$0xff]
        %v1619 = vld [vmem:[#allocation4 + $0xc0] sm:$0xff]
        %v1620 = vld [vmem:[#allocation4 + $0xc8] sm:$0xff]
        %v1621 = vld [vmem:[#allocation4 + $0xd0] sm:$0xff]
        %v1622 = vld [vmem:[#allocation4 + $0xd8] sm:$0xff]
        %v1623 = vld [vmem:[#allocation4 + $0xe0] sm:$0xff]
        %v1624 = vld [vmem:[#allocation4 + $0xe8] sm:$0xff]
        %v1625 = vld [vmem:[#allocation4 + $0xf0] sm:$0xff]
        %v1626 = vld [vmem:[#allocation4 + $0xf8] sm:$0xff]
        %v1627 = vld [vmem:[#allocation4 + $0x100] sm:$0xff]
        %v1628 = vld [vmem:[#allocation4 + $0x108] sm:$0xff]
        %v1629 = vld [vmem:[#allocation4 + $0x110] sm:$0xff]
        %v1630 = vld [vmem:[#allocation4 + $0x118] sm:$0xff]
        %v1631 = vld [vmem:[#allocation4 + $0x120] sm:$0xff]
        %v1632 = vld [vmem:[#allocation4 + $0x128] sm:$0xff]
        %v1633 = vld [vmem:[#allocation4 + $0x130] sm:$0xff]
        %v1634 = vld [vmem:[#allocation4 + $0x138] sm:$0xff]
        %v1635 = vld [vmem:[#allocation4 + $0x140] sm:$0xff]
        %v1636 = vld [vmem:[#allocation4 + $0x148] sm:$0xff]
        %v1637 = vld [vmem:[#allocation4 + $0x150] sm:$0xff]
        %v1638 = vld [vmem:[#allocation4 + $0x158] sm:$0xff]
        %v1639 = vld [vmem:[#allocation4 + $0x160] sm:$0xff]
        %v1640 = vld [vmem:[#allocation4 + $0x168] sm:$0xff]
        %v1641 = vld [vmem:[#allocation4 + $0x170] sm:$0xff]
        %v1642 = vld [vmem:[#allocation4 + $0x178] sm:$0xff]
        %1643 = vmatprep.subr.mxu0 %v1596
        %1644 = vmatpush1.msra.mxu0 %v1595
        %1645 = vmatprep.subr.mxu0 %v1599
        %1646 = vmatpush1.msra.mxu0 %v1598
        %1647 = vmatprep.subr.mxu0 %v1602
        %1648 = vmatpush1.msra.mxu0 %v1601
        %1649 = vmatprep.subr.mxu0 %v1605
        %1650 = vmatpush1.msra.mxu0 %v1604
        %1651 = vmatprep.subr.mxu0 %v1608
        %1652 = vmatpush1.msra.mxu0 %v1607
        %1653 = vmatprep.subr.mxu0 %v1611
        %1654 = vmatpush1.msra.mxu0 %v1610
        %1655 = vmatprep.subr.mxu0 %v1614
        %1656 = vmatpush1.msra.mxu0 %v1613
        %1657 = vmatprep.subr.mxu0 %v1617
        %1658 = vmatpush1.msra.mxu0 %v1616
        %1659 = vmatprep.subr.mxu0 %v1620
        %1660 = vmatpush1.msra.mxu0 %v1619
        %1661 = vmatprep.subr.mxu0 %v1623
        %1662 = vmatpush1.msra.mxu0 %v1622
        %1663 = vmatprep.subr.mxu0 %v1626
        %1664 = vmatpush1.msra.mxu0 %v1625
        %1665 = vmatprep.subr.mxu0 %v1629
        %1666 = vmatpush1.msra.mxu0 %v1628
        %1667 = vmatprep.subr.mxu0 %v1632
        %1668 = vmatpush1.msra.mxu0 %v1631
        %1669 = vmatprep.subr.mxu0 %v1635
        %1670 = vmatpush1.msra.mxu0 %v1634
        %1671 = vmatprep.subr.mxu0 %v1638
        %1672 = vmatpush1.msra.mxu0 %v1637
        %1673 = vmatprep.subr.mxu0 %v1641
        %1674 = vmatpush1.msra.mxu0 %v1640
        %1675 = vmatprep.subr.mxu0 0.0
        %1676 = vmatpush1.msra.mxu0 0.0
        %1677 = vmatprep.subr.mxu0 0.0
        %1678 = vmatpush1.msra.mxu0 0.0
        %1679 = vmatprep.subr.mxu0 0.0
        %1680 = vmatpush1.msra.mxu0 0.0
        %1681 = vmatprep.subr.mxu0 0.0
        %1682 = vmatpush1.msra.mxu0 0.0
        %1683 = vmatprep.subr.mxu0 0.0
        %1684 = vmatpush1.msra.mxu0 0.0
        %1685 = vmatprep.subr.mxu0 0.0
        %1686 = vmatpush1.msra.mxu0 0.0
        %1687 = vmatprep.subr.mxu0 0.0
        %1688 = vmatpush1.msra.mxu0 0.0
        %1689 = vmatprep.subr.mxu0 0.0
        %1690 = vmatpush1.msra.mxu0 0.0
        %1691 = vmatprep.subr.mxu0 0.0
        %1692 = vmatpush1.msra.mxu0 0.0
        %1693 = vmatprep.subr.mxu0 0.0
        %1694 = vmatpush1.msra.mxu0 0.0
        %1695 = vmatprep.subr.mxu0 0.0
        %1696 = vmatpush1.msra.mxu0 0.0
        %1697 = vmatprep.subr.mxu0 0.0
        %1698 = vmatpush1.msra.mxu0 0.0
        %1699 = vmatprep.subr.mxu0 0.0
        %1700 = vmatpush1.msra.mxu0 0.0
        %1701 = vmatprep.subr.mxu0 0.0
        %1702 = vmatpush1.msra.mxu0 0.0
        %1703 = vmatprep.subr.mxu0 0.0
        %1704 = vmatpush1.msra.mxu0 0.0
        %1705 = vmatprep.subr.mxu0 0.0
        %1706 = vmatpush1.msra.mxu0 0.0
        %1707 = vmatprep.mubr.f32.mxu0 0.0
        %1708 = vmatmul.mubr.f32.gmra.mrb[0].mxu0 %v1360
        %v1709 = vpop.f32.mrb[0].mxu0
        %v1710 = vadd.f32 0.0, %v1709
        %v1711 = vpop.f32.mrb[0].mxu0
        %v1712 = vadd.f32 0.0, %v1711
        %1713 = vdwg.mxu0
        %1714 = vmatprep.subr.mxu0 0.0
        %1715 = vmatpush1.msra.mxu0 %v1597
        %1716 = vmatprep.subr.mxu0 0.0
        %1717 = vmatpush1.msra.mxu0 %v1600
        %1718 = vmatprep.subr.mxu0 0.0
        %1719 = vmatpush1.msra.mxu0 %v1603
        %1720 = vmatprep.subr.mxu0 0.0
        %1721 = vmatpush1.msra.mxu0 %v1606
        %1722 = vmatprep.subr.mxu0 0.0
        %1723 = vmatpush1.msra.mxu0 %v1609
        %1724 = vmatprep.subr.mxu0 0.0
        %1725 = vmatpush1.msra.mxu0 %v1612
        %1726 = vmatprep.subr.mxu0 0.0
        %1727 = vmatpush1.msra.mxu0 %v1615
        %1728 = vmatprep.subr.mxu0 0.0
        %1729 = vmatpush1.msra.mxu0 %v1618
        %1730 = vmatprep.subr.mxu0 0.0
        %1731 = vmatpush1.msra.mxu0 %v1621
        %1732 = vmatprep.subr.mxu0 0.0
        %1733 = vmatpush1.msra.mxu0 %v1624
        %1734 = vmatprep.subr.mxu0 0.0
        %1735 = vmatpush1.msra.mxu0 %v1627
        %1736 = vmatprep.subr.mxu0 0.0
        %1737 = vmatpush1.msra.mxu0 %v1630
        %1738 = vmatprep.subr.mxu0 0.0
        %1739 = vmatpush1.msra.mxu0 %v1633
        %1740 = vmatprep.subr.mxu0 0.0
        %1741 = vmatpush1.msra.mxu0 %v1636
        %1742 = vmatprep.subr.mxu0 0.0
        %1743 = vmatpush1.msra.mxu0 %v1639
        %1744 = vmatprep.subr.mxu0 0.0
        %1745 = vmatpush1.msra.mxu0 %v1642
        %1746 = vmatprep.subr.mxu0 0.0
        %1747 = vmatpush1.msra.mxu0 0.0
        %1748 = vmatprep.subr.mxu0 0.0
        %1749 = vmatpush1.msra.mxu0 0.0
        %1750 = vmatprep.subr.mxu0 0.0
        %1751 = vmatpush1.msra.mxu0 0.0
        %1752 = vmatprep.subr.mxu0 0.0
        %1753 = vmatpush1.msra.mxu0 0.0
        %1754 = vmatprep.subr.mxu0 0.0
        %1755 = vmatpush1.msra.mxu0 0.0
        %1756 = vmatprep.subr.mxu0 0.0
        %1757 = vmatpush1.msra.mxu0 0.0
        %1758 = vmatprep.subr.mxu0 0.0
        %1759 = vmatpush1.msra.mxu0 0.0
        %1760 = vmatprep.subr.mxu0 0.0
        %1761 = vmatpush1.msra.mxu0 0.0
        %1762 = vmatprep.subr.mxu0 0.0
        %1763 = vmatpush1.msra.mxu0 0.0
        %1764 = vmatprep.subr.mxu0 0.0
        %1765 = vmatpush1.msra.mxu0 0.0
        %1766 = vmatprep.subr.mxu0 0.0
        %1767 = vmatpush1.msra.mxu0 0.0
        %1768 = vmatprep.subr.mxu0 0.0
        %1769 = vmatpush1.msra.mxu0 0.0
        %1770 = vmatprep.subr.mxu0 0.0
        %1771 = vmatpush1.msra.mxu0 0.0
        %1772 = vmatprep.subr.mxu0 0.0
        %1773 = vmatpush1.msra.mxu0 0.0
        %1774 = vmatprep.subr.mxu0 0.0
        %1775 = vmatpush1.msra.mxu0 0.0
        %1776 = vmatprep.subr.mxu0 0.0
        %1777 = vmatpush1.msra.mxu0 0.0
        %1778 = vmatprep.mubr.f32.mxu0 0.0
        %1779 = vmatmul.mubr.f32.gmra.mrb[0].mxu0 %v1360
        %v1780 = vpop.f32.mrb[0].mxu0
        %v1781 = vadd.f32 0.0, %v1780
        %v1782 = vpop.f32.mrb[0].mxu0
        %1783 = vdwg.mxu0
        %v1784 = vadd.f32 %v1591, %v1710
        %v1785 = vxor.u32 %v1784, 2147483648
        %v1786 = vmul.f32 %v1785, 1.442695
        %v1787 = vpow.pop %v1786
        %v1788 = vadd.f32 %v1787, 1.0
        %v1789 = vrcp.pop %v1788
        %v1790 = vmul.f32 1.0, %v1789
        %v1791 = vadd.f32 %v1592, %v1712
        %v1792 = vxor.u32 %v1791, 2147483648
        %v1793 = vmul.f32 %v1792, 1.442695
        %v1794 = vpow.pop %v1793
        %v1795 = vadd.f32 %v1794, 1.0
        %v1796 = vrcp.pop %v1795
        %v1797 = vmul.f32 1.0, %v1796
        %v1798 = vadd.f32 %v1781, %v451
        %v1799 = vmul.f32 %v1790, %v1798
        %v1800 = vadd.f32 %v1593, %v1799
        %v1801 = vtanh.pop %v1800
        %v1802 = vsub.f32 1.0, %v1797
        %v1803 = vmul.f32 %v1802, %v1801
        %v1804 = vmul.f32 %v1797, %v1360
        %v1805 = vadd.f32 %v1803, %v1804
        %v1806 = vstv %s1594
        %vm1807 = vcmp.lt.s32.totalorder %v1806, %v438
        %v1808 = vsel %vm1807, 1, 0
        %1809 = vset.pattern.permute.xlu0 0
        %1810 = vperm.xlu0 %1809, %v1808
        %v1811 = vpop.permute.xlu0 %1810
        %vm1812 = vcmp.eq.s32.totalorder %v1811, 1
        %v1813 = vsel %vm1812, %v1805, 0.0
        %v1814 = vsel %vm1812, %v1805, %v1360
        %s1815 = scalar_lea.vmem %s426, 8
        %1816 = vst [vmem:[%s1815] sm:$0xff] %v1813
        %s1817 = scalar_lea.vmem %s404, 72
        %v1818 = vld [vmem:[%s1817] sm:$0xff]
        %v1819 = vld [vmem:[%s1817 + $0x8] sm:$0xff]
        %v1820 = vld [vmem:[%s1817 + $0x10] sm:$0xff]
        %s1821 = sadd.s32 %s453, 3
        %v1822 = vld [vmem:[%s3] sm:$0xff]
        %v1823 = vld [vmem:[%s3 + $0x8] sm:$0xff]
        %v1824 = vld [vmem:[%s3 + $0x10] sm:$0xff]
        %v1825 = vld [vmem:[%s3 + $0x18] sm:$0xff]
        %v1826 = vld [vmem:[%s3 + $0x20] sm:$0xff]
        %v1827 = vld [vmem:[%s3 + $0x28] sm:$0xff]
        %v1828 = vld [vmem:[%s3 + $0x30] sm:$0xff]
        %v1829 = vld [vmem:[%s3 + $0x38] sm:$0xff]
        %v1830 = vld [vmem:[%s3 + $0x40] sm:$0xff]
        %v1831 = vld [vmem:[%s3 + $0x48] sm:$0xff]
        %v1832 = vld [vmem:[%s3 + $0x50] sm:$0xff]
        %v1833 = vld [vmem:[%s3 + $0x58] sm:$0xff]
        %v1834 = vld [vmem:[%s3 + $0x60] sm:$0xff]
        %v1835 = vld [vmem:[%s3 + $0x68] sm:$0xff]
        %v1836 = vld [vmem:[%s3 + $0x70] sm:$0xff]
        %v1837 = vld [vmem:[%s3 + $0x78] sm:$0xff]
        %v1838 = vld [vmem:[%s3 + $0x80] sm:$0xff]
        %v1839 = vld [vmem:[%s3 + $0x88] sm:$0xff]
        %v1840 = vld [vmem:[%s3 + $0x90] sm:$0xff]
        %v1841 = vld [vmem:[%s3 + $0x98] sm:$0xff]
        %v1842 = vld [vmem:[%s3 + $0xa0] sm:$0xff]
        %v1843 = vld [vmem:[%s3 + $0xa8] sm:$0xff]
        %v1844 = vld [vmem:[%s3 + $0xb0] sm:$0xff]
        %v1845 = vld [vmem:[%s3 + $0xb8] sm:$0xff]
        %v1846 = vld [vmem:[%s3 + $0xc0] sm:$0xff]
        %v1847 = vld [vmem:[%s3 + $0xc8] sm:$0xff]
        %v1848 = vld [vmem:[%s3 + $0xd0] sm:$0xff]
        %v1849 = vld [vmem:[%s3 + $0xd8] sm:$0xff]
        %v1850 = vld [vmem:[%s3 + $0xe0] sm:$0xff]
        %v1851 = vld [vmem:[%s3 + $0xe8] sm:$0xff]
        %v1852 = vld [vmem:[%s3 + $0xf0] sm:$0xff]
        %v1853 = vld [vmem:[%s3 + $0xf8] sm:$0xff]
        %v1854 = vld [vmem:[%s3 + $0x100] sm:$0xff]
        %v1855 = vld [vmem:[%s3 + $0x108] sm:$0xff]
        %v1856 = vld [vmem:[%s3 + $0x110] sm:$0xff]
        %v1857 = vld [vmem:[%s3 + $0x118] sm:$0xff]
        %v1858 = vld [vmem:[%s3 + $0x120] sm:$0xff]
        %v1859 = vld [vmem:[%s3 + $0x128] sm:$0xff]
        %v1860 = vld [vmem:[%s3 + $0x130] sm:$0xff]
        %v1861 = vld [vmem:[%s3 + $0x138] sm:$0xff]
        %v1862 = vld [vmem:[%s3 + $0x140] sm:$0xff]
        %v1863 = vld [vmem:[%s3 + $0x148] sm:$0xff]
        %v1864 = vld [vmem:[%s3 + $0x150] sm:$0xff]
        %v1865 = vld [vmem:[%s3 + $0x158] sm:$0xff]
        %v1866 = vld [vmem:[%s3 + $0x160] sm:$0xff]
        %v1867 = vld [vmem:[%s3 + $0x168] sm:$0xff]
        %v1868 = vld [vmem:[%s3 + $0x170] sm:$0xff]
        %v1869 = vld [vmem:[%s3 + $0x178] sm:$0xff]
        %1870 = vmatprep.subr.mxu0 %v1823
        %1871 = vmatpush1.msra.mxu0 %v1822
        %1872 = vmatprep.subr.mxu0 %v1826
        %1873 = vmatpush1.msra.mxu0 %v1825
        %1874 = vmatprep.subr.mxu0 %v1829
        %1875 = vmatpush1.msra.mxu0 %v1828
        %1876 = vmatprep.subr.mxu0 %v1832
        %1877 = vmatpush1.msra.mxu0 %v1831
        %1878 = vmatprep.subr.mxu0 %v1835
        %1879 = vmatpush1.msra.mxu0 %v1834
        %1880 = vmatprep.subr.mxu0 %v1838
        %1881 = vmatpush1.msra.mxu0 %v1837
        %1882 = vmatprep.subr.mxu0 %v1841
        %1883 = vmatpush1.msra.mxu0 %v1840
        %1884 = vmatprep.subr.mxu0 %v1844
        %1885 = vmatpush1.msra.mxu0 %v1843
        %1886 = vmatprep.subr.mxu0 %v1847
        %1887 = vmatpush1.msra.mxu0 %v1846
        %1888 = vmatprep.subr.mxu0 %v1850
        %1889 = vmatpush1.msra.mxu0 %v1849
        %1890 = vmatprep.subr.mxu0 %v1853
        %1891 = vmatpush1.msra.mxu0 %v1852
        %1892 = vmatprep.subr.mxu0 %v1856
        %1893 = vmatpush1.msra.mxu0 %v1855
        %1894 = vmatprep.subr.mxu0 %v1859
        %1895 = vmatpush1.msra.mxu0 %v1858
        %1896 = vmatprep.subr.mxu0 %v1862
        %1897 = vmatpush1.msra.mxu0 %v1861
        %1898 = vmatprep.subr.mxu0 %v1865
        %1899 = vmatpush1.msra.mxu0 %v1864
        %1900 = vmatprep.subr.mxu0 %v1868
        %1901 = vmatpush1.msra.mxu0 %v1867
        %1902 = vmatprep.subr.mxu0 0.0
        %1903 = vmatpush1.msra.mxu0 0.0
        %1904 = vmatprep.subr.mxu0 0.0
        %1905 = vmatpush1.msra.mxu0 0.0
        %1906 = vmatprep.subr.mxu0 0.0
        %1907 = vmatpush1.msra.mxu0 0.0
        %1908 = vmatprep.subr.mxu0 0.0
        %1909 = vmatpush1.msra.mxu0 0.0
        %1910 = vmatprep.subr.mxu0 0.0
        %1911 = vmatpush1.msra.mxu0 0.0
        %1912 = vmatprep.subr.mxu0 0.0
        %1913 = vmatpush1.msra.mxu0 0.0
        %1914 = vmatprep.subr.mxu0 0.0
        %1915 = vmatpush1.msra.mxu0 0.0
        %1916 = vmatprep.subr.mxu0 0.0
        %1917 = vmatpush1.msra.mxu0 0.0
        %1918 = vmatprep.subr.mxu0 0.0
        %1919 = vmatpush1.msra.mxu0 0.0
        %1920 = vmatprep.subr.mxu0 0.0
        %1921 = vmatpush1.msra.mxu0 0.0
        %1922 = vmatprep.subr.mxu0 0.0
        %1923 = vmatpush1.msra.mxu0 0.0
        %1924 = vmatprep.subr.mxu0 0.0
        %1925 = vmatpush1.msra.mxu0 0.0
        %1926 = vmatprep.subr.mxu0 0.0
        %1927 = vmatpush1.msra.mxu0 0.0
        %1928 = vmatprep.subr.mxu0 0.0
        %1929 = vmatpush1.msra.mxu0 0.0
        %1930 = vmatprep.subr.mxu0 0.0
        %1931 = vmatpush1.msra.mxu0 0.0
        %1932 = vmatprep.subr.mxu0 0.0
        %1933 = vmatpush1.msra.mxu0 0.0
        %1934 = vmatprep.mubr.f32.mxu0 0.0
        %1935 = vmatmul.mubr.f32.gmra.mrb[0].mxu0 %v1587
        %v1936 = vpop.f32.mrb[0].mxu0
        %v1937 = vadd.f32 0.0, %v1936
        %v1938 = vpop.f32.mrb[0].mxu0
        %v1939 = vadd.f32 0.0, %v1938
        %1940 = vdwg.mxu0
        %1941 = vmatprep.subr.mxu0 0.0
        %1942 = vmatpush1.msra.mxu0 %v1824
        %1943 = vmatprep.subr.mxu0 0.0
        %1944 = vmatpush1.msra.mxu0 %v1827
        %1945 = vmatprep.subr.mxu0 0.0
        %1946 = vmatpush1.msra.mxu0 %v1830
        %1947 = vmatprep.subr.mxu0 0.0
        %1948 = vmatpush1.msra.mxu0 %v1833
        %1949 = vmatprep.subr.mxu0 0.0
        %1950 = vmatpush1.msra.mxu0 %v1836
        %1951 = vmatprep.subr.mxu0 0.0
        %1952 = vmatpush1.msra.mxu0 %v1839
        %1953 = vmatprep.subr.mxu0 0.0
        %1954 = vmatpush1.msra.mxu0 %v1842
        %1955 = vmatprep.subr.mxu0 0.0
        %1956 = vmatpush1.msra.mxu0 %v1845
        %1957 = vmatprep.subr.mxu0 0.0
        %1958 = vmatpush1.msra.mxu0 %v1848
        %1959 = vmatprep.subr.mxu0 0.0
        %1960 = vmatpush1.msra.mxu0 %v1851
        %1961 = vmatprep.subr.mxu0 0.0
        %1962 = vmatpush1.msra.mxu0 %v1854
        %1963 = vmatprep.subr.mxu0 0.0
        %1964 = vmatpush1.msra.mxu0 %v1857
        %1965 = vmatprep.subr.mxu0 0.0
        %1966 = vmatpush1.msra.mxu0 %v1860
        %1967 = vmatprep.subr.mxu0 0.0
        %1968 = vmatpush1.msra.mxu0 %v1863
        %1969 = vmatprep.subr.mxu0 0.0
        %1970 = vmatpush1.msra.mxu0 %v1866
        %1971 = vmatprep.subr.mxu0 0.0
        %1972 = vmatpush1.msra.mxu0 %v1869
        %1973 = vmatprep.subr.mxu0 0.0
        %1974 = vmatpush1.msra.mxu0 0.0
        %1975 = vmatprep.subr.mxu0 0.0
        %1976 = vmatpush1.msra.mxu0 0.0
        %1977 = vmatprep.subr.mxu0 0.0
        %1978 = vmatpush1.msra.mxu0 0.0
        %1979 = vmatprep.subr.mxu0 0.0
        %1980 = vmatpush1.msra.mxu0 0.0
        %1981 = vmatprep.subr.mxu0 0.0
        %1982 = vmatpush1.msra.mxu0 0.0
        %1983 = vmatprep.subr.mxu0 0.0
        %1984 = vmatpush1.msra.mxu0 0.0
        %1985 = vmatprep.subr.mxu0 0.0
        %1986 = vmatpush1.msra.mxu0 0.0
        %1987 = vmatprep.subr.mxu0 0.0
        %1988 = vmatpush1.msra.mxu0 0.0
        %1989 = vmatprep.subr.mxu0 0.0
        %1990 = vmatpush1.msra.mxu0 0.0
        %1991 = vmatprep.subr.mxu0 0.0
        %1992 = vmatpush1.msra.mxu0 0.0
        %1993 = vmatprep.subr.mxu0 0.0
        %1994 = vmatpush1.msra.mxu0 0.0
        %1995 = vmatprep.subr.mxu0 0.0
        %1996 = vmatpush1.msra.mxu0 0.0
        %1997 = vmatprep.subr.mxu0 0.0
        %1998 = vmatpush1.msra.mxu0 0.0
        %1999 = vmatprep.subr.mxu0 0.0
        %2000 = vmatpush1.msra.mxu0 0.0
        %2001 = vmatprep.subr.mxu0 0.0
        %2002 = vmatpush1.msra.mxu0 0.0
        %2003 = vmatprep.subr.mxu0 0.0
        %2004 = vmatpush1.msra.mxu0 0.0
        %2005 = vmatprep.mubr.f32.mxu0 0.0
        %2006 = vmatmul.mubr.f32.gmra.mrb[0].mxu0 %v1587
        %v2007 = vpop.f32.mrb[0].mxu0
        %v2008 = vadd.f32 0.0, %v2007
        %v2009 = vpop.f32.mrb[0].mxu0
        %2010 = vdwg.mxu0
        %v2011 = vadd.f32 %v1818, %v1937
        %v2012 = vxor.u32 %v2011, 2147483648
        %v2013 = vmul.f32 %v2012, 1.442695
        %v2014 = vpow.pop %v2013
        %v2015 = vadd.f32 %v2014, 1.0
        %v2016 = vrcp.pop %v2015
        %v2017 = vmul.f32 1.0, %v2016
        %v2018 = vadd.f32 %v1819, %v1939
        %v2019 = vxor.u32 %v2018, 2147483648
        %v2020 = vmul.f32 %v2019, 1.442695
        %v2021 = vpow.pop %v2020
        %v2022 = vadd.f32 %v2021, 1.0
        %v2023 = vrcp.pop %v2022
        %v2024 = vmul.f32 1.0, %v2023
        %v2025 = vadd.f32 %v2008, %v444
        %v2026 = vmul.f32 %v2017, %v2025
        %v2027 = vadd.f32 %v1820, %v2026
        %v2028 = vtanh.pop %v2027
        %v2029 = vsub.f32 1.0, %v2024
        %v2030 = vmul.f32 %v2029, %v2028
        %v2031 = vmul.f32 %v2024, %v1587
        %v2032 = vadd.f32 %v2030, %v2031
        %v2033 = vstv %s1821
        %vm2034 = vcmp.lt.s32.totalorder %v2033, %v438
        %v2035 = vsel %vm2034, 1, 0
        %2036 = vset.pattern.permute.xlu0 0
        %2037 = vperm.xlu0 %2036, %v2035
        %v2038 = vpop.permute.xlu0 %2037
        %vm2039 = vcmp.eq.s32.totalorder %v2038, 1
        %v2040 = vsel %vm2039, %v2032, 0.0
        %v2041 = vsel %vm2039, %v2032, %v1587
        %s2042 = scalar_lea.vmem %s419, 24
        %2043 = vst [vmem:[%s2042] sm:$0xff] %v2040
        %v2044 = vld [vmem:[%s412] sm:$0xff]
        %v2045 = vld [vmem:[%s412 + $0x8] sm:$0xff]
        %v2046 = vld [vmem:[%s412 + $0x10] sm:$0xff]
        %v2047 = vld [vmem:[#allocation4] sm:$0xff]
        %v2048 = vld [vmem:[#allocation4 + $0x8] sm:$0xff]
        %v2049 = vld [vmem:[#allocation4 + $0x10] sm:$0xff]
        %v2050 = vld [vmem:[#allocation4 + $0x18] sm:$0xff]
        %v2051 = vld [vmem:[#allocation4 + $0x20] sm:$0xff]
        %v2052 = vld [vmem:[#allocation4 + $0x28] sm:$0xff]
        %v2053 = vld [vmem:[#allocation4 + $0x30] sm:$0xff]
        %v2054 = vld [vmem:[#allocation4 + $0x38] sm:$0xff]
        %v2055 = vld [vmem:[#allocation4 + $0x40] sm:$0xff]
        %v2056 = vld [vmem:[#allocation4 + $0x48] sm:$0xff]
        %v2057 = vld [vmem:[#allocation4 + $0x50] sm:$0xff]
        %v2058 = vld [vmem:[#allocation4 + $0x58] sm:$0xff]
        %v2059 = vld [vmem:[#allocation4 + $0x60] sm:$0xff]
        %v2060 = vld [vmem:[#allocation4 + $0x68] sm:$0xff]
        %v2061 = vld [vmem:[#allocation4 + $0x70] sm:$0xff]
        %v2062 = vld [vmem:[#allocation4 + $0x78] sm:$0xff]
        %v2063 = vld [vmem:[#allocation4 + $0x80] sm:$0xff]
        %v2064 = vld [vmem:[#allocation4 + $0x88] sm:$0xff]
        %v2065 = vld [vmem:[#allocation4 + $0x90] sm:$0xff]
        %v2066 = vld [vmem:[#allocation4 + $0x98] sm:$0xff]
        %v2067 = vld [vmem:[#allocation4 + $0xa0] sm:$0xff]
        %v2068 = vld [vmem:[#allocation4 + $0xa8] sm:$0xff]
        %v2069 = vld [vmem:[#allocation4 + $0xb0] sm:$0xff]
        %v2070 = vld [vmem:[#allocation4 + $0xb8] sm:$0xff]
        %v2071 = vld [vmem:[#allocation4 + $0xc0] sm:$0xff]
        %v2072 = vld [vmem:[#allocation4 + $0xc8] sm:$0xff]
        %v2073 = vld [vmem:[#allocation4 + $0xd0] sm:$0xff]
        %v2074 = vld [vmem:[#allocation4 + $0xd8] sm:$0xff]
        %v2075 = vld [vmem:[#allocation4 + $0xe0] sm:$0xff]
        %v2076 = vld [vmem:[#allocation4 + $0xe8] sm:$0xff]
        %v2077 = vld [vmem:[#allocation4 + $0xf0] sm:$0xff]
        %v2078 = vld [vmem:[#allocation4 + $0xf8] sm:$0xff]
        %v2079 = vld [vmem:[#allocation4 + $0x100] sm:$0xff]
        %v2080 = vld [vmem:[#allocation4 + $0x108] sm:$0xff]
        %v2081 = vld [vmem:[#allocation4 + $0x110] sm:$0xff]
        %v2082 = vld [vmem:[#allocation4 + $0x118] sm:$0xff]
        %v2083 = vld [vmem:[#allocation4 + $0x120] sm:$0xff]
        %v2084 = vld [vmem:[#allocation4 + $0x128] sm:$0xff]
        %v2085 = vld [vmem:[#allocation4 + $0x130] sm:$0xff]
        %v2086 = vld [vmem:[#allocation4 + $0x138] sm:$0xff]
        %v2087 = vld [vmem:[#allocation4 + $0x140] sm:$0xff]
        %v2088 = vld [vmem:[#allocation4 + $0x148] sm:$0xff]
        %v2089 = vld [vmem:[#allocation4 + $0x150] sm:$0xff]
        %v2090 = vld [vmem:[#allocation4 + $0x158] sm:$0xff]
        %v2091 = vld [vmem:[#allocation4 + $0x160] sm:$0xff]
        %v2092 = vld [vmem:[#allocation4 + $0x168] sm:$0xff]
        %v2093 = vld [vmem:[#allocation4 + $0x170] sm:$0xff]
        %v2094 = vld [vmem:[#allocation4 + $0x178] sm:$0xff]
        %2095 = vmatprep.subr.mxu0 %v2048
        %2096 = vmatpush1.msra.mxu0 %v2047
        %2097 = vmatprep.subr.mxu0 %v2051
        %2098 = vmatpush1.msra.mxu0 %v2050
        %2099 = vmatprep.subr.mxu0 %v2054
        %2100 = vmatpush1.msra.mxu0 %v2053
        %2101 = vmatprep.subr.mxu0 %v2057
        %2102 = vmatpush1.msra.mxu0 %v2056
        %2103 = vmatprep.subr.mxu0 %v2060
        %2104 = vmatpush1.msra.mxu0 %v2059
        %2105 = vmatprep.subr.mxu0 %v2063
        %2106 = vmatpush1.msra.mxu0 %v2062
        %2107 = vmatprep.subr.mxu0 %v2066
        %2108 = vmatpush1.msra.mxu0 %v2065
        %2109 = vmatprep.subr.mxu0 %v2069
        %2110 = vmatpush1.msra.mxu0 %v2068
        %2111 = vmatprep.subr.mxu0 %v2072
        %2112 = vmatpush1.msra.mxu0 %v2071
        %2113 = vmatprep.subr.mxu0 %v2075
        %2114 = vmatpush1.msra.mxu0 %v2074
        %2115 = vmatprep.subr.mxu0 %v2078
        %2116 = vmatpush1.msra.mxu0 %v2077
        %2117 = vmatprep.subr.mxu0 %v2081
        %2118 = vmatpush1.msra.mxu0 %v2080
        %2119 = vmatprep.subr.mxu0 %v2084
        %2120 = vmatpush1.msra.mxu0 %v2083
        %2121 = vmatprep.subr.mxu0 %v2087
        %2122 = vmatpush1.msra.mxu0 %v2086
        %2123 = vmatprep.subr.mxu0 %v2090
        %2124 = vmatpush1.msra.mxu0 %v2089
        %2125 = vmatprep.subr.mxu0 %v2093
        %2126 = vmatpush1.msra.mxu0 %v2092
        %2127 = vmatprep.subr.mxu0 0.0
        %2128 = vmatpush1.msra.mxu0 0.0
        %2129 = vmatprep.subr.mxu0 0.0
        %2130 = vmatpush1.msra.mxu0 0.0
        %2131 = vmatprep.subr.mxu0 0.0
        %2132 = vmatpush1.msra.mxu0 0.0
        %2133 = vmatprep.subr.mxu0 0.0
        %2134 = vmatpush1.msra.mxu0 0.0
        %2135 = vmatprep.subr.mxu0 0.0
        %2136 = vmatpush1.msra.mxu0 0.0
        %2137 = vmatprep.subr.mxu0 0.0
        %2138 = vmatpush1.msra.mxu0 0.0
        %2139 = vmatprep.subr.mxu0 0.0
        %2140 = vmatpush1.msra.mxu0 0.0
        %2141 = vmatprep.subr.mxu0 0.0
        %2142 = vmatpush1.msra.mxu0 0.0
        %2143 = vmatprep.subr.mxu0 0.0
        %2144 = vmatpush1.msra.mxu0 0.0
        %2145 = vmatprep.subr.mxu0 0.0
        %2146 = vmatpush1.msra.mxu0 0.0
        %2147 = vmatprep.subr.mxu0 0.0
        %2148 = vmatpush1.msra.mxu0 0.0
        %2149 = vmatprep.subr.mxu0 0.0
        %2150 = vmatpush1.msra.mxu0 0.0
        %2151 = vmatprep.subr.mxu0 0.0
        %2152 = vmatpush1.msra.mxu0 0.0
        %2153 = vmatprep.subr.mxu0 0.0
        %2154 = vmatpush1.msra.mxu0 0.0
        %2155 = vmatprep.subr.mxu0 0.0
        %2156 = vmatpush1.msra.mxu0 0.0
        %2157 = vmatprep.subr.mxu0 0.0
        %2158 = vmatpush1.msra.mxu0 0.0
        %2159 = vmatprep.mubr.f32.mxu0 0.0
        %2160 = vmatmul.mubr.f32.gmra.mrb[0].mxu0 %v1814
        %v2161 = vpop.f32.mrb[0].mxu0
        %v2162 = vadd.f32 0.0, %v2161
        %v2163 = vpop.f32.mrb[0].mxu0
        %v2164 = vadd.f32 0.0, %v2163
        %2165 = vdwg.mxu0
        %2166 = vmatprep.subr.mxu0 0.0
        %2167 = vmatpush1.msra.mxu0 %v2049
        %2168 = vmatprep.subr.mxu0 0.0
        %2169 = vmatpush1.msra.mxu0 %v2052
        %2170 = vmatprep.subr.mxu0 0.0
        %2171 = vmatpush1.msra.mxu0 %v2055
        %2172 = vmatprep.subr.mxu0 0.0
        %2173 = vmatpush1.msra.mxu0 %v2058
        %2174 = vmatprep.subr.mxu0 0.0
        %2175 = vmatpush1.msra.mxu0 %v2061
        %2176 = vmatprep.subr.mxu0 0.0
        %2177 = vmatpush1.msra.mxu0 %v2064
        %2178 = vmatprep.subr.mxu0 0.0
        %2179 = vmatpush1.msra.mxu0 %v2067
        %2180 = vmatprep.subr.mxu0 0.0
        %2181 = vmatpush1.msra.mxu0 %v2070
        %2182 = vmatprep.subr.mxu0 0.0
        %2183 = vmatpush1.msra.mxu0 %v2073
        %2184 = vmatprep.subr.mxu0 0.0
        %2185 = vmatpush1.msra.mxu0 %v2076
        %2186 = vmatprep.subr.mxu0 0.0
        %2187 = vmatpush1.msra.mxu0 %v2079
        %2188 = vmatprep.subr.mxu0 0.0
        %2189 = vmatpush1.msra.mxu0 %v2082
        %2190 = vmatprep.subr.mxu0 0.0
        %2191 = vmatpush1.msra.mxu0 %v2085
        %2192 = vmatprep.subr.mxu0 0.0
        %2193 = vmatpush1.msra.mxu0 %v2088
        %2194 = vmatprep.subr.mxu0 0.0
        %2195 = vmatpush1.msra.mxu0 %v2091
        %2196 = vmatprep.subr.mxu0 0.0
        %2197 = vmatpush1.msra.mxu0 %v2094
        %2198 = vmatprep.subr.mxu0 0.0
        %2199 = vmatpush1.msra.mxu0 0.0
        %2200 = vmatprep.subr.mxu0 0.0
        %2201 = vmatpush1.msra.mxu0 0.0
        %2202 = vmatprep.subr.mxu0 0.0
        %2203 = vmatpush1.msra.mxu0 0.0
        %2204 = vmatprep.subr.mxu0 0.0
        %2205 = vmatpush1.msra.mxu0 0.0
        %2206 = vmatprep.subr.mxu0 0.0
        %2207 = vmatpush1.msra.mxu0 0.0
        %2208 = vmatprep.subr.mxu0 0.0
        %2209 = vmatpush1.msra.mxu0 0.0
        %2210 = vmatprep.subr.mxu0 0.0
        %2211 = vmatpush1.msra.mxu0 0.0
        %2212 = vmatprep.subr.mxu0 0.0
        %2213 = vmatpush1.msra.mxu0 0.0
        %2214 = vmatprep.subr.mxu0 0.0
        %2215 = vmatpush1.msra.mxu0 0.0
        %2216 = vmatprep.subr.mxu0 0.0
        %2217 = vmatpush1.msra.mxu0 0.0
        %2218 = vmatprep.subr.mxu0 0.0
        %2219 = vmatpush1.msra.mxu0 0.0
        %2220 = vmatprep.subr.mxu0 0.0
        %2221 = vmatpush1.msra.mxu0 0.0
        %2222 = vmatprep.subr.mxu0 0.0
        %2223 = vmatpush1.msra.mxu0 0.0
        %2224 = vmatprep.subr.mxu0 0.0
        %2225 = vmatpush1.msra.mxu0 0.0
        %2226 = vmatprep.subr.mxu0 0.0
        %2227 = vmatpush1.msra.mxu0 0.0
        %2228 = vmatprep.subr.mxu0 0.0
        %2229 = vmatpush1.msra.mxu0 0.0
        %2230 = vmatprep.mubr.f32.mxu0 0.0
        %2231 = vmatmul.mubr.f32.gmra.mrb[0].mxu0 %v1814
        %v2232 = vpop.f32.mrb[0].mxu0
        %v2233 = vadd.f32 0.0, %v2232
        %v2234 = vpop.f32.mrb[0].mxu0
        %2235 = vdwg.mxu0
        %v2236 = vadd.f32 %v2044, %v2162
        %v2237 = vxor.u32 %v2236, 2147483648
        %v2238 = vmul.f32 %v2237, 1.442695
        %v2239 = vpow.pop %v2238
        %v2240 = vadd.f32 %v2239, 1.0
        %v2241 = vrcp.pop %v2240
        %v2242 = vmul.f32 1.0, %v2241
        %v2243 = vadd.f32 %v2045, %v2164
        %v2244 = vxor.u32 %v2243, 2147483648
        %v2245 = vmul.f32 %v2244, 1.442695
        %v2246 = vpow.pop %v2245
        %v2247 = vadd.f32 %v2246, 1.0
        %v2248 = vrcp.pop %v2247
        %v2249 = vmul.f32 1.0, %v2248
        %v2250 = vadd.f32 %v2233, %v451
        %v2251 = vmul.f32 %v2242, %v2250
        %v2252 = vadd.f32 %v2046, %v2251
        %v2253 = vtanh.pop %v2252
        %v2254 = vsub.f32 1.0, %v2249
        %v2255 = vmul.f32 %v2254, %v2253
        %v2256 = vmul.f32 %v2249, %v1814
        %v2257 = vadd.f32 %v2255, %v2256
        %v2258 = vstv %s455
        %vm2259 = vcmp.lt.s32.totalorder %v2258, %v438
        %v2260 = vsel %vm2259, 1, 0
        %2261 = vset.pattern.permute.xlu0 0
        %2262 = vperm.xlu0 %2261, %v2260
        %v2263 = vpop.permute.xlu0 %2262
        %vm2264 = vcmp.eq.s32.totalorder %v2263, 1
        %v2265 = vsel %vm2264, %v2257, 0.0
        %v2266 = vsel %vm2264, %v2257, %v1814
        %2267 = vst [vmem:[%s426] sm:$0xff] %v2265
        %2268 = vst [vmem:[#allocation2] sm:$0xff] %v2041
        %2269 = vst [vmem:[#allocation3] sm:$0xff] %v2266
        %p2270 = scmp.eq.s32.totalorder %s23, 1
        // Predicated region
        $region61: #{_lambda_.2} parent=51 // pred_check
          %p2271 = pneg %p2270
        $region62: #{_lambda_.2} parent=51 // pred_check_branch
          %2273 = sbr.rel (%p2271) target = $region64
        $region63: #{_lambda_.2} parent=51 // pred_region
          %2274 = vst [vmem:[%s10] sm:$0xff] %v2041
          %s2275 = scalar_lea.vmem %s10, 8
          %2276 = vst [vmem:[%s2275] sm:$0xff] %v2266
        $region64: #{_lambda_.2} parent=51 // pred_fallthru
          _
        %s2277 = smul.u32 4, %s23
        %p2278 = scmp.lt.s32.totalorder %s2277, 7
        %s2279 = scalar_select %p2278, %s2277, 7
        %s2280 = smul.addr %s2279, 8
        %s2281 = scalar_lea.vmem %s8, %s2280
        %s2282 = ssub.s32 1, %s23
        %s2283 = smul.u32 4, %s2282
        %p2284 = scmp.lt.s32.totalorder %s2283, 7
        %s2285 = scalar_select %p2284, %s2283, 7
        %s2286 = smul.addr %s2285, 8
        %s2287 = scalar_lea.vmem %s9, %s2286
        // Predicated region
        $region65: #{_lambda_.2} parent=51 // pred_check
          %p2288 = pneg %p221
        $region66: #{_lambda_.2} parent=51 // pred_check_branch
          %2290 = sbr.rel (%p2288) target = $region68
        $region67: #{_lambda_.2} parent=51 // pred_region
          %s2291 = smul.u32 4, %s23
        $region68: #{_lambda_.2} parent=51 // pred_fallthru
          _
        // Predicated region
        $region69: #{_lambda_.2} parent=51 // pred_check
          %p2292 = pneg %p249
        $region70: #{_lambda_.2} parent=51 // pred_check_branch
          %2294 = sbr.rel (%p2292) target = $region72
        $region71: #{_lambda_.2} parent=51 // pred_region
          %s2295 = ssub.s32 1, %s23
          %s2296 = smul.u32 4, %s2295
        $region72: #{_lambda_.2} parent=51 // pred_fallthru
          _
        // Predicated region
        $region73: #{_lambda_.2} parent=51 // pred_check
          %p2297 = pneg %p270
        $region74: #{_lambda_.2} parent=51 // pred_check_branch
          %2299 = sbr.rel (%p2297) target = $region76
        $region75: #{_lambda_.2} parent=51 // pred_region
          _
        $region76: #{_lambda_.2} parent=51 // pred_fallthru
          _
        // Predicated region
        $region77: #{_lambda_.2} parent=51 // pred_check
          %p2300 = pneg %p270
        $region78: #{_lambda_.2} parent=51 // pred_check_branch
          %2302 = sbr.rel (%p2300) target = $region80
        $region79: #{_lambda_.2} parent=51 // pred_region
          _
        $region80: #{_lambda_.2} parent=51 // pred_fallthru
          _
      $region52: #{_lambda_.2} parent=5 // pred_fallthru
        _
      %p2303 = scmp.le.s32.totalorder 2, %s18
      // Predicated region
      $region81: #{_lambda_.2} parent=5 // pred_check
        %p2304 = pneg %p2303
      $region82: #{_lambda_.2} parent=5 // pred_check_branch
        %2306 = sbr.rel (%p2304) target = $region84
      $region83: #{_lambda_.2} parent=5 // pred_region
        %s2307 = ssub.s32 %s18, 2
        // Predicated region
        $region85: #{_lambda_.2} parent=83 // pred_check
          %p2308 = pneg %p227
        $region86: #{_lambda_.2} parent=83 // pred_check_branch
          %2310 = sbr.rel (%p2308) target = $region88
        $region87: #{_lambda_.2} parent=83 // pred_region
          %s2311 = smul.u32 4, %s24
          %p2312 = scmp.lt.s32.totalorder %s2311, 7
          %s2313 = scalar_select %p2312, %s2311, 7
          %s2314 = smul.addr %s2313, 8
          %s2315 = scalar_lea.vmem %s8, %s2314
        $region88: #{_lambda_.2} parent=83 // pred_fallthru
          _
        // Predicated region
        $region89: #{_lambda_.2} parent=83 // pred_check
          %p2316 = pneg %p255
        $region90: #{_lambda_.2} parent=83 // pred_check_branch
          %2318 = sbr.rel (%p2316) target = $region92
        $region91: #{_lambda_.2} parent=83 // pred_region
          %s2319 = ssub.s32 1, %s24
          %s2320 = smul.u32 4, %s2319
          %p2321 = scmp.lt.s32.totalorder %s2320, 7
          %s2322 = scalar_select %p2321, %s2320, 7
          %s2323 = smul.addr %s2322, 8
          %s2324 = scalar_lea.vmem %s9, %s2323
        $region92: #{_lambda_.2} parent=83 // pred_fallthru
          _
      $region84: #{_lambda_.2} parent=5 // pred_fallthru
        _
    $region6: #{_lambda_.2} parent=1 // loop_footer
      %s22 = sadd.s32 1, %s18
    $region7: #{_lambda_.2} parent=1 // loop_footer_branch
      %17 = sbr.rel target = $region3
    $region8: #{_lambda_.2} parent=1 // loop_exit
      _
    %2325 = vsyncpa [#allocation5], 1
    %s2326 = scalar_lea.sflag [#allocation5], 1
    %2327 = vsyncpa %s2326, 1

// kernel: _lambda_.3
$region0: #{_lambda_.3}
  #allocation0 [shape = 'u32[]', space=smem, size = 0x4, offset = 0x4, fixed_abs, tag = 'smem constant byte address 0x4 - core index']
  #allocation1 [shape = 'u32[144,128]{1,0:T(1,128)}', space=vmem, size = 0x12000, scoped, tag = 'internal scratch']
  #allocation2 [shape = 'f32[8,128]{1,0:T(8,128)}', space=vmem, size = 0x1000, scoped, tag = 'scratch operand']
  #allocation3 [shape = 'f32[8,128]{1,0:T(8,128)}', space=vmem, size = 0x1000, scoped, tag = 'scratch operand']
  %s0 = inlined_call_operand.vmem [shape: f32[8,8,384], index: 0, kind: input, shape index: {}]
  %s1 = inlined_call_operand.vmem [shape: f32[8,8,384], index: 1, kind: input, shape index: {}]
  %s2 = inlined_call_operand.vmem [shape: s32[8,1], index: 2, kind: input, shape index: {}]
  %s3 = inlined_call_operand.vmem [shape: f32[128,384], index: 3, kind: input, shape index: {}]
  %s4 = inlined_call_operand.vmem [shape: f32[128,384], index: 4, kind: input, shape index: {}]
  %s5 = inlined_call_operand.vmem [shape: f32[1,128], index: 5, kind: input, shape index: {}]
  %s6 = inlined_call_operand.vmem [shape: f32[1,128], index: 6, kind: input, shape index: {}]
  %s7 = inlined_call_operand.vmem [shape: f32[2,8,128], index: 7, kind: input, shape index: {}]
  %s8 = inlined_call_operand.vmem [shape: f32[8,8,128], index: 8, kind: output, shape index: {0}]
  %s9 = inlined_call_operand.vmem [shape: f32[8,8,128], index: 9, kind: output, shape index: {1}]
  %s10 = inlined_call_operand.vmem [shape: f32[2,8,128], index: 10, kind: output, shape index: {2}]
  %11 = xla_tuple %s8, %s9, %s10
  %s12 = sld [smem:[#allocation0]]
  $region89: #{_lambda_.3} parent=0
    _
  %s14 = ssub.s32 1, %s12
  %s15 = scalar_select 0, %s14, %s12
  loop: start=0, step=1, limit=4
  $region2: #{_lambda_.3} parent=0 // loop_pre_header
    _
  $region3: #{_lambda_.3} parent=0 // loop_header
    %s17 = sphi 0, %s21
    %p18 = scmp.ge.s32.totalorder %s17, 4
    %s27 = sphi 0, %s29
    %s30 = sphi 0, %s27
    %s31 = sphi 0, %s30
    %s47 = sphi 0, %s31
    %s55 = sphi 0, %s57
    %s58 = sphi 0, %s55
    %s59 = sphi 0, %s58
    %s75 = sphi 0, %s59
    %s79 = sphi 0, %s79
    %s81 = sphi 0, %s79
    %s82 = sphi 0, %s81
    %s96 = sphi 0, %s82
    %s100 = sphi 0, %s100
    %s102 = sphi 0, %s100
    %s103 = sphi 0, %s102
    %s117 = sphi 0, %s103
    %s121 = sphi 0, %s121
    %s123 = sphi 0, %s121
    %s124 = sphi 0, %s123
    %s138 = sphi 0, %s124
    %s142 = sphi 0, %s142
    %s144 = sphi 0, %s142
    %s145 = sphi 0, %s144
    %s159 = sphi 0, %s145
    %s163 = sphi 0, %s163
    %s165 = sphi 0, %s163
    %s166 = sphi 0, %s165
    %s180 = sphi 0, %s166
    %s184 = sphi 0, %s184
    %s186 = sphi 0, %s184
    %s187 = sphi 0, %s186
    %s201 = sphi 0, %s187
    %s207 = sphi 0, %s209
    %s210 = sphi 0, %s207
    %s211 = sphi 0, %s210
    %s227 = sphi 0, %s211
    %s235 = sphi 0, %s237
    %s238 = sphi 0, %s235
    %s239 = sphi 0, %s238
    %s255 = sphi 0, %s239
    %s259 = sphi 0, %s259
    %s261 = sphi 0, %s259
    %s262 = sphi 0, %s261
    %s276 = sphi 0, %s262
  $region4: #{_lambda_.3} parent=0 // loop_header_branch
    %20 = sbr.rel (%p18) target = $region8
  $region5: #{_lambda_.3} parent=0 // loop_body
    %s22 = ssub.s32 %s17, 1
    %s23 = ssub.s32 %s17, 2
    %s24 = sadd.s32 %s17, 1
    %s25 = ssub.s32 %s17, %s24
    %p26 = scmp.eq.s32.totalorder %s25, 0
    %s28 = sadd.s32 %s27, 1
    %s29 = scalar_select %p26, %s27, %s28
    %p32 = pneg %p26
    %p33 = scmp.eq.s32.totalorder %s17, 1
    %p34 = por %p32, %p33
    %p35 = scmp.ne.s32.totalorder %s27, %s30
    %p36 = scmp.eq.s32.totalorder %s17, 0
    %p37 = por %p35, %p36
    %p38 = scmp.ne.s32.totalorder %s27, %s30
    %p39 = scmp.eq.s32.totalorder %s22, 1
    %p40 = por %p38, %p39
    %p41 = scmp.ne.s32.totalorder %s30, %s31
    %p42 = scmp.eq.s32.totalorder %s22, 0
    %p43 = por %p41, %p42
    %p44 = scmp.ne.s32.totalorder %s30, %s31
    %p45 = scmp.eq.s32.totalorder %s23, 1
    %p46 = por %p44, %p45
    %p48 = scmp.ne.s32.totalorder %s31, %s47
    %p49 = scmp.eq.s32.totalorder %s23, 0
    %p50 = por %p48, %p49
    %s51 = ssub.s32 1, %s17
    %s52 = ssub.s32 1, %s24
    %s53 = ssub.s32 %s51, %s52
    %p54 = scmp.eq.s32.totalorder %s53, 0
    %s56 = sadd.s32 %s55, 1
    %s57 = scalar_select %p54, %s55, %s56
    %p60 = pneg %p54
    %p61 = scmp.eq.s32.totalorder %s17, 1
    %p62 = por %p60, %p61
    %p63 = scmp.ne.s32.totalorder %s55, %s58
    %p64 = scmp.eq.s32.totalorder %s17, 0
    %p65 = por %p63, %p64
    %p66 = scmp.ne.s32.totalorder %s55, %s58
    %p67 = scmp.eq.s32.totalorder %s22, 1
    %p68 = por %p66, %p67
    %p69 = scmp.ne.s32.totalorder %s58, %s59
    %p70 = scmp.eq.s32.totalorder %s22, 0
    %p71 = por %p69, %p70
    %p72 = scmp.ne.s32.totalorder %s58, %s59
    %p73 = scmp.eq.s32.totalorder %s23, 1
    %p74 = por %p72, %p73
    %p76 = scmp.ne.s32.totalorder %s59, %s75
    %p77 = scmp.eq.s32.totalorder %s23, 0
    %p78 = por %p76, %p77
    %s80 = sadd.s32 %s79, 1
    %p83 = scmp.eq.s32.totalorder %s17, 1
    %p84 = scmp.ne.s32.totalorder %s79, %s81
    %p85 = scmp.eq.s32.totalorder %s17, 0
    %p86 = por %p84, %p85
    %p87 = scmp.ne.s32.totalorder %s79, %s81
    %p88 = scmp.eq.s32.totalorder %s22, 1
    %p89 = por %p87, %p88
    %p90 = scmp.ne.s32.totalorder %s81, %s82
    %p91 = scmp.eq.s32.totalorder %s22, 0
    %p92 = por %p90, %p91
    %p93 = scmp.ne.s32.totalorder %s81, %s82
    %p94 = scmp.eq.s32.totalorder %s23, 1
    %p95 = por %p93, %p94
    %p97 = scmp.ne.s32.totalorder %s82, %s96
    %p98 = scmp.eq.s32.totalorder %s23, 0
    %p99 = por %p97, %p98
    %s101 = sadd.s32 %s100, 1
    %p104 = scmp.eq.s32.totalorder %s17, 1
    %p105 = scmp.ne.s32.totalorder %s100, %s102
    %p106 = scmp.eq.s32.totalorder %s17, 0
    %p107 = por %p105, %p106
    %p108 = scmp.ne.s32.totalorder %s100, %s102
    %p109 = scmp.eq.s32.totalorder %s22, 1
    %p110 = por %p108, %p109
    %p111 = scmp.ne.s32.totalorder %s102, %s103
    %p112 = scmp.eq.s32.totalorder %s22, 0
    %p113 = por %p111, %p112
    %p114 = scmp.ne.s32.totalorder %s102, %s103
    %p115 = scmp.eq.s32.totalorder %s23, 1
    %p116 = por %p114, %p115
    %p118 = scmp.ne.s32.totalorder %s103, %s117
    %p119 = scmp.eq.s32.totalorder %s23, 0
    %p120 = por %p118, %p119
    %s122 = sadd.s32 %s121, 1
    %p125 = scmp.eq.s32.totalorder %s17, 1
    %p126 = scmp.ne.s32.totalorder %s121, %s123
    %p127 = scmp.eq.s32.totalorder %s17, 0
    %p128 = por %p126, %p127
    %p129 = scmp.ne.s32.totalorder %s121, %s123
    %p130 = scmp.eq.s32.totalorder %s22, 1
    %p131 = por %p129, %p130
    %p132 = scmp.ne.s32.totalorder %s123, %s124
    %p133 = scmp.eq.s32.totalorder %s22, 0
    %p134 = por %p132, %p133
    %p135 = scmp.ne.s32.totalorder %s123, %s124
    %p136 = scmp.eq.s32.totalorder %s23, 1
    %p137 = por %p135, %p136
    %p139 = scmp.ne.s32.totalorder %s124, %s138
    %p140 = scmp.eq.s32.totalorder %s23, 0
    %p141 = por %p139, %p140
    %s143 = sadd.s32 %s142, 1
    %p146 = scmp.eq.s32.totalorder %s17, 1
    %p147 = scmp.ne.s32.totalorder %s142, %s144
    %p148 = scmp.eq.s32.totalorder %s17, 0
    %p149 = por %p147, %p148
    %p150 = scmp.ne.s32.totalorder %s142, %s144
    %p151 = scmp.eq.s32.totalorder %s22, 1
    %p152 = por %p150, %p151
    %p153 = scmp.ne.s32.totalorder %s144, %s145
    %p154 = scmp.eq.s32.totalorder %s22, 0
    %p155 = por %p153, %p154
    %p156 = scmp.ne.s32.totalorder %s144, %s145
    %p157 = scmp.eq.s32.totalorder %s23, 1
    %p158 = por %p156, %p157
    %p160 = scmp.ne.s32.totalorder %s145, %s159
    %p161 = scmp.eq.s32.totalorder %s23, 0
    %p162 = por %p160, %p161
    %s164 = sadd.s32 %s163, 1
    %p167 = scmp.eq.s32.totalorder %s17, 1
    %p168 = scmp.ne.s32.totalorder %s163, %s165
    %p169 = scmp.eq.s32.totalorder %s17, 0
    %p170 = por %p168, %p169
    %p171 = scmp.ne.s32.totalorder %s163, %s165
    %p172 = scmp.eq.s32.totalorder %s22, 1
    %p173 = por %p171, %p172
    %p174 = scmp.ne.s32.totalorder %s165, %s166
    %p175 = scmp.eq.s32.totalorder %s22, 0
    %p176 = por %p174, %p175
    %p177 = scmp.ne.s32.totalorder %s165, %s166
    %p178 = scmp.eq.s32.totalorder %s23, 1
    %p179 = por %p177, %p178
    %p181 = scmp.ne.s32.totalorder %s166, %s180
    %p182 = scmp.eq.s32.totalorder %s23, 0
    %p183 = por %p181, %p182
    %s185 = sadd.s32 %s184, 1
    %p188 = scmp.eq.s32.totalorder %s17, 1
    %p189 = scmp.ne.s32.totalorder %s184, %s186
    %p190 = scmp.eq.s32.totalorder %s17, 0
    %p191 = por %p189, %p190
    %p192 = scmp.ne.s32.totalorder %s184, %s186
    %p193 = scmp.eq.s32.totalorder %s22, 1
    %p194 = por %p192, %p193
    %p195 = scmp.ne.s32.totalorder %s186, %s187
    %p196 = scmp.eq.s32.totalorder %s22, 0
    %p197 = por %p195, %p196
    %p198 = scmp.ne.s32.totalorder %s186, %s187
    %p199 = scmp.eq.s32.totalorder %s23, 1
    %p200 = por %p198, %p199
    %p202 = scmp.ne.s32.totalorder %s187, %s201
    %p203 = scmp.eq.s32.totalorder %s23, 0
    %p204 = por %p202, %p203
    %s205 = ssub.s32 %s17, %s24
    %p206 = scmp.eq.s32.totalorder %s205, 0
    %s208 = sadd.s32 %s207, 1
    %s209 = scalar_select %p206, %s207, %s208
    %p212 = pneg %p206
    %p213 = scmp.eq.s32.totalorder %s17, 1
    %p214 = por %p212, %p213
    %p215 = scmp.ne.s32.totalorder %s207, %s210
    %p216 = scmp.eq.s32.totalorder %s17, 0
    %p217 = por %p215, %p216
    %p218 = scmp.ne.s32.totalorder %s207, %s210
    %p219 = scmp.eq.s32.totalorder %s22, 1
    %p220 = por %p218, %p219
    %p221 = scmp.ne.s32.totalorder %s210, %s211
    %p222 = scmp.eq.s32.totalorder %s22, 0
    %p223 = por %p221, %p222
    %p224 = scmp.ne.s32.totalorder %s210, %s211
    %p225 = scmp.eq.s32.totalorder %s23, 1
    %p226 = por %p224, %p225
    %p228 = scmp.ne.s32.totalorder %s211, %s227
    %p229 = scmp.eq.s32.totalorder %s23, 0
    %p230 = por %p228, %p229
    %s231 = ssub.s32 1, %s17
    %s232 = ssub.s32 1, %s24
    %s233 = ssub.s32 %s231, %s232
    %p234 = scmp.eq.s32.totalorder %s233, 0
    %s236 = sadd.s32 %s235, 1
    %s237 = scalar_select %p234, %s235, %s236
    %p240 = pneg %p234
    %p241 = scmp.eq.s32.totalorder %s17, 1
    %p242 = por %p240, %p241
    %p243 = scmp.ne.s32.totalorder %s235, %s238
    %p244 = scmp.eq.s32.totalorder %s17, 0
    %p245 = por %p243, %p244
    %p246 = scmp.ne.s32.totalorder %s235, %s238
    %p247 = scmp.eq.s32.totalorder %s22, 1
    %p248 = por %p246, %p247
    %p249 = scmp.ne.s32.totalorder %s238, %s239
    %p250 = scmp.eq.s32.totalorder %s22, 0
    %p251 = por %p249, %p250
    %p252 = scmp.ne.s32.totalorder %s238, %s239
    %p253 = scmp.eq.s32.totalorder %s23, 1
    %p254 = por %p252, %p253
    %p256 = scmp.ne.s32.totalorder %s239, %s255
    %p257 = scmp.eq.s32.totalorder %s23, 0
    %p258 = por %p256, %p257
    %s260 = sadd.s32 %s259, 1
    %p263 = scmp.eq.s32.totalorder %s17, 1
    %p264 = scmp.ne.s32.totalorder %s259, %s261
    %p265 = scmp.eq.s32.totalorder %s17, 0
    %p266 = por %p264, %p265
    %p267 = scmp.ne.s32.totalorder %s259, %s261
    %p268 = scmp.eq.s32.totalorder %s22, 1
    %p269 = por %p267, %p268
    %p270 = scmp.ne.s32.totalorder %s261, %s262
    %p271 = scmp.eq.s32.totalorder %s22, 0
    %p272 = por %p270, %p271
    %p273 = scmp.ne.s32.totalorder %s261, %s262
    %p274 = scmp.eq.s32.totalorder %s23, 1
    %p275 = por %p273, %p274
    %p277 = scmp.ne.s32.totalorder %s262, %s276
    %p278 = scmp.eq.s32.totalorder %s23, 0
    %p279 = por %p277, %p278
    %p280 = scmp.le.s32.totalorder 1, %s17
    %p281 = scmp.lt.s32.totalorder %s17, 3
    %p282 = pnand %p280, %p281
    %p283 = pneg %p282
    // Predicated region
    $region9: #{_lambda_.3} parent=5 // pred_check
      _
    $region10: #{_lambda_.3} parent=5 // pred_check_branch
      %285 = sbr.rel (%p282) target = $region12
    $region11: #{_lambda_.3} parent=5 // pred_region
      %s286 = ssub.s32 %s17, 1
      // Predicated region
      $region13: #{_lambda_.3} parent=11 // pred_check
        %p287 = pneg %p92
      $region14: #{_lambda_.3} parent=11 // pred_check_branch
        %289 = sbr.rel (%p287) target = $region16
      $region15: #{_lambda_.3} parent=11 // pred_region
        _
      $region16: #{_lambda_.3} parent=11 // pred_fallthru
        _
      // Predicated region
      $region17: #{_lambda_.3} parent=11 // pred_check
        %p290 = pneg %p113
      $region18: #{_lambda_.3} parent=11 // pred_check_branch
        %292 = sbr.rel (%p290) target = $region20
      $region19: #{_lambda_.3} parent=11 // pred_region
        _
      $region20: #{_lambda_.3} parent=11 // pred_fallthru
        _
      // Predicated region
      $region21: #{_lambda_.3} parent=11 // pred_check
        %p293 = pneg %p134
      $region22: #{_lambda_.3} parent=11 // pred_check_branch
        %295 = sbr.rel (%p293) target = $region24
      $region23: #{_lambda_.3} parent=11 // pred_region
        _
      $region24: #{_lambda_.3} parent=11 // pred_fallthru
        _
      // Predicated region
      $region25: #{_lambda_.3} parent=11 // pred_check
        %p296 = pneg %p155
      $region26: #{_lambda_.3} parent=11 // pred_check_branch
        %298 = sbr.rel (%p296) target = $region28
      $region27: #{_lambda_.3} parent=11 // pred_region
        _
      $region28: #{_lambda_.3} parent=11 // pred_fallthru
        _
      // Predicated region
      $region29: #{_lambda_.3} parent=11 // pred_check
        %p299 = pneg %p176
      $region30: #{_lambda_.3} parent=11 // pred_check_branch
        %301 = sbr.rel (%p299) target = $region32
      $region31: #{_lambda_.3} parent=11 // pred_region
        _
      $region32: #{_lambda_.3} parent=11 // pred_fallthru
        _
      // Predicated region
      $region33: #{_lambda_.3} parent=11 // pred_check
        %p302 = pneg %p197
      $region34: #{_lambda_.3} parent=11 // pred_check_branch
        %304 = sbr.rel (%p302) target = $region36
      $region35: #{_lambda_.3} parent=11 // pred_region
        _
      $region36: #{_lambda_.3} parent=11 // pred_fallthru
        _
    $region12: #{_lambda_.3} parent=5 // pred_fallthru
      _
    %p305 = scmp.lt.s32.totalorder %s17, 2
    // Predicated region
    $region37: #{_lambda_.3} parent=5 // pred_check
      %p306 = pneg %p305
    $region38: #{_lambda_.3} parent=5 // pred_check_branch
      %308 = sbr.rel (%p306) target = $region40
    $region39: #{_lambda_.3} parent=5 // pred_region
      // Predicated region
      $region41: #{_lambda_.3} parent=39 // pred_check
        %p309 = pneg %p37
      $region42: #{_lambda_.3} parent=39 // pred_check_branch
        %311 = sbr.rel (%p309) target = $region44
      $region43: #{_lambda_.3} parent=39 // pred_region
        %s312 = smul.u32 4, %s17
        %p313 = scmp.lt.s32.totalorder %s312, 7
        %s314 = scalar_select %p313, %s312, 7
        %s315 = smul.addr %s314, 3
        %s316 = smul.addr %s315, 8
        %s317 = scalar_lea.vmem %s0, %s316
        %s318 = smul.u32 4, %s17
      $region44: #{_lambda_.3} parent=39 // pred_fallthru
        _
      // Predicated region
      $region45: #{_lambda_.3} parent=39 // pred_check
        %p319 = pneg %p65
      $region46: #{_lambda_.3} parent=39 // pred_check_branch
        %321 = sbr.rel (%p319) target = $region48
      $region47: #{_lambda_.3} parent=39 // pred_region
        %s322 = ssub.s32 1, %s17
        %s323 = smul.u32 4, %s322
        %p324 = scmp.lt.s32.totalorder %s323, 7
        %s325 = scalar_select %p324, %s323, 7
        %s326 = smul.addr %s325, 3
        %s327 = smul.addr %s326, 8
        %s328 = scalar_lea.vmem %s1, %s327
        %s329 = ssub.s32 1, %s17
        %s330 = smul.u32 4, %s329
      $region48: #{_lambda_.3} parent=39 // pred_fallthru
        _
    $region40: #{_lambda_.3} parent=5 // pred_fallthru
      _
    %p331 = scmp.le.s32.totalorder 1, %s17
    %p332 = scmp.lt.s32.totalorder %s17, 3
    %p333 = pnand %p331, %p332
    %p334 = pneg %p333
    // Predicated region
    $region49: #{_lambda_.3} parent=5 // pred_check
      _
    $region50: #{_lambda_.3} parent=5 // pred_check_branch
      %336 = sbr.rel (%p333) target = $region52
    $region51: #{_lambda_.3} parent=5 // pred_region
      %s337 = ssub.s32 %s17, 1
      %s338 = smul.u32 4, %s22
      %p339 = scmp.lt.s32.totalorder %s338, 7
      %s340 = scalar_select %p339, %s338, 7
      %s341 = smul.addr %s340, 3
      %s342 = smul.addr %s341, 8
      %s343 = scalar_lea.vmem %s0, %s342
      %p344 = pneg %p43
      %p345 = pneg %p40
      %s346 = ssub.s32 1, %s22
      %s347 = smul.u32 4, %s346
      %p348 = scmp.lt.s32.totalorder %s347, 7
      %s349 = scalar_select %p348, %s347, 7
      %s350 = smul.addr %s349, 3
      %s351 = smul.addr %s350, 8
      %s352 = scalar_lea.vmem %s1, %s351
      %p353 = pneg %p71
      %p354 = pneg %p68
      %p355 = pneg %p92
      %p356 = pneg %p89
      %p357 = pneg %p113
      %p358 = pneg %p110
      %p359 = pneg %p134
      %p360 = pneg %p131
      %p361 = pneg %p155
      %p362 = pneg %p152
      %p363 = pneg %p176
      %p364 = pneg %p173
      %p365 = pneg %p197
      %p366 = pneg %p194
      %p367 = pneg %p223
      %p368 = pneg %p220
      %s369 = smul.u32 4, %s22
      %p370 = scmp.lt.s32.totalorder %s369, 7
      %s371 = scalar_select %p370, %s369, 7
      %s372 = smul.addr %s371, 8
      %s373 = scalar_lea.vmem %s8, %s372
      %p374 = pneg %p251
      %p375 = pneg %p248
      %s376 = ssub.s32 1, %s22
      %s377 = smul.u32 4, %s376
      %p378 = scmp.lt.s32.totalorder %s377, 7
      %s379 = scalar_select %p378, %s377, 7
      %s380 = smul.addr %s379, 8
      %s381 = scalar_lea.vmem %s9, %s380
      %p382 = pneg %p272
      %p383 = pneg %p269
      %s384 = smul.u32 4, %s22
      %p385 = scmp.lt.s32.totalorder %s384, 7
      %s386 = scalar_select %p385, %s384, 7
      %s387 = smul.addr %s386, 3
      %s388 = smul.addr %s387, 8
      %s389 = scalar_lea.vmem %s0, %s388
      %s390 = smul.u32 4, %s22
      %s391 = ssub.s32 1, %s22
      %s392 = smul.u32 4, %s391
      %p393 = scmp.lt.s32.totalorder %s392, 7
      %s394 = scalar_select %p393, %s392, 7
      %s395 = smul.addr %s394, 3
      %s396 = smul.addr %s395, 8
      %s397 = scalar_lea.vmem %s1, %s396
      %s398 = ssub.s32 1, %s22
      %s399 = smul.u32 4, %s398
      %s400 = smul.u32 4, %s22
      %p401 = scmp.lt.s32.totalorder %s400, 7
      %s402 = scalar_select %p401, %s400, 7
      %s403 = smul.addr %s402, 8
      %s404 = scalar_lea.vmem %s8, %s403
      %s405 = smul.u32 4, %s22
      %s406 = ssub.s32 1, %s22
      %s407 = smul.u32 4, %s406
      %p408 = scmp.lt.s32.totalorder %s407, 7
      %s409 = scalar_select %p408, %s407, 7
      %s410 = smul.addr %s409, 8
      %s411 = scalar_lea.vmem %s9, %s410
      %s412 = ssub.s32 1, %s22
      %s413 = smul.u32 4, %s412
      %p414 = scmp.eq.s32.totalorder %s22, 0
      // Predicated region
      $region53: #{_lambda_.3} parent=51 // pred_check
        %p415 = pneg %p414
      $region54: #{_lambda_.3} parent=51 // pred_check_branch
        %417 = sbr.rel (%p415) target = $region56
      $region55: #{_lambda_.3} parent=51 // pred_region
        %v418 = vld [vmem:[%s7] sm:$0xff]
        %419 = vst [vmem:[#allocation2] sm:$0xff] %v418
        %s420 = scalar_lea.vmem %s7, 8
        %v421 = vld [vmem:[%s420] sm:$0xff]
        %422 = vst [vmem:[#allocation3] sm:$0xff] %v421
      $region56: #{_lambda_.3} parent=51 // pred_fallthru
        _
      %v423 = vld [vmem:[%s2] sm:$0xff]
      %v424 = vld [vmem:[%s5] sm:$0x1]
      %v426 = vlaneseq
      %v427 = vshrl.u32 %v426, 7
      %v428 = vsub.s32 0, %v427
      %v429 = vrot.slane %v424, %v428
      %v431 = vld [vmem:[%s6] sm:$0x1]
      %v433 = vlaneseq
      %v434 = vshrl.u32 %v433, 7
      %v435 = vsub.s32 0, %v434
      %v436 = vrot.slane %v431, %v435
      %s438 = smul.u32 %s22, 4
      %s439 = ssub.s32 1, %s22
      %s440 = smul.u32 %s439, 4
      %v441 = vld [vmem:[#allocation2] sm:$0xff]
      %v442 = vld [vmem:[#allocation3] sm:$0xff]
      %v443 = vld [vmem:[%s389] sm:$0xff]
      %v444 = vld [vmem:[%s389 + $0x8] sm:$0xff]
      %v445 = vld [vmem:[%s389 + $0x10] sm:$0xff]
      %v446 = vld [vmem:[%s3] sm:$0xff]
      %v447 = vld [vmem:[%s3 + $0x8] sm:$0xff]
      %v448 = vld [vmem:[%s3 + $0x10] sm:$0xff]
      %v449 = vld [vmem:[%s3 + $0x18] sm:$0xff]
      %v450 = vld [vmem:[%s3 + $0x20] sm:$0xff]
      %v451 = vld [vmem:[%s3 + $0x28] sm:$0xff]
      %v452 = vld [vmem:[%s3 + $0x30] sm:$0xff]
      %v453 = vld [vmem:[%s3 + $0x38] sm:$0xff]
      %v454 = vld [vmem:[%s3 + $0x40] sm:$0xff]
      %v455 = vld [vmem:[%s3 + $0x48] sm:$0xff]
      %v456 = vld [vmem:[%s3 + $0x50] sm:$0xff]
      %v457 = vld [vmem:[%s3 + $0x58] sm:$0xff]
      %v458 = vld [vmem:[%s3 + $0x60] sm:$0xff]
      %v459 = vld [vmem:[%s3 + $0x68] sm:$0xff]
      %v460 = vld [vmem:[%s3 + $0x70] sm:$0xff]
      %v461 = vld [vmem:[%s3 + $0x78] sm:$0xff]
      %v462 = vld [vmem:[%s3 + $0x80] sm:$0xff]
      %v463 = vld [vmem:[%s3 + $0x88] sm:$0xff]
      %v464 = vld [vmem:[%s3 + $0x90] sm:$0xff]
      %v465 = vld [vmem:[%s3 + $0x98] sm:$0xff]
      %v466 = vld [vmem:[%s3 + $0xa0] sm:$0xff]
      %v467 = vld [vmem:[%s3 + $0xa8] sm:$0xff]
      %v468 = vld [vmem:[%s3 + $0xb0] sm:$0xff]
      %v469 = vld [vmem:[%s3 + $0xb8] sm:$0xff]
      %v470 = vld [vmem:[%s3 + $0xc0] sm:$0xff]
      %v471 = vld [vmem:[%s3 + $0xc8] sm:$0xff]
      %v472 = vld [vmem:[%s3 + $0xd0] sm:$0xff]
      %v473 = vld [vmem:[%s3 + $0xd8] sm:$0xff]
      %v474 = vld [vmem:[%s3 + $0xe0] sm:$0xff]
      %v475 = vld [vmem:[%s3 + $0xe8] sm:$0xff]
      %v476 = vld [vmem:[%s3 + $0xf0] sm:$0xff]
      %v477 = vld [vmem:[%s3 + $0xf8] sm:$0xff]
      %v478 = vld [vmem:[%s3 + $0x100] sm:$0xff]
      %v479 = vld [vmem:[%s3 + $0x108] sm:$0xff]
      %v480 = vld [vmem:[%s3 + $0x110] sm:$0xff]
      %v481 = vld [vmem:[%s3 + $0x118] sm:$0xff]
      %v482 = vld [vmem:[%s3 + $0x120] sm:$0xff]
      %v483 = vld [vmem:[%s3 + $0x128] sm:$0xff]
      %v484 = vld [vmem:[%s3 + $0x130] sm:$0xff]
      %v485 = vld [vmem:[%s3 + $0x138] sm:$0xff]
      %v486 = vld [vmem:[%s3 + $0x140] sm:$0xff]
      %v487 = vld [vmem:[%s3 + $0x148] sm:$0xff]
      %v488 = vld [vmem:[%s3 + $0x150] sm:$0xff]
      %v489 = vld [vmem:[%s3 + $0x158] sm:$0xff]
      %v490 = vld [vmem:[%s3 + $0x160] sm:$0xff]
      %v491 = vld [vmem:[%s3 + $0x168] sm:$0xff]
      %v492 = vld [vmem:[%s3 + $0x170] sm:$0xff]
      %v493 = vld [vmem:[%s3 + $0x178] sm:$0xff]
      %494 = vmatprep.subr.mxu0 %v447
      %495 = vmatpush1.msra.mxu0 %v446
      %496 = vmatprep.subr.mxu0 %v450
      %497 = vmatpush1.msra.mxu0 %v449
      %498 = vmatprep.subr.mxu0 %v453
      %499 = vmatpush1.msra.mxu0 %v452
      %500 = vmatprep.subr.mxu0 %v456
      %501 = vmatpush1.msra.mxu0 %v455
      %502 = vmatprep.subr.mxu0 %v459
      %503 = vmatpush1.msra.mxu0 %v458
      %504 = vmatprep.subr.mxu0 %v462
      %505 = vmatpush1.msra.mxu0 %v461
      %506 = vmatprep.subr.mxu0 %v465
      %507 = vmatpush1.msra.mxu0 %v464
      %508 = vmatprep.subr.mxu0 %v468
      %509 = vmatpush1.msra.mxu0 %v467
      %510 = vmatprep.subr.mxu0 %v471
      %511 = vmatpush1.msra.mxu0 %v470
      %512 = vmatprep.subr.mxu0 %v474
      %513 = vmatpush1.msra.mxu0 %v473
      %514 = vmatprep.subr.mxu0 %v477
      %515 = vmatpush1.msra.mxu0 %v476
      %516 = vmatprep.subr.mxu0 %v480
      %517 = vmatpush1.msra.mxu0 %v479
      %518 = vmatprep.subr.mxu0 %v483
      %519 = vmatpush1.msra.mxu0 %v482
      %520 = vmatprep.subr.mxu0 %v486
      %521 = vmatpush1.msra.mxu0 %v485
      %522 = vmatprep.subr.mxu0 %v489
      %523 = vmatpush1.msra.mxu0 %v488
      %524 = vmatprep.subr.mxu0 %v492
      %525 = vmatpush1.msra.mxu0 %v491
      %526 = vmatprep.subr.mxu0 0.0
      %527 = vmatpush1.msra.mxu0 0.0
      %528 = vmatprep.subr.mxu0 0.0
      %529 = vmatpush1.msra.mxu0 0.0
      %530 = vmatprep.subr.mxu0 0.0
      %531 = vmatpush1.msra.mxu0 0.0
      %532 = vmatprep.subr.mxu0 0.0
      %533 = vmatpush1.msra.mxu0 0.0
      %534 = vmatprep.subr.mxu0 0.0
      %535 = vmatpush1.msra.mxu0 0.0
      %536 = vmatprep.subr.mxu0 0.0
      %537 = vmatpush1.msra.mxu0 0.0
      %538 = vmatprep.subr.mxu0 0.0
      %539 = vmatpush1.msra.mxu0 0.0
      %540 = vmatprep.subr.mxu0 0.0
      %541 = vmatpush1.msra.mxu0 0.0
      %542 = vmatprep.subr.mxu0 0.0
      %543 = vmatpush1.msra.mxu0 0.0
      %544 = vmatprep.subr.mxu0 0.0
      %545 = vmatpush1.msra.mxu0 0.0
      %546 = vmatprep.subr.mxu0 0.0
      %547 = vmatpush1.msra.mxu0 0.0
      %548 = vmatprep.subr.mxu0 0.0
      %549 = vmatpush1.msra.mxu0 0.0
      %550 = vmatprep.subr.mxu0 0.0
      %551 = vmatpush1.msra.mxu0 0.0
      %552 = vmatprep.subr.mxu0 0.0
      %553 = vmatpush1.msra.mxu0 0.0
      %554 = vmatprep.subr.mxu0 0.0
      %555 = vmatpush1.msra.mxu0 0.0
      %556 = vmatprep.subr.mxu0 0.0
      %557 = vmatpush1.msra.mxu0 0.0
      %558 = vmatprep.mubr.f32.mxu0 0.0
      %559 = vmatmul.mubr.f32.gmra.mrb[0].mxu0 %v441
      %v560 = vpop.f32.mrb[0].mxu0
      %v561 = vadd.f32 0.0, %v560
      %v562 = vpop.f32.mrb[0].mxu0
      %v563 = vadd.f32 0.0, %v562
      %564 = vdwg.mxu0
      %565 = vmatprep.subr.mxu0 0.0
      %566 = vmatpush1.msra.mxu0 %v448
      %567 = vmatprep.subr.mxu0 0.0
      %568 = vmatpush1.msra.mxu0 %v451
      %569 = vmatprep.subr.mxu0 0.0
      %570 = vmatpush1.msra.mxu0 %v454
      %571 = vmatprep.subr.mxu0 0.0
      %572 = vmatpush1.msra.mxu0 %v457
      %573 = vmatprep.subr.mxu0 0.0
      %574 = vmatpush1.msra.mxu0 %v460
      %575 = vmatprep.subr.mxu0 0.0
      %576 = vmatpush1.msra.mxu0 %v463
      %577 = vmatprep.subr.mxu0 0.0
      %578 = vmatpush1.msra.mxu0 %v466
      %579 = vmatprep.subr.mxu0 0.0
      %580 = vmatpush1.msra.mxu0 %v469
      %581 = vmatprep.subr.mxu0 0.0
      %582 = vmatpush1.msra.mxu0 %v472
      %583 = vmatprep.subr.mxu0 0.0
      %584 = vmatpush1.msra.mxu0 %v475
      %585 = vmatprep.subr.mxu0 0.0
      %586 = vmatpush1.msra.mxu0 %v478
      %587 = vmatprep.subr.mxu0 0.0
      %588 = vmatpush1.msra.mxu0 %v481
      %589 = vmatprep.subr.mxu0 0.0
      %590 = vmatpush1.msra.mxu0 %v484
      %591 = vmatprep.subr.mxu0 0.0
      %592 = vmatpush1.msra.mxu0 %v487
      %593 = vmatprep.subr.mxu0 0.0
      %594 = vmatpush1.msra.mxu0 %v490
      %595 = vmatprep.subr.mxu0 0.0
      %596 = vmatpush1.msra.mxu0 %v493
      %597 = vmatprep.subr.mxu0 0.0
      %598 = vmatpush1.msra.mxu0 0.0
      %599 = vmatprep.subr.mxu0 0.0
      %600 = vmatpush1.msra.mxu0 0.0
      %601 = vmatprep.subr.mxu0 0.0
      %602 = vmatpush1.msra.mxu0 0.0
      %603 = vmatprep.subr.mxu0 0.0
      %604 = vmatpush1.msra.mxu0 0.0
      %605 = vmatprep.subr.mxu0 0.0
      %606 = vmatpush1.msra.mxu0 0.0
      %607 = vmatprep.subr.mxu0 0.0
      %608 = vmatpush1.msra.mxu0 0.0
      %609 = vmatprep.subr.mxu0 0.0
      %610 = vmatpush1.msra.mxu0 0.0
      %611 = vmatprep.subr.mxu0 0.0
      %612 = vmatpush1.msra.mxu0 0.0
      %613 = vmatprep.subr.mxu0 0.0
      %614 = vmatpush1.msra.mxu0 0.0
      %615 = vmatprep.subr.mxu0 0.0
      %616 = vmatpush1.msra.mxu0 0.0
      %617 = vmatprep.subr.mxu0 0.0
      %618 = vmatpush1.msra.mxu0 0.0
      %619 = vmatprep.subr.mxu0 0.0
      %620 = vmatpush1.msra.mxu0 0.0
      %621 = vmatprep.subr.mxu0 0.0
      %622 = vmatpush1.msra.mxu0 0.0
      %623 = vmatprep.subr.mxu0 0.0
      %624 = vmatpush1.msra.mxu0 0.0
      %625 = vmatprep.subr.mxu0 0.0
      %626 = vmatpush1.msra.mxu0 0.0
      %627 = vmatprep.subr.mxu0 0.0
      %628 = vmatpush1.msra.mxu0 0.0
      %629 = vmatprep.mubr.f32.mxu0 0.0
      %630 = vmatmul.mubr.f32.gmra.mrb[0].mxu0 %v441
      %v631 = vpop.f32.mrb[0].mxu0
      %v632 = vadd.f32 0.0, %v631
      %v633 = vpop.f32.mrb[0].mxu0
      %634 = vdwg.mxu0
      %v635 = vadd.f32 %v443, %v561
      %v636 = vxor.u32 %v635, 2147483648
      %v637 = vmul.f32 %v636, 1.442695
      %v638 = vpow.pop %v637
      %v639 = vadd.f32 %v638, 1.0
      %v640 = vrcp.pop %v639
      %v641 = vmul.f32 1.0, %v640
      %v642 = vadd.f32 %v444, %v563
      %v643 = vxor.u32 %v642, 2147483648
      %v644 = vmul.f32 %v643, 1.442695
      %v645 = vpow.pop %v644
      %v646 = vadd.f32 %v645, 1.0
      %v647 = vrcp.pop %v646
      %v648 = vmul.f32 1.0, %v647
      %v649 = vadd.f32 %v632, %v429
      %v650 = vmul.f32 %v641, %v649
      %v651 = vadd.f32 %v445, %v650
      %v652 = vtanh.pop %v651
      %v653 = vsub.f32 1.0, %v648
      %v654 = vmul.f32 %v653, %v652
      %v655 = vmul.f32 %v648, %v441
      %v656 = vadd.f32 %v654, %v655
      %v657 = vstv %s438
      %vm658 = vcmp.lt.s32.totalorder %v657, %v423
      %v659 = vsel %vm658, 1, 0
      %660 = vset.pattern.permute.xlu0 0
      %661 = vperm.xlu0 %660, %v659
      %v662 = vpop.permute.xlu0 %661
      %vm663 = vcmp.eq.s32.totalorder %v662, 1
      %v664 = vsel %vm663, %v656, 0.0
      %v665 = vsel %vm663, %v656, %v441
      %666 = vst [vmem:[%s404] sm:$0xff] %v664
      %s667 = scalar_lea.vmem %s397, 72
      %v668 = vld [vmem:[%s667] sm:$0xff]
      %v669 = vld [vmem:[%s667 + $0x8] sm:$0xff]
      %v670 = vld [vmem:[%s667 + $0x10] sm:$0xff]
      %s671 = sadd.s32 %s440, 3
      %v672 = vld [vmem:[%s4] sm:$0xff]
      %v673 = vld [vmem:[%s4 + $0x8] sm:$0xff]
      %v674 = vld [vmem:[%s4 + $0x10] sm:$0xff]
      %v675 = vld [vmem:[%s4 + $0x18] sm:$0xff]
      %v676 = vld [vmem:[%s4 + $0x20] sm:$0xff]
      %v677 = vld [vmem:[%s4 + $0x28] sm:$0xff]
      %v678 = vld [vmem:[%s4 + $0x30] sm:$0xff]
      %v679 = vld [vmem:[%s4 + $0x38] sm:$0xff]
      %v680 = vld [vmem:[%s4 + $0x40] sm:$0xff]
      %v681 = vld [vmem:[%s4 + $0x48] sm:$0xff]
      %v682 = vld [vmem:[%s4 + $0x50] sm:$0xff]
      %v683 = vld [vmem:[%s4 + $0x58] sm:$0xff]
      %v684 = vld [vmem:[%s4 + $0x60] sm:$0xff]
      %v685 = vld [vmem:[%s4 + $0x68] sm:$0xff]
      %v686 = vld [vmem:[%s4 + $0x70] sm:$0xff]
      %v687 = vld [vmem:[%s4 + $0x78] sm:$0xff]
      %v688 = vld [vmem:[%s4 + $0x80] sm:$0xff]
      %v689 = vld [vmem:[%s4 + $0x88] sm:$0xff]
      %v690 = vld [vmem:[%s4 + $0x90] sm:$0xff]
      %v691 = vld [vmem:[%s4 + $0x98] sm:$0xff]
      %v692 = vld [vmem:[%s4 + $0xa0] sm:$0xff]
      %v693 = vld [vmem:[%s4 + $0xa8] sm:$0xff]
      %v694 = vld [vmem:[%s4 + $0xb0] sm:$0xff]
      %v695 = vld [vmem:[%s4 + $0xb8] sm:$0xff]
      %v696 = vld [vmem:[%s4 + $0xc0] sm:$0xff]
      %v697 = vld [vmem:[%s4 + $0xc8] sm:$0xff]
      %v698 = vld [vmem:[%s4 + $0xd0] sm:$0xff]
      %v699 = vld [vmem:[%s4 + $0xd8] sm:$0xff]
      %v700 = vld [vmem:[%s4 + $0xe0] sm:$0xff]
      %v701 = vld [vmem:[%s4 + $0xe8] sm:$0xff]
      %v702 = vld [vmem:[%s4 + $0xf0] sm:$0xff]
      %v703 = vld [vmem:[%s4 + $0xf8] sm:$0xff]
      %v704 = vld [vmem:[%s4 + $0x100] sm:$0xff]
      %v705 = vld [vmem:[%s4 + $0x108] sm:$0xff]
      %v706 = vld [vmem:[%s4 + $0x110] sm:$0xff]
      %v707 = vld [vmem:[%s4 + $0x118] sm:$0xff]
      %v708 = vld [vmem:[%s4 + $0x120] sm:$0xff]
      %v709 = vld [vmem:[%s4 + $0x128] sm:$0xff]
      %v710 = vld [vmem:[%s4 + $0x130] sm:$0xff]
      %v711 = vld [vmem:[%s4 + $0x138] sm:$0xff]
      %v712 = vld [vmem:[%s4 + $0x140] sm:$0xff]
      %v713 = vld [vmem:[%s4 + $0x148] sm:$0xff]
      %v714 = vld [vmem:[%s4 + $0x150] sm:$0xff]
      %v715 = vld [vmem:[%s4 + $0x158] sm:$0xff]
      %v716 = vld [vmem:[%s4 + $0x160] sm:$0xff]
      %v717 = vld [vmem:[%s4 + $0x168] sm:$0xff]
      %v718 = vld [vmem:[%s4 + $0x170] sm:$0xff]
      %v719 = vld [vmem:[%s4 + $0x178] sm:$0xff]
      %720 = vmatprep.subr.mxu0 %v673
      %721 = vmatpush1.msra.mxu0 %v672
      %722 = vmatprep.subr.mxu0 %v676
      %723 = vmatpush1.msra.mxu0 %v675
      %724 = vmatprep.subr.mxu0 %v679
      %725 = vmatpush1.msra.mxu0 %v678
      %726 = vmatprep.subr.mxu0 %v682
      %727 = vmatpush1.msra.mxu0 %v681
      %728 = vmatprep.subr.mxu0 %v685
      %729 = vmatpush1.msra.mxu0 %v684
      %730 = vmatprep.subr.mxu0 %v688
      %731 = vmatpush1.msra.mxu0 %v687
      %732 = vmatprep.subr.mxu0 %v691
      %733 = vmatpush1.msra.mxu0 %v690
      %734 = vmatprep.subr.mxu0 %v694
      %735 = vmatpush1.msra.mxu0 %v693
      %736 = vmatprep.subr.mxu0 %v697
      %737 = vmatpush1.msra.mxu0 %v696
      %738 = vmatprep.subr.mxu0 %v700
      %739 = vmatpush1.msra.mxu0 %v699
      %740 = vmatprep.subr.mxu0 %v703
      %741 = vmatpush1.msra.mxu0 %v702
      %742 = vmatprep.subr.mxu0 %v706
      %743 = vmatpush1.msra.mxu0 %v705
      %744 = vmatprep.subr.mxu0 %v709
      %745 = vmatpush1.msra.mxu0 %v708
      %746 = vmatprep.subr.mxu0 %v712
      %747 = vmatpush1.msra.mxu0 %v711
      %748 = vmatprep.subr.mxu0 %v715
      %749 = vmatpush1.msra.mxu0 %v714
      %750 = vmatprep.subr.mxu0 %v718
      %751 = vmatpush1.msra.mxu0 %v717
      %752 = vmatprep.subr.mxu0 0.0
      %753 = vmatpush1.msra.mxu0 0.0
      %754 = vmatprep.subr.mxu0 0.0
      %755 = vmatpush1.msra.mxu0 0.0
      %756 = vmatprep.subr.mxu0 0.0
      %757 = vmatpush1.msra.mxu0 0.0
      %758 = vmatprep.subr.mxu0 0.0
      %759 = vmatpush1.msra.mxu0 0.0
      %760 = vmatprep.subr.mxu0 0.0
      %761 = vmatpush1.msra.mxu0 0.0
      %762 = vmatprep.subr.mxu0 0.0
      %763 = vmatpush1.msra.mxu0 0.0
      %764 = vmatprep.subr.mxu0 0.0
      %765 = vmatpush1.msra.mxu0 0.0
      %766 = vmatprep.subr.mxu0 0.0
      %767 = vmatpush1.msra.mxu0 0.0
      %768 = vmatprep.subr.mxu0 0.0
      %769 = vmatpush1.msra.mxu0 0.0
      %770 = vmatprep.subr.mxu0 0.0
      %771 = vmatpush1.msra.mxu0 0.0
      %772 = vmatprep.subr.mxu0 0.0
      %773 = vmatpush1.msra.mxu0 0.0
      %774 = vmatprep.subr.mxu0 0.0
      %775 = vmatpush1.msra.mxu0 0.0
      %776 = vmatprep.subr.mxu0 0.0
      %777 = vmatpush1.msra.mxu0 0.0
      %778 = vmatprep.subr.mxu0 0.0
      %779 = vmatpush1.msra.mxu0 0.0
      %780 = vmatprep.subr.mxu0 0.0
      %781 = vmatpush1.msra.mxu0 0.0
      %782 = vmatprep.subr.mxu0 0.0
      %783 = vmatpush1.msra.mxu0 0.0
      %784 = vmatprep.mubr.f32.mxu0 0.0
      %785 = vmatmul.mubr.f32.gmra.mrb[0].mxu0 %v442
      %v786 = vpop.f32.mrb[0].mxu0
      %v787 = vadd.f32 0.0, %v786
      %v788 = vpop.f32.mrb[0].mxu0
      %v789 = vadd.f32 0.0, %v788
      %790 = vdwg.mxu0
      %791 = vmatprep.subr.mxu0 0.0
      %792 = vmatpush1.msra.mxu0 %v674
      %793 = vmatprep.subr.mxu0 0.0
      %794 = vmatpush1.msra.mxu0 %v677
      %795 = vmatprep.subr.mxu0 0.0
      %796 = vmatpush1.msra.mxu0 %v680
      %797 = vmatprep.subr.mxu0 0.0
      %798 = vmatpush1.msra.mxu0 %v683
      %799 = vmatprep.subr.mxu0 0.0
      %800 = vmatpush1.msra.mxu0 %v686
      %801 = vmatprep.subr.mxu0 0.0
      %802 = vmatpush1.msra.mxu0 %v689
      %803 = vmatprep.subr.mxu0 0.0
      %804 = vmatpush1.msra.mxu0 %v692
      %805 = vmatprep.subr.mxu0 0.0
      %806 = vmatpush1.msra.mxu0 %v695
      %807 = vmatprep.subr.mxu0 0.0
      %808 = vmatpush1.msra.mxu0 %v698
      %809 = vmatprep.subr.mxu0 0.0
      %810 = vmatpush1.msra.mxu0 %v701
      %811 = vmatprep.subr.mxu0 0.0
      %812 = vmatpush1.msra.mxu0 %v704
      %813 = vmatprep.subr.mxu0 0.0
      %814 = vmatpush1.msra.mxu0 %v707
      %815 = vmatprep.subr.mxu0 0.0
      %816 = vmatpush1.msra.mxu0 %v710
      %817 = vmatprep.subr.mxu0 0.0
      %818 = vmatpush1.msra.mxu0 %v713
      %819 = vmatprep.subr.mxu0 0.0
      %820 = vmatpush1.msra.mxu0 %v716
      %821 = vmatprep.subr.mxu0 0.0
      %822 = vmatpush1.msra.mxu0 %v719
      %823 = vmatprep.subr.mxu0 0.0
      %824 = vmatpush1.msra.mxu0 0.0
      %825 = vmatprep.subr.mxu0 0.0
      %826 = vmatpush1.msra.mxu0 0.0
      %827 = vmatprep.subr.mxu0 0.0
      %828 = vmatpush1.msra.mxu0 0.0
      %829 = vmatprep.subr.mxu0 0.0
      %830 = vmatpush1.msra.mxu0 0.0
      %831 = vmatprep.subr.mxu0 0.0
      %832 = vmatpush1.msra.mxu0 0.0
      %833 = vmatprep.subr.mxu0 0.0
      %834 = vmatpush1.msra.mxu0 0.0
      %835 = vmatprep.subr.mxu0 0.0
      %836 = vmatpush1.msra.mxu0 0.0
      %837 = vmatprep.subr.mxu0 0.0
      %838 = vmatpush1.msra.mxu0 0.0
      %839 = vmatprep.subr.mxu0 0.0
      %840 = vmatpush1.msra.mxu0 0.0
      %841 = vmatprep.subr.mxu0 0.0
      %842 = vmatpush1.msra.mxu0 0.0
      %843 = vmatprep.subr.mxu0 0.0
      %844 = vmatpush1.msra.mxu0 0.0
      %845 = vmatprep.subr.mxu0 0.0
      %846 = vmatpush1.msra.mxu0 0.0
      %847 = vmatprep.subr.mxu0 0.0
      %848 = vmatpush1.msra.mxu0 0.0
      %849 = vmatprep.subr.mxu0 0.0
      %850 = vmatpush1.msra.mxu0 0.0
      %851 = vmatprep.subr.mxu0 0.0
      %852 = vmatpush1.msra.mxu0 0.0
      %853 = vmatprep.subr.mxu0 0.0
      %854 = vmatpush1.msra.mxu0 0.0
      %855 = vmatprep.mubr.f32.mxu0 0.0
      %856 = vmatmul.mubr.f32.gmra.mrb[0].mxu0 %v442
      %v857 = vpop.f32.mrb[0].mxu0
      %v858 = vadd.f32 0.0, %v857
      %v859 = vpop.f32.mrb[0].mxu0
      %860 = vdwg.mxu0
      %v861 = vadd.f32 %v668, %v787
      %v862 = vxor.u32 %v861, 2147483648
      %v863 = vmul.f32 %v862, 1.442695
      %v864 = vpow.pop %v863
      %v865 = vadd.f32 %v864, 1.0
      %v866 = vrcp.pop %v865
      %v867 = vmul.f32 1.0, %v866
      %v868 = vadd.f32 %v669, %v789
      %v869 = vxor.u32 %v868, 2147483648
      %v870 = vmul.f32 %v869, 1.442695
      %v871 = vpow.pop %v870
      %v872 = vadd.f32 %v871, 1.0
      %v873 = vrcp.pop %v872
      %v874 = vmul.f32 1.0, %v873
      %v875 = vadd.f32 %v858, %v436
      %v876 = vmul.f32 %v867, %v875
      %v877 = vadd.f32 %v670, %v876
      %v878 = vtanh.pop %v877
      %v879 = vsub.f32 1.0, %v874
      %v880 = vmul.f32 %v879, %v878
      %v881 = vmul.f32 %v874, %v442
      %v882 = vadd.f32 %v880, %v881
      %v883 = vstv %s671
      %vm884 = vcmp.lt.s32.totalorder %v883, %v423
      %v885 = vsel %vm884, 1, 0
      %886 = vset.pattern.permute.xlu0 0
      %887 = vperm.xlu0 %886, %v885
      %v888 = vpop.permute.xlu0 %887
      %vm889 = vcmp.eq.s32.totalorder %v888, 1
      %v890 = vsel %vm889, %v882, 0.0
      %v891 = vsel %vm889, %v882, %v442
      %s892 = scalar_lea.vmem %s411, 24
      %893 = vst [vmem:[%s892] sm:$0xff] %v890
      %s894 = scalar_lea.vmem %s389, 24
      %v895 = vld [vmem:[%s894] sm:$0xff]
      %v896 = vld [vmem:[%s894 + $0x8] sm:$0xff]
      %v897 = vld [vmem:[%s894 + $0x10] sm:$0xff]
      %s898 = sadd.s32 %s438, 1
      %v899 = vld [vmem:[%s3] sm:$0xff]
      %v900 = vld [vmem:[%s3 + $0x8] sm:$0xff]
      %v901 = vld [vmem:[%s3 + $0x10] sm:$0xff]
      %v902 = vld [vmem:[%s3 + $0x18] sm:$0xff]
      %v903 = vld [vmem:[%s3 + $0x20] sm:$0xff]
      %v904 = vld [vmem:[%s3 + $0x28] sm:$0xff]
      %v905 = vld [vmem:[%s3 + $0x30] sm:$0xff]
      %v906 = vld [vmem:[%s3 + $0x38] sm:$0xff]
      %v907 = vld [vmem:[%s3 + $0x40] sm:$0xff]
      %v908 = vld [vmem:[%s3 + $0x48] sm:$0xff]
      %v909 = vld [vmem:[%s3 + $0x50] sm:$0xff]
      %v910 = vld [vmem:[%s3 + $0x58] sm:$0xff]
      %v911 = vld [vmem:[%s3 + $0x60] sm:$0xff]
      %v912 = vld [vmem:[%s3 + $0x68] sm:$0xff]
      %v913 = vld [vmem:[%s3 + $0x70] sm:$0xff]
      %v914 = vld [vmem:[%s3 + $0x78] sm:$0xff]
      %v915 = vld [vmem:[%s3 + $0x80] sm:$0xff]
      %v916 = vld [vmem:[%s3 + $0x88] sm:$0xff]
      %v917 = vld [vmem:[%s3 + $0x90] sm:$0xff]
      %v918 = vld [vmem:[%s3 + $0x98] sm:$0xff]
      %v919 = vld [vmem:[%s3 + $0xa0] sm:$0xff]
      %v920 = vld [vmem:[%s3 + $0xa8] sm:$0xff]
      %v921 = vld [vmem:[%s3 + $0xb0] sm:$0xff]
      %v922 = vld [vmem:[%s3 + $0xb8] sm:$0xff]
      %v923 = vld [vmem:[%s3 + $0xc0] sm:$0xff]
      %v924 = vld [vmem:[%s3 + $0xc8] sm:$0xff]
      %v925 = vld [vmem:[%s3 + $0xd0] sm:$0xff]
      %v926 = vld [vmem:[%s3 + $0xd8] sm:$0xff]
      %v927 = vld [vmem:[%s3 + $0xe0] sm:$0xff]
      %v928 = vld [vmem:[%s3 + $0xe8] sm:$0xff]
      %v929 = vld [vmem:[%s3 + $0xf0] sm:$0xff]
      %v930 = vld [vmem:[%s3 + $0xf8] sm:$0xff]
      %v931 = vld [vmem:[%s3 + $0x100] sm:$0xff]
      %v932 = vld [vmem:[%s3 + $0x108] sm:$0xff]
      %v933 = vld [vmem:[%s3 + $0x110] sm:$0xff]
      %v934 = vld [vmem:[%s3 + $0x118] sm:$0xff]
      %v935 = vld [vmem:[%s3 + $0x120] sm:$0xff]
      %v936 = vld [vmem:[%s3 + $0x128] sm:$0xff]
      %v937 = vld [vmem:[%s3 + $0x130] sm:$0xff]
      %v938 = vld [vmem:[%s3 + $0x138] sm:$0xff]
      %v939 = vld [vmem:[%s3 + $0x140] sm:$0xff]
      %v940 = vld [vmem:[%s3 + $0x148] sm:$0xff]
      %v941 = vld [vmem:[%s3 + $0x150] sm:$0xff]
      %v942 = vld [vmem:[%s3 + $0x158] sm:$0xff]
      %v943 = vld [vmem:[%s3 + $0x160] sm:$0xff]
      %v944 = vld [vmem:[%s3 + $0x168] sm:$0xff]
      %v945 = vld [vmem:[%s3 + $0x170] sm:$0xff]
      %v946 = vld [vmem:[%s3 + $0x178] sm:$0xff]
      %947 = vmatprep.subr.mxu0 %v900
      %948 = vmatpush1.msra.mxu0 %v899
      %949 = vmatprep.subr.mxu0 %v903
      %950 = vmatpush1.msra.mxu0 %v902
      %951 = vmatprep.subr.mxu0 %v906
      %952 = vmatpush1.msra.mxu0 %v905
      %953 = vmatprep.subr.mxu0 %v909
      %954 = vmatpush1.msra.mxu0 %v908
      %955 = vmatprep.subr.mxu0 %v912
      %956 = vmatpush1.msra.mxu0 %v911
      %957 = vmatprep.subr.mxu0 %v915
      %958 = vmatpush1.msra.mxu0 %v914
      %959 = vmatprep.subr.mxu0 %v918
      %960 = vmatpush1.msra.mxu0 %v917
      %961 = vmatprep.subr.mxu0 %v921
      %962 = vmatpush1.msra.mxu0 %v920
      %963 = vmatprep.subr.mxu0 %v924
      %964 = vmatpush1.msra.mxu0 %v923
      %965 = vmatprep.subr.mxu0 %v927
      %966 = vmatpush1.msra.mxu0 %v926
      %967 = vmatprep.subr.mxu0 %v930
      %968 = vmatpush1.msra.mxu0 %v929
      %969 = vmatprep.subr.mxu0 %v933
      %970 = vmatpush1.msra.mxu0 %v932
      %971 = vmatprep.subr.mxu0 %v936
      %972 = vmatpush1.msra.mxu0 %v935
      %973 = vmatprep.subr.mxu0 %v939
      %974 = vmatpush1.msra.mxu0 %v938
      %975 = vmatprep.subr.mxu0 %v942
      %976 = vmatpush1.msra.mxu0 %v941
      %977 = vmatprep.subr.mxu0 %v945
      %978 = vmatpush1.msra.mxu0 %v944
      %979 = vmatprep.subr.mxu0 0.0
      %980 = vmatpush1.msra.mxu0 0.0
      %981 = vmatprep.subr.mxu0 0.0
      %982 = vmatpush1.msra.mxu0 0.0
      %983 = vmatprep.subr.mxu0 0.0
      %984 = vmatpush1.msra.mxu0 0.0
      %985 = vmatprep.subr.mxu0 0.0
      %986 = vmatpush1.msra.mxu0 0.0
      %987 = vmatprep.subr.mxu0 0.0
      %988 = vmatpush1.msra.mxu0 0.0
      %989 = vmatprep.subr.mxu0 0.0
      %990 = vmatpush1.msra.mxu0 0.0
      %991 = vmatprep.subr.mxu0 0.0
      %992 = vmatpush1.msra.mxu0 0.0
      %993 = vmatprep.subr.mxu0 0.0
      %994 = vmatpush1.msra.mxu0 0.0
      %995 = vmatprep.subr.mxu0 0.0
      %996 = vmatpush1.msra.mxu0 0.0
      %997 = vmatprep.subr.mxu0 0.0
      %998 = vmatpush1.msra.mxu0 0.0
      %999 = vmatprep.subr.mxu0 0.0
      %1000 = vmatpush1.msra.mxu0 0.0
      %1001 = vmatprep.subr.mxu0 0.0
      %1002 = vmatpush1.msra.mxu0 0.0
      %1003 = vmatprep.subr.mxu0 0.0
      %1004 = vmatpush1.msra.mxu0 0.0
      %1005 = vmatprep.subr.mxu0 0.0
      %1006 = vmatpush1.msra.mxu0 0.0
      %1007 = vmatprep.subr.mxu0 0.0
      %1008 = vmatpush1.msra.mxu0 0.0
      %1009 = vmatprep.subr.mxu0 0.0
      %1010 = vmatpush1.msra.mxu0 0.0
      %1011 = vmatprep.mubr.f32.mxu0 0.0
      %1012 = vmatmul.mubr.f32.gmra.mrb[0].mxu0 %v665
      %v1013 = vpop.f32.mrb[0].mxu0
      %v1014 = vadd.f32 0.0, %v1013
      %v1015 = vpop.f32.mrb[0].mxu0
      %v1016 = vadd.f32 0.0, %v1015
      %1017 = vdwg.mxu0
      %1018 = vmatprep.subr.mxu0 0.0
      %1019 = vmatpush1.msra.mxu0 %v901
      %1020 = vmatprep.subr.mxu0 0.0
      %1021 = vmatpush1.msra.mxu0 %v904
      %1022 = vmatprep.subr.mxu0 0.0
      %1023 = vmatpush1.msra.mxu0 %v907
      %1024 = vmatprep.subr.mxu0 0.0
      %1025 = vmatpush1.msra.mxu0 %v910
      %1026 = vmatprep.subr.mxu0 0.0
      %1027 = vmatpush1.msra.mxu0 %v913
      %1028 = vmatprep.subr.mxu0 0.0
      %1029 = vmatpush1.msra.mxu0 %v916
      %1030 = vmatprep.subr.mxu0 0.0
      %1031 = vmatpush1.msra.mxu0 %v919
      %1032 = vmatprep.subr.mxu0 0.0
      %1033 = vmatpush1.msra.mxu0 %v922
      %1034 = vmatprep.subr.mxu0 0.0
      %1035 = vmatpush1.msra.mxu0 %v925
      %1036 = vmatprep.subr.mxu0 0.0
      %1037 = vmatpush1.msra.mxu0 %v928
      %1038 = vmatprep.subr.mxu0 0.0
      %1039 = vmatpush1.msra.mxu0 %v931
      %1040 = vmatprep.subr.mxu0 0.0
      %1041 = vmatpush1.msra.mxu0 %v934
      %1042 = vmatprep.subr.mxu0 0.0
      %1043 = vmatpush1.msra.mxu0 %v937
      %1044 = vmatprep.subr.mxu0 0.0
      %1045 = vmatpush1.msra.mxu0 %v940
      %1046 = vmatprep.subr.mxu0 0.0
      %1047 = vmatpush1.msra.mxu0 %v943
      %1048 = vmatprep.subr.mxu0 0.0
      %1049 = vmatpush1.msra.mxu0 %v946
      %1050 = vmatprep.subr.mxu0 0.0
      %1051 = vmatpush1.msra.mxu0 0.0
      %1052 = vmatprep.subr.mxu0 0.0
      %1053 = vmatpush1.msra.mxu0 0.0
      %1054 = vmatprep.subr.mxu0 0.0
      %1055 = vmatpush1.msra.mxu0 0.0
      %1056 = vmatprep.subr.mxu0 0.0
      %1057 = vmatpush1.msra.mxu0 0.0
      %1058 = vmatprep.subr.mxu0 0.0
      %1059 = vmatpush1.msra.mxu0 0.0
      %1060 = vmatprep.subr.mxu0 0.0
      %1061 = vmatpush1.msra.mxu0 0.0
      %1062 = vmatprep.subr.mxu0 0.0
      %1063 = vmatpush1.msra.mxu0 0.0
      %1064 = vmatprep.subr.mxu0 0.0
      %1065 = vmatpush1.msra.mxu0 0.0
      %1066 = vmatprep.subr.mxu0 0.0
      %1067 = vmatpush1.msra.mxu0 0.0
      %1068 = vmatprep.subr.mxu0 0.0
      %1069 = vmatpush1.msra.mxu0 0.0
      %1070 = vmatprep.subr.mxu0 0.0
      %1071 = vmatpush1.msra.mxu0 0.0
      %1072 = vmatprep.subr.mxu0 0.0
      %1073 = vmatpush1.msra.mxu0 0.0
      %1074 = vmatprep.subr.mxu0 0.0
      %1075 = vmatpush1.msra.mxu0 0.0
      %1076 = vmatprep.subr.mxu0 0.0
      %1077 = vmatpush1.msra.mxu0 0.0
      %1078 = vmatprep.subr.mxu0 0.0
      %1079 = vmatpush1.msra.mxu0 0.0
      %1080 = vmatprep.subr.mxu0 0.0
      %1081 = vmatpush1.msra.mxu0 0.0
      %1082 = vmatprep.mubr.f32.mxu0 0.0
      %1083 = vmatmul.mubr.f32.gmra.mrb[0].mxu0 %v665
      %v1084 = vpop.f32.mrb[0].mxu0
      %v1085 = vadd.f32 0.0, %v1084
      %v1086 = vpop.f32.mrb[0].mxu0
      %1087 = vdwg.mxu0
      %v1088 = vadd.f32 %v895, %v1014
      %v1089 = vxor.u32 %v1088, 2147483648
      %v1090 = vmul.f32 %v1089, 1.442695
      %v1091 = vpow.pop %v1090
      %v1092 = vadd.f32 %v1091, 1.0
      %v1093 = vrcp.pop %v1092
      %v1094 = vmul.f32 1.0, %v1093
      %v1095 = vadd.f32 %v896, %v1016
      %v1096 = vxor.u32 %v1095, 2147483648
      %v1097 = vmul.f32 %v1096, 1.442695
      %v1098 = vpow.pop %v1097
      %v1099 = vadd.f32 %v1098, 1.0
      %v1100 = vrcp.pop %v1099
      %v1101 = vmul.f32 1.0, %v1100
      %v1102 = vadd.f32 %v1085, %v429
      %v1103 = vmul.f32 %v1094, %v1102
      %v1104 = vadd.f32 %v897, %v1103
      %v1105 = vtanh.pop %v1104
      %v1106 = vsub.f32 1.0, %v1101
      %v1107 = vmul.f32 %v1106, %v1105
      %v1108 = vmul.f32 %v1101, %v665
      %v1109 = vadd.f32 %v1107, %v1108
      %v1110 = vstv %s898
      %vm1111 = vcmp.lt.s32.totalorder %v1110, %v423
      %v1112 = vsel %vm1111, 1, 0
      %1113 = vset.pattern.permute.xlu0 0
      %1114 = vperm.xlu0 %1113, %v1112
      %v1115 = vpop.permute.xlu0 %1114
      %vm1116 = vcmp.eq.s32.totalorder %v1115, 1
      %v1117 = vsel %vm1116, %v1109, 0.0
      %v1118 = vsel %vm1116, %v1109, %v665
      %s1119 = scalar_lea.vmem %s404, 8
      %1120 = vst [vmem:[%s1119] sm:$0xff] %v1117
      %s1121 = scalar_lea.vmem %s397, 48
      %v1122 = vld [vmem:[%s1121] sm:$0xff]
      %v1123 = vld [vmem:[%s1121 + $0x8] sm:$0xff]
      %v1124 = vld [vmem:[%s1121 + $0x10] sm:$0xff]
      %s1125 = sadd.s32 %s440, 2
      %v1126 = vld [vmem:[%s4] sm:$0xff]
      %v1127 = vld [vmem:[%s4 + $0x8] sm:$0xff]
      %v1128 = vld [vmem:[%s4 + $0x10] sm:$0xff]
      %v1129 = vld [vmem:[%s4 + $0x18] sm:$0xff]
      %v1130 = vld [vmem:[%s4 + $0x20] sm:$0xff]
      %v1131 = vld [vmem:[%s4 + $0x28] sm:$0xff]
      %v1132 = vld [vmem:[%s4 + $0x30] sm:$0xff]
      %v1133 = vld [vmem:[%s4 + $0x38] sm:$0xff]
      %v1134 = vld [vmem:[%s4 + $0x40] sm:$0xff]
      %v1135 = vld [vmem:[%s4 + $0x48] sm:$0xff]
      %v1136 = vld [vmem:[%s4 + $0x50] sm:$0xff]
      %v1137 = vld [vmem:[%s4 + $0x58] sm:$0xff]
      %v1138 = vld [vmem:[%s4 + $0x60] sm:$0xff]
      %v1139 = vld [vmem:[%s4 + $0x68] sm:$0xff]
      %v1140 = vld [vmem:[%s4 + $0x70] sm:$0xff]
      %v1141 = vld [vmem:[%s4 + $0x78] sm:$0xff]
      %v1142 = vld [vmem:[%s4 + $0x80] sm:$0xff]
      %v1143 = vld [vmem:[%s4 + $0x88] sm:$0xff]
      %v1144 = vld [vmem:[%s4 + $0x90] sm:$0xff]
      %v1145 = vld [vmem:[%s4 + $0x98] sm:$0xff]
      %v1146 = vld [vmem:[%s4 + $0xa0] sm:$0xff]
      %v1147 = vld [vmem:[%s4 + $0xa8] sm:$0xff]
      %v1148 = vld [vmem:[%s4 + $0xb0] sm:$0xff]
      %v1149 = vld [vmem:[%s4 + $0xb8] sm:$0xff]
      %v1150 = vld [vmem:[%s4 + $0xc0] sm:$0xff]
      %v1151 = vld [vmem:[%s4 + $0xc8] sm:$0xff]
      %v1152 = vld [vmem:[%s4 + $0xd0] sm:$0xff]
      %v1153 = vld [vmem:[%s4 + $0xd8] sm:$0xff]
      %v1154 = vld [vmem:[%s4 + $0xe0] sm:$0xff]
      %v1155 = vld [vmem:[%s4 + $0xe8] sm:$0xff]
      %v1156 = vld [vmem:[%s4 + $0xf0] sm:$0xff]
      %v1157 = vld [vmem:[%s4 + $0xf8] sm:$0xff]
      %v1158 = vld [vmem:[%s4 + $0x100] sm:$0xff]
      %v1159 = vld [vmem:[%s4 + $0x108] sm:$0xff]
      %v1160 = vld [vmem:[%s4 + $0x110] sm:$0xff]
      %v1161 = vld [vmem:[%s4 + $0x118] sm:$0xff]
      %v1162 = vld [vmem:[%s4 + $0x120] sm:$0xff]
      %v1163 = vld [vmem:[%s4 + $0x128] sm:$0xff]
      %v1164 = vld [vmem:[%s4 + $0x130] sm:$0xff]
      %v1165 = vld [vmem:[%s4 + $0x138] sm:$0xff]
      %v1166 = vld [vmem:[%s4 + $0x140] sm:$0xff]
      %v1167 = vld [vmem:[%s4 + $0x148] sm:$0xff]
      %v1168 = vld [vmem:[%s4 + $0x150] sm:$0xff]
      %v1169 = vld [vmem:[%s4 + $0x158] sm:$0xff]
      %v1170 = vld [vmem:[%s4 + $0x160] sm:$0xff]
      %v1171 = vld [vmem:[%s4 + $0x168] sm:$0xff]
      %v1172 = vld [vmem:[%s4 + $0x170] sm:$0xff]
      %v1173 = vld [vmem:[%s4 + $0x178] sm:$0xff]
      %1174 = vmatprep.subr.mxu0 %v1127
      %1175 = vmatpush1.msra.mxu0 %v1126
      %1176 = vmatprep.subr.mxu0 %v1130
      %1177 = vmatpush1.msra.mxu0 %v1129
      %1178 = vmatprep.subr.mxu0 %v1133
      %1179 = vmatpush1.msra.mxu0 %v1132
      %1180 = vmatprep.subr.mxu0 %v1136
      %1181 = vmatpush1.msra.mxu0 %v1135
      %1182 = vmatprep.subr.mxu0 %v1139
      %1183 = vmatpush1.msra.mxu0 %v1138
      %1184 = vmatprep.subr.mxu0 %v1142
      %1185 = vmatpush1.msra.mxu0 %v1141
      %1186 = vmatprep.subr.mxu0 %v1145
      %1187 = vmatpush1.msra.mxu0 %v1144
      %1188 = vmatprep.subr.mxu0 %v1148
      %1189 = vmatpush1.msra.mxu0 %v1147
      %1190 = vmatprep.subr.mxu0 %v1151
      %1191 = vmatpush1.msra.mxu0 %v1150
      %1192 = vmatprep.subr.mxu0 %v1154
      %1193 = vmatpush1.msra.mxu0 %v1153
      %1194 = vmatprep.subr.mxu0 %v1157
      %1195 = vmatpush1.msra.mxu0 %v1156
      %1196 = vmatprep.subr.mxu0 %v1160
      %1197 = vmatpush1.msra.mxu0 %v1159
      %1198 = vmatprep.subr.mxu0 %v1163
      %1199 = vmatpush1.msra.mxu0 %v1162
      %1200 = vmatprep.subr.mxu0 %v1166
      %1201 = vmatpush1.msra.mxu0 %v1165
      %1202 = vmatprep.subr.mxu0 %v1169
      %1203 = vmatpush1.msra.mxu0 %v1168
      %1204 = vmatprep.subr.mxu0 %v1172
      %1205 = vmatpush1.msra.mxu0 %v1171
      %1206 = vmatprep.subr.mxu0 0.0
      %1207 = vmatpush1.msra.mxu0 0.0
      %1208 = vmatprep.subr.mxu0 0.0
      %1209 = vmatpush1.msra.mxu0 0.0
      %1210 = vmatprep.subr.mxu0 0.0
      %1211 = vmatpush1.msra.mxu0 0.0
      %1212 = vmatprep.subr.mxu0 0.0
      %1213 = vmatpush1.msra.mxu0 0.0
      %1214 = vmatprep.subr.mxu0 0.0
      %1215 = vmatpush1.msra.mxu0 0.0
      %1216 = vmatprep.subr.mxu0 0.0
      %1217 = vmatpush1.msra.mxu0 0.0
      %1218 = vmatprep.subr.mxu0 0.0
      %1219 = vmatpush1.msra.mxu0 0.0
      %1220 = vmatprep.subr.mxu0 0.0
      %1221 = vmatpush1.msra.mxu0 0.0
      %1222 = vmatprep.subr.mxu0 0.0
      %1223 = vmatpush1.msra.mxu0 0.0
      %1224 = vmatprep.subr.mxu0 0.0
      %1225 = vmatpush1.msra.mxu0 0.0
      %1226 = vmatprep.subr.mxu0 0.0
      %1227 = vmatpush1.msra.mxu0 0.0
      %1228 = vmatprep.subr.mxu0 0.0
      %1229 = vmatpush1.msra.mxu0 0.0
      %1230 = vmatprep.subr.mxu0 0.0
      %1231 = vmatpush1.msra.mxu0 0.0
      %1232 = vmatprep.subr.mxu0 0.0
      %1233 = vmatpush1.msra.mxu0 0.0
      %1234 = vmatprep.subr.mxu0 0.0
      %1235 = vmatpush1.msra.mxu0 0.0
      %1236 = vmatprep.subr.mxu0 0.0
      %1237 = vmatpush1.msra.mxu0 0.0
      %1238 = vmatprep.mubr.f32.mxu0 0.0
      %1239 = vmatmul.mubr.f32.gmra.mrb[0].mxu0 %v891
      %v1240 = vpop.f32.mrb[0].mxu0
      %v1241 = vadd.f32 0.0, %v1240
      %v1242 = vpop.f32.mrb[0].mxu0
      %v1243 = vadd.f32 0.0, %v1242
      %1244 = vdwg.mxu0
      %1245 = vmatprep.subr.mxu0 0.0
      %1246 = vmatpush1.msra.mxu0 %v1128
      %1247 = vmatprep.subr.mxu0 0.0
      %1248 = vmatpush1.msra.mxu0 %v1131
      %1249 = vmatprep.subr.mxu0 0.0
      %1250 = vmatpush1.msra.mxu0 %v1134
      %1251 = vmatprep.subr.mxu0 0.0
      %1252 = vmatpush1.msra.mxu0 %v1137
      %1253 = vmatprep.subr.mxu0 0.0
      %1254 = vmatpush1.msra.mxu0 %v1140
      %1255 = vmatprep.subr.mxu0 0.0
      %1256 = vmatpush1.msra.mxu0 %v1143
      %1257 = vmatprep.subr.mxu0 0.0
      %1258 = vmatpush1.msra.mxu0 %v1146
      %1259 = vmatprep.subr.mxu0 0.0
      %1260 = vmatpush1.msra.mxu0 %v1149
      %1261 = vmatprep.subr.mxu0 0.0
      %1262 = vmatpush1.msra.mxu0 %v1152
      %1263 = vmatprep.subr.mxu0 0.0
      %1264 = vmatpush1.msra.mxu0 %v1155
      %1265 = vmatprep.subr.mxu0 0.0
      %1266 = vmatpush1.msra.mxu0 %v1158
      %1267 = vmatprep.subr.mxu0 0.0
      %1268 = vmatpush1.msra.mxu0 %v1161
      %1269 = vmatprep.subr.mxu0 0.0
      %1270 = vmatpush1.msra.mxu0 %v1164
      %1271 = vmatprep.subr.mxu0 0.0
      %1272 = vmatpush1.msra.mxu0 %v1167
      %1273 = vmatprep.subr.mxu0 0.0
      %1274 = vmatpush1.msra.mxu0 %v1170
      %1275 = vmatprep.subr.mxu0 0.0
      %1276 = vmatpush1.msra.mxu0 %v1173
      %1277 = vmatprep.subr.mxu0 0.0
      %1278 = vmatpush1.msra.mxu0 0.0
      %1279 = vmatprep.subr.mxu0 0.0
      %1280 = vmatpush1.msra.mxu0 0.0
      %1281 = vmatprep.subr.mxu0 0.0
      %1282 = vmatpush1.msra.mxu0 0.0
      %1283 = vmatprep.subr.mxu0 0.0
      %1284 = vmatpush1.msra.mxu0 0.0
      %1285 = vmatprep.subr.mxu0 0.0
      %1286 = vmatpush1.msra.mxu0 0.0
      %1287 = vmatprep.subr.mxu0 0.0
      %1288 = vmatpush1.msra.mxu0 0.0
      %1289 = vmatprep.subr.mxu0 0.0
      %1290 = vmatpush1.msra.mxu0 0.0
      %1291 = vmatprep.subr.mxu0 0.0
      %1292 = vmatpush1.msra.mxu0 0.0
      %1293 = vmatprep.subr.mxu0 0.0
      %1294 = vmatpush1.msra.mxu0 0.0
      %1295 = vmatprep.subr.mxu0 0.0
      %1296 = vmatpush1.msra.mxu0 0.0
      %1297 = vmatprep.subr.mxu0 0.0
      %1298 = vmatpush1.msra.mxu0 0.0
      %1299 = vmatprep.subr.mxu0 0.0
      %1300 = vmatpush1.msra.mxu0 0.0
      %1301 = vmatprep.subr.mxu0 0.0
      %1302 = vmatpush1.msra.mxu0 0.0
      %1303 = vmatprep.subr.mxu0 0.0
      %1304 = vmatpush1.msra.mxu0 0.0
      %1305 = vmatprep.subr.mxu0 0.0
      %1306 = vmatpush1.msra.mxu0 0.0
      %1307 = vmatprep.subr.mxu0 0.0
      %1308 = vmatpush1.msra.mxu0 0.0
      %1309 = vmatprep.mubr.f32.mxu0 0.0
      %1310 = vmatmul.mubr.f32.gmra.mrb[0].mxu0 %v891
      %v1311 = vpop.f32.mrb[0].mxu0
      %v1312 = vadd.f32 0.0, %v1311
      %v1313 = vpop.f32.mrb[0].mxu0
      %1314 = vdwg.mxu0
      %v1315 = vadd.f32 %v1122, %v1241
      %v1316 = vxor.u32 %v1315, 2147483648
      %v1317 = vmul.f32 %v1316, 1.442695
      %v1318 = vpow.pop %v1317
      %v1319 = vadd.f32 %v1318, 1.0
      %v1320 = vrcp.pop %v1319
      %v1321 = vmul.f32 1.0, %v1320
      %v1322 = vadd.f32 %v1123, %v1243
      %v1323 = vxor.u32 %v1322, 2147483648
      %v1324 = vmul.f32 %v1323, 1.442695
      %v1325 = vpow.pop %v1324
      %v1326 = vadd.f32 %v1325, 1.0
      %v1327 = vrcp.pop %v1326
      %v1328 = vmul.f32 1.0, %v1327
      %v1329 = vadd.f32 %v1312, %v436
      %v1330 = vmul.f32 %v1321, %v1329
      %v1331 = vadd.f32 %v1124, %v1330
      %v1332 = vtanh.pop %v1331
      %v1333 = vsub.f32 1.0, %v1328
      %v1334 = vmul.f32 %v1333, %v1332
      %v1335 = vmul.f32 %v1328, %v891
      %v1336 = vadd.f32 %v1334, %v1335
      %v1337 = vstv %s1125
      %vm1338 = vcmp.lt.s32.totalorder %v1337, %v423
      %v1339 = vsel %vm1338, 1, 0
      %1340 = vset.pattern.permute.xlu0 0
      %1341 = vperm.xlu0 %1340, %v1339
      %v1342 = vpop.permute.xlu0 %1341
      %vm1343 = vcmp.eq.s32.totalorder %v1342, 1
      %v1344 = vsel %vm1343, %v1336, 0.0
      %v1345 = vsel %vm1343, %v1336, %v891
      %s1346 = scalar_lea.vmem %s411, 16
      %1347 = vst [vmem:[%s1346] sm:$0xff] %v1344
      %s1348 = scalar_lea.vmem %s389, 48
      %v1349 = vld [vmem:[%s1348] sm:$0xff]
      %v1350 = vld [vmem:[%s1348 + $0x8] sm:$0xff]
      %v1351 = vld [vmem:[%s1348 + $0x10] sm:$0xff]
      %s1352 = sadd.s32 %s438, 2
      %v1353 = vld [vmem:[%s3] sm:$0xff]
      %v1354 = vld [vmem:[%s3 + $0x8] sm:$0xff]
      %v1355 = vld [vmem:[%s3 + $0x10] sm:$0xff]
      %v1356 = vld [vmem:[%s3 + $0x18] sm:$0xff]
      %v1357 = vld [vmem:[%s3 + $0x20] sm:$0xff]
      %v1358 = vld [vmem:[%s3 + $0x28] sm:$0xff]
      %v1359 = vld [vmem:[%s3 + $0x30] sm:$0xff]
      %v1360 = vld [vmem:[%s3 + $0x38] sm:$0xff]
      %v1361 = vld [vmem:[%s3 + $0x40] sm:$0xff]
      %v1362 = vld [vmem:[%s3 + $0x48] sm:$0xff]
      %v1363 = vld [vmem:[%s3 + $0x50] sm:$0xff]
      %v1364 = vld [vmem:[%s3 + $0x58] sm:$0xff]
      %v1365 = vld [vmem:[%s3 + $0x60] sm:$0xff]
      %v1366 = vld [vmem:[%s3 + $0x68] sm:$0xff]
      %v1367 = vld [vmem:[%s3 + $0x70] sm:$0xff]
      %v1368 = vld [vmem:[%s3 + $0x78] sm:$0xff]
      %v1369 = vld [vmem:[%s3 + $0x80] sm:$0xff]
      %v1370 = vld [vmem:[%s3 + $0x88] sm:$0xff]
      %v1371 = vld [vmem:[%s3 + $0x90] sm:$0xff]
      %v1372 = vld [vmem:[%s3 + $0x98] sm:$0xff]
      %v1373 = vld [vmem:[%s3 + $0xa0] sm:$0xff]
      %v1374 = vld [vmem:[%s3 + $0xa8] sm:$0xff]
      %v1375 = vld [vmem:[%s3 + $0xb0] sm:$0xff]
      %v1376 = vld [vmem:[%s3 + $0xb8] sm:$0xff]
      %v1377 = vld [vmem:[%s3 + $0xc0] sm:$0xff]
      %v1378 = vld [vmem:[%s3 + $0xc8] sm:$0xff]
      %v1379 = vld [vmem:[%s3 + $0xd0] sm:$0xff]
      %v1380 = vld [vmem:[%s3 + $0xd8] sm:$0xff]
      %v1381 = vld [vmem:[%s3 + $0xe0] sm:$0xff]
      %v1382 = vld [vmem:[%s3 + $0xe8] sm:$0xff]
      %v1383 = vld [vmem:[%s3 + $0xf0] sm:$0xff]
      %v1384 = vld [vmem:[%s3 + $0xf8] sm:$0xff]
      %v1385 = vld [vmem:[%s3 + $0x100] sm:$0xff]
      %v1386 = vld [vmem:[%s3 + $0x108] sm:$0xff]
      %v1387 = vld [vmem:[%s3 + $0x110] sm:$0xff]
      %v1388 = vld [vmem:[%s3 + $0x118] sm:$0xff]
      %v1389 = vld [vmem:[%s3 + $0x120] sm:$0xff]
      %v1390 = vld [vmem:[%s3 + $0x128] sm:$0xff]
      %v1391 = vld [vmem:[%s3 + $0x130] sm:$0xff]
      %v1392 = vld [vmem:[%s3 + $0x138] sm:$0xff]
      %v1393 = vld [vmem:[%s3 + $0x140] sm:$0xff]
      %v1394 = vld [vmem:[%s3 + $0x148] sm:$0xff]
      %v1395 = vld [vmem:[%s3 + $0x150] sm:$0xff]
      %v1396 = vld [vmem:[%s3 + $0x158] sm:$0xff]
      %v1397 = vld [vmem:[%s3 + $0x160] sm:$0xff]
      %v1398 = vld [vmem:[%s3 + $0x168] sm:$0xff]
      %v1399 = vld [vmem:[%s3 + $0x170] sm:$0xff]
      %v1400 = vld [vmem:[%s3 + $0x178] sm:$0xff]
      %1401 = vmatprep.subr.mxu0 %v1354
      %1402 = vmatpush1.msra.mxu0 %v1353
      %1403 = vmatprep.subr.mxu0 %v1357
      %1404 = vmatpush1.msra.mxu0 %v1356
      %1405 = vmatprep.subr.mxu0 %v1360
      %1406 = vmatpush1.msra.mxu0 %v1359
      %1407 = vmatprep.subr.mxu0 %v1363
      %1408 = vmatpush1.msra.mxu0 %v1362
      %1409 = vmatprep.subr.mxu0 %v1366
      %1410 = vmatpush1.msra.mxu0 %v1365
      %1411 = vmatprep.subr.mxu0 %v1369
      %1412 = vmatpush1.msra.mxu0 %v1368
      %1413 = vmatprep.subr.mxu0 %v1372
      %1414 = vmatpush1.msra.mxu0 %v1371
      %1415 = vmatprep.subr.mxu0 %v1375
      %1416 = vmatpush1.msra.mxu0 %v1374
      %1417 = vmatprep.subr.mxu0 %v1378
      %1418 = vmatpush1.msra.mxu0 %v1377
      %1419 = vmatprep.subr.mxu0 %v1381
      %1420 = vmatpush1.msra.mxu0 %v1380
      %1421 = vmatprep.subr.mxu0 %v1384
      %1422 = vmatpush1.msra.mxu0 %v1383
      %1423 = vmatprep.subr.mxu0 %v1387
      %1424 = vmatpush1.msra.mxu0 %v1386
      %1425 = vmatprep.subr.mxu0 %v1390
      %1426 = vmatpush1.msra.mxu0 %v1389
      %1427 = vmatprep.subr.mxu0 %v1393
      %1428 = vmatpush1.msra.mxu0 %v1392
      %1429 = vmatprep.subr.mxu0 %v1396
      %1430 = vmatpush1.msra.mxu0 %v1395
      %1431 = vmatprep.subr.mxu0 %v1399
      %1432 = vmatpush1.msra.mxu0 %v1398
      %1433 = vmatprep.subr.mxu0 0.0
      %1434 = vmatpush1.msra.mxu0 0.0
      %1435 = vmatprep.subr.mxu0 0.0
      %1436 = vmatpush1.msra.mxu0 0.0
      %1437 = vmatprep.subr.mxu0 0.0
      %1438 = vmatpush1.msra.mxu0 0.0
      %1439 = vmatprep.subr.mxu0 0.0
      %1440 = vmatpush1.msra.mxu0 0.0
      %1441 = vmatprep.subr.mxu0 0.0
      %1442 = vmatpush1.msra.mxu0 0.0
      %1443 = vmatprep.subr.mxu0 0.0
      %1444 = vmatpush1.msra.mxu0 0.0
      %1445 = vmatprep.subr.mxu0 0.0
      %1446 = vmatpush1.msra.mxu0 0.0
      %1447 = vmatprep.subr.mxu0 0.0
      %1448 = vmatpush1.msra.mxu0 0.0
      %1449 = vmatprep.subr.mxu0 0.0
      %1450 = vmatpush1.msra.mxu0 0.0
      %1451 = vmatprep.subr.mxu0 0.0
      %1452 = vmatpush1.msra.mxu0 0.0
      %1453 = vmatprep.subr.mxu0 0.0
      %1454 = vmatpush1.msra.mxu0 0.0
      %1455 = vmatprep.subr.mxu0 0.0
      %1456 = vmatpush1.msra.mxu0 0.0
      %1457 = vmatprep.subr.mxu0 0.0
      %1458 = vmatpush1.msra.mxu0 0.0
      %1459 = vmatprep.subr.mxu0 0.0
      %1460 = vmatpush1.msra.mxu0 0.0
      %1461 = vmatprep.subr.mxu0 0.0
      %1462 = vmatpush1.msra.mxu0 0.0
      %1463 = vmatprep.subr.mxu0 0.0
      %1464 = vmatpush1.msra.mxu0 0.0
      %1465 = vmatprep.mubr.f32.mxu0 0.0
      %1466 = vmatmul.mubr.f32.gmra.mrb[0].mxu0 %v1118
      %v1467 = vpop.f32.mrb[0].mxu0
      %v1468 = vadd.f32 0.0, %v1467
      %v1469 = vpop.f32.mrb[0].mxu0
      %v1470 = vadd.f32 0.0, %v1469
      %1471 = vdwg.mxu0
      %1472 = vmatprep.subr.mxu0 0.0
      %1473 = vmatpush1.msra.mxu0 %v1355
      %1474 = vmatprep.subr.mxu0 0.0
      %1475 = vmatpush1.msra.mxu0 %v1358
      %1476 = vmatprep.subr.mxu0 0.0
      %1477 = vmatpush1.msra.mxu0 %v1361
      %1478 = vmatprep.subr.mxu0 0.0
      %1479 = vmatpush1.msra.mxu0 %v1364
      %1480 = vmatprep.subr.mxu0 0.0
      %1481 = vmatpush1.msra.mxu0 %v1367
      %1482 = vmatprep.subr.mxu0 0.0
      %1483 = vmatpush1.msra.mxu0 %v1370
      %1484 = vmatprep.subr.mxu0 0.0
      %1485 = vmatpush1.msra.mxu0 %v1373
      %1486 = vmatprep.subr.mxu0 0.0
      %1487 = vmatpush1.msra.mxu0 %v1376
      %1488 = vmatprep.subr.mxu0 0.0
      %1489 = vmatpush1.msra.mxu0 %v1379
      %1490 = vmatprep.subr.mxu0 0.0
      %1491 = vmatpush1.msra.mxu0 %v1382
      %1492 = vmatprep.subr.mxu0 0.0
      %1493 = vmatpush1.msra.mxu0 %v1385
      %1494 = vmatprep.subr.mxu0 0.0
      %1495 = vmatpush1.msra.mxu0 %v1388
      %1496 = vmatprep.subr.mxu0 0.0
      %1497 = vmatpush1.msra.mxu0 %v1391
      %1498 = vmatprep.subr.mxu0 0.0
      %1499 = vmatpush1.msra.mxu0 %v1394
      %1500 = vmatprep.subr.mxu0 0.0
      %1501 = vmatpush1.msra.mxu0 %v1397
      %1502 = vmatprep.subr.mxu0 0.0
      %1503 = vmatpush1.msra.mxu0 %v1400
      %1504 = vmatprep.subr.mxu0 0.0
      %1505 = vmatpush1.msra.mxu0 0.0
      %1506 = vmatprep.subr.mxu0 0.0
      %1507 = vmatpush1.msra.mxu0 0.0
      %1508 = vmatprep.subr.mxu0 0.0
      %1509 = vmatpush1.msra.mxu0 0.0
      %1510 = vmatprep.subr.mxu0 0.0
      %1511 = vmatpush1.msra.mxu0 0.0
      %1512 = vmatprep.subr.mxu0 0.0
      %1513 = vmatpush1.msra.mxu0 0.0
      %1514 = vmatprep.subr.mxu0 0.0
      %1515 = vmatpush1.msra.mxu0 0.0
      %1516 = vmatprep.subr.mxu0 0.0
      %1517 = vmatpush1.msra.mxu0 0.0
      %1518 = vmatprep.subr.mxu0 0.0
      %1519 = vmatpush1.msra.mxu0 0.0
      %1520 = vmatprep.subr.mxu0 0.0
      %1521 = vmatpush1.msra.mxu0 0.0
      %1522 = vmatprep.subr.mxu0 0.0
      %1523 = vmatpush1.msra.mxu0 0.0
      %1524 = vmatprep.subr.mxu0 0.0
      %1525 = vmatpush1.msra.mxu0 0.0
      %1526 = vmatprep.subr.mxu0 0.0
      %1527 = vmatpush1.msra.mxu0 0.0
      %1528 = vmatprep.subr.mxu0 0.0
      %1529 = vmatpush1.msra.mxu0 0.0
      %1530 = vmatprep.subr.mxu0 0.0
      %1531 = vmatpush1.msra.mxu0 0.0
      %1532 = vmatprep.subr.mxu0 0.0
      %1533 = vmatpush1.msra.mxu0 0.0
      %1534 = vmatprep.subr.mxu0 0.0
      %1535 = vmatpush1.msra.mxu0 0.0
      %1536 = vmatprep.mubr.f32.mxu0 0.0
      %1537 = vmatmul.mubr.f32.gmra.mrb[0].mxu0 %v1118
      %v1538 = vpop.f32.mrb[0].mxu0
      %v1539 = vadd.f32 0.0, %v1538
      %v1540 = vpop.f32.mrb[0].mxu0
      %1541 = vdwg.mxu0
      %v1542 = vadd.f32 %v1349, %v1468
      %v1543 = vxor.u32 %v1542, 2147483648
      %v1544 = vmul.f32 %v1543, 1.442695
      %v1545 = vpow.pop %v1544
      %v1546 = vadd.f32 %v1545, 1.0
      %v1547 = vrcp.pop %v1546
      %v1548 = vmul.f32 1.0, %v1547
      %v1549 = vadd.f32 %v1350, %v1470
      %v1550 = vxor.u32 %v1549, 2147483648
      %v1551 = vmul.f32 %v1550, 1.442695
      %v1552 = vpow.pop %v1551
      %v1553 = vadd.f32 %v1552, 1.0
      %v1554 = vrcp.pop %v1553
      %v1555 = vmul.f32 1.0, %v1554
      %v1556 = vadd.f32 %v1539, %v429
      %v1557 = vmul.f32 %v1548, %v1556
      %v1558 = vadd.f32 %v1351, %v1557
      %v1559 = vtanh.pop %v1558
      %v1560 = vsub.f32 1.0, %v1555
      %v1561 = vmul.f32 %v1560, %v1559
      %v1562 = vmul.f32 %v1555, %v1118
      %v1563 = vadd.f32 %v1561, %v1562
      %v1564 = vstv %s1352
      %vm1565 = vcmp.lt.s32.totalorder %v1564, %v423
      %v1566 = vsel %vm1565, 1, 0
      %1567 = vset.pattern.permute.xlu0 0
      %1568 = vperm.xlu0 %1567, %v1566
      %v1569 = vpop.permute.xlu0 %1568
      %vm1570 = vcmp.eq.s32.totalorder %v1569, 1
      %v1571 = vsel %vm1570, %v1563, 0.0
      %v1572 = vsel %vm1570, %v1563, %v1118
      %s1573 = scalar_lea.vmem %s404, 16
      %1574 = vst [vmem:[%s1573] sm:$0xff] %v1571
      %s1575 = scalar_lea.vmem %s397, 24
      %v1576 = vld [vmem:[%s1575] sm:$0xff]
      %v1577 = vld [vmem:[%s1575 + $0x8] sm:$0xff]
      %v1578 = vld [vmem:[%s1575 + $0x10] sm:$0xff]
      %s1579 = sadd.s32 %s440, 1
      %v1580 = vld [vmem:[%s4] sm:$0xff]
      %v1581 = vld [vmem:[%s4 + $0x8] sm:$0xff]
      %v1582 = vld [vmem:[%s4 + $0x10] sm:$0xff]
      %v1583 = vld [vmem:[%s4 + $0x18] sm:$0xff]
      %v1584 = vld [vmem:[%s4 + $0x20] sm:$0xff]
      %v1585 = vld [vmem:[%s4 + $0x28] sm:$0xff]
      %v1586 = vld [vmem:[%s4 + $0x30] sm:$0xff]
      %v1587 = vld [vmem:[%s4 + $0x38] sm:$0xff]
      %v1588 = vld [vmem:[%s4 + $0x40] sm:$0xff]
      %v1589 = vld [vmem:[%s4 + $0x48] sm:$0xff]
      %v1590 = vld [vmem:[%s4 + $0x50] sm:$0xff]
      %v1591 = vld [vmem:[%s4 + $0x58] sm:$0xff]
      %v1592 = vld [vmem:[%s4 + $0x60] sm:$0xff]
      %v1593 = vld [vmem:[%s4 + $0x68] sm:$0xff]
      %v1594 = vld [vmem:[%s4 + $0x70] sm:$0xff]
      %v1595 = vld [vmem:[%s4 + $0x78] sm:$0xff]
      %v1596 = vld [vmem:[%s4 + $0x80] sm:$0xff]
      %v1597 = vld [vmem:[%s4 + $0x88] sm:$0xff]
      %v1598 = vld [vmem:[%s4 + $0x90] sm:$0xff]
      %v1599 = vld [vmem:[%s4 + $0x98] sm:$0xff]
      %v1600 = vld [vmem:[%s4 + $0xa0] sm:$0xff]
      %v1601 = vld [vmem:[%s4 + $0xa8] sm:$0xff]
      %v1602 = vld [vmem:[%s4 + $0xb0] sm:$0xff]
      %v1603 = vld [vmem:[%s4 + $0xb8] sm:$0xff]
      %v1604 = vld [vmem:[%s4 + $0xc0] sm:$0xff]
      %v1605 = vld [vmem:[%s4 + $0xc8] sm:$0xff]
      %v1606 = vld [vmem:[%s4 + $0xd0] sm:$0xff]
      %v1607 = vld [vmem:[%s4 + $0xd8] sm:$0xff]
      %v1608 = vld [vmem:[%s4 + $0xe0] sm:$0xff]
      %v1609 = vld [vmem:[%s4 + $0xe8] sm:$0xff]
      %v1610 = vld [vmem:[%s4 + $0xf0] sm:$0xff]
      %v1611 = vld [vmem:[%s4 + $0xf8] sm:$0xff]
      %v1612 = vld [vmem:[%s4 + $0x100] sm:$0xff]
      %v1613 = vld [vmem:[%s4 + $0x108] sm:$0xff]
      %v1614 = vld [vmem:[%s4 + $0x110] sm:$0xff]
      %v1615 = vld [vmem:[%s4 + $0x118] sm:$0xff]
      %v1616 = vld [vmem:[%s4 + $0x120] sm:$0xff]
      %v1617 = vld [vmem:[%s4 + $0x128] sm:$0xff]
      %v1618 = vld [vmem:[%s4 + $0x130] sm:$0xff]
      %v1619 = vld [vmem:[%s4 + $0x138] sm:$0xff]
      %v1620 = vld [vmem:[%s4 + $0x140] sm:$0xff]
      %v1621 = vld [vmem:[%s4 + $0x148] sm:$0xff]
      %v1622 = vld [vmem:[%s4 + $0x150] sm:$0xff]
      %v1623 = vld [vmem:[%s4 + $0x158] sm:$0xff]
      %v1624 = vld [vmem:[%s4 + $0x160] sm:$0xff]
      %v1625 = vld [vmem:[%s4 + $0x168] sm:$0xff]
      %v1626 = vld [vmem:[%s4 + $0x170] sm:$0xff]
      %v1627 = vld [vmem:[%s4 + $0x178] sm:$0xff]
      %1628 = vmatprep.subr.mxu0 %v1581
      %1629 = vmatpush1.msra.mxu0 %v1580
      %1630 = vmatprep.subr.mxu0 %v1584
      %1631 = vmatpush1.msra.mxu0 %v1583
      %1632 = vmatprep.subr.mxu0 %v1587
      %1633 = vmatpush1.msra.mxu0 %v1586
      %1634 = vmatprep.subr.mxu0 %v1590
      %1635 = vmatpush1.msra.mxu0 %v1589
      %1636 = vmatprep.subr.mxu0 %v1593
      %1637 = vmatpush1.msra.mxu0 %v1592
      %1638 = vmatprep.subr.mxu0 %v1596
      %1639 = vmatpush1.msra.mxu0 %v1595
      %1640 = vmatprep.subr.mxu0 %v1599
      %1641 = vmatpush1.msra.mxu0 %v1598
      %1642 = vmatprep.subr.mxu0 %v1602
      %1643 = vmatpush1.msra.mxu0 %v1601
      %1644 = vmatprep.subr.mxu0 %v1605
      %1645 = vmatpush1.msra.mxu0 %v1604
      %1646 = vmatprep.subr.mxu0 %v1608
      %1647 = vmatpush1.msra.mxu0 %v1607
      %1648 = vmatprep.subr.mxu0 %v1611
      %1649 = vmatpush1.msra.mxu0 %v1610
      %1650 = vmatprep.subr.mxu0 %v1614
      %1651 = vmatpush1.msra.mxu0 %v1613
      %1652 = vmatprep.subr.mxu0 %v1617
      %1653 = vmatpush1.msra.mxu0 %v1616
      %1654 = vmatprep.subr.mxu0 %v1620
      %1655 = vmatpush1.msra.mxu0 %v1619
      %1656 = vmatprep.subr.mxu0 %v1623
      %1657 = vmatpush1.msra.mxu0 %v1622
      %1658 = vmatprep.subr.mxu0 %v1626
      %1659 = vmatpush1.msra.mxu0 %v1625
      %1660 = vmatprep.subr.mxu0 0.0
      %1661 = vmatpush1.msra.mxu0 0.0
      %1662 = vmatprep.subr.mxu0 0.0
      %1663 = vmatpush1.msra.mxu0 0.0
      %1664 = vmatprep.subr.mxu0 0.0
      %1665 = vmatpush1.msra.mxu0 0.0
      %1666 = vmatprep.subr.mxu0 0.0
      %1667 = vmatpush1.msra.mxu0 0.0
      %1668 = vmatprep.subr.mxu0 0.0
      %1669 = vmatpush1.msra.mxu0 0.0
      %1670 = vmatprep.subr.mxu0 0.0
      %1671 = vmatpush1.msra.mxu0 0.0
      %1672 = vmatprep.subr.mxu0 0.0
      %1673 = vmatpush1.msra.mxu0 0.0
      %1674 = vmatprep.subr.mxu0 0.0
      %1675 = vmatpush1.msra.mxu0 0.0
      %1676 = vmatprep.subr.mxu0 0.0
      %1677 = vmatpush1.msra.mxu0 0.0
      %1678 = vmatprep.subr.mxu0 0.0
      %1679 = vmatpush1.msra.mxu0 0.0
      %1680 = vmatprep.subr.mxu0 0.0
      %1681 = vmatpush1.msra.mxu0 0.0
      %1682 = vmatprep.subr.mxu0 0.0
      %1683 = vmatpush1.msra.mxu0 0.0
      %1684 = vmatprep.subr.mxu0 0.0
      %1685 = vmatpush1.msra.mxu0 0.0
      %1686 = vmatprep.subr.mxu0 0.0
      %1687 = vmatpush1.msra.mxu0 0.0
      %1688 = vmatprep.subr.mxu0 0.0
      %1689 = vmatpush1.msra.mxu0 0.0
      %1690 = vmatprep.subr.mxu0 0.0
      %1691 = vmatpush1.msra.mxu0 0.0
      %1692 = vmatprep.mubr.f32.mxu0 0.0
      %1693 = vmatmul.mubr.f32.gmra.mrb[0].mxu0 %v1345
      %v1694 = vpop.f32.mrb[0].mxu0
      %v1695 = vadd.f32 0.0, %v1694
      %v1696 = vpop.f32.mrb[0].mxu0
      %v1697 = vadd.f32 0.0, %v1696
      %1698 = vdwg.mxu0
      %1699 = vmatprep.subr.mxu0 0.0
      %1700 = vmatpush1.msra.mxu0 %v1582
      %1701 = vmatprep.subr.mxu0 0.0
      %1702 = vmatpush1.msra.mxu0 %v1585
      %1703 = vmatprep.subr.mxu0 0.0
      %1704 = vmatpush1.msra.mxu0 %v1588
      %1705 = vmatprep.subr.mxu0 0.0
      %1706 = vmatpush1.msra.mxu0 %v1591
      %1707 = vmatprep.subr.mxu0 0.0
      %1708 = vmatpush1.msra.mxu0 %v1594
      %1709 = vmatprep.subr.mxu0 0.0
      %1710 = vmatpush1.msra.mxu0 %v1597
      %1711 = vmatprep.subr.mxu0 0.0
      %1712 = vmatpush1.msra.mxu0 %v1600
      %1713 = vmatprep.subr.mxu0 0.0
      %1714 = vmatpush1.msra.mxu0 %v1603
      %1715 = vmatprep.subr.mxu0 0.0
      %1716 = vmatpush1.msra.mxu0 %v1606
      %1717 = vmatprep.subr.mxu0 0.0
      %1718 = vmatpush1.msra.mxu0 %v1609
      %1719 = vmatprep.subr.mxu0 0.0
      %1720 = vmatpush1.msra.mxu0 %v1612
      %1721 = vmatprep.subr.mxu0 0.0
      %1722 = vmatpush1.msra.mxu0 %v1615
      %1723 = vmatprep.subr.mxu0 0.0
      %1724 = vmatpush1.msra.mxu0 %v1618
      %1725 = vmatprep.subr.mxu0 0.0
      %1726 = vmatpush1.msra.mxu0 %v1621
      %1727 = vmatprep.subr.mxu0 0.0
      %1728 = vmatpush1.msra.mxu0 %v1624
      %1729 = vmatprep.subr.mxu0 0.0
      %1730 = vmatpush1.msra.mxu0 %v1627
      %1731 = vmatprep.subr.mxu0 0.0
      %1732 = vmatpush1.msra.mxu0 0.0
      %1733 = vmatprep.subr.mxu0 0.0
      %1734 = vmatpush1.msra.mxu0 0.0
      %1735 = vmatprep.subr.mxu0 0.0
      %1736 = vmatpush1.msra.mxu0 0.0
      %1737 = vmatprep.subr.mxu0 0.0
      %1738 = vmatpush1.msra.mxu0 0.0
      %1739 = vmatprep.subr.mxu0 0.0
      %1740 = vmatpush1.msra.mxu0 0.0
      %1741 = vmatprep.subr.mxu0 0.0
      %1742 = vmatpush1.msra.mxu0 0.0
      %1743 = vmatprep.subr.mxu0 0.0
      %1744 = vmatpush1.msra.mxu0 0.0
      %1745 = vmatprep.subr.mxu0 0.0
      %1746 = vmatpush1.msra.mxu0 0.0
      %1747 = vmatprep.subr.mxu0 0.0
      %1748 = vmatpush1.msra.mxu0 0.0
      %1749 = vmatprep.subr.mxu0 0.0
      %1750 = vmatpush1.msra.mxu0 0.0
      %1751 = vmatprep.subr.mxu0 0.0
      %1752 = vmatpush1.msra.mxu0 0.0
      %1753 = vmatprep.subr.mxu0 0.0
      %1754 = vmatpush1.msra.mxu0 0.0
      %1755 = vmatprep.subr.mxu0 0.0
      %1756 = vmatpush1.msra.mxu0 0.0
      %1757 = vmatprep.subr.mxu0 0.0
      %1758 = vmatpush1.msra.mxu0 0.0
      %1759 = vmatprep.subr.mxu0 0.0
      %1760 = vmatpush1.msra.mxu0 0.0
      %1761 = vmatprep.subr.mxu0 0.0
      %1762 = vmatpush1.msra.mxu0 0.0
      %1763 = vmatprep.mubr.f32.mxu0 0.0
      %1764 = vmatmul.mubr.f32.gmra.mrb[0].mxu0 %v1345
      %v1765 = vpop.f32.mrb[0].mxu0
      %v1766 = vadd.f32 0.0, %v1765
      %v1767 = vpop.f32.mrb[0].mxu0
      %1768 = vdwg.mxu0
      %v1769 = vadd.f32 %v1576, %v1695
      %v1770 = vxor.u32 %v1769, 2147483648
      %v1771 = vmul.f32 %v1770, 1.442695
      %v1772 = vpow.pop %v1771
      %v1773 = vadd.f32 %v1772, 1.0
      %v1774 = vrcp.pop %v1773
      %v1775 = vmul.f32 1.0, %v1774
      %v1776 = vadd.f32 %v1577, %v1697
      %v1777 = vxor.u32 %v1776, 2147483648
      %v1778 = vmul.f32 %v1777, 1.442695
      %v1779 = vpow.pop %v1778
      %v1780 = vadd.f32 %v1779, 1.0
      %v1781 = vrcp.pop %v1780
      %v1782 = vmul.f32 1.0, %v1781
      %v1783 = vadd.f32 %v1766, %v436
      %v1784 = vmul.f32 %v1775, %v1783
      %v1785 = vadd.f32 %v1578, %v1784
      %v1786 = vtanh.pop %v1785
      %v1787 = vsub.f32 1.0, %v1782
      %v1788 = vmul.f32 %v1787, %v1786
      %v1789 = vmul.f32 %v1782, %v1345
      %v1790 = vadd.f32 %v1788, %v1789
      %v1791 = vstv %s1579
      %vm1792 = vcmp.lt.s32.totalorder %v1791, %v423
      %v1793 = vsel %vm1792, 1, 0
      %1794 = vset.pattern.permute.xlu0 0
      %1795 = vperm.xlu0 %1794, %v1793
      %v1796 = vpop.permute.xlu0 %1795
      %vm1797 = vcmp.eq.s32.totalorder %v1796, 1
      %v1798 = vsel %vm1797, %v1790, 0.0
      %v1799 = vsel %vm1797, %v1790, %v1345
      %s1800 = scalar_lea.vmem %s411, 8
      %1801 = vst [vmem:[%s1800] sm:$0xff] %v1798
      %s1802 = scalar_lea.vmem %s389, 72
      %v1803 = vld [vmem:[%s1802] sm:$0xff]
      %v1804 = vld [vmem:[%s1802 + $0x8] sm:$0xff]
      %v1805 = vld [vmem:[%s1802 + $0x10] sm:$0xff]
      %s1806 = sadd.s32 %s438, 3
      %v1807 = vld [vmem:[%s3] sm:$0xff]
      %v1808 = vld [vmem:[%s3 + $0x8] sm:$0xff]
      %v1809 = vld [vmem:[%s3 + $0x10] sm:$0xff]
      %v1810 = vld [vmem:[%s3 + $0x18] sm:$0xff]
      %v1811 = vld [vmem:[%s3 + $0x20] sm:$0xff]
      %v1812 = vld [vmem:[%s3 + $0x28] sm:$0xff]
      %v1813 = vld [vmem:[%s3 + $0x30] sm:$0xff]
      %v1814 = vld [vmem:[%s3 + $0x38] sm:$0xff]
      %v1815 = vld [vmem:[%s3 + $0x40] sm:$0xff]
      %v1816 = vld [vmem:[%s3 + $0x48] sm:$0xff]
      %v1817 = vld [vmem:[%s3 + $0x50] sm:$0xff]
      %v1818 = vld [vmem:[%s3 + $0x58] sm:$0xff]
      %v1819 = vld [vmem:[%s3 + $0x60] sm:$0xff]
      %v1820 = vld [vmem:[%s3 + $0x68] sm:$0xff]
      %v1821 = vld [vmem:[%s3 + $0x70] sm:$0xff]
      %v1822 = vld [vmem:[%s3 + $0x78] sm:$0xff]
      %v1823 = vld [vmem:[%s3 + $0x80] sm:$0xff]
      %v1824 = vld [vmem:[%s3 + $0x88] sm:$0xff]
      %v1825 = vld [vmem:[%s3 + $0x90] sm:$0xff]
      %v1826 = vld [vmem:[%s3 + $0x98] sm:$0xff]
      %v1827 = vld [vmem:[%s3 + $0xa0] sm:$0xff]
      %v1828 = vld [vmem:[%s3 + $0xa8] sm:$0xff]
      %v1829 = vld [vmem:[%s3 + $0xb0] sm:$0xff]
      %v1830 = vld [vmem:[%s3 + $0xb8] sm:$0xff]
      %v1831 = vld [vmem:[%s3 + $0xc0] sm:$0xff]
      %v1832 = vld [vmem:[%s3 + $0xc8] sm:$0xff]
      %v1833 = vld [vmem:[%s3 + $0xd0] sm:$0xff]
      %v1834 = vld [vmem:[%s3 + $0xd8] sm:$0xff]
      %v1835 = vld [vmem:[%s3 + $0xe0] sm:$0xff]
      %v1836 = vld [vmem:[%s3 + $0xe8] sm:$0xff]
      %v1837 = vld [vmem:[%s3 + $0xf0] sm:$0xff]
      %v1838 = vld [vmem:[%s3 + $0xf8] sm:$0xff]
      %v1839 = vld [vmem:[%s3 + $0x100] sm:$0xff]
      %v1840 = vld [vmem:[%s3 + $0x108] sm:$0xff]
      %v1841 = vld [vmem:[%s3 + $0x110] sm:$0xff]
      %v1842 = vld [vmem:[%s3 + $0x118] sm:$0xff]
      %v1843 = vld [vmem:[%s3 + $0x120] sm:$0xff]
      %v1844 = vld [vmem:[%s3 + $0x128] sm:$0xff]
      %v1845 = vld [vmem:[%s3 + $0x130] sm:$0xff]
      %v1846 = vld [vmem:[%s3 + $0x138] sm:$0xff]
      %v1847 = vld [vmem:[%s3 + $0x140] sm:$0xff]
      %v1848 = vld [vmem:[%s3 + $0x148] sm:$0xff]
      %v1849 = vld [vmem:[%s3 + $0x150] sm:$0xff]
      %v1850 = vld [vmem:[%s3 + $0x158] sm:$0xff]
      %v1851 = vld [vmem:[%s3 + $0x160] sm:$0xff]
      %v1852 = vld [vmem:[%s3 + $0x168] sm:$0xff]
      %v1853 = vld [vmem:[%s3 + $0x170] sm:$0xff]
      %v1854 = vld [vmem:[%s3 + $0x178] sm:$0xff]
      %1855 = vmatprep.subr.mxu0 %v1808
      %1856 = vmatpush1.msra.mxu0 %v1807
      %1857 = vmatprep.subr.mxu0 %v1811
      %1858 = vmatpush1.msra.mxu0 %v1810
      %1859 = vmatprep.subr.mxu0 %v1814
      %1860 = vmatpush1.msra.mxu0 %v1813
      %1861 = vmatprep.subr.mxu0 %v1817
      %1862 = vmatpush1.msra.mxu0 %v1816
      %1863 = vmatprep.subr.mxu0 %v1820
      %1864 = vmatpush1.msra.mxu0 %v1819
      %1865 = vmatprep.subr.mxu0 %v1823
      %1866 = vmatpush1.msra.mxu0 %v1822
      %1867 = vmatprep.subr.mxu0 %v1826
      %1868 = vmatpush1.msra.mxu0 %v1825
      %1869 = vmatprep.subr.mxu0 %v1829
      %1870 = vmatpush1.msra.mxu0 %v1828
      %1871 = vmatprep.subr.mxu0 %v1832
      %1872 = vmatpush1.msra.mxu0 %v1831
      %1873 = vmatprep.subr.mxu0 %v1835
      %1874 = vmatpush1.msra.mxu0 %v1834
      %1875 = vmatprep.subr.mxu0 %v1838
      %1876 = vmatpush1.msra.mxu0 %v1837
      %1877 = vmatprep.subr.mxu0 %v1841
      %1878 = vmatpush1.msra.mxu0 %v1840
      %1879 = vmatprep.subr.mxu0 %v1844
      %1880 = vmatpush1.msra.mxu0 %v1843
      %1881 = vmatprep.subr.mxu0 %v1847
      %1882 = vmatpush1.msra.mxu0 %v1846
      %1883 = vmatprep.subr.mxu0 %v1850
      %1884 = vmatpush1.msra.mxu0 %v1849
      %1885 = vmatprep.subr.mxu0 %v1853
      %1886 = vmatpush1.msra.mxu0 %v1852
      %1887 = vmatprep.subr.mxu0 0.0
      %1888 = vmatpush1.msra.mxu0 0.0
      %1889 = vmatprep.subr.mxu0 0.0
      %1890 = vmatpush1.msra.mxu0 0.0
      %1891 = vmatprep.subr.mxu0 0.0
      %1892 = vmatpush1.msra.mxu0 0.0
      %1893 = vmatprep.subr.mxu0 0.0
      %1894 = vmatpush1.msra.mxu0 0.0
      %1895 = vmatprep.subr.mxu0 0.0
      %1896 = vmatpush1.msra.mxu0 0.0
      %1897 = vmatprep.subr.mxu0 0.0
      %1898 = vmatpush1.msra.mxu0 0.0
      %1899 = vmatprep.subr.mxu0 0.0
      %1900 = vmatpush1.msra.mxu0 0.0
      %1901 = vmatprep.subr.mxu0 0.0
      %1902 = vmatpush1.msra.mxu0 0.0
      %1903 = vmatprep.subr.mxu0 0.0
      %1904 = vmatpush1.msra.mxu0 0.0
      %1905 = vmatprep.subr.mxu0 0.0
      %1906 = vmatpush1.msra.mxu0 0.0
      %1907 = vmatprep.subr.mxu0 0.0
      %1908 = vmatpush1.msra.mxu0 0.0
      %1909 = vmatprep.subr.mxu0 0.0
      %1910 = vmatpush1.msra.mxu0 0.0
      %1911 = vmatprep.subr.mxu0 0.0
      %1912 = vmatpush1.msra.mxu0 0.0
      %1913 = vmatprep.subr.mxu0 0.0
      %1914 = vmatpush1.msra.mxu0 0.0
      %1915 = vmatprep.subr.mxu0 0.0
      %1916 = vmatpush1.msra.mxu0 0.0
      %1917 = vmatprep.subr.mxu0 0.0
      %1918 = vmatpush1.msra.mxu0 0.0
      %1919 = vmatprep.mubr.f32.mxu0 0.0
      %1920 = vmatmul.mubr.f32.gmra.mrb[0].mxu0 %v1572
      %v1921 = vpop.f32.mrb[0].mxu0
      %v1922 = vadd.f32 0.0, %v1921
      %v1923 = vpop.f32.mrb[0].mxu0
      %v1924 = vadd.f32 0.0, %v1923
      %1925 = vdwg.mxu0
      %1926 = vmatprep.subr.mxu0 0.0
      %1927 = vmatpush1.msra.mxu0 %v1809
      %1928 = vmatprep.subr.mxu0 0.0
      %1929 = vmatpush1.msra.mxu0 %v1812
      %1930 = vmatprep.subr.mxu0 0.0
      %1931 = vmatpush1.msra.mxu0 %v1815
      %1932 = vmatprep.subr.mxu0 0.0
      %1933 = vmatpush1.msra.mxu0 %v1818
      %1934 = vmatprep.subr.mxu0 0.0
      %1935 = vmatpush1.msra.mxu0 %v1821
      %1936 = vmatprep.subr.mxu0 0.0
      %1937 = vmatpush1.msra.mxu0 %v1824
      %1938 = vmatprep.subr.mxu0 0.0
      %1939 = vmatpush1.msra.mxu0 %v1827
      %1940 = vmatprep.subr.mxu0 0.0
      %1941 = vmatpush1.msra.mxu0 %v1830
      %1942 = vmatprep.subr.mxu0 0.0
      %1943 = vmatpush1.msra.mxu0 %v1833
      %1944 = vmatprep.subr.mxu0 0.0
      %1945 = vmatpush1.msra.mxu0 %v1836
      %1946 = vmatprep.subr.mxu0 0.0
      %1947 = vmatpush1.msra.mxu0 %v1839
      %1948 = vmatprep.subr.mxu0 0.0
      %1949 = vmatpush1.msra.mxu0 %v1842
      %1950 = vmatprep.subr.mxu0 0.0
      %1951 = vmatpush1.msra.mxu0 %v1845
      %1952 = vmatprep.subr.mxu0 0.0
      %1953 = vmatpush1.msra.mxu0 %v1848
      %1954 = vmatprep.subr.mxu0 0.0
      %1955 = vmatpush1.msra.mxu0 %v1851
      %1956 = vmatprep.subr.mxu0 0.0
      %1957 = vmatpush1.msra.mxu0 %v1854
      %1958 = vmatprep.subr.mxu0 0.0
      %1959 = vmatpush1.msra.mxu0 0.0
      %1960 = vmatprep.subr.mxu0 0.0
      %1961 = vmatpush1.msra.mxu0 0.0
      %1962 = vmatprep.subr.mxu0 0.0
      %1963 = vmatpush1.msra.mxu0 0.0
      %1964 = vmatprep.subr.mxu0 0.0
      %1965 = vmatpush1.msra.mxu0 0.0
      %1966 = vmatprep.subr.mxu0 0.0
      %1967 = vmatpush1.msra.mxu0 0.0
      %1968 = vmatprep.subr.mxu0 0.0
      %1969 = vmatpush1.msra.mxu0 0.0
      %1970 = vmatprep.subr.mxu0 0.0
      %1971 = vmatpush1.msra.mxu0 0.0
      %1972 = vmatprep.subr.mxu0 0.0
      %1973 = vmatpush1.msra.mxu0 0.0
      %1974 = vmatprep.subr.mxu0 0.0
      %1975 = vmatpush1.msra.mxu0 0.0
      %1976 = vmatprep.subr.mxu0 0.0
      %1977 = vmatpush1.msra.mxu0 0.0
      %1978 = vmatprep.subr.mxu0 0.0
      %1979 = vmatpush1.msra.mxu0 0.0
      %1980 = vmatprep.subr.mxu0 0.0
      %1981 = vmatpush1.msra.mxu0 0.0
      %1982 = vmatprep.subr.mxu0 0.0
      %1983 = vmatpush1.msra.mxu0 0.0
      %1984 = vmatprep.subr.mxu0 0.0
      %1985 = vmatpush1.msra.mxu0 0.0
      %1986 = vmatprep.subr.mxu0 0.0
      %1987 = vmatpush1.msra.mxu0 0.0
      %1988 = vmatprep.subr.mxu0 0.0
      %1989 = vmatpush1.msra.mxu0 0.0
      %1990 = vmatprep.mubr.f32.mxu0 0.0
      %1991 = vmatmul.mubr.f32.gmra.mrb[0].mxu0 %v1572
      %v1992 = vpop.f32.mrb[0].mxu0
      %v1993 = vadd.f32 0.0, %v1992
      %v1994 = vpop.f32.mrb[0].mxu0
      %1995 = vdwg.mxu0
      %v1996 = vadd.f32 %v1803, %v1922
      %v1997 = vxor.u32 %v1996, 2147483648
      %v1998 = vmul.f32 %v1997, 1.442695
      %v1999 = vpow.pop %v1998
      %v2000 = vadd.f32 %v1999, 1.0
      %v2001 = vrcp.pop %v2000
      %v2002 = vmul.f32 1.0, %v2001
      %v2003 = vadd.f32 %v1804, %v1924
      %v2004 = vxor.u32 %v2003, 2147483648
      %v2005 = vmul.f32 %v2004, 1.442695
      %v2006 = vpow.pop %v2005
      %v2007 = vadd.f32 %v2006, 1.0
      %v2008 = vrcp.pop %v2007
      %v2009 = vmul.f32 1.0, %v2008
      %v2010 = vadd.f32 %v1993, %v429
      %v2011 = vmul.f32 %v2002, %v2010
      %v2012 = vadd.f32 %v1805, %v2011
      %v2013 = vtanh.pop %v2012
      %v2014 = vsub.f32 1.0, %v2009
      %v2015 = vmul.f32 %v2014, %v2013
      %v2016 = vmul.f32 %v2009, %v1572
      %v2017 = vadd.f32 %v2015, %v2016
      %v2018 = vstv %s1806
      %vm2019 = vcmp.lt.s32.totalorder %v2018, %v423
      %v2020 = vsel %vm2019, 1, 0
      %2021 = vset.pattern.permute.xlu0 0
      %2022 = vperm.xlu0 %2021, %v2020
      %v2023 = vpop.permute.xlu0 %2022
      %vm2024 = vcmp.eq.s32.totalorder %v2023, 1
      %v2025 = vsel %vm2024, %v2017, 0.0
      %v2026 = vsel %vm2024, %v2017, %v1572
      %s2027 = scalar_lea.vmem %s404, 24
      %2028 = vst [vmem:[%s2027] sm:$0xff] %v2025
      %v2029 = vld [vmem:[%s397] sm:$0xff]
      %v2030 = vld [vmem:[%s397 + $0x8] sm:$0xff]
      %v2031 = vld [vmem:[%s397 + $0x10] sm:$0xff]
      %v2032 = vld [vmem:[%s4] sm:$0xff]
      %v2033 = vld [vmem:[%s4 + $0x8] sm:$0xff]
      %v2034 = vld [vmem:[%s4 + $0x10] sm:$0xff]
      %v2035 = vld [vmem:[%s4 + $0x18] sm:$0xff]
      %v2036 = vld [vmem:[%s4 + $0x20] sm:$0xff]
      %v2037 = vld [vmem:[%s4 + $0x28] sm:$0xff]
      %v2038 = vld [vmem:[%s4 + $0x30] sm:$0xff]
      %v2039 = vld [vmem:[%s4 + $0x38] sm:$0xff]
      %v2040 = vld [vmem:[%s4 + $0x40] sm:$0xff]
      %v2041 = vld [vmem:[%s4 + $0x48] sm:$0xff]
      %v2042 = vld [vmem:[%s4 + $0x50] sm:$0xff]
      %v2043 = vld [vmem:[%s4 + $0x58] sm:$0xff]
      %v2044 = vld [vmem:[%s4 + $0x60] sm:$0xff]
      %v2045 = vld [vmem:[%s4 + $0x68] sm:$0xff]
      %v2046 = vld [vmem:[%s4 + $0x70] sm:$0xff]
      %v2047 = vld [vmem:[%s4 + $0x78] sm:$0xff]
      %v2048 = vld [vmem:[%s4 + $0x80] sm:$0xff]
      %v2049 = vld [vmem:[%s4 + $0x88] sm:$0xff]
      %v2050 = vld [vmem:[%s4 + $0x90] sm:$0xff]
      %v2051 = vld [vmem:[%s4 + $0x98] sm:$0xff]
      %v2052 = vld [vmem:[%s4 + $0xa0] sm:$0xff]
      %v2053 = vld [vmem:[%s4 + $0xa8] sm:$0xff]
      %v2054 = vld [vmem:[%s4 + $0xb0] sm:$0xff]
      %v2055 = vld [vmem:[%s4 + $0xb8] sm:$0xff]
      %v2056 = vld [vmem:[%s4 + $0xc0] sm:$0xff]
      %v2057 = vld [vmem:[%s4 + $0xc8] sm:$0xff]
      %v2058 = vld [vmem:[%s4 + $0xd0] sm:$0xff]
      %v2059 = vld [vmem:[%s4 + $0xd8] sm:$0xff]
      %v2060 = vld [vmem:[%s4 + $0xe0] sm:$0xff]
      %v2061 = vld [vmem:[%s4 + $0xe8] sm:$0xff]
      %v2062 = vld [vmem:[%s4 + $0xf0] sm:$0xff]
      %v2063 = vld [vmem:[%s4 + $0xf8] sm:$0xff]
      %v2064 = vld [vmem:[%s4 + $0x100] sm:$0xff]
      %v2065 = vld [vmem:[%s4 + $0x108] sm:$0xff]
      %v2066 = vld [vmem:[%s4 + $0x110] sm:$0xff]
      %v2067 = vld [vmem:[%s4 + $0x118] sm:$0xff]
      %v2068 = vld [vmem:[%s4 + $0x120] sm:$0xff]
      %v2069 = vld [vmem:[%s4 + $0x128] sm:$0xff]
      %v2070 = vld [vmem:[%s4 + $0x130] sm:$0xff]
      %v2071 = vld [vmem:[%s4 + $0x138] sm:$0xff]
      %v2072 = vld [vmem:[%s4 + $0x140] sm:$0xff]
      %v2073 = vld [vmem:[%s4 + $0x148] sm:$0xff]
      %v2074 = vld [vmem:[%s4 + $0x150] sm:$0xff]
      %v2075 = vld [vmem:[%s4 + $0x158] sm:$0xff]
      %v2076 = vld [vmem:[%s4 + $0x160] sm:$0xff]
      %v2077 = vld [vmem:[%s4 + $0x168] sm:$0xff]
      %v2078 = vld [vmem:[%s4 + $0x170] sm:$0xff]
      %v2079 = vld [vmem:[%s4 + $0x178] sm:$0xff]
      %2080 = vmatprep.subr.mxu0 %v2033
      %2081 = vmatpush1.msra.mxu0 %v2032
      %2082 = vmatprep.subr.mxu0 %v2036
      %2083 = vmatpush1.msra.mxu0 %v2035
      %2084 = vmatprep.subr.mxu0 %v2039
      %2085 = vmatpush1.msra.mxu0 %v2038
      %2086 = vmatprep.subr.mxu0 %v2042
      %2087 = vmatpush1.msra.mxu0 %v2041
      %2088 = vmatprep.subr.mxu0 %v2045
      %2089 = vmatpush1.msra.mxu0 %v2044
      %2090 = vmatprep.subr.mxu0 %v2048
      %2091 = vmatpush1.msra.mxu0 %v2047
      %2092 = vmatprep.subr.mxu0 %v2051
      %2093 = vmatpush1.msra.mxu0 %v2050
      %2094 = vmatprep.subr.mxu0 %v2054
      %2095 = vmatpush1.msra.mxu0 %v2053
      %2096 = vmatprep.subr.mxu0 %v2057
      %2097 = vmatpush1.msra.mxu0 %v2056
      %2098 = vmatprep.subr.mxu0 %v2060
      %2099 = vmatpush1.msra.mxu0 %v2059
      %2100 = vmatprep.subr.mxu0 %v2063
      %2101 = vmatpush1.msra.mxu0 %v2062
      %2102 = vmatprep.subr.mxu0 %v2066
      %2103 = vmatpush1.msra.mxu0 %v2065
      %2104 = vmatprep.subr.mxu0 %v2069
      %2105 = vmatpush1.msra.mxu0 %v2068
      %2106 = vmatprep.subr.mxu0 %v2072
      %2107 = vmatpush1.msra.mxu0 %v2071
      %2108 = vmatprep.subr.mxu0 %v2075
      %2109 = vmatpush1.msra.mxu0 %v2074
      %2110 = vmatprep.subr.mxu0 %v2078
      %2111 = vmatpush1.msra.mxu0 %v2077
      %2112 = vmatprep.subr.mxu0 0.0
      %2113 = vmatpush1.msra.mxu0 0.0
      %2114 = vmatprep.subr.mxu0 0.0
      %2115 = vmatpush1.msra.mxu0 0.0
      %2116 = vmatprep.subr.mxu0 0.0
      %2117 = vmatpush1.msra.mxu0 0.0
      %2118 = vmatprep.subr.mxu0 0.0
      %2119 = vmatpush1.msra.mxu0 0.0
      %2120 = vmatprep.subr.mxu0 0.0
      %2121 = vmatpush1.msra.mxu0 0.0
      %2122 = vmatprep.subr.mxu0 0.0
      %2123 = vmatpush1.msra.mxu0 0.0
      %2124 = vmatprep.subr.mxu0 0.0
      %2125 = vmatpush1.msra.mxu0 0.0
      %2126 = vmatprep.subr.mxu0 0.0
      %2127 = vmatpush1.msra.mxu0 0.0
      %2128 = vmatprep.subr.mxu0 0.0
      %2129 = vmatpush1.msra.mxu0 0.0
      %2130 = vmatprep.subr.mxu0 0.0
      %2131 = vmatpush1.msra.mxu0 0.0
      %2132 = vmatprep.subr.mxu0 0.0
      %2133 = vmatpush1.msra.mxu0 0.0
      %2134 = vmatprep.subr.mxu0 0.0
      %2135 = vmatpush1.msra.mxu0 0.0
      %2136 = vmatprep.subr.mxu0 0.0
      %2137 = vmatpush1.msra.mxu0 0.0
      %2138 = vmatprep.subr.mxu0 0.0
      %2139 = vmatpush1.msra.mxu0 0.0
      %2140 = vmatprep.subr.mxu0 0.0
      %2141 = vmatpush1.msra.mxu0 0.0
      %2142 = vmatprep.subr.mxu0 0.0
      %2143 = vmatpush1.msra.mxu0 0.0
      %2144 = vmatprep.mubr.f32.mxu0 0.0
      %2145 = vmatmul.mubr.f32.gmra.mrb[0].mxu0 %v1799
      %v2146 = vpop.f32.mrb[0].mxu0
      %v2147 = vadd.f32 0.0, %v2146
      %v2148 = vpop.f32.mrb[0].mxu0
      %v2149 = vadd.f32 0.0, %v2148
      %2150 = vdwg.mxu0
      %2151 = vmatprep.subr.mxu0 0.0
      %2152 = vmatpush1.msra.mxu0 %v2034
      %2153 = vmatprep.subr.mxu0 0.0
      %2154 = vmatpush1.msra.mxu0 %v2037
      %2155 = vmatprep.subr.mxu0 0.0
      %2156 = vmatpush1.msra.mxu0 %v2040
      %2157 = vmatprep.subr.mxu0 0.0
      %2158 = vmatpush1.msra.mxu0 %v2043
      %2159 = vmatprep.subr.mxu0 0.0
      %2160 = vmatpush1.msra.mxu0 %v2046
      %2161 = vmatprep.subr.mxu0 0.0
      %2162 = vmatpush1.msra.mxu0 %v2049
      %2163 = vmatprep.subr.mxu0 0.0
      %2164 = vmatpush1.msra.mxu0 %v2052
      %2165 = vmatprep.subr.mxu0 0.0
      %2166 = vmatpush1.msra.mxu0 %v2055
      %2167 = vmatprep.subr.mxu0 0.0
      %2168 = vmatpush1.msra.mxu0 %v2058
      %2169 = vmatprep.subr.mxu0 0.0
      %2170 = vmatpush1.msra.mxu0 %v2061
      %2171 = vmatprep.subr.mxu0 0.0
      %2172 = vmatpush1.msra.mxu0 %v2064
      %2173 = vmatprep.subr.mxu0 0.0
      %2174 = vmatpush1.msra.mxu0 %v2067
      %2175 = vmatprep.subr.mxu0 0.0
      %2176 = vmatpush1.msra.mxu0 %v2070
      %2177 = vmatprep.subr.mxu0 0.0
      %2178 = vmatpush1.msra.mxu0 %v2073
      %2179 = vmatprep.subr.mxu0 0.0
      %2180 = vmatpush1.msra.mxu0 %v2076
      %2181 = vmatprep.subr.mxu0 0.0
      %2182 = vmatpush1.msra.mxu0 %v2079
      %2183 = vmatprep.subr.mxu0 0.0
      %2184 = vmatpush1.msra.mxu0 0.0
      %2185 = vmatprep.subr.mxu0 0.0
      %2186 = vmatpush1.msra.mxu0 0.0
      %2187 = vmatprep.subr.mxu0 0.0
      %2188 = vmatpush1.msra.mxu0 0.0
      %2189 = vmatprep.subr.mxu0 0.0
      %2190 = vmatpush1.msra.mxu0 0.0
      %2191 = vmatprep.subr.mxu0 0.0
      %2192 = vmatpush1.msra.mxu0 0.0
      %2193 = vmatprep.subr.mxu0 0.0
      %2194 = vmatpush1.msra.mxu0 0.0
      %2195 = vmatprep.subr.mxu0 0.0
      %2196 = vmatpush1.msra.mxu0 0.0
      %2197 = vmatprep.subr.mxu0 0.0
      %2198 = vmatpush1.msra.mxu0 0.0
      %2199 = vmatprep.subr.mxu0 0.0
      %2200 = vmatpush1.msra.mxu0 0.0
      %2201 = vmatprep.subr.mxu0 0.0
      %2202 = vmatpush1.msra.mxu0 0.0
      %2203 = vmatprep.subr.mxu0 0.0
      %2204 = vmatpush1.msra.mxu0 0.0
      %2205 = vmatprep.subr.mxu0 0.0
      %2206 = vmatpush1.msra.mxu0 0.0
      %2207 = vmatprep.subr.mxu0 0.0
      %2208 = vmatpush1.msra.mxu0 0.0
      %2209 = vmatprep.subr.mxu0 0.0
      %2210 = vmatpush1.msra.mxu0 0.0
      %2211 = vmatprep.subr.mxu0 0.0
      %2212 = vmatpush1.msra.mxu0 0.0
      %2213 = vmatprep.subr.mxu0 0.0
      %2214 = vmatpush1.msra.mxu0 0.0
      %2215 = vmatprep.mubr.f32.mxu0 0.0
      %2216 = vmatmul.mubr.f32.gmra.mrb[0].mxu0 %v1799
      %v2217 = vpop.f32.mrb[0].mxu0
      %v2218 = vadd.f32 0.0, %v2217
      %v2219 = vpop.f32.mrb[0].mxu0
      %2220 = vdwg.mxu0
      %v2221 = vadd.f32 %v2029, %v2147
      %v2222 = vxor.u32 %v2221, 2147483648
      %v2223 = vmul.f32 %v2222, 1.442695
      %v2224 = vpow.pop %v2223
      %v2225 = vadd.f32 %v2224, 1.0
      %v2226 = vrcp.pop %v2225
      %v2227 = vmul.f32 1.0, %v2226
      %v2228 = vadd.f32 %v2030, %v2149
      %v2229 = vxor.u32 %v2228, 2147483648
      %v2230 = vmul.f32 %v2229, 1.442695
      %v2231 = vpow.pop %v2230
      %v2232 = vadd.f32 %v2231, 1.0
      %v2233 = vrcp.pop %v2232
      %v2234 = vmul.f32 1.0, %v2233
      %v2235 = vadd.f32 %v2218, %v436
      %v2236 = vmul.f32 %v2227, %v2235
      %v2237 = vadd.f32 %v2031, %v2236
      %v2238 = vtanh.pop %v2237
      %v2239 = vsub.f32 1.0, %v2234
      %v2240 = vmul.f32 %v2239, %v2238
      %v2241 = vmul.f32 %v2234, %v1799
      %v2242 = vadd.f32 %v2240, %v2241
      %v2243 = vstv %s440
      %vm2244 = vcmp.lt.s32.totalorder %v2243, %v423
      %v2245 = vsel %vm2244, 1, 0
      %2246 = vset.pattern.permute.xlu0 0
      %2247 = vperm.xlu0 %2246, %v2245
      %v2248 = vpop.permute.xlu0 %2247
      %vm2249 = vcmp.eq.s32.totalorder %v2248, 1
      %v2250 = vsel %vm2249, %v2242, 0.0
      %v2251 = vsel %vm2249, %v2242, %v1799
      %2252 = vst [vmem:[%s411] sm:$0xff] %v2250
      %2253 = vst [vmem:[#allocation2] sm:$0xff] %v2026
      %2254 = vst [vmem:[#allocation3] sm:$0xff] %v2251
      %p2255 = scmp.eq.s32.totalorder %s22, 1
      // Predicated region
      $region57: #{_lambda_.3} parent=51 // pred_check
        %p2256 = pneg %p2255
      $region58: #{_lambda_.3} parent=51 // pred_check_branch
        %2258 = sbr.rel (%p2256) target = $region60
      $region59: #{_lambda_.3} parent=51 // pred_region
        %2259 = vst [vmem:[%s10] sm:$0xff] %v2026
        %s2260 = scalar_lea.vmem %s10, 8
        %2261 = vst [vmem:[%s2260] sm:$0xff] %v2251
      $region60: #{_lambda_.3} parent=51 // pred_fallthru
        _
      %s2262 = smul.u32 4, %s22
      %p2263 = scmp.lt.s32.totalorder %s2262, 7
      %s2264 = scalar_select %p2263, %s2262, 7
      %s2265 = smul.addr %s2264, 8
      %s2266 = scalar_lea.vmem %s8, %s2265
      %s2267 = ssub.s32 1, %s22
      %s2268 = smul.u32 4, %s2267
      %p2269 = scmp.lt.s32.totalorder %s2268, 7
      %s2270 = scalar_select %p2269, %s2268, 7
      %s2271 = smul.addr %s2270, 8
      %s2272 = scalar_lea.vmem %s9, %s2271
      // Predicated region
      $region61: #{_lambda_.3} parent=51 // pred_check
        %p2273 = pneg %p220
      $region62: #{_lambda_.3} parent=51 // pred_check_branch
        %2275 = sbr.rel (%p2273) target = $region64
      $region63: #{_lambda_.3} parent=51 // pred_region
        %s2276 = smul.u32 4, %s22
      $region64: #{_lambda_.3} parent=51 // pred_fallthru
        _
      // Predicated region
      $region65: #{_lambda_.3} parent=51 // pred_check
        %p2277 = pneg %p248
      $region66: #{_lambda_.3} parent=51 // pred_check_branch
        %2279 = sbr.rel (%p2277) target = $region68
      $region67: #{_lambda_.3} parent=51 // pred_region
        %s2280 = ssub.s32 1, %s22
        %s2281 = smul.u32 4, %s2280
      $region68: #{_lambda_.3} parent=51 // pred_fallthru
        _
      // Predicated region
      $region69: #{_lambda_.3} parent=51 // pred_check
        %p2282 = pneg %p269
      $region70: #{_lambda_.3} parent=51 // pred_check_branch
        %2284 = sbr.rel (%p2282) target = $region72
      $region71: #{_lambda_.3} parent=51 // pred_region
        _
      $region72: #{_lambda_.3} parent=51 // pred_fallthru
        _
      // Predicated region
      $region73: #{_lambda_.3} parent=51 // pred_check
        %p2285 = pneg %p269
      $region74: #{_lambda_.3} parent=51 // pred_check_branch
        %2287 = sbr.rel (%p2285) target = $region76
      $region75: #{_lambda_.3} parent=51 // pred_region
        _
      $region76: #{_lambda_.3} parent=51 // pred_fallthru
        _
    $region52: #{_lambda_.3} parent=5 // pred_fallthru
      _
    %p2288 = scmp.le.s32.totalorder 2, %s17
    // Predicated region
    $region77: #{_lambda_.3} parent=5 // pred_check
      %p2289 = pneg %p2288
    $region78: #{_lambda_.3} parent=5 // pred_check_branch
      %2291 = sbr.rel (%p2289) target = $region80
    $region79: #{_lambda_.3} parent=5 // pred_region
      %s2292 = ssub.s32 %s17, 2
      // Predicated region
      $region81: #{_lambda_.3} parent=79 // pred_check
        %p2293 = pneg %p226
      $region82: #{_lambda_.3} parent=79 // pred_check_branch
        %2295 = sbr.rel (%p2293) target = $region84
      $region83: #{_lambda_.3} parent=79 // pred_region
        %s2296 = smul.u32 4, %s23
        %p2297 = scmp.lt.s32.totalorder %s2296, 7
        %s2298 = scalar_select %p2297, %s2296, 7
        %s2299 = smul.addr %s2298, 8
        %s2300 = scalar_lea.vmem %s8, %s2299
      $region84: #{_lambda_.3} parent=79 // pred_fallthru
        _
      // Predicated region
      $region85: #{_lambda_.3} parent=79 // pred_check
        %p2301 = pneg %p254
      $region86: #{_lambda_.3} parent=79 // pred_check_branch
        %2303 = sbr.rel (%p2301) target = $region88
      $region87: #{_lambda_.3} parent=79 // pred_region
        %s2304 = ssub.s32 1, %s23
        %s2305 = smul.u32 4, %s2304
        %p2306 = scmp.lt.s32.totalorder %s2305, 7
        %s2307 = scalar_select %p2306, %s2305, 7
        %s2308 = smul.addr %s2307, 8
        %s2309 = scalar_lea.vmem %s9, %s2308
      $region88: #{_lambda_.3} parent=79 // pred_fallthru
        _
    $region80: #{_lambda_.3} parent=5 // pred_fallthru
      _
  $region6: #{_lambda_.3} parent=0 // loop_footer
    %s21 = sadd.s32 1, %s17
  $region7: #{_lambda_.3} parent=0 // loop_footer_branch
    %16 = sbr.rel target = $region3
  $region8: #{_lambda_.3} parent=0 // loop_exit
    _

</llo_original>
